<compile_context>
chip_gen: v5e
topology: v5e:2x2
jax: 0.10.0
libtpu: 0.0.40
codegen_flags: <defaults>
</compile_context>

<pallas_src>
import functools

import numpy as np
import jax
import jax.numpy as jnp
from jax.experimental import pallas as pl
from jax.experimental.pallas import tpu as pltpu

NUM_INPUTS = 2           # config['num_inputs']
NUM_HIDDEN_LAYERS = 8    # config['num_layers'] hidden Linear+tanh layers
HIDDEN = 40              # config['neurons_per_layer']
NUM_OUTPUTS = 2          # (psi, p)
RHO = 1.0
NU = 0.01
MAX_TILE = 1024          # max collocation points per grid step (lane dim)
OUT_ROWS = 8             # psi, u, v, u_eqn, v_eqn, 3 pad rows (sublane align)


# ----------------------------- kernel helpers ------------------------------
def _hidden_layer_jet(src_ref, dst_ref, wT, b, t_pts):
    """One Linear+tanh layer applied to the fused jet slab (ref -> ref).

    src_ref/dst_ref: (HIDDEN, 10*T) VMEM scratch; component c occupies lanes
                     [c*T, (c+1)*T), order (val, x, y, xx, xy, yy,
                     xxx, xxy, xyy, yyy).
    wT: (fan_out, fan_in)   (torch nn.Linear.weight orientation)
    b:  (fan_out, 1)
    """
    # Single MXU push for all 10 jet components.
    z_all = jnp.dot(wT, src_ref[...], preferred_element_type=jnp.float32)

    def c(k):
        return z_all[:, k * t_pts:(k + 1) * t_pts]

    z = c(0) + b
    zx, zy = c(1), c(2)
    zxx, zxy, zyy = c(3), c(4), c(5)
    zxxx, zxxy, zxyy, zyyy = c(6), c(7), c(8), c(9)

    t = jnp.tanh(z)                      # EUP
    tt = t * t
    t1 = 1.0 - tt                        # tanh'
    t2 = -2.0 * (t * t1)                 # tanh''
    t3 = 2.0 * t1 * (2.0 * tt - t1)      # tanh''' = -2*t1^2 + 4*t^2*t1

    # common subexpressions
    t2zx = t2 * zx
    t2zy = t2 * zy
    t3zx = t3 * zx
    zx2 = zx * zx
    zy2 = zy * zy
    zxzy = zx * zy

    def put(k, v):
        # lane-aligned (k*T is a multiple of 128) unmasked stores
        dst_ref[:, k * t_pts:(k + 1) * t_pts] = v

    put(0, t)
    put(1, t1 * zx)
    put(2, t1 * zy)
    put(3, t2zx * zx + t1 * zxx)
    put(4, t2zx * zy + t1 * zxy)
    put(5, t2zy * zy + t1 * zyy)
    put(6, t3zx * zx2 + 3.0 * (t2zx * zxx) + t1 * zxxx)
    put(7, t3zx * zxzy + 2.0 * (t2zx * zxy) + t2zy * zxx + t1 * zxxy)
    put(8, t3zx * zy2 + t2zx * zyy + 2.0 * (t2zy * zxy) + t1 * zxyy)
    put(9, t3 * (zy2 * zy) + 3.0 * (t2zy * zyy) + t1 * zyyy)


def _ns_kernel(xy_ref, w_in_ref, b_in_ref, w_hid_ref, b_hid_ref,
               w_out_ref, b_out_ref, out_ref, slab_a, slab_b,
               *, rho, nu, n_hidden):
    t_pts = xy_ref.shape[1]                   # TILE
    xy = xy_ref[...]                          # (2, T): row0 = x, row1 = y
    w_in = w_in_ref[...]                      # (40, 2)
    b_in = b_in_ref[...]                      # (40, 1)

    # ---- input layer: z = W.xy + b; dz/dx = W[:,0], dz/dy = W[:,1], rest 0.
    z = jnp.dot(w_in, xy, preferred_element_type=jnp.float32) + b_in  # (40, T)
    wx = w_in[:, 0:1]
    wy = w_in[:, 1:2]

    t = jnp.tanh(z)
    tt = t * t
    t1 = 1.0 - tt
    t2 = -2.0 * (t * t1)
    t3 = 2.0 * t1 * (2.0 * tt - t1)

    wx2 = wx * wx
    wy2 = wy * wy
    wxwy = wx * wy

    def put_a(k, v):
        slab_a[:, k * t_pts:(k + 1) * t_pts] = v

    put_a(0, t)
    put_a(1, t1 * wx)
    put_a(2, t1 * wy)
    put_a(3, t2 * wx2)
    put_a(4, t2 * wxwy)
    put_a(5, t2 * wy2)
    put_a(6, t3 * (wx2 * wx))
    put_a(7, t3 * (wx2 * wy))
    put_a(8, t3 * (wx * wy2))
    put_a(9, t3 * (wy2 * wy))

    # ---- 7 hidden Linear+tanh layers: ping-pong VMEM slabs, one MXU push each.
    slabs = (slab_a, slab_b)
    src = 0
    for i in range(n_hidden - 1):
        _hidden_layer_jet(slabs[src], slabs[1 - src],
                          w_hid_ref[i], b_hid_ref[i], t_pts)
        src = 1 - src

    # ---- output layer (psi, p), no activation.
    # (p column is only consumed through the x / y slots; the extra MXU work
    #  on its higher-order slots is negligible and keeps this a single push.)
    o = jnp.dot(w_out_ref[...], slabs[src][...],
                preferred_element_type=jnp.float32)       # (2, 10T)

    def d(row, comp):
        return o[row:row + 1, comp * t_pts:(comp + 1) * t_pts]

    psi = d(0, 0) + b_out_ref[0:1, 0:1]
    u = d(0, 2)            # psi_y
    v = -d(0, 1)           # -psi_x
    u_x = d(0, 4)          # psi_xy
    u_y = d(0, 5)          # psi_yy
    u_xx = d(0, 7)         # psi_xxy
    u_yy = d(0, 9)         # psi_yyy
    v_x = -d(0, 3)         # -psi_xx
    v_y = -d(0, 4)         # -psi_xy
    v_xx = -d(0, 6)        # -psi_xxx
    v_yy = -d(0, 8)        # -psi_xyy
    p_x = d(1, 1)
    p_y = d(1, 2)

    u_eqn = rho * (u * u_x + v * u_y) + p_x - nu * (u_xx + u_yy)
    v_eqn = rho * (u * v_x + v * v_y) + p_y - nu * (v_xx + v_yy)

    # One unmasked lane-dense (8, T) output store:
    # rows = psi, u, v, u_eqn, v_eqn, 0, 0, 0.
    out_ref[...] = jnp.concatenate(
        [psi, u, v, u_eqn, v_eqn, jnp.zeros((3, t_pts), jnp.float32)], axis=0)


# ------------------------------ host wrappers -------------------------------
def _pick_tile(n, max_tile=MAX_TILE):
    """Tile multiple of 128, capped at max_tile, preferring >= 2 grid steps
    (so the 'parallel' grid axis can be sharded across v7x's two TCs)."""
    n128 = ((max(n, 1) + 127) // 128) * 128
    tile = min(max_tile, max(128, (n128 // 2 // 128) * 128))
    return tile


def ns_gradients(params, xy, *, rho=RHO, nu=NU, max_tile=MAX_TILE):
    """Returns (psi (N,1), uv=(u,v) (N,2), eqn=(u_eqn,v_eqn) (N,2))."""
    w_in, b_in, w_hid, b_hid, w_out, b_out = params   # stored as (fan_in, fan_out)
    n = xy.shape[0]
    tile = _pick_tile(n, max_tile)
    n_pad = ((n + tile - 1) // tile) * tile

    # transpose to points-in-lanes layout (tiny host-side XLA ops)
    xy_t = jnp.pad(xy.astype(jnp.float32), ((0, n_pad - n), (0, 0))).T   # (2, Np)
    w_in_t = w_in.T                               # (40, 2)
    b_in_t = b_in.reshape(HIDDEN, 1)              # (40, 1)
    w_hid_t = jnp.swapaxes(w_hid, 1, 2)           # (L-1, 40, 40)
    b_hid_t = jnp.swapaxes(b_hid, 1, 2)           # (L-1, 40, 1)
    w_out_t = w_out.T                             # (2, 40)
    b_out_t = b_out.reshape(NUM_OUTPUTS, 1)       # (2, 1)

    grid = (n_pad // tile,)
    kernel = functools.partial(_ns_kernel, rho=rho, nu=nu,
                               n_hidden=NUM_HIDDEN_LAYERS)

    out = pl.pallas_call(
        kernel,
        out_shape=jax.ShapeDtypeStruct((OUT_ROWS, n_pad), jnp.float32),
        grid_spec=pltpu.PrefetchScalarGridSpec(
            num_scalar_prefetch=0,
            grid=grid,
            in_specs=[
                pl.BlockSpec((NUM_INPUTS, tile), lambda i: (0, i)),
                pl.BlockSpec(w_in_t.shape, lambda i: (0, 0)),
                pl.BlockSpec(b_in_t.shape, lambda i: (0, 0)),
                pl.BlockSpec(w_hid_t.shape, lambda i: (0, 0, 0)),
                pl.BlockSpec(b_hid_t.shape, lambda i: (0, 0, 0)),
                pl.BlockSpec(w_out_t.shape, lambda i: (0, 0)),
                pl.BlockSpec(b_out_t.shape, lambda i: (0, 0)),
            ],
            out_specs=pl.BlockSpec((OUT_ROWS, tile), lambda i: (0, i)),
            # ping-pong jet slabs (value + 9 derivative components each)
            scratch_shapes=[pltpu.VMEM((HIDDEN, 10 * tile), jnp.float32)] * 2),
        compiler_params=pltpu.CompilerParams(
            dimension_semantics=("parallel",),
            vmem_limit_bytes=32 << 20),
    )(xy_t, w_in_t, b_in_t, w_hid_t, b_hid_t, w_out_t, b_out_t)

    psi = out[0:1, :n].T       # (n, 1)
    uv = out[1:3, :n].T        # (n, 2)
    eqn = out[3:5, :n].T       # (n, 2)
    return psi, uv, eqn


def pinn_forward(params, xy_eqn, xy_bnd, *, rho=RHO, nu=NU):
    """Mirrors PINN.forward: returns (uv_eqn, psi_bnd, uv_bnd).

    The two point sets are fused into a single pallas_call (one launch, one
    pipelined grid) and split on the host.
    """
    n_eqn = xy_eqn.shape[0]
    xy_all = jnp.concatenate([xy_eqn, xy_bnd], axis=0)
    psi, uv, eqn = ns_gradients(params, xy_all, rho=rho, nu=nu)
    uv_eqn = eqn[:n_eqn]
    psi_b = psi[n_eqn:]
    uv_bnd = uv[n_eqn:]
    psi_bnd = jnp.concatenate([psi_b, psi_b], axis=1)   # column_stack([psi, psi])
    return uv_eqn, psi_bnd, uv_bnd


def init_params(key):
    """Deterministic kaiming-normal init (biases zero), weights as (fan_in, fan_out)."""
    keys = jax.random.split(key, NUM_HIDDEN_LAYERS + 1)

    def kaiming(k, fan_in, fan_out):
        return jnp.sqrt(2.0 / fan_in) * jax.random.normal(
            k, (fan_in, fan_out), jnp.float32)

    w_in = kaiming(keys[0], NUM_INPUTS, HIDDEN)
    b_in = jnp.zeros((1, HIDDEN), jnp.float32)
    w_hid = jnp.stack([kaiming(keys[i + 1], HIDDEN, HIDDEN)
                       for i in range(NUM_HIDDEN_LAYERS - 1)])
    b_hid = jnp.zeros((NUM_HIDDEN_LAYERS - 1, 1, HIDDEN), jnp.float32)
    w_out = kaiming(keys[-1], HIDDEN, NUM_OUTPUTS)
    b_out = jnp.zeros((1, NUM_OUTPUTS), jnp.float32)
    return (w_in, b_in, w_hid, b_hid, w_out, b_out)


# ------------------------- pure-JAX autodiff reference ----------------------
def _mlp_point(params, xy):
    w_in, b_in, w_hid, b_hid, w_out, b_out = params
    hp = jax.lax.Precision.HIGHEST
    h = jnp.tanh(jnp.dot(xy, w_in, precision=hp) + b_in[0])
    for i in range(NUM_HIDDEN_LAYERS - 1):
        h = jnp.tanh(jnp.dot(h, w_hid[i], precision=hp) + b_hid[i, 0])
    return jnp.dot(h, w_out, precision=hp) + b_out[0]


def reference_forward(params, xy_eqn, xy_bnd, rho, nu):
    psi_fn = lambda p: _mlp_point(params, p)[0]
    p_fn = lambda p: _mlp_point(params, p)[1]
    d1 = jax.jacfwd(psi_fn)
    d2 = jax.jacfwd(d1)
    d3 = jax.jacfwd(d2)
    dp = jax.jacfwd(p_fn)

    def grads(pt):
        g1, g2, g3, gp = d1(pt), d2(pt), d3(pt), dp(pt)
        psi = psi_fn(pt)
        u, v = g1[1], -g1[0]
        u_x, u_y = g2[1, 0], g2[1, 1]
        v_x, v_y = -g2[0, 0], -g2[0, 1]
        u_xx, u_yy = g3[1, 0, 0], g3[1, 1, 1]
        v_xx, v_yy = -g3[0, 0, 0], -g3[0, 1, 1]
        p_x, p_y = gp[0], gp[1]
        u_eqn = rho * (u * u_x + v * u_y) + p_x - nu * (u_xx + u_yy)
        v_eqn = rho * (u * v_x + v * v_y) + p_y - nu * (v_xx + v_yy)
        return psi, u, v, u_eqn, v_eqn

    _, _, _, ue, ve = jax.vmap(grads)(xy_eqn)
    psi_b, u_b, v_b, _, _ = jax.vmap(grads)(xy_bnd)
    uv_eqn = jnp.stack([ue, ve], axis=1)
    psi_bnd = jnp.stack([psi_b, psi_b], axis=1)
    uv_bnd = jnp.stack([u_b, v_b], axis=1)
    return uv_eqn, psi_bnd, uv_bnd


if __name__ == "__main__":
    key = jax.random.PRNGKey(0)
    kp, ke, kb = jax.random.split(key, 3)
    params = init_params(kp)

    xy_eqn = jax.random.uniform(ke, (256, 2), jnp.float32)   # collocation points
    xy_bnd = jax.random.uniform(kb, (128, 2), jnp.float32)   # boundary points

    uv_eqn, psi_bnd, uv_bnd = jax.block_until_ready(
        pinn_forward(params, xy_eqn, xy_bnd))

    assert uv_eqn.shape == (256, 2)
    assert psi_bnd.shape == (128, 2)
    assert uv_bnd.shape == (128, 2)

    uv_eqn_r, psi_bnd_r, uv_bnd_r = reference_forward(
        params, xy_eqn, xy_bnd, RHO, NU)
    np.testing.assert_allclose(np.asarray(psi_bnd), np.asarray(psi_bnd_r),
                               rtol=1e-3, atol=1e-4)
    np.testing.assert_allclose(np.asarray(uv_bnd), np.asarray(uv_bnd_r),
                               rtol=1e-3, atol=1e-3)
    np.testing.assert_allclose(np.asarray(uv_eqn), np.asarray(uv_eqn_r),
                               rtol=2e-2, atol=1e-2)

    print("KERNEL_OK")
</pallas_src>

<mosaic_0001>
module attributes {stable_mosaic.version = 11 : i64} {
  func.func @_ns_kernel(%arg0: i32, %arg1: memref<2x128xf32, #tpu.memory_space<vmem>>, %arg2: memref<40x2xf32, #tpu.memory_space<vmem>>, %arg3: memref<40x1xf32, #tpu.memory_space<vmem>>, %arg4: memref<7x40x40xf32, #tpu.memory_space<vmem>>, %arg5: memref<7x40x1xf32, #tpu.memory_space<vmem>>, %arg6: memref<2x40xf32, #tpu.memory_space<vmem>>, %arg7: memref<2x1xf32, #tpu.memory_space<vmem>>, %arg8: memref<8x128xf32, #tpu.memory_space<vmem>>, %arg9: memref<40x1280xf32, #tpu.memory_space<vmem>>, %arg10: memref<40x1280xf32, #tpu.memory_space<vmem>>) attributes {dimension_semantics = [#tpu.dimension_semantics<parallel>], iteration_bounds = array<i64: 3>, scalar_prefetch = 0 : i64, scratch_operands = 2 : i64, tpu.core_type = #tpu.core_type<tc>, window_params = [{transform_indices = @transform_0, window_bounds = array<i64: 2, 128>}, {pipeline_mode = #tpu.pipeline_mode<synchronous>, transform_indices = @transform_1, window_bounds = array<i64: 40, 2>}, {pipeline_mode = #tpu.pipeline_mode<synchronous>, transform_indices = @transform_2, window_bounds = array<i64: 40, 1>}, {pipeline_mode = #tpu.pipeline_mode<synchronous>, transform_indices = @transform_3, window_bounds = array<i64: 7, 40, 40>}, {pipeline_mode = #tpu.pipeline_mode<synchronous>, transform_indices = @transform_4, window_bounds = array<i64: 7, 40, 1>}, {pipeline_mode = #tpu.pipeline_mode<synchronous>, transform_indices = @transform_5, window_bounds = array<i64: 2, 40>}, {pipeline_mode = #tpu.pipeline_mode<synchronous>, transform_indices = @transform_6, window_bounds = array<i64: 2, 1>}, {transform_indices = @transform_7, window_bounds = array<i64: 8, 128>}]} {
    %c0 = arith.constant 0 : index
    %c0_0 = arith.constant 0 : index
    %0 = vector.load %arg1[%c0, %c0_0] : memref<2x128xf32, #tpu.memory_space<vmem>>, vector<2x128xf32>
    %c0_1 = arith.constant 0 : index
    %c0_2 = arith.constant 0 : index
    %1 = vector.load %arg2[%c0_1, %c0_2] : memref<40x2xf32, #tpu.memory_space<vmem>>, vector<40x2xf32>
    %c0_3 = arith.constant 0 : index
    %c0_4 = arith.constant 0 : index
    %2 = vector.load %arg3[%c0_3, %c0_4] : memref<40x1xf32, #tpu.memory_space<vmem>>, vector<40x1xf32>
    %cst = arith.constant dense<0.000000e+00> : vector<40x128xf32>
    %3 = tpu.matmul %1, %0, %cst {dimension_numbers = #tpu.dot_dimension_numbers<[1], [0], [0], [1], [0, 0, 1, 1], [], []>} : vector<40x2xf32>, vector<2x128xf32>, vector<40x128xf32> -> vector<40x128xf32>
    %4 = vector.broadcast %2 : vector<40x1xf32> to vector<40x128xf32>
    %5 = arith.addf %3, %4 : vector<40x128xf32>
    %6 = vector.extract_strided_slice %1 {offsets = [0, 0], sizes = [40, 1], strides = [1, 1]} : vector<40x2xf32> to vector<40x1xf32>
    %7 = vector.extract_strided_slice %1 {offsets = [0, 1], sizes = [40, 1], strides = [1, 1]} : vector<40x2xf32> to vector<40x1xf32>
    %8 = math.tanh %5 : vector<40x128xf32>
    %9 = arith.mulf %8, %8 : vector<40x128xf32>
    %cst_5 = arith.constant 1.000000e+00 : f32
    %10 = vector.broadcast %cst_5 : f32 to vector<40x128xf32>
    %11 = arith.subf %10, %9 : vector<40x128xf32>
    %12 = arith.mulf %8, %11 : vector<40x128xf32>
    %cst_6 = arith.constant -2.000000e+00 : f32
    %13 = vector.broadcast %cst_6 : f32 to vector<40x128xf32>
    %14 = arith.mulf %13, %12 : vector<40x128xf32>
    %cst_7 = arith.constant 2.000000e+00 : f32
    %15 = vector.broadcast %cst_7 : f32 to vector<40x128xf32>
    %16 = arith.mulf %15, %11 : vector<40x128xf32>
    %cst_8 = arith.constant 2.000000e+00 : f32
    %17 = vector.broadcast %cst_8 : f32 to vector<40x128xf32>
    %18 = arith.mulf %17, %9 : vector<40x128xf32>
    %19 = arith.subf %18, %11 : vector<40x128xf32>
    %20 = arith.mulf %16, %19 : vector<40x128xf32>
    %21 = arith.mulf %6, %6 : vector<40x1xf32>
    %22 = arith.mulf %7, %7 : vector<40x1xf32>
    %23 = arith.mulf %6, %7 : vector<40x1xf32>
    %c0_9 = arith.constant 0 : index
    %c0_10 = arith.constant 0 : index
    %24 = vector.load %arg9[%c0_9, %c0_10] : memref<40x1280xf32, #tpu.memory_space<vmem>>, vector<40x128xf32>
    tpu.vector_store %arg9[%c0_9, %c0_10], %8 {strides = array<i32>} : memref<40x1280xf32, #tpu.memory_space<vmem>>, vector<40x128xf32>,
    %25 = vector.broadcast %6 : vector<40x1xf32> to vector<40x128xf32>
    %26 = arith.mulf %11, %25 : vector<40x128xf32>
    %c0_11 = arith.constant 0 : index
    %c128 = arith.constant 128 : index
    %27 = vector.load %arg9[%c0_11, %c128] : memref<40x1280xf32, #tpu.memory_space<vmem>>, vector<40x128xf32>
    tpu.vector_store %arg9[%c0_11, %c128], %26 {strides = array<i32>} : memref<40x1280xf32, #tpu.memory_space<vmem>>, vector<40x128xf32>,
    %28 = vector.broadcast %7 : vector<40x1xf32> to vector<40x128xf32>
    %29 = arith.mulf %11, %28 : vector<40x128xf32>
    %c0_12 = arith.constant 0 : index
    %c256 = arith.constant 256 : index
    %30 = vector.load %arg9[%c0_12, %c256] : memref<40x1280xf32, #tpu.memory_space<vmem>>, vector<40x128xf32>
    tpu.vector_store %arg9[%c0_12, %c256], %29 {strides = array<i32>} : memref<40x1280xf32, #tpu.memory_space<vmem>>, vector<40x128xf32>,
    %31 = vector.broadcast %21 : vector<40x1xf32> to vector<40x128xf32>
    %32 = arith.mulf %14, %31 : vector<40x128xf32>
    %c0_13 = arith.constant 0 : index
    %c384 = arith.constant 384 : index
    %33 = vector.load %arg9[%c0_13, %c384] : memref<40x1280xf32, #tpu.memory_space<vmem>>, vector<40x128xf32>
    tpu.vector_store %arg9[%c0_13, %c384], %32 {strides = array<i32>} : memref<40x1280xf32, #tpu.memory_space<vmem>>, vector<40x128xf32>,
    %34 = vector.broadcast %23 : vector<40x1xf32> to vector<40x128xf32>
    %35 = arith.mulf %14, %34 : vector<40x128xf32>
    %c0_14 = arith.constant 0 : index
    %c512 = arith.constant 512 : index
    %36 = vector.load %arg9[%c0_14, %c512] : memref<40x1280xf32, #tpu.memory_space<vmem>>, vector<40x128xf32>
    tpu.vector_store %arg9[%c0_14, %c512], %35 {strides = array<i32>} : memref<40x1280xf32, #tpu.memory_space<vmem>>, vector<40x128xf32>,
    %37 = vector.broadcast %22 : vector<40x1xf32> to vector<40x128xf32>
    %38 = arith.mulf %14, %37 : vector<40x128xf32>
    %c0_15 = arith.constant 0 : index
    %c640 = arith.constant 640 : index
    %39 = vector.load %arg9[%c0_15, %c640] : memref<40x1280xf32, #tpu.memory_space<vmem>>, vector<40x128xf32>
    tpu.vector_store %arg9[%c0_15, %c640], %38 {strides = array<i32>} : memref<40x1280xf32, #tpu.memory_space<vmem>>, vector<40x128xf32>,
    %40 = arith.mulf %21, %6 : vector<40x1xf32>
    %41 = vector.broadcast %40 : vector<40x1xf32> to vector<40x128xf32>
    %42 = arith.mulf %20, %41 : vector<40x128xf32>
    %c0_16 = arith.constant 0 : index
    %c768 = arith.constant 768 : index
    %43 = vector.load %arg9[%c0_16, %c768] : memref<40x1280xf32, #tpu.memory_space<vmem>>, vector<40x128xf32>
    tpu.vector_store %arg9[%c0_16, %c768], %42 {strides = array<i32>} : memref<40x1280xf32, #tpu.memory_space<vmem>>, vector<40x128xf32>,
    %44 = arith.mulf %21, %7 : vector<40x1xf32>
    %45 = vector.broadcast %44 : vector<40x1xf32> to vector<40x128xf32>
    %46 = arith.mulf %20, %45 : vector<40x128xf32>
    %c0_17 = arith.constant 0 : index
    %c896 = arith.constant 896 : index
    %47 = vector.load %arg9[%c0_17, %c896] : memref<40x1280xf32, #tpu.memory_space<vmem>>, vector<40x128xf32>
    tpu.vector_store %arg9[%c0_17, %c896], %46 {strides = array<i32>} : memref<40x1280xf32, #tpu.memory_space<vmem>>, vector<40x128xf32>,
    %48 = arith.mulf %6, %22 : vector<40x1xf32>
    %49 = vector.broadcast %48 : vector<40x1xf32> to vector<40x128xf32>
    %50 = arith.mulf %20, %49 : vector<40x128xf32>
    %c0_18 = arith.constant 0 : index
    %c1024 = arith.constant 1024 : index
    %51 = vector.load %arg9[%c0_18, %c1024] : memref<40x1280xf32, #tpu.memory_space<vmem>>, vector<40x128xf32>
    tpu.vector_store %arg9[%c0_18, %c1024], %50 {strides = array<i32>} : memref<40x1280xf32, #tpu.memory_space<vmem>>, vector<40x128xf32>,
    %52 = arith.mulf %22, %7 : vector<40x1xf32>
    %53 = vector.broadcast %52 : vector<40x1xf32> to vector<40x128xf32>
    %54 = arith.mulf %20, %53 : vector<40x128xf32>
    %c0_19 = arith.constant 0 : index
    %c1152 = arith.constant 1152 : index
    %55 = vector.load %arg9[%c0_19, %c1152] : memref<40x1280xf32, #tpu.memory_space<vmem>>, vector<40x128xf32>
    tpu.vector_store %arg9[%c0_19, %c1152], %54 {strides = array<i32>} : memref<40x1280xf32, #tpu.memory_space<vmem>>, vector<40x128xf32>,
    %c0_20 = arith.constant 0 : index
    %c0_21 = arith.constant 0 : index
    %c0_22 = arith.constant 0 : index
    %56 = vector.load %arg4[%c0_20, %c0_21, %c0_22] : memref<7x40x40xf32, #tpu.memory_space<vmem>>, vector<1x40x40xf32>
    %57 = vector.shape_cast %56 : vector<1x40x40xf32> to vector<40x40xf32>
    %c0_23 = arith.constant 0 : index
    %c0_24 = arith.constant 0 : index
    %c0_25 = arith.constant 0 : index
    %58 = vector.load %arg5[%c0_23, %c0_24, %c0_25] : memref<7x40x1xf32, #tpu.memory_space<vmem>>, vector<1x40x1xf32>
    %59 = vector.shape_cast %58 : vector<1x40x1xf32> to vector<40x1xf32>
    %c0_26 = arith.constant 0 : index
    %c0_27 = arith.constant 0 : index
    %60 = vector.load %arg9[%c0_26, %c0_27] : memref<40x1280xf32, #tpu.memory_space<vmem>>, vector<40x1280xf32>
    %cst_28 = arith.constant dense<0.000000e+00> : vector<40x1280xf32>
    %61 = tpu.matmul %57, %60, %cst_28 {dimension_numbers = #tpu.dot_dimension_numbers<[1], [0], [0], [1], [0, 0, 1, 1], [], []>} : vector<40x40xf32>, vector<40x1280xf32>, vector<40x1280xf32> -> vector<40x1280xf32>
    %62 = vector.extract_strided_slice %61 {offsets = [0, 0], sizes = [40, 128], strides = [1, 1]} : vector<40x1280xf32> to vector<40x128xf32>
    %63 = vector.broadcast %59 : vector<40x1xf32> to vector<40x128xf32>
    %64 = arith.addf %62, %63 : vector<40x128xf32>
    %65 = vector.extract_strided_slice %61 {offsets = [0, 128], sizes = [40, 128], strides = [1, 1]} : vector<40x1280xf32> to vector<40x128xf32>
    %66 = vector.extract_strided_slice %61 {offsets = [0, 256], sizes = [40, 128], strides = [1, 1]} : vector<40x1280xf32> to vector<40x128xf32>
    %67 = vector.extract_strided_slice %61 {offsets = [0, 384], sizes = [40, 128], strides = [1, 1]} : vector<40x1280xf32> to vector<40x128xf32>
    %68 = vector.extract_strided_slice %61 {offsets = [0, 512], sizes = [40, 128], strides = [1, 1]} : vector<40x1280xf32> to vector<40x128xf32>
    %69 = vector.extract_strided_slice %61 {offsets = [0, 640], sizes = [40, 128], strides = [1, 1]} : vector<40x1280xf32> to vector<40x128xf32>
    %70 = vector.extract_strided_slice %61 {offsets = [0, 768], sizes = [40, 128], strides = [1, 1]} : vector<40x1280xf32> to vector<40x128xf32>
    %71 = vector.extract_strided_slice %61 {offsets = [0, 896], sizes = [40, 128], strides = [1, 1]} : vector<40x1280xf32> to vector<40x128xf32>
    %72 = vector.extract_strided_slice %61 {offsets = [0, 1024], sizes = [40, 128], strides = [1, 1]} : vector<40x1280xf32> to vector<40x128xf32>
    %73 = vector.extract_strided_slice %61 {offsets = [0, 1152], sizes = [40, 128], strides = [1, 1]} : vector<40x1280xf32> to vector<40x128xf32>
    %74 = math.tanh %64 : vector<40x128xf32>
    %75 = arith.mulf %74, %74 : vector<40x128xf32>
    %cst_29 = arith.constant 1.000000e+00 : f32
    %76 = vector.broadcast %cst_29 : f32 to vector<40x128xf32>
    %77 = arith.subf %76, %75 : vector<40x128xf32>
    %78 = arith.mulf %74, %77 : vector<40x128xf32>
    %cst_30 = arith.constant -2.000000e+00 : f32
    %79 = vector.broadcast %cst_30 : f32 to vector<40x128xf32>
    %80 = arith.mulf %79, %78 : vector<40x128xf32>
    %cst_31 = arith.constant 2.000000e+00 : f32
    %81 = vector.broadcast %cst_31 : f32 to vector<40x128xf32>
    %82 = arith.mulf %81, %77 : vector<40x128xf32>
    %cst_32 = arith.constant 2.000000e+00 : f32
    %83 = vector.broadcast %cst_32 : f32 to vector<40x128xf32>
    %84 = arith.mulf %83, %75 : vector<40x128xf32>
    %85 = arith.subf %84, %77 : vector<40x128xf32>
    %86 = arith.mulf %82, %85 : vector<40x128xf32>
    %87 = arith.mulf %80, %65 : vector<40x128xf32>
    %88 = arith.mulf %80, %66 : vector<40x128xf32>
    %89 = arith.mulf %86, %65 : vector<40x128xf32>
    %90 = arith.mulf %65, %65 : vector<40x128xf32>
    %91 = arith.mulf %66, %66 : vector<40x128xf32>
    %92 = arith.mulf %65, %66 : vector<40x128xf32>
    %c0_33 = arith.constant 0 : index
    %c0_34 = arith.constant 0 : index
    %93 = vector.load %arg10[%c0_33, %c0_34] : memref<40x1280xf32, #tpu.memory_space<vmem>>, vector<40x128xf32>
    tpu.vector_store %arg10[%c0_33, %c0_34], %74 {strides = array<i32>} : memref<40x1280xf32, #tpu.memory_space<vmem>>, vector<40x128xf32>,
    %94 = arith.mulf %77, %65 : vector<40x128xf32>
    %c0_35 = arith.constant 0 : index
    %c128_36 = arith.constant 128 : index
    %95 = vector.load %arg10[%c0_35, %c128_36] : memref<40x1280xf32, #tpu.memory_space<vmem>>, vector<40x128xf32>
    tpu.vector_store %arg10[%c0_35, %c128_36], %94 {strides = array<i32>} : memref<40x1280xf32, #tpu.memory_space<vmem>>, vector<40x128xf32>,
    %96 = arith.mulf %77, %66 : vector<40x128xf32>
    %c0_37 = arith.constant 0 : index
    %c256_38 = arith.constant 256 : index
    %97 = vector.load %arg10[%c0_37, %c256_38] : memref<40x1280xf32, #tpu.memory_space<vmem>>, vector<40x128xf32>
    tpu.vector_store %arg10[%c0_37, %c256_38], %96 {strides = array<i32>} : memref<40x1280xf32, #tpu.memory_space<vmem>>, vector<40x128xf32>,
    %98 = arith.mulf %87, %65 : vector<40x128xf32>
    %99 = arith.mulf %77, %67 : vector<40x128xf32>
    %100 = arith.addf %98, %99 : vector<40x128xf32>
    %c0_39 = arith.constant 0 : index
    %c384_40 = arith.constant 384 : index
    %101 = vector.load %arg10[%c0_39, %c384_40] : memref<40x1280xf32, #tpu.memory_space<vmem>>, vector<40x128xf32>
    tpu.vector_store %arg10[%c0_39, %c384_40], %100 {strides = array<i32>} : memref<40x1280xf32, #tpu.memory_space<vmem>>, vector<40x128xf32>,
    %102 = arith.mulf %87, %66 : vector<40x128xf32>
    %103 = arith.mulf %77, %68 : vector<40x128xf32>
    %104 = arith.addf %102, %103 : vector<40x128xf32>
    %c0_41 = arith.constant 0 : index
    %c512_42 = arith.constant 512 : index
    %105 = vector.load %arg10[%c0_41, %c512_42] : memref<40x1280xf32, #tpu.memory_space<vmem>>, vector<40x128xf32>
    tpu.vector_store %arg10[%c0_41, %c512_42], %104 {strides = array<i32>} : memref<40x1280xf32, #tpu.memory_space<vmem>>, vector<40x128xf32>,
    %106 = arith.mulf %88, %66 : vector<40x128xf32>
    %107 = arith.mulf %77, %69 : vector<40x128xf32>
    %108 = arith.addf %106, %107 : vector<40x128xf32>
    %c0_43 = arith.constant 0 : index
    %c640_44 = arith.constant 640 : index
    %109 = vector.load %arg10[%c0_43, %c640_44] : memref<40x1280xf32, #tpu.memory_space<vmem>>, vector<40x128xf32>
    tpu.vector_store %arg10[%c0_43, %c640_44], %108 {strides = array<i32>} : memref<40x1280xf32, #tpu.memory_space<vmem>>, vector<40x128xf32>,
    %110 = arith.mulf %89, %90 : vector<40x128xf32>
    %111 = arith.mulf %87, %67 : vector<40x128xf32>
    %cst_45 = arith.constant 3.000000e+00 : f32
    %112 = vector.broadcast %cst_45 : f32 to vector<40x128xf32>
    %113 = arith.mulf %112, %111 : vector<40x128xf32>
    %114 = arith.addf %110, %113 : vector<40x128xf32>
    %115 = arith.mulf %77, %70 : vector<40x128xf32>
    %116 = arith.addf %114, %115 : vector<40x128xf32>
    %c0_46 = arith.constant 0 : index
    %c768_47 = arith.constant 768 : index
    %117 = vector.load %arg10[%c0_46, %c768_47] : memref<40x1280xf32, #tpu.memory_space<vmem>>, vector<40x128xf32>
    tpu.vector_store %arg10[%c0_46, %c768_47], %116 {strides = array<i32>} : memref<40x1280xf32, #tpu.memory_space<vmem>>, vector<40x128xf32>,
    %118 = arith.mulf %89, %92 : vector<40x128xf32>
    %119 = arith.mulf %87, %68 : vector<40x128xf32>
    %cst_48 = arith.constant 2.000000e+00 : f32
    %120 = vector.broadcast %cst_48 : f32 to vector<40x128xf32>
    %121 = arith.mulf %120, %119 : vector<40x128xf32>
    %122 = arith.addf %118, %121 : vector<40x128xf32>
    %123 = arith.mulf %88, %67 : vector<40x128xf32>
    %124 = arith.addf %122, %123 : vector<40x128xf32>
    %125 = arith.mulf %77, %71 : vector<40x128xf32>
    %126 = arith.addf %124, %125 : vector<40x128xf32>
    %c0_49 = arith.constant 0 : index
    %c896_50 = arith.constant 896 : index
    %127 = vector.load %arg10[%c0_49, %c896_50] : memref<40x1280xf32, #tpu.memory_space<vmem>>, vector<40x128xf32>
    tpu.vector_store %arg10[%c0_49, %c896_50], %126 {strides = array<i32>} : memref<40x1280xf32, #tpu.memory_space<vmem>>, vector<40x128xf32>,
    %128 = arith.mulf %89, %91 : vector<40x128xf32>
    %129 = arith.mulf %87, %69 : vector<40x128xf32>
    %130 = arith.addf %128, %129 : vector<40x128xf32>
    %131 = arith.mulf %88, %68 : vector<40x128xf32>
    %cst_51 = arith.constant 2.000000e+00 : f32
    %132 = vector.broadcast %cst_51 : f32 to vector<40x128xf32>
    %133 = arith.mulf %132, %131 : vector<40x128xf32>
    %134 = arith.addf %130, %133 : vector<40x128xf32>
    %135 = arith.mulf %77, %72 : vector<40x128xf32>
    %136 = arith.addf %134, %135 : vector<40x128xf32>
    %c0_52 = arith.constant 0 : index
    %c1024_53 = arith.constant 1024 : index
    %137 = vector.load %arg10[%c0_52, %c1024_53] : memref<40x1280xf32, #tpu.memory_space<vmem>>, vector<40x128xf32>
    tpu.vector_store %arg10[%c0_52, %c1024_53], %136 {strides = array<i32>} : memref<40x1280xf32, #tpu.memory_space<vmem>>, vector<40x128xf32>,
    %138 = arith.mulf %91, %66 : vector<40x128xf32>
    %139 = arith.mulf %86, %138 : vector<40x128xf32>
    %140 = arith.mulf %88, %69 : vector<40x128xf32>
    %cst_54 = arith.constant 3.000000e+00 : f32
    %141 = vector.broadcast %cst_54 : f32 to vector<40x128xf32>
    %142 = arith.mulf %141, %140 : vector<40x128xf32>
    %143 = arith.addf %139, %142 : vector<40x128xf32>
    %144 = arith.mulf %77, %73 : vector<40x128xf32>
    %145 = arith.addf %143, %144 : vector<40x128xf32>
    %c0_55 = arith.constant 0 : index
    %c1152_56 = arith.constant 1152 : index
    %146 = vector.load %arg10[%c0_55, %c1152_56] : memref<40x1280xf32, #tpu.memory_space<vmem>>, vector<40x128xf32>
    tpu.vector_store %arg10[%c0_55, %c1152_56], %145 {strides = array<i32>} : memref<40x1280xf32, #tpu.memory_space<vmem>>, vector<40x128xf32>,
    %c1 = arith.constant 1 : index
    %c0_57 = arith.constant 0 : index
    %c0_58 = arith.constant 0 : index
    %147 = vector.load %arg4[%c1, %c0_57, %c0_58] : memref<7x40x40xf32, #tpu.memory_space<vmem>>, vector<1x40x40xf32>
    %148 = vector.shape_cast %147 : vector<1x40x40xf32> to vector<40x40xf32>
    %c1_59 = arith.constant 1 : index
    %c0_60 = arith.constant 0 : index
    %c0_61 = arith.constant 0 : index
    %149 = vector.load %arg5[%c1_59, %c0_60, %c0_61] : memref<7x40x1xf32, #tpu.memory_space<vmem>>, vector<1x40x1xf32>
    %150 = vector.shape_cast %149 : vector<1x40x1xf32> to vector<40x1xf32>
    %c0_62 = arith.constant 0 : index
    %c0_63 = arith.constant 0 : index
    %151 = vector.load %arg10[%c0_62, %c0_63] : memref<40x1280xf32, #tpu.memory_space<vmem>>, vector<40x1280xf32>
    %cst_64 = arith.constant dense<0.000000e+00> : vector<40x1280xf32>
    %152 = tpu.matmul %148, %151, %cst_64 {dimension_numbers = #tpu.dot_dimension_numbers<[1], [0], [0], [1], [0, 0, 1, 1], [], []>} : vector<40x40xf32>, vector<40x1280xf32>, vector<40x1280xf32> -> vector<40x1280xf32>
    %153 = vector.extract_strided_slice %152 {offsets = [0, 0], sizes = [40, 128], strides = [1, 1]} : vector<40x1280xf32> to vector<40x128xf32>
    %154 = vector.broadcast %150 : vector<40x1xf32> to vector<40x128xf32>
    %155 = arith.addf %153, %154 : vector<40x128xf32>
    %156 = vector.extract_strided_slice %152 {offsets = [0, 128], sizes = [40, 128], strides = [1, 1]} : vector<40x1280xf32> to vector<40x128xf32>
    %157 = vector.extract_strided_slice %152 {offsets = [0, 256], sizes = [40, 128], strides = [1, 1]} : vector<40x1280xf32> to vector<40x128xf32>
    %158 = vector.extract_strided_slice %152 {offsets = [0, 384], sizes = [40, 128], strides = [1, 1]} : vector<40x1280xf32> to vector<40x128xf32>
    %159 = vector.extract_strided_slice %152 {offsets = [0, 512], sizes = [40, 128], strides = [1, 1]} : vector<40x1280xf32> to vector<40x128xf32>
    %160 = vector.extract_strided_slice %152 {offsets = [0, 640], sizes = [40, 128], strides = [1, 1]} : vector<40x1280xf32> to vector<40x128xf32>
    %161 = vector.extract_strided_slice %152 {offsets = [0, 768], sizes = [40, 128], strides = [1, 1]} : vector<40x1280xf32> to vector<40x128xf32>
    %162 = vector.extract_strided_slice %152 {offsets = [0, 896], sizes = [40, 128], strides = [1, 1]} : vector<40x1280xf32> to vector<40x128xf32>
    %163 = vector.extract_strided_slice %152 {offsets = [0, 1024], sizes = [40, 128], strides = [1, 1]} : vector<40x1280xf32> to vector<40x128xf32>
    %164 = vector.extract_strided_slice %152 {offsets = [0, 1152], sizes = [40, 128], strides = [1, 1]} : vector<40x1280xf32> to vector<40x128xf32>
    %165 = math.tanh %155 : vector<40x128xf32>
    %166 = arith.mulf %165, %165 : vector<40x128xf32>
    %cst_65 = arith.constant 1.000000e+00 : f32
    %167 = vector.broadcast %cst_65 : f32 to vector<40x128xf32>
    %168 = arith.subf %167, %166 : vector<40x128xf32>
    %169 = arith.mulf %165, %168 : vector<40x128xf32>
    %cst_66 = arith.constant -2.000000e+00 : f32
    %170 = vector.broadcast %cst_66 : f32 to vector<40x128xf32>
    %171 = arith.mulf %170, %169 : vector<40x128xf32>
    %cst_67 = arith.constant 2.000000e+00 : f32
    %172 = vector.broadcast %cst_67 : f32 to vector<40x128xf32>
    %173 = arith.mulf %172, %168 : vector<40x128xf32>
    %cst_68 = arith.constant 2.000000e+00 : f32
    %174 = vector.broadcast %cst_68 : f32 to vector<40x128xf32>
    %175 = arith.mulf %174, %166 : vector<40x128xf32>
    %176 = arith.subf %175, %168 : vector<40x128xf32>
    %177 = arith.mulf %173, %176 : vector<40x128xf32>
    %178 = arith.mulf %171, %156 : vector<40x128xf32>
    %179 = arith.mulf %171, %157 : vector<40x128xf32>
    %180 = arith.mulf %177, %156 : vector<40x128xf32>
    %181 = arith.mulf %156, %156 : vector<40x128xf32>
    %182 = arith.mulf %157, %157 : vector<40x128xf32>
    %183 = arith.mulf %156, %157 : vector<40x128xf32>
    %c0_69 = arith.constant 0 : index
    %c0_70 = arith.constant 0 : index
    %184 = vector.load %arg9[%c0_69, %c0_70] : memref<40x1280xf32, #tpu.memory_space<vmem>>, vector<40x128xf32>
    tpu.vector_store %arg9[%c0_69, %c0_70], %165 {strides = array<i32>} : memref<40x1280xf32, #tpu.memory_space<vmem>>, vector<40x128xf32>,
    %185 = arith.mulf %168, %156 : vector<40x128xf32>
    %c0_71 = arith.constant 0 : index
    %c128_72 = arith.constant 128 : index
    %186 = vector.load %arg9[%c0_71, %c128_72] : memref<40x1280xf32, #tpu.memory_space<vmem>>, vector<40x128xf32>
    tpu.vector_store %arg9[%c0_71, %c128_72], %185 {strides = array<i32>} : memref<40x1280xf32, #tpu.memory_space<vmem>>, vector<40x128xf32>,
    %187 = arith.mulf %168, %157 : vector<40x128xf32>
    %c0_73 = arith.constant 0 : index
    %c256_74 = arith.constant 256 : index
    %188 = vector.load %arg9[%c0_73, %c256_74] : memref<40x1280xf32, #tpu.memory_space<vmem>>, vector<40x128xf32>
    tpu.vector_store %arg9[%c0_73, %c256_74], %187 {strides = array<i32>} : memref<40x1280xf32, #tpu.memory_space<vmem>>, vector<40x128xf32>,
    %189 = arith.mulf %178, %156 : vector<40x128xf32>
    %190 = arith.mulf %168, %158 : vector<40x128xf32>
    %191 = arith.addf %189, %190 : vector<40x128xf32>
    %c0_75 = arith.constant 0 : index
    %c384_76 = arith.constant 384 : index
    %192 = vector.load %arg9[%c0_75, %c384_76] : memref<40x1280xf32, #tpu.memory_space<vmem>>, vector<40x128xf32>
    tpu.vector_store %arg9[%c0_75, %c384_76], %191 {strides = array<i32>} : memref<40x1280xf32, #tpu.memory_space<vmem>>, vector<40x128xf32>,
    %193 = arith.mulf %178, %157 : vector<40x128xf32>
    %194 = arith.mulf %168, %159 : vector<40x128xf32>
    %195 = arith.addf %193, %194 : vector<40x128xf32>
    %c0_77 = arith.constant 0 : index
    %c512_78 = arith.constant 512 : index
    %196 = vector.load %arg9[%c0_77, %c512_78] : memref<40x1280xf32, #tpu.memory_space<vmem>>, vector<40x128xf32>
    tpu.vector_store %arg9[%c0_77, %c512_78], %195 {strides = array<i32>} : memref<40x1280xf32, #tpu.memory_space<vmem>>, vector<40x128xf32>,
    %197 = arith.mulf %179, %157 : vector<40x128xf32>
    %198 = arith.mulf %168, %160 : vector<40x128xf32>
    %199 = arith.addf %197, %198 : vector<40x128xf32>
    %c0_79 = arith.constant 0 : index
    %c640_80 = arith.constant 640 : index
    %200 = vector.load %arg9[%c0_79, %c640_80] : memref<40x1280xf32, #tpu.memory_space<vmem>>, vector<40x128xf32>
    tpu.vector_store %arg9[%c0_79, %c640_80], %199 {strides = array<i32>} : memref<40x1280xf32, #tpu.memory_space<vmem>>, vector<40x128xf32>,
    %201 = arith.mulf %180, %181 : vector<40x128xf32>
    %202 = arith.mulf %178, %158 : vector<40x128xf32>
    %cst_81 = arith.constant 3.000000e+00 : f32
    %203 = vector.broadcast %cst_81 : f32 to vector<40x128xf32>
    %204 = arith.mulf %203, %202 : vector<40x128xf32>
    %205 = arith.addf %201, %204 : vector<40x128xf32>
    %206 = arith.mulf %168, %161 : vector<40x128xf32>
    %207 = arith.addf %205, %206 : vector<40x128xf32>
    %c0_82 = arith.constant 0 : index
    %c768_83 = arith.constant 768 : index
    %208 = vector.load %arg9[%c0_82, %c768_83] : memref<40x1280xf32, #tpu.memory_space<vmem>>, vector<40x128xf32>
    tpu.vector_store %arg9[%c0_82, %c768_83], %207 {strides = array<i32>} : memref<40x1280xf32, #tpu.memory_space<vmem>>, vector<40x128xf32>,
    %209 = arith.mulf %180, %183 : vector<40x128xf32>
    %210 = arith.mulf %178, %159 : vector<40x128xf32>
    %cst_84 = arith.constant 2.000000e+00 : f32
    %211 = vector.broadcast %cst_84 : f32 to vector<40x128xf32>
    %212 = arith.mulf %211, %210 : vector<40x128xf32>
    %213 = arith.addf %209, %212 : vector<40x128xf32>
    %214 = arith.mulf %179, %158 : vector<40x128xf32>
    %215 = arith.addf %213, %214 : vector<40x128xf32>
    %216 = arith.mulf %168, %162 : vector<40x128xf32>
    %217 = arith.addf %215, %216 : vector<40x128xf32>
    %c0_85 = arith.constant 0 : index
    %c896_86 = arith.constant 896 : index
    %218 = vector.load %arg9[%c0_85, %c896_86] : memref<40x1280xf32, #tpu.memory_space<vmem>>, vector<40x128xf32>
    tpu.vector_store %arg9[%c0_85, %c896_86], %217 {strides = array<i32>} : memref<40x1280xf32, #tpu.memory_space<vmem>>, vector<40x128xf32>,
    %219 = arith.mulf %180, %182 : vector<40x128xf32>
    %220 = arith.mulf %178, %160 : vector<40x128xf32>
    %221 = arith.addf %219, %220 : vector<40x128xf32>
    %222 = arith.mulf %179, %159 : vector<40x128xf32>
    %cst_87 = arith.constant 2.000000e+00 : f32
    %223 = vector.broadcast %cst_87 : f32 to vector<40x128xf32>
    %224 = arith.mulf %223, %222 : vector<40x128xf32>
    %225 = arith.addf %221, %224 : vector<40x128xf32>
    %226 = arith.mulf %168, %163 : vector<40x128xf32>
    %227 = arith.addf %225, %226 : vector<40x128xf32>
    %c0_88 = arith.constant 0 : index
    %c1024_89 = arith.constant 1024 : index
    %228 = vector.load %arg9[%c0_88, %c1024_89] : memref<40x1280xf32, #tpu.memory_space<vmem>>, vector<40x128xf32>
    tpu.vector_store %arg9[%c0_88, %c1024_89], %227 {strides = array<i32>} : memref<40x1280xf32, #tpu.memory_space<vmem>>, vector<40x128xf32>,
    %229 = arith.mulf %182, %157 : vector<40x128xf32>
    %230 = arith.mulf %177, %229 : vector<40x128xf32>
    %231 = arith.mulf %179, %160 : vector<40x128xf32>
    %cst_90 = arith.constant 3.000000e+00 : f32
    %232 = vector.broadcast %cst_90 : f32 to vector<40x128xf32>
    %233 = arith.mulf %232, %231 : vector<40x128xf32>
    %234 = arith.addf %230, %233 : vector<40x128xf32>
    %235 = arith.mulf %168, %164 : vector<40x128xf32>
    %236 = arith.addf %234, %235 : vector<40x128xf32>
    %c0_91 = arith.constant 0 : index
    %c1152_92 = arith.constant 1152 : index
    %237 = vector.load %arg9[%c0_91, %c1152_92] : memref<40x1280xf32, #tpu.memory_space<vmem>>, vector<40x128xf32>
    tpu.vector_store %arg9[%c0_91, %c1152_92], %236 {strides = array<i32>} : memref<40x1280xf32, #tpu.memory_space<vmem>>, vector<40x128xf32>,
    %c2 = arith.constant 2 : index
    %c0_93 = arith.constant 0 : index
    %c0_94 = arith.constant 0 : index
    %238 = vector.load %arg4[%c2, %c0_93, %c0_94] : memref<7x40x40xf32, #tpu.memory_space<vmem>>, vector<1x40x40xf32>
    %239 = vector.shape_cast %238 : vector<1x40x40xf32> to vector<40x40xf32>
    %c2_95 = arith.constant 2 : index
    %c0_96 = arith.constant 0 : index
    %c0_97 = arith.constant 0 : index
    %240 = vector.load %arg5[%c2_95, %c0_96, %c0_97] : memref<7x40x1xf32, #tpu.memory_space<vmem>>, vector<1x40x1xf32>
    %241 = vector.shape_cast %240 : vector<1x40x1xf32> to vector<40x1xf32>
    %c0_98 = arith.constant 0 : index
    %c0_99 = arith.constant 0 : index
    %242 = vector.load %arg9[%c0_98, %c0_99] : memref<40x1280xf32, #tpu.memory_space<vmem>>, vector<40x1280xf32>
    %cst_100 = arith.constant dense<0.000000e+00> : vector<40x1280xf32>
    %243 = tpu.matmul %239, %242, %cst_100 {dimension_numbers = #tpu.dot_dimension_numbers<[1], [0], [0], [1], [0, 0, 1, 1], [], []>} : vector<40x40xf32>, vector<40x1280xf32>, vector<40x1280xf32> -> vector<40x1280xf32>
    %244 = vector.extract_strided_slice %243 {offsets = [0, 0], sizes = [40, 128], strides = [1, 1]} : vector<40x1280xf32> to vector<40x128xf32>
    %245 = vector.broadcast %241 : vector<40x1xf32> to vector<40x128xf32>
    %246 = arith.addf %244, %245 : vector<40x128xf32>
    %247 = vector.extract_strided_slice %243 {offsets = [0, 128], sizes = [40, 128], strides = [1, 1]} : vector<40x1280xf32> to vector<40x128xf32>
    %248 = vector.extract_strided_slice %243 {offsets = [0, 256], sizes = [40, 128], strides = [1, 1]} : vector<40x1280xf32> to vector<40x128xf32>
    %249 = vector.extract_strided_slice %243 {offsets = [0, 384], sizes = [40, 128], strides = [1, 1]} : vector<40x1280xf32> to vector<40x128xf32>
    %250 = vector.extract_strided_slice %243 {offsets = [0, 512], sizes = [40, 128], strides = [1, 1]} : vector<40x1280xf32> to vector<40x128xf32>
    %251 = vector.extract_strided_slice %243 {offsets = [0, 640], sizes = [40, 128], strides = [1, 1]} : vector<40x1280xf32> to vector<40x128xf32>
    %252 = vector.extract_strided_slice %243 {offsets = [0, 768], sizes = [40, 128], strides = [1, 1]} : vector<40x1280xf32> to vector<40x128xf32>
    %253 = vector.extract_strided_slice %243 {offsets = [0, 896], sizes = [40, 128], strides = [1, 1]} : vector<40x1280xf32> to vector<40x128xf32>
    %254 = vector.extract_strided_slice %243 {offsets = [0, 1024], sizes = [40, 128], strides = [1, 1]} : vector<40x1280xf32> to vector<40x128xf32>
    %255 = vector.extract_strided_slice %243 {offsets = [0, 1152], sizes = [40, 128], strides = [1, 1]} : vector<40x1280xf32> to vector<40x128xf32>
    %256 = math.tanh %246 : vector<40x128xf32>
    %257 = arith.mulf %256, %256 : vector<40x128xf32>
    %cst_101 = arith.constant 1.000000e+00 : f32
    %258 = vector.broadcast %cst_101 : f32 to vector<40x128xf32>
    %259 = arith.subf %258, %257 : vector<40x128xf32>
    %260 = arith.mulf %256, %259 : vector<40x128xf32>
    %cst_102 = arith.constant -2.000000e+00 : f32
    %261 = vector.broadcast %cst_102 : f32 to vector<40x128xf32>
    %262 = arith.mulf %261, %260 : vector<40x128xf32>
    %cst_103 = arith.constant 2.000000e+00 : f32
    %263 = vector.broadcast %cst_103 : f32 to vector<40x128xf32>
    %264 = arith.mulf %263, %259 : vector<40x128xf32>
    %cst_104 = arith.constant 2.000000e+00 : f32
    %265 = vector.broadcast %cst_104 : f32 to vector<40x128xf32>
    %266 = arith.mulf %265, %257 : vector<40x128xf32>
    %267 = arith.subf %266, %259 : vector<40x128xf32>
    %268 = arith.mulf %264, %267 : vector<40x128xf32>
    %269 = arith.mulf %262, %247 : vector<40x128xf32>
    %270 = arith.mulf %262, %248 : vector<40x128xf32>
    %271 = arith.mulf %268, %247 : vector<40x128xf32>
    %272 = arith.mulf %247, %247 : vector<40x128xf32>
    %273 = arith.mulf %248, %248 : vector<40x128xf32>
    %274 = arith.mulf %247, %248 : vector<40x128xf32>
    %c0_105 = arith.constant 0 : index
    %c0_106 = arith.constant 0 : index
    %275 = vector.load %arg10[%c0_105, %c0_106] : memref<40x1280xf32, #tpu.memory_space<vmem>>, vector<40x128xf32>
    tpu.vector_store %arg10[%c0_105, %c0_106], %256 {strides = array<i32>} : memref<40x1280xf32, #tpu.memory_space<vmem>>, vector<40x128xf32>,
    %276 = arith.mulf %259, %247 : vector<40x128xf32>
    %c0_107 = arith.constant 0 : index
    %c128_108 = arith.constant 128 : index
    %277 = vector.load %arg10[%c0_107, %c128_108] : memref<40x1280xf32, #tpu.memory_space<vmem>>, vector<40x128xf32>
    tpu.vector_store %arg10[%c0_107, %c128_108], %276 {strides = array<i32>} : memref<40x1280xf32, #tpu.memory_space<vmem>>, vector<40x128xf32>,
    %278 = arith.mulf %259, %248 : vector<40x128xf32>
    %c0_109 = arith.constant 0 : index
    %c256_110 = arith.constant 256 : index
    %279 = vector.load %arg10[%c0_109, %c256_110] : memref<40x1280xf32, #tpu.memory_space<vmem>>, vector<40x128xf32>
    tpu.vector_store %arg10[%c0_109, %c256_110], %278 {strides = array<i32>} : memref<40x1280xf32, #tpu.memory_space<vmem>>, vector<40x128xf32>,
    %280 = arith.mulf %269, %247 : vector<40x128xf32>
    %281 = arith.mulf %259, %249 : vector<40x128xf32>
    %282 = arith.addf %280, %281 : vector<40x128xf32>
    %c0_111 = arith.constant 0 : index
    %c384_112 = arith.constant 384 : index
    %283 = vector.load %arg10[%c0_111, %c384_112] : memref<40x1280xf32, #tpu.memory_space<vmem>>, vector<40x128xf32>
    tpu.vector_store %arg10[%c0_111, %c384_112], %282 {strides = array<i32>} : memref<40x1280xf32, #tpu.memory_space<vmem>>, vector<40x128xf32>,
    %284 = arith.mulf %269, %248 : vector<40x128xf32>
    %285 = arith.mulf %259, %250 : vector<40x128xf32>
    %286 = arith.addf %284, %285 : vector<40x128xf32>
    %c0_113 = arith.constant 0 : index
    %c512_114 = arith.constant 512 : index
    %287 = vector.load %arg10[%c0_113, %c512_114] : memref<40x1280xf32, #tpu.memory_space<vmem>>, vector<40x128xf32>
    tpu.vector_store %arg10[%c0_113, %c512_114], %286 {strides = array<i32>} : memref<40x1280xf32, #tpu.memory_space<vmem>>, vector<40x128xf32>,
    %288 = arith.mulf %270, %248 : vector<40x128xf32>
    %289 = arith.mulf %259, %251 : vector<40x128xf32>
    %290 = arith.addf %288, %289 : vector<40x128xf32>
    %c0_115 = arith.constant 0 : index
    %c640_116 = arith.constant 640 : index
    %291 = vector.load %arg10[%c0_115, %c640_116] : memref<40x1280xf32, #tpu.memory_space<vmem>>, vector<40x128xf32>
    tpu.vector_store %arg10[%c0_115, %c640_116], %290 {strides = array<i32>} : memref<40x1280xf32, #tpu.memory_space<vmem>>, vector<40x128xf32>,
    %292 = arith.mulf %271, %272 : vector<40x128xf32>
    %293 = arith.mulf %269, %249 : vector<40x128xf32>
    %cst_117 = arith.constant 3.000000e+00 : f32
    %294 = vector.broadcast %cst_117 : f32 to vector<40x128xf32>
    %295 = arith.mulf %294, %293 : vector<40x128xf32>
    %296 = arith.addf %292, %295 : vector<40x128xf32>
    %297 = arith.mulf %259, %252 : vector<40x128xf32>
    %298 = arith.addf %296, %297 : vector<40x128xf32>
    %c0_118 = arith.constant 0 : index
    %c768_119 = arith.constant 768 : index
    %299 = vector.load %arg10[%c0_118, %c768_119] : memref<40x1280xf32, #tpu.memory_space<vmem>>, vector<40x128xf32>
    tpu.vector_store %arg10[%c0_118, %c768_119], %298 {strides = array<i32>} : memref<40x1280xf32, #tpu.memory_space<vmem>>, vector<40x128xf32>,
    %300 = arith.mulf %271, %274 : vector<40x128xf32>
    %301 = arith.mulf %269, %250 : vector<40x128xf32>
    %cst_120 = arith.constant 2.000000e+00 : f32
    %302 = vector.broadcast %cst_120 : f32 to vector<40x128xf32>
    %303 = arith.mulf %302, %301 : vector<40x128xf32>
    %304 = arith.addf %300, %303 : vector<40x128xf32>
    %305 = arith.mulf %270, %249 : vector<40x128xf32>
    %306 = arith.addf %304, %305 : vector<40x128xf32>
    %307 = arith.mulf %259, %253 : vector<40x128xf32>
    %308 = arith.addf %306, %307 : vector<40x128xf32>
    %c0_121 = arith.constant 0 : index
    %c896_122 = arith.constant 896 : index
    %309 = vector.load %arg10[%c0_121, %c896_122] : memref<40x1280xf32, #tpu.memory_space<vmem>>, vector<40x128xf32>
    tpu.vector_store %arg10[%c0_121, %c896_122], %308 {strides = array<i32>} : memref<40x1280xf32, #tpu.memory_space<vmem>>, vector<40x128xf32>,
    %310 = arith.mulf %271, %273 : vector<40x128xf32>
    %311 = arith.mulf %269, %251 : vector<40x128xf32>
    %312 = arith.addf %310, %311 : vector<40x128xf32>
    %313 = arith.mulf %270, %250 : vector<40x128xf32>
    %cst_123 = arith.constant 2.000000e+00 : f32
    %314 = vector.broadcast %cst_123 : f32 to vector<40x128xf32>
    %315 = arith.mulf %314, %313 : vector<40x128xf32>
    %316 = arith.addf %312, %315 : vector<40x128xf32>
    %317 = arith.mulf %259, %254 : vector<40x128xf32>
    %318 = arith.addf %316, %317 : vector<40x128xf32>
    %c0_124 = arith.constant 0 : index
    %c1024_125 = arith.constant 1024 : index
    %319 = vector.load %arg10[%c0_124, %c1024_125] : memref<40x1280xf32, #tpu.memory_space<vmem>>, vector<40x128xf32>
    tpu.vector_store %arg10[%c0_124, %c1024_125], %318 {strides = array<i32>} : memref<40x1280xf32, #tpu.memory_space<vmem>>, vector<40x128xf32>,
    %320 = arith.mulf %273, %248 : vector<40x128xf32>
    %321 = arith.mulf %268, %320 : vector<40x128xf32>
    %322 = arith.mulf %270, %251 : vector<40x128xf32>
    %cst_126 = arith.constant 3.000000e+00 : f32
    %323 = vector.broadcast %cst_126 : f32 to vector<40x128xf32>
    %324 = arith.mulf %323, %322 : vector<40x128xf32>
    %325 = arith.addf %321, %324 : vector<40x128xf32>
    %326 = arith.mulf %259, %255 : vector<40x128xf32>
    %327 = arith.addf %325, %326 : vector<40x128xf32>
    %c0_127 = arith.constant 0 : index
    %c1152_128 = arith.constant 1152 : index
    %328 = vector.load %arg10[%c0_127, %c1152_128] : memref<40x1280xf32, #tpu.memory_space<vmem>>, vector<40x128xf32>
    tpu.vector_store %arg10[%c0_127, %c1152_128], %327 {strides = array<i32>} : memref<40x1280xf32, #tpu.memory_space<vmem>>, vector<40x128xf32>,
    %c3 = arith.constant 3 : index
    %c0_129 = arith.constant 0 : index
    %c0_130 = arith.constant 0 : index
    %329 = vector.load %arg4[%c3, %c0_129, %c0_130] : memref<7x40x40xf32, #tpu.memory_space<vmem>>, vector<1x40x40xf32>
    %330 = vector.shape_cast %329 : vector<1x40x40xf32> to vector<40x40xf32>
    %c3_131 = arith.constant 3 : index
    %c0_132 = arith.constant 0 : index
    %c0_133 = arith.constant 0 : index
    %331 = vector.load %arg5[%c3_131, %c0_132, %c0_133] : memref<7x40x1xf32, #tpu.memory_space<vmem>>, vector<1x40x1xf32>
    %332 = vector.shape_cast %331 : vector<1x40x1xf32> to vector<40x1xf32>
    %c0_134 = arith.constant 0 : index
    %c0_135 = arith.constant 0 : index
    %333 = vector.load %arg10[%c0_134, %c0_135] : memref<40x1280xf32, #tpu.memory_space<vmem>>, vector<40x1280xf32>
    %cst_136 = arith.constant dense<0.000000e+00> : vector<40x1280xf32>
    %334 = tpu.matmul %330, %333, %cst_136 {dimension_numbers = #tpu.dot_dimension_numbers<[1], [0], [0], [1], [0, 0, 1, 1], [], []>} : vector<40x40xf32>, vector<40x1280xf32>, vector<40x1280xf32> -> vector<40x1280xf32>
    %335 = vector.extract_strided_slice %334 {offsets = [0, 0], sizes = [40, 128], strides = [1, 1]} : vector<40x1280xf32> to vector<40x128xf32>
    %336 = vector.broadcast %332 : vector<40x1xf32> to vector<40x128xf32>
    %337 = arith.addf %335, %336 : vector<40x128xf32>
    %338 = vector.extract_strided_slice %334 {offsets = [0, 128], sizes = [40, 128], strides = [1, 1]} : vector<40x1280xf32> to vector<40x128xf32>
    %339 = vector.extract_strided_slice %334 {offsets = [0, 256], sizes = [40, 128], strides = [1, 1]} : vector<40x1280xf32> to vector<40x128xf32>
    %340 = vector.extract_strided_slice %334 {offsets = [0, 384], sizes = [40, 128], strides = [1, 1]} : vector<40x1280xf32> to vector<40x128xf32>
    %341 = vector.extract_strided_slice %334 {offsets = [0, 512], sizes = [40, 128], strides = [1, 1]} : vector<40x1280xf32> to vector<40x128xf32>
    %342 = vector.extract_strided_slice %334 {offsets = [0, 640], sizes = [40, 128], strides = [1, 1]} : vector<40x1280xf32> to vector<40x128xf32>
    %343 = vector.extract_strided_slice %334 {offsets = [0, 768], sizes = [40, 128], strides = [1, 1]} : vector<40x1280xf32> to vector<40x128xf32>
    %344 = vector.extract_strided_slice %334 {offsets = [0, 896], sizes = [40, 128], strides = [1, 1]} : vector<40x1280xf32> to vector<40x128xf32>
    %345 = vector.extract_strided_slice %334 {offsets = [0, 1024], sizes = [40, 128], strides = [1, 1]} : vector<40x1280xf32> to vector<40x128xf32>
    %346 = vector.extract_strided_slice %334 {offsets = [0, 1152], sizes = [40, 128], strides = [1, 1]} : vector<40x1280xf32> to vector<40x128xf32>
    %347 = math.tanh %337 : vector<40x128xf32>
    %348 = arith.mulf %347, %347 : vector<40x128xf32>
    %cst_137 = arith.constant 1.000000e+00 : f32
    %349 = vector.broadcast %cst_137 : f32 to vector<40x128xf32>
    %350 = arith.subf %349, %348 : vector<40x128xf32>
    %351 = arith.mulf %347, %350 : vector<40x128xf32>
    %cst_138 = arith.constant -2.000000e+00 : f32
    %352 = vector.broadcast %cst_138 : f32 to vector<40x128xf32>
    %353 = arith.mulf %352, %351 : vector<40x128xf32>
    %cst_139 = arith.constant 2.000000e+00 : f32
    %354 = vector.broadcast %cst_139 : f32 to vector<40x128xf32>
    %355 = arith.mulf %354, %350 : vector<40x128xf32>
    %cst_140 = arith.constant 2.000000e+00 : f32
    %356 = vector.broadcast %cst_140 : f32 to vector<40x128xf32>
    %357 = arith.mulf %356, %348 : vector<40x128xf32>
    %358 = arith.subf %357, %350 : vector<40x128xf32>
    %359 = arith.mulf %355, %358 : vector<40x128xf32>
    %360 = arith.mulf %353, %338 : vector<40x128xf32>
    %361 = arith.mulf %353, %339 : vector<40x128xf32>
    %362 = arith.mulf %359, %338 : vector<40x128xf32>
    %363 = arith.mulf %338, %338 : vector<40x128xf32>
    %364 = arith.mulf %339, %339 : vector<40x128xf32>
    %365 = arith.mulf %338, %339 : vector<40x128xf32>
    %c0_141 = arith.constant 0 : index
    %c0_142 = arith.constant 0 : index
    %366 = vector.load %arg9[%c0_141, %c0_142] : memref<40x1280xf32, #tpu.memory_space<vmem>>, vector<40x128xf32>
    tpu.vector_store %arg9[%c0_141, %c0_142], %347 {strides = array<i32>} : memref<40x1280xf32, #tpu.memory_space<vmem>>, vector<40x128xf32>,
    %367 = arith.mulf %350, %338 : vector<40x128xf32>
    %c0_143 = arith.constant 0 : index
    %c128_144 = arith.constant 128 : index
    %368 = vector.load %arg9[%c0_143, %c128_144] : memref<40x1280xf32, #tpu.memory_space<vmem>>, vector<40x128xf32>
    tpu.vector_store %arg9[%c0_143, %c128_144], %367 {strides = array<i32>} : memref<40x1280xf32, #tpu.memory_space<vmem>>, vector<40x128xf32>,
    %369 = arith.mulf %350, %339 : vector<40x128xf32>
    %c0_145 = arith.constant 0 : index
    %c256_146 = arith.constant 256 : index
    %370 = vector.load %arg9[%c0_145, %c256_146] : memref<40x1280xf32, #tpu.memory_space<vmem>>, vector<40x128xf32>
    tpu.vector_store %arg9[%c0_145, %c256_146], %369 {strides = array<i32>} : memref<40x1280xf32, #tpu.memory_space<vmem>>, vector<40x128xf32>,
    %371 = arith.mulf %360, %338 : vector<40x128xf32>
    %372 = arith.mulf %350, %340 : vector<40x128xf32>
    %373 = arith.addf %371, %372 : vector<40x128xf32>
    %c0_147 = arith.constant 0 : index
    %c384_148 = arith.constant 384 : index
    %374 = vector.load %arg9[%c0_147, %c384_148] : memref<40x1280xf32, #tpu.memory_space<vmem>>, vector<40x128xf32>
    tpu.vector_store %arg9[%c0_147, %c384_148], %373 {strides = array<i32>} : memref<40x1280xf32, #tpu.memory_space<vmem>>, vector<40x128xf32>,
    %375 = arith.mulf %360, %339 : vector<40x128xf32>
    %376 = arith.mulf %350, %341 : vector<40x128xf32>
    %377 = arith.addf %375, %376 : vector<40x128xf32>
    %c0_149 = arith.constant 0 : index
    %c512_150 = arith.constant 512 : index
    %378 = vector.load %arg9[%c0_149, %c512_150] : memref<40x1280xf32, #tpu.memory_space<vmem>>, vector<40x128xf32>
    tpu.vector_store %arg9[%c0_149, %c512_150], %377 {strides = array<i32>} : memref<40x1280xf32, #tpu.memory_space<vmem>>, vector<40x128xf32>,
    %379 = arith.mulf %361, %339 : vector<40x128xf32>
    %380 = arith.mulf %350, %342 : vector<40x128xf32>
    %381 = arith.addf %379, %380 : vector<40x128xf32>
    %c0_151 = arith.constant 0 : index
    %c640_152 = arith.constant 640 : index
    %382 = vector.load %arg9[%c0_151, %c640_152] : memref<40x1280xf32, #tpu.memory_space<vmem>>, vector<40x128xf32>
    tpu.vector_store %arg9[%c0_151, %c640_152], %381 {strides = array<i32>} : memref<40x1280xf32, #tpu.memory_space<vmem>>, vector<40x128xf32>,
    %383 = arith.mulf %362, %363 : vector<40x128xf32>
    %384 = arith.mulf %360, %340 : vector<40x128xf32>
    %cst_153 = arith.constant 3.000000e+00 : f32
    %385 = vector.broadcast %cst_153 : f32 to vector<40x128xf32>
    %386 = arith.mulf %385, %384 : vector<40x128xf32>
    %387 = arith.addf %383, %386 : vector<40x128xf32>
    %388 = arith.mulf %350, %343 : vector<40x128xf32>
    %389 = arith.addf %387, %388 : vector<40x128xf32>
    %c0_154 = arith.constant 0 : index
    %c768_155 = arith.constant 768 : index
    %390 = vector.load %arg9[%c0_154, %c768_155] : memref<40x1280xf32, #tpu.memory_space<vmem>>, vector<40x128xf32>
    tpu.vector_store %arg9[%c0_154, %c768_155], %389 {strides = array<i32>} : memref<40x1280xf32, #tpu.memory_space<vmem>>, vector<40x128xf32>,
    %391 = arith.mulf %362, %365 : vector<40x128xf32>
    %392 = arith.mulf %360, %341 : vector<40x128xf32>
    %cst_156 = arith.constant 2.000000e+00 : f32
    %393 = vector.broadcast %cst_156 : f32 to vector<40x128xf32>
    %394 = arith.mulf %393, %392 : vector<40x128xf32>
    %395 = arith.addf %391, %394 : vector<40x128xf32>
    %396 = arith.mulf %361, %340 : vector<40x128xf32>
    %397 = arith.addf %395, %396 : vector<40x128xf32>
    %398 = arith.mulf %350, %344 : vector<40x128xf32>
    %399 = arith.addf %397, %398 : vector<40x128xf32>
    %c0_157 = arith.constant 0 : index
    %c896_158 = arith.constant 896 : index
    %400 = vector.load %arg9[%c0_157, %c896_158] : memref<40x1280xf32, #tpu.memory_space<vmem>>, vector<40x128xf32>
    tpu.vector_store %arg9[%c0_157, %c896_158], %399 {strides = array<i32>} : memref<40x1280xf32, #tpu.memory_space<vmem>>, vector<40x128xf32>,
    %401 = arith.mulf %362, %364 : vector<40x128xf32>
    %402 = arith.mulf %360, %342 : vector<40x128xf32>
    %403 = arith.addf %401, %402 : vector<40x128xf32>
    %404 = arith.mulf %361, %341 : vector<40x128xf32>
    %cst_159 = arith.constant 2.000000e+00 : f32
    %405 = vector.broadcast %cst_159 : f32 to vector<40x128xf32>
    %406 = arith.mulf %405, %404 : vector<40x128xf32>
    %407 = arith.addf %403, %406 : vector<40x128xf32>
    %408 = arith.mulf %350, %345 : vector<40x128xf32>
    %409 = arith.addf %407, %408 : vector<40x128xf32>
    %c0_160 = arith.constant 0 : index
    %c1024_161 = arith.constant 1024 : index
    %410 = vector.load %arg9[%c0_160, %c1024_161] : memref<40x1280xf32, #tpu.memory_space<vmem>>, vector<40x128xf32>
    tpu.vector_store %arg9[%c0_160, %c1024_161], %409 {strides = array<i32>} : memref<40x1280xf32, #tpu.memory_space<vmem>>, vector<40x128xf32>,
    %411 = arith.mulf %364, %339 : vector<40x128xf32>
    %412 = arith.mulf %359, %411 : vector<40x128xf32>
    %413 = arith.mulf %361, %342 : vector<40x128xf32>
    %cst_162 = arith.constant 3.000000e+00 : f32
    %414 = vector.broadcast %cst_162 : f32 to vector<40x128xf32>
    %415 = arith.mulf %414, %413 : vector<40x128xf32>
    %416 = arith.addf %412, %415 : vector<40x128xf32>
    %417 = arith.mulf %350, %346 : vector<40x128xf32>
    %418 = arith.addf %416, %417 : vector<40x128xf32>
    %c0_163 = arith.constant 0 : index
    %c1152_164 = arith.constant 1152 : index
    %419 = vector.load %arg9[%c0_163, %c1152_164] : memref<40x1280xf32, #tpu.memory_space<vmem>>, vector<40x128xf32>
    tpu.vector_store %arg9[%c0_163, %c1152_164], %418 {strides = array<i32>} : memref<40x1280xf32, #tpu.memory_space<vmem>>, vector<40x128xf32>,
    %c4 = arith.constant 4 : index
    %c0_165 = arith.constant 0 : index
    %c0_166 = arith.constant 0 : index
    %420 = vector.load %arg4[%c4, %c0_165, %c0_166] : memref<7x40x40xf32, #tpu.memory_space<vmem>>, vector<1x40x40xf32>
    %421 = vector.shape_cast %420 : vector<1x40x40xf32> to vector<40x40xf32>
    %c4_167 = arith.constant 4 : index
    %c0_168 = arith.constant 0 : index
    %c0_169 = arith.constant 0 : index
    %422 = vector.load %arg5[%c4_167, %c0_168, %c0_169] : memref<7x40x1xf32, #tpu.memory_space<vmem>>, vector<1x40x1xf32>
    %423 = vector.shape_cast %422 : vector<1x40x1xf32> to vector<40x1xf32>
    %c0_170 = arith.constant 0 : index
    %c0_171 = arith.constant 0 : index
    %424 = vector.load %arg9[%c0_170, %c0_171] : memref<40x1280xf32, #tpu.memory_space<vmem>>, vector<40x1280xf32>
    %cst_172 = arith.constant dense<0.000000e+00> : vector<40x1280xf32>
    %425 = tpu.matmul %421, %424, %cst_172 {dimension_numbers = #tpu.dot_dimension_numbers<[1], [0], [0], [1], [0, 0, 1, 1], [], []>} : vector<40x40xf32>, vector<40x1280xf32>, vector<40x1280xf32> -> vector<40x1280xf32>
    %426 = vector.extract_strided_slice %425 {offsets = [0, 0], sizes = [40, 128], strides = [1, 1]} : vector<40x1280xf32> to vector<40x128xf32>
    %427 = vector.broadcast %423 : vector<40x1xf32> to vector<40x128xf32>
    %428 = arith.addf %426, %427 : vector<40x128xf32>
    %429 = vector.extract_strided_slice %425 {offsets = [0, 128], sizes = [40, 128], strides = [1, 1]} : vector<40x1280xf32> to vector<40x128xf32>
    %430 = vector.extract_strided_slice %425 {offsets = [0, 256], sizes = [40, 128], strides = [1, 1]} : vector<40x1280xf32> to vector<40x128xf32>
    %431 = vector.extract_strided_slice %425 {offsets = [0, 384], sizes = [40, 128], strides = [1, 1]} : vector<40x1280xf32> to vector<40x128xf32>
    %432 = vector.extract_strided_slice %425 {offsets = [0, 512], sizes = [40, 128], strides = [1, 1]} : vector<40x1280xf32> to vector<40x128xf32>
    %433 = vector.extract_strided_slice %425 {offsets = [0, 640], sizes = [40, 128], strides = [1, 1]} : vector<40x1280xf32> to vector<40x128xf32>
    %434 = vector.extract_strided_slice %425 {offsets = [0, 768], sizes = [40, 128], strides = [1, 1]} : vector<40x1280xf32> to vector<40x128xf32>
    %435 = vector.extract_strided_slice %425 {offsets = [0, 896], sizes = [40, 128], strides = [1, 1]} : vector<40x1280xf32> to vector<40x128xf32>
    %436 = vector.extract_strided_slice %425 {offsets = [0, 1024], sizes = [40, 128], strides = [1, 1]} : vector<40x1280xf32> to vector<40x128xf32>
    %437 = vector.extract_strided_slice %425 {offsets = [0, 1152], sizes = [40, 128], strides = [1, 1]} : vector<40x1280xf32> to vector<40x128xf32>
    %438 = math.tanh %428 : vector<40x128xf32>
    %439 = arith.mulf %438, %438 : vector<40x128xf32>
    %cst_173 = arith.constant 1.000000e+00 : f32
    %440 = vector.broadcast %cst_173 : f32 to vector<40x128xf32>
    %441 = arith.subf %440, %439 : vector<40x128xf32>
    %442 = arith.mulf %438, %441 : vector<40x128xf32>
    %cst_174 = arith.constant -2.000000e+00 : f32
    %443 = vector.broadcast %cst_174 : f32 to vector<40x128xf32>
    %444 = arith.mulf %443, %442 : vector<40x128xf32>
    %cst_175 = arith.constant 2.000000e+00 : f32
    %445 = vector.broadcast %cst_175 : f32 to vector<40x128xf32>
    %446 = arith.mulf %445, %441 : vector<40x128xf32>
    %cst_176 = arith.constant 2.000000e+00 : f32
    %447 = vector.broadcast %cst_176 : f32 to vector<40x128xf32>
    %448 = arith.mulf %447, %439 : vector<40x128xf32>
    %449 = arith.subf %448, %441 : vector<40x128xf32>
    %450 = arith.mulf %446, %449 : vector<40x128xf32>
    %451 = arith.mulf %444, %429 : vector<40x128xf32>
    %452 = arith.mulf %444, %430 : vector<40x128xf32>
    %453 = arith.mulf %450, %429 : vector<40x128xf32>
    %454 = arith.mulf %429, %429 : vector<40x128xf32>
    %455 = arith.mulf %430, %430 : vector<40x128xf32>
    %456 = arith.mulf %429, %430 : vector<40x128xf32>
    %c0_177 = arith.constant 0 : index
    %c0_178 = arith.constant 0 : index
    %457 = vector.load %arg10[%c0_177, %c0_178] : memref<40x1280xf32, #tpu.memory_space<vmem>>, vector<40x128xf32>
    tpu.vector_store %arg10[%c0_177, %c0_178], %438 {strides = array<i32>} : memref<40x1280xf32, #tpu.memory_space<vmem>>, vector<40x128xf32>,
    %458 = arith.mulf %441, %429 : vector<40x128xf32>
    %c0_179 = arith.constant 0 : index
    %c128_180 = arith.constant 128 : index
    %459 = vector.load %arg10[%c0_179, %c128_180] : memref<40x1280xf32, #tpu.memory_space<vmem>>, vector<40x128xf32>
    tpu.vector_store %arg10[%c0_179, %c128_180], %458 {strides = array<i32>} : memref<40x1280xf32, #tpu.memory_space<vmem>>, vector<40x128xf32>,
    %460 = arith.mulf %441, %430 : vector<40x128xf32>
    %c0_181 = arith.constant 0 : index
    %c256_182 = arith.constant 256 : index
    %461 = vector.load %arg10[%c0_181, %c256_182] : memref<40x1280xf32, #tpu.memory_space<vmem>>, vector<40x128xf32>
    tpu.vector_store %arg10[%c0_181, %c256_182], %460 {strides = array<i32>} : memref<40x1280xf32, #tpu.memory_space<vmem>>, vector<40x128xf32>,
    %462 = arith.mulf %451, %429 : vector<40x128xf32>
    %463 = arith.mulf %441, %431 : vector<40x128xf32>
    %464 = arith.addf %462, %463 : vector<40x128xf32>
    %c0_183 = arith.constant 0 : index
    %c384_184 = arith.constant 384 : index
    %465 = vector.load %arg10[%c0_183, %c384_184] : memref<40x1280xf32, #tpu.memory_space<vmem>>, vector<40x128xf32>
    tpu.vector_store %arg10[%c0_183, %c384_184], %464 {strides = array<i32>} : memref<40x1280xf32, #tpu.memory_space<vmem>>, vector<40x128xf32>,
    %466 = arith.mulf %451, %430 : vector<40x128xf32>
    %467 = arith.mulf %441, %432 : vector<40x128xf32>
    %468 = arith.addf %466, %467 : vector<40x128xf32>
    %c0_185 = arith.constant 0 : index
    %c512_186 = arith.constant 512 : index
    %469 = vector.load %arg10[%c0_185, %c512_186] : memref<40x1280xf32, #tpu.memory_space<vmem>>, vector<40x128xf32>
    tpu.vector_store %arg10[%c0_185, %c512_186], %468 {strides = array<i32>} : memref<40x1280xf32, #tpu.memory_space<vmem>>, vector<40x128xf32>,
    %470 = arith.mulf %452, %430 : vector<40x128xf32>
    %471 = arith.mulf %441, %433 : vector<40x128xf32>
    %472 = arith.addf %470, %471 : vector<40x128xf32>
    %c0_187 = arith.constant 0 : index
    %c640_188 = arith.constant 640 : index
    %473 = vector.load %arg10[%c0_187, %c640_188] : memref<40x1280xf32, #tpu.memory_space<vmem>>, vector<40x128xf32>
    tpu.vector_store %arg10[%c0_187, %c640_188], %472 {strides = array<i32>} : memref<40x1280xf32, #tpu.memory_space<vmem>>, vector<40x128xf32>,
    %474 = arith.mulf %453, %454 : vector<40x128xf32>
    %475 = arith.mulf %451, %431 : vector<40x128xf32>
    %cst_189 = arith.constant 3.000000e+00 : f32
    %476 = vector.broadcast %cst_189 : f32 to vector<40x128xf32>
    %477 = arith.mulf %476, %475 : vector<40x128xf32>
    %478 = arith.addf %474, %477 : vector<40x128xf32>
    %479 = arith.mulf %441, %434 : vector<40x128xf32>
    %480 = arith.addf %478, %479 : vector<40x128xf32>
    %c0_190 = arith.constant 0 : index
    %c768_191 = arith.constant 768 : index
    %481 = vector.load %arg10[%c0_190, %c768_191] : memref<40x1280xf32, #tpu.memory_space<vmem>>, vector<40x128xf32>
    tpu.vector_store %arg10[%c0_190, %c768_191], %480 {strides = array<i32>} : memref<40x1280xf32, #tpu.memory_space<vmem>>, vector<40x128xf32>,
    %482 = arith.mulf %453, %456 : vector<40x128xf32>
    %483 = arith.mulf %451, %432 : vector<40x128xf32>
    %cst_192 = arith.constant 2.000000e+00 : f32
    %484 = vector.broadcast %cst_192 : f32 to vector<40x128xf32>
    %485 = arith.mulf %484, %483 : vector<40x128xf32>
    %486 = arith.addf %482, %485 : vector<40x128xf32>
    %487 = arith.mulf %452, %431 : vector<40x128xf32>
    %488 = arith.addf %486, %487 : vector<40x128xf32>
    %489 = arith.mulf %441, %435 : vector<40x128xf32>
    %490 = arith.addf %488, %489 : vector<40x128xf32>
    %c0_193 = arith.constant 0 : index
    %c896_194 = arith.constant 896 : index
    %491 = vector.load %arg10[%c0_193, %c896_194] : memref<40x1280xf32, #tpu.memory_space<vmem>>, vector<40x128xf32>
    tpu.vector_store %arg10[%c0_193, %c896_194], %490 {strides = array<i32>} : memref<40x1280xf32, #tpu.memory_space<vmem>>, vector<40x128xf32>,
    %492 = arith.mulf %453, %455 : vector<40x128xf32>
    %493 = arith.mulf %451, %433 : vector<40x128xf32>
    %494 = arith.addf %492, %493 : vector<40x128xf32>
    %495 = arith.mulf %452, %432 : vector<40x128xf32>
    %cst_195 = arith.constant 2.000000e+00 : f32
    %496 = vector.broadcast %cst_195 : f32 to vector<40x128xf32>
    %497 = arith.mulf %496, %495 : vector<40x128xf32>
    %498 = arith.addf %494, %497 : vector<40x128xf32>
    %499 = arith.mulf %441, %436 : vector<40x128xf32>
    %500 = arith.addf %498, %499 : vector<40x128xf32>
    %c0_196 = arith.constant 0 : index
    %c1024_197 = arith.constant 1024 : index
    %501 = vector.load %arg10[%c0_196, %c1024_197] : memref<40x1280xf32, #tpu.memory_space<vmem>>, vector<40x128xf32>
    tpu.vector_store %arg10[%c0_196, %c1024_197], %500 {strides = array<i32>} : memref<40x1280xf32, #tpu.memory_space<vmem>>, vector<40x128xf32>,
    %502 = arith.mulf %455, %430 : vector<40x128xf32>
    %503 = arith.mulf %450, %502 : vector<40x128xf32>
    %504 = arith.mulf %452, %433 : vector<40x128xf32>
    %cst_198 = arith.constant 3.000000e+00 : f32
    %505 = vector.broadcast %cst_198 : f32 to vector<40x128xf32>
    %506 = arith.mulf %505, %504 : vector<40x128xf32>
    %507 = arith.addf %503, %506 : vector<40x128xf32>
    %508 = arith.mulf %441, %437 : vector<40x128xf32>
    %509 = arith.addf %507, %508 : vector<40x128xf32>
    %c0_199 = arith.constant 0 : index
    %c1152_200 = arith.constant 1152 : index
    %510 = vector.load %arg10[%c0_199, %c1152_200] : memref<40x1280xf32, #tpu.memory_space<vmem>>, vector<40x128xf32>
    tpu.vector_store %arg10[%c0_199, %c1152_200], %509 {strides = array<i32>} : memref<40x1280xf32, #tpu.memory_space<vmem>>, vector<40x128xf32>,
    %c5 = arith.constant 5 : index
    %c0_201 = arith.constant 0 : index
    %c0_202 = arith.constant 0 : index
    %511 = vector.load %arg4[%c5, %c0_201, %c0_202] : memref<7x40x40xf32, #tpu.memory_space<vmem>>, vector<1x40x40xf32>
    %512 = vector.shape_cast %511 : vector<1x40x40xf32> to vector<40x40xf32>
    %c5_203 = arith.constant 5 : index
    %c0_204 = arith.constant 0 : index
    %c0_205 = arith.constant 0 : index
    %513 = vector.load %arg5[%c5_203, %c0_204, %c0_205] : memref<7x40x1xf32, #tpu.memory_space<vmem>>, vector<1x40x1xf32>
    %514 = vector.shape_cast %513 : vector<1x40x1xf32> to vector<40x1xf32>
    %c0_206 = arith.constant 0 : index
    %c0_207 = arith.constant 0 : index
    %515 = vector.load %arg10[%c0_206, %c0_207] : memref<40x1280xf32, #tpu.memory_space<vmem>>, vector<40x1280xf32>
    %cst_208 = arith.constant dense<0.000000e+00> : vector<40x1280xf32>
    %516 = tpu.matmul %512, %515, %cst_208 {dimension_numbers = #tpu.dot_dimension_numbers<[1], [0], [0], [1], [0, 0, 1, 1], [], []>} : vector<40x40xf32>, vector<40x1280xf32>, vector<40x1280xf32> -> vector<40x1280xf32>
    %517 = vector.extract_strided_slice %516 {offsets = [0, 0], sizes = [40, 128], strides = [1, 1]} : vector<40x1280xf32> to vector<40x128xf32>
    %518 = vector.broadcast %514 : vector<40x1xf32> to vector<40x128xf32>
    %519 = arith.addf %517, %518 : vector<40x128xf32>
    %520 = vector.extract_strided_slice %516 {offsets = [0, 128], sizes = [40, 128], strides = [1, 1]} : vector<40x1280xf32> to vector<40x128xf32>
    %521 = vector.extract_strided_slice %516 {offsets = [0, 256], sizes = [40, 128], strides = [1, 1]} : vector<40x1280xf32> to vector<40x128xf32>
    %522 = vector.extract_strided_slice %516 {offsets = [0, 384], sizes = [40, 128], strides = [1, 1]} : vector<40x1280xf32> to vector<40x128xf32>
    %523 = vector.extract_strided_slice %516 {offsets = [0, 512], sizes = [40, 128], strides = [1, 1]} : vector<40x1280xf32> to vector<40x128xf32>
    %524 = vector.extract_strided_slice %516 {offsets = [0, 640], sizes = [40, 128], strides = [1, 1]} : vector<40x1280xf32> to vector<40x128xf32>
    %525 = vector.extract_strided_slice %516 {offsets = [0, 768], sizes = [40, 128], strides = [1, 1]} : vector<40x1280xf32> to vector<40x128xf32>
    %526 = vector.extract_strided_slice %516 {offsets = [0, 896], sizes = [40, 128], strides = [1, 1]} : vector<40x1280xf32> to vector<40x128xf32>
    %527 = vector.extract_strided_slice %516 {offsets = [0, 1024], sizes = [40, 128], strides = [1, 1]} : vector<40x1280xf32> to vector<40x128xf32>
    %528 = vector.extract_strided_slice %516 {offsets = [0, 1152], sizes = [40, 128], strides = [1, 1]} : vector<40x1280xf32> to vector<40x128xf32>
    %529 = math.tanh %519 : vector<40x128xf32>
    %530 = arith.mulf %529, %529 : vector<40x128xf32>
    %cst_209 = arith.constant 1.000000e+00 : f32
    %531 = vector.broadcast %cst_209 : f32 to vector<40x128xf32>
    %532 = arith.subf %531, %530 : vector<40x128xf32>
    %533 = arith.mulf %529, %532 : vector<40x128xf32>
    %cst_210 = arith.constant -2.000000e+00 : f32
    %534 = vector.broadcast %cst_210 : f32 to vector<40x128xf32>
    %535 = arith.mulf %534, %533 : vector<40x128xf32>
    %cst_211 = arith.constant 2.000000e+00 : f32
    %536 = vector.broadcast %cst_211 : f32 to vector<40x128xf32>
    %537 = arith.mulf %536, %532 : vector<40x128xf32>
    %cst_212 = arith.constant 2.000000e+00 : f32
    %538 = vector.broadcast %cst_212 : f32 to vector<40x128xf32>
    %539 = arith.mulf %538, %530 : vector<40x128xf32>
    %540 = arith.subf %539, %532 : vector<40x128xf32>
    %541 = arith.mulf %537, %540 : vector<40x128xf32>
    %542 = arith.mulf %535, %520 : vector<40x128xf32>
    %543 = arith.mulf %535, %521 : vector<40x128xf32>
    %544 = arith.mulf %541, %520 : vector<40x128xf32>
    %545 = arith.mulf %520, %520 : vector<40x128xf32>
    %546 = arith.mulf %521, %521 : vector<40x128xf32>
    %547 = arith.mulf %520, %521 : vector<40x128xf32>
    %c0_213 = arith.constant 0 : index
    %c0_214 = arith.constant 0 : index
    %548 = vector.load %arg9[%c0_213, %c0_214] : memref<40x1280xf32, #tpu.memory_space<vmem>>, vector<40x128xf32>
    tpu.vector_store %arg9[%c0_213, %c0_214], %529 {strides = array<i32>} : memref<40x1280xf32, #tpu.memory_space<vmem>>, vector<40x128xf32>,
    %549 = arith.mulf %532, %520 : vector<40x128xf32>
    %c0_215 = arith.constant 0 : index
    %c128_216 = arith.constant 128 : index
    %550 = vector.load %arg9[%c0_215, %c128_216] : memref<40x1280xf32, #tpu.memory_space<vmem>>, vector<40x128xf32>
    tpu.vector_store %arg9[%c0_215, %c128_216], %549 {strides = array<i32>} : memref<40x1280xf32, #tpu.memory_space<vmem>>, vector<40x128xf32>,
    %551 = arith.mulf %532, %521 : vector<40x128xf32>
    %c0_217 = arith.constant 0 : index
    %c256_218 = arith.constant 256 : index
    %552 = vector.load %arg9[%c0_217, %c256_218] : memref<40x1280xf32, #tpu.memory_space<vmem>>, vector<40x128xf32>
    tpu.vector_store %arg9[%c0_217, %c256_218], %551 {strides = array<i32>} : memref<40x1280xf32, #tpu.memory_space<vmem>>, vector<40x128xf32>,
    %553 = arith.mulf %542, %520 : vector<40x128xf32>
    %554 = arith.mulf %532, %522 : vector<40x128xf32>
    %555 = arith.addf %553, %554 : vector<40x128xf32>
    %c0_219 = arith.constant 0 : index
    %c384_220 = arith.constant 384 : index
    %556 = vector.load %arg9[%c0_219, %c384_220] : memref<40x1280xf32, #tpu.memory_space<vmem>>, vector<40x128xf32>
    tpu.vector_store %arg9[%c0_219, %c384_220], %555 {strides = array<i32>} : memref<40x1280xf32, #tpu.memory_space<vmem>>, vector<40x128xf32>,
    %557 = arith.mulf %542, %521 : vector<40x128xf32>
    %558 = arith.mulf %532, %523 : vector<40x128xf32>
    %559 = arith.addf %557, %558 : vector<40x128xf32>
    %c0_221 = arith.constant 0 : index
    %c512_222 = arith.constant 512 : index
    %560 = vector.load %arg9[%c0_221, %c512_222] : memref<40x1280xf32, #tpu.memory_space<vmem>>, vector<40x128xf32>
    tpu.vector_store %arg9[%c0_221, %c512_222], %559 {strides = array<i32>} : memref<40x1280xf32, #tpu.memory_space<vmem>>, vector<40x128xf32>,
    %561 = arith.mulf %543, %521 : vector<40x128xf32>
    %562 = arith.mulf %532, %524 : vector<40x128xf32>
    %563 = arith.addf %561, %562 : vector<40x128xf32>
    %c0_223 = arith.constant 0 : index
    %c640_224 = arith.constant 640 : index
    %564 = vector.load %arg9[%c0_223, %c640_224] : memref<40x1280xf32, #tpu.memory_space<vmem>>, vector<40x128xf32>
    tpu.vector_store %arg9[%c0_223, %c640_224], %563 {strides = array<i32>} : memref<40x1280xf32, #tpu.memory_space<vmem>>, vector<40x128xf32>,
    %565 = arith.mulf %544, %545 : vector<40x128xf32>
    %566 = arith.mulf %542, %522 : vector<40x128xf32>
    %cst_225 = arith.constant 3.000000e+00 : f32
    %567 = vector.broadcast %cst_225 : f32 to vector<40x128xf32>
    %568 = arith.mulf %567, %566 : vector<40x128xf32>
    %569 = arith.addf %565, %568 : vector<40x128xf32>
    %570 = arith.mulf %532, %525 : vector<40x128xf32>
    %571 = arith.addf %569, %570 : vector<40x128xf32>
    %c0_226 = arith.constant 0 : index
    %c768_227 = arith.constant 768 : index
    %572 = vector.load %arg9[%c0_226, %c768_227] : memref<40x1280xf32, #tpu.memory_space<vmem>>, vector<40x128xf32>
    tpu.vector_store %arg9[%c0_226, %c768_227], %571 {strides = array<i32>} : memref<40x1280xf32, #tpu.memory_space<vmem>>, vector<40x128xf32>,
    %573 = arith.mulf %544, %547 : vector<40x128xf32>
    %574 = arith.mulf %542, %523 : vector<40x128xf32>
    %cst_228 = arith.constant 2.000000e+00 : f32
    %575 = vector.broadcast %cst_228 : f32 to vector<40x128xf32>
    %576 = arith.mulf %575, %574 : vector<40x128xf32>
    %577 = arith.addf %573, %576 : vector<40x128xf32>
    %578 = arith.mulf %543, %522 : vector<40x128xf32>
    %579 = arith.addf %577, %578 : vector<40x128xf32>
    %580 = arith.mulf %532, %526 : vector<40x128xf32>
    %581 = arith.addf %579, %580 : vector<40x128xf32>
    %c0_229 = arith.constant 0 : index
    %c896_230 = arith.constant 896 : index
    %582 = vector.load %arg9[%c0_229, %c896_230] : memref<40x1280xf32, #tpu.memory_space<vmem>>, vector<40x128xf32>
    tpu.vector_store %arg9[%c0_229, %c896_230], %581 {strides = array<i32>} : memref<40x1280xf32, #tpu.memory_space<vmem>>, vector<40x128xf32>,
    %583 = arith.mulf %544, %546 : vector<40x128xf32>
    %584 = arith.mulf %542, %524 : vector<40x128xf32>
    %585 = arith.addf %583, %584 : vector<40x128xf32>
    %586 = arith.mulf %543, %523 : vector<40x128xf32>
    %cst_231 = arith.constant 2.000000e+00 : f32
    %587 = vector.broadcast %cst_231 : f32 to vector<40x128xf32>
    %588 = arith.mulf %587, %586 : vector<40x128xf32>
    %589 = arith.addf %585, %588 : vector<40x128xf32>
    %590 = arith.mulf %532, %527 : vector<40x128xf32>
    %591 = arith.addf %589, %590 : vector<40x128xf32>
    %c0_232 = arith.constant 0 : index
    %c1024_233 = arith.constant 1024 : index
    %592 = vector.load %arg9[%c0_232, %c1024_233] : memref<40x1280xf32, #tpu.memory_space<vmem>>, vector<40x128xf32>
    tpu.vector_store %arg9[%c0_232, %c1024_233], %591 {strides = array<i32>} : memref<40x1280xf32, #tpu.memory_space<vmem>>, vector<40x128xf32>,
    %593 = arith.mulf %546, %521 : vector<40x128xf32>
    %594 = arith.mulf %541, %593 : vector<40x128xf32>
    %595 = arith.mulf %543, %524 : vector<40x128xf32>
    %cst_234 = arith.constant 3.000000e+00 : f32
    %596 = vector.broadcast %cst_234 : f32 to vector<40x128xf32>
    %597 = arith.mulf %596, %595 : vector<40x128xf32>
    %598 = arith.addf %594, %597 : vector<40x128xf32>
    %599 = arith.mulf %532, %528 : vector<40x128xf32>
    %600 = arith.addf %598, %599 : vector<40x128xf32>
    %c0_235 = arith.constant 0 : index
    %c1152_236 = arith.constant 1152 : index
    %601 = vector.load %arg9[%c0_235, %c1152_236] : memref<40x1280xf32, #tpu.memory_space<vmem>>, vector<40x128xf32>
    tpu.vector_store %arg9[%c0_235, %c1152_236], %600 {strides = array<i32>} : memref<40x1280xf32, #tpu.memory_space<vmem>>, vector<40x128xf32>,
    %c6 = arith.constant 6 : index
    %c0_237 = arith.constant 0 : index
    %c0_238 = arith.constant 0 : index
    %602 = vector.load %arg4[%c6, %c0_237, %c0_238] : memref<7x40x40xf32, #tpu.memory_space<vmem>>, vector<1x40x40xf32>
    %603 = vector.shape_cast %602 : vector<1x40x40xf32> to vector<40x40xf32>
    %c6_239 = arith.constant 6 : index
    %c0_240 = arith.constant 0 : index
    %c0_241 = arith.constant 0 : index
    %604 = vector.load %arg5[%c6_239, %c0_240, %c0_241] : memref<7x40x1xf32, #tpu.memory_space<vmem>>, vector<1x40x1xf32>
    %605 = vector.shape_cast %604 : vector<1x40x1xf32> to vector<40x1xf32>
    %c0_242 = arith.constant 0 : index
    %c0_243 = arith.constant 0 : index
    %606 = vector.load %arg9[%c0_242, %c0_243] : memref<40x1280xf32, #tpu.memory_space<vmem>>, vector<40x1280xf32>
    %cst_244 = arith.constant dense<0.000000e+00> : vector<40x1280xf32>
    %607 = tpu.matmul %603, %606, %cst_244 {dimension_numbers = #tpu.dot_dimension_numbers<[1], [0], [0], [1], [0, 0, 1, 1], [], []>} : vector<40x40xf32>, vector<40x1280xf32>, vector<40x1280xf32> -> vector<40x1280xf32>
    %608 = vector.extract_strided_slice %607 {offsets = [0, 0], sizes = [40, 128], strides = [1, 1]} : vector<40x1280xf32> to vector<40x128xf32>
    %609 = vector.broadcast %605 : vector<40x1xf32> to vector<40x128xf32>
    %610 = arith.addf %608, %609 : vector<40x128xf32>
    %611 = vector.extract_strided_slice %607 {offsets = [0, 128], sizes = [40, 128], strides = [1, 1]} : vector<40x1280xf32> to vector<40x128xf32>
    %612 = vector.extract_strided_slice %607 {offsets = [0, 256], sizes = [40, 128], strides = [1, 1]} : vector<40x1280xf32> to vector<40x128xf32>
    %613 = vector.extract_strided_slice %607 {offsets = [0, 384], sizes = [40, 128], strides = [1, 1]} : vector<40x1280xf32> to vector<40x128xf32>
    %614 = vector.extract_strided_slice %607 {offsets = [0, 512], sizes = [40, 128], strides = [1, 1]} : vector<40x1280xf32> to vector<40x128xf32>
    %615 = vector.extract_strided_slice %607 {offsets = [0, 640], sizes = [40, 128], strides = [1, 1]} : vector<40x1280xf32> to vector<40x128xf32>
    %616 = vector.extract_strided_slice %607 {offsets = [0, 768], sizes = [40, 128], strides = [1, 1]} : vector<40x1280xf32> to vector<40x128xf32>
    %617 = vector.extract_strided_slice %607 {offsets = [0, 896], sizes = [40, 128], strides = [1, 1]} : vector<40x1280xf32> to vector<40x128xf32>
    %618 = vector.extract_strided_slice %607 {offsets = [0, 1024], sizes = [40, 128], strides = [1, 1]} : vector<40x1280xf32> to vector<40x128xf32>
    %619 = vector.extract_strided_slice %607 {offsets = [0, 1152], sizes = [40, 128], strides = [1, 1]} : vector<40x1280xf32> to vector<40x128xf32>
    %620 = math.tanh %610 : vector<40x128xf32>
    %621 = arith.mulf %620, %620 : vector<40x128xf32>
    %cst_245 = arith.constant 1.000000e+00 : f32
    %622 = vector.broadcast %cst_245 : f32 to vector<40x128xf32>
    %623 = arith.subf %622, %621 : vector<40x128xf32>
    %624 = arith.mulf %620, %623 : vector<40x128xf32>
    %cst_246 = arith.constant -2.000000e+00 : f32
    %625 = vector.broadcast %cst_246 : f32 to vector<40x128xf32>
    %626 = arith.mulf %625, %624 : vector<40x128xf32>
    %cst_247 = arith.constant 2.000000e+00 : f32
    %627 = vector.broadcast %cst_247 : f32 to vector<40x128xf32>
    %628 = arith.mulf %627, %623 : vector<40x128xf32>
    %cst_248 = arith.constant 2.000000e+00 : f32
    %629 = vector.broadcast %cst_248 : f32 to vector<40x128xf32>
    %630 = arith.mulf %629, %621 : vector<40x128xf32>
    %631 = arith.subf %630, %623 : vector<40x128xf32>
    %632 = arith.mulf %628, %631 : vector<40x128xf32>
    %633 = arith.mulf %626, %611 : vector<40x128xf32>
    %634 = arith.mulf %626, %612 : vector<40x128xf32>
    %635 = arith.mulf %632, %611 : vector<40x128xf32>
    %636 = arith.mulf %611, %611 : vector<40x128xf32>
    %637 = arith.mulf %612, %612 : vector<40x128xf32>
    %638 = arith.mulf %611, %612 : vector<40x128xf32>
    %c0_249 = arith.constant 0 : index
    %c0_250 = arith.constant 0 : index
    %639 = vector.load %arg10[%c0_249, %c0_250] : memref<40x1280xf32, #tpu.memory_space<vmem>>, vector<40x128xf32>
    tpu.vector_store %arg10[%c0_249, %c0_250], %620 {strides = array<i32>} : memref<40x1280xf32, #tpu.memory_space<vmem>>, vector<40x128xf32>,
    %640 = arith.mulf %623, %611 : vector<40x128xf32>
    %c0_251 = arith.constant 0 : index
    %c128_252 = arith.constant 128 : index
    %641 = vector.load %arg10[%c0_251, %c128_252] : memref<40x1280xf32, #tpu.memory_space<vmem>>, vector<40x128xf32>
    tpu.vector_store %arg10[%c0_251, %c128_252], %640 {strides = array<i32>} : memref<40x1280xf32, #tpu.memory_space<vmem>>, vector<40x128xf32>,
    %642 = arith.mulf %623, %612 : vector<40x128xf32>
    %c0_253 = arith.constant 0 : index
    %c256_254 = arith.constant 256 : index
    %643 = vector.load %arg10[%c0_253, %c256_254] : memref<40x1280xf32, #tpu.memory_space<vmem>>, vector<40x128xf32>
    tpu.vector_store %arg10[%c0_253, %c256_254], %642 {strides = array<i32>} : memref<40x1280xf32, #tpu.memory_space<vmem>>, vector<40x128xf32>,
    %644 = arith.mulf %633, %611 : vector<40x128xf32>
    %645 = arith.mulf %623, %613 : vector<40x128xf32>
    %646 = arith.addf %644, %645 : vector<40x128xf32>
    %c0_255 = arith.constant 0 : index
    %c384_256 = arith.constant 384 : index
    %647 = vector.load %arg10[%c0_255, %c384_256] : memref<40x1280xf32, #tpu.memory_space<vmem>>, vector<40x128xf32>
    tpu.vector_store %arg10[%c0_255, %c384_256], %646 {strides = array<i32>} : memref<40x1280xf32, #tpu.memory_space<vmem>>, vector<40x128xf32>,
    %648 = arith.mulf %633, %612 : vector<40x128xf32>
    %649 = arith.mulf %623, %614 : vector<40x128xf32>
    %650 = arith.addf %648, %649 : vector<40x128xf32>
    %c0_257 = arith.constant 0 : index
    %c512_258 = arith.constant 512 : index
    %651 = vector.load %arg10[%c0_257, %c512_258] : memref<40x1280xf32, #tpu.memory_space<vmem>>, vector<40x128xf32>
    tpu.vector_store %arg10[%c0_257, %c512_258], %650 {strides = array<i32>} : memref<40x1280xf32, #tpu.memory_space<vmem>>, vector<40x128xf32>,
    %652 = arith.mulf %634, %612 : vector<40x128xf32>
    %653 = arith.mulf %623, %615 : vector<40x128xf32>
    %654 = arith.addf %652, %653 : vector<40x128xf32>
    %c0_259 = arith.constant 0 : index
    %c640_260 = arith.constant 640 : index
    %655 = vector.load %arg10[%c0_259, %c640_260] : memref<40x1280xf32, #tpu.memory_space<vmem>>, vector<40x128xf32>
    tpu.vector_store %arg10[%c0_259, %c640_260], %654 {strides = array<i32>} : memref<40x1280xf32, #tpu.memory_space<vmem>>, vector<40x128xf32>,
    %656 = arith.mulf %635, %636 : vector<40x128xf32>
    %657 = arith.mulf %633, %613 : vector<40x128xf32>
    %cst_261 = arith.constant 3.000000e+00 : f32
    %658 = vector.broadcast %cst_261 : f32 to vector<40x128xf32>
    %659 = arith.mulf %658, %657 : vector<40x128xf32>
    %660 = arith.addf %656, %659 : vector<40x128xf32>
    %661 = arith.mulf %623, %616 : vector<40x128xf32>
    %662 = arith.addf %660, %661 : vector<40x128xf32>
    %c0_262 = arith.constant 0 : index
    %c768_263 = arith.constant 768 : index
    %663 = vector.load %arg10[%c0_262, %c768_263] : memref<40x1280xf32, #tpu.memory_space<vmem>>, vector<40x128xf32>
    tpu.vector_store %arg10[%c0_262, %c768_263], %662 {strides = array<i32>} : memref<40x1280xf32, #tpu.memory_space<vmem>>, vector<40x128xf32>,
    %664 = arith.mulf %635, %638 : vector<40x128xf32>
    %665 = arith.mulf %633, %614 : vector<40x128xf32>
    %cst_264 = arith.constant 2.000000e+00 : f32
    %666 = vector.broadcast %cst_264 : f32 to vector<40x128xf32>
    %667 = arith.mulf %666, %665 : vector<40x128xf32>
    %668 = arith.addf %664, %667 : vector<40x128xf32>
    %669 = arith.mulf %634, %613 : vector<40x128xf32>
    %670 = arith.addf %668, %669 : vector<40x128xf32>
    %671 = arith.mulf %623, %617 : vector<40x128xf32>
    %672 = arith.addf %670, %671 : vector<40x128xf32>
    %c0_265 = arith.constant 0 : index
    %c896_266 = arith.constant 896 : index
    %673 = vector.load %arg10[%c0_265, %c896_266] : memref<40x1280xf32, #tpu.memory_space<vmem>>, vector<40x128xf32>
    tpu.vector_store %arg10[%c0_265, %c896_266], %672 {strides = array<i32>} : memref<40x1280xf32, #tpu.memory_space<vmem>>, vector<40x128xf32>,
    %674 = arith.mulf %635, %637 : vector<40x128xf32>
    %675 = arith.mulf %633, %615 : vector<40x128xf32>
    %676 = arith.addf %674, %675 : vector<40x128xf32>
    %677 = arith.mulf %634, %614 : vector<40x128xf32>
    %cst_267 = arith.constant 2.000000e+00 : f32
    %678 = vector.broadcast %cst_267 : f32 to vector<40x128xf32>
    %679 = arith.mulf %678, %677 : vector<40x128xf32>
    %680 = arith.addf %676, %679 : vector<40x128xf32>
    %681 = arith.mulf %623, %618 : vector<40x128xf32>
    %682 = arith.addf %680, %681 : vector<40x128xf32>
    %c0_268 = arith.constant 0 : index
    %c1024_269 = arith.constant 1024 : index
    %683 = vector.load %arg10[%c0_268, %c1024_269] : memref<40x1280xf32, #tpu.memory_space<vmem>>, vector<40x128xf32>
    tpu.vector_store %arg10[%c0_268, %c1024_269], %682 {strides = array<i32>} : memref<40x1280xf32, #tpu.memory_space<vmem>>, vector<40x128xf32>,
    %684 = arith.mulf %637, %612 : vector<40x128xf32>
    %685 = arith.mulf %632, %684 : vector<40x128xf32>
    %686 = arith.mulf %634, %615 : vector<40x128xf32>
    %cst_270 = arith.constant 3.000000e+00 : f32
    %687 = vector.broadcast %cst_270 : f32 to vector<40x128xf32>
    %688 = arith.mulf %687, %686 : vector<40x128xf32>
    %689 = arith.addf %685, %688 : vector<40x128xf32>
    %690 = arith.mulf %623, %619 : vector<40x128xf32>
    %691 = arith.addf %689, %690 : vector<40x128xf32>
    %c0_271 = arith.constant 0 : index
    %c1152_272 = arith.constant 1152 : index
    %692 = vector.load %arg10[%c0_271, %c1152_272] : memref<40x1280xf32, #tpu.memory_space<vmem>>, vector<40x128xf32>
    tpu.vector_store %arg10[%c0_271, %c1152_272], %691 {strides = array<i32>} : memref<40x1280xf32, #tpu.memory_space<vmem>>, vector<40x128xf32>,
    %c0_273 = arith.constant 0 : index
    %c0_274 = arith.constant 0 : index
    %693 = vector.load %arg6[%c0_273, %c0_274] : memref<2x40xf32, #tpu.memory_space<vmem>>, vector<2x40xf32>
    %c0_275 = arith.constant 0 : index
    %c0_276 = arith.constant 0 : index
    %694 = vector.load %arg10[%c0_275, %c0_276] : memref<40x1280xf32, #tpu.memory_space<vmem>>, vector<40x1280xf32>
    %cst_277 = arith.constant dense<0.000000e+00> : vector<2x1280xf32>
    %695 = tpu.matmul %693, %694, %cst_277 {dimension_numbers = #tpu.dot_dimension_numbers<[1], [0], [0], [1], [0, 0, 1, 1], [], []>} : vector<2x40xf32>, vector<40x1280xf32>, vector<2x1280xf32> -> vector<2x1280xf32>
    %696 = vector.extract_strided_slice %695 {offsets = [0, 0], sizes = [1, 128], strides = [1, 1]} : vector<2x1280xf32> to vector<1x128xf32>
    %c0_278 = arith.constant 0 : index
    %c0_279 = arith.constant 0 : index
    %697 = vector.load %arg7[%c0_278, %c0_279] : memref<2x1xf32, #tpu.memory_space<vmem>>, vector<1x1xf32>
    %698 = vector.broadcast %697 : vector<1x1xf32> to vector<1x128xf32>
    %699 = arith.addf %696, %698 : vector<1x128xf32>
    %700 = vector.extract_strided_slice %695 {offsets = [0, 256], sizes = [1, 128], strides = [1, 1]} : vector<2x1280xf32> to vector<1x128xf32>
    %701 = vector.extract_strided_slice %695 {offsets = [0, 128], sizes = [1, 128], strides = [1, 1]} : vector<2x1280xf32> to vector<1x128xf32>
    %cst_280 = arith.constant 0.000000e+00 : f32
    %702 = vector.broadcast %cst_280 : f32 to vector<1x128xf32>
    %703 = arith.subf %702, %701 : vector<1x128xf32>
    %704 = vector.extract_strided_slice %695 {offsets = [0, 512], sizes = [1, 128], strides = [1, 1]} : vector<2x1280xf32> to vector<1x128xf32>
    %705 = vector.extract_strided_slice %695 {offsets = [0, 640], sizes = [1, 128], strides = [1, 1]} : vector<2x1280xf32> to vector<1x128xf32>
    %706 = vector.extract_strided_slice %695 {offsets = [0, 896], sizes = [1, 128], strides = [1, 1]} : vector<2x1280xf32> to vector<1x128xf32>
    %707 = vector.extract_strided_slice %695 {offsets = [0, 1152], sizes = [1, 128], strides = [1, 1]} : vector<2x1280xf32> to vector<1x128xf32>
    %708 = vector.extract_strided_slice %695 {offsets = [0, 384], sizes = [1, 128], strides = [1, 1]} : vector<2x1280xf32> to vector<1x128xf32>
    %cst_281 = arith.constant 0.000000e+00 : f32
    %709 = vector.broadcast %cst_281 : f32 to vector<1x128xf32>
    %710 = arith.subf %709, %708 : vector<1x128xf32>
    %711 = vector.extract_strided_slice %695 {offsets = [0, 512], sizes = [1, 128], strides = [1, 1]} : vector<2x1280xf32> to vector<1x128xf32>
    %cst_282 = arith.constant 0.000000e+00 : f32
    %712 = vector.broadcast %cst_282 : f32 to vector<1x128xf32>
    %713 = arith.subf %712, %711 : vector<1x128xf32>
    %714 = vector.extract_strided_slice %695 {offsets = [0, 768], sizes = [1, 128], strides = [1, 1]} : vector<2x1280xf32> to vector<1x128xf32>
    %cst_283 = arith.constant 0.000000e+00 : f32
    %715 = vector.broadcast %cst_283 : f32 to vector<1x128xf32>
    %716 = arith.subf %715, %714 : vector<1x128xf32>
    %717 = vector.extract_strided_slice %695 {offsets = [0, 1024], sizes = [1, 128], strides = [1, 1]} : vector<2x1280xf32> to vector<1x128xf32>
    %cst_284 = arith.constant 0.000000e+00 : f32
    %718 = vector.broadcast %cst_284 : f32 to vector<1x128xf32>
    %719 = arith.subf %718, %717 : vector<1x128xf32>
    %720 = vector.extract_strided_slice %695 {offsets = [1, 128], sizes = [1, 128], strides = [1, 1]} : vector<2x1280xf32> to vector<1x128xf32>
    %721 = vector.extract_strided_slice %695 {offsets = [1, 256], sizes = [1, 128], strides = [1, 1]} : vector<2x1280xf32> to vector<1x128xf32>
    %722 = arith.mulf %700, %704 : vector<1x128xf32>
    %723 = arith.mulf %703, %705 : vector<1x128xf32>
    %724 = arith.addf %722, %723 : vector<1x128xf32>
    %cst_285 = arith.constant 1.000000e+00 : f32
    %725 = vector.broadcast %cst_285 : f32 to vector<1x128xf32>
    %726 = arith.mulf %725, %724 : vector<1x128xf32>
    %727 = arith.addf %726, %720 : vector<1x128xf32>
    %728 = arith.addf %706, %707 : vector<1x128xf32>
    %cst_286 = arith.constant 0.00999999977 : f32
    %729 = vector.broadcast %cst_286 : f32 to vector<1x128xf32>
    %730 = arith.mulf %729, %728 : vector<1x128xf32>
    %731 = arith.subf %727, %730 : vector<1x128xf32>
    %732 = arith.mulf %700, %710 : vector<1x128xf32>
    %733 = arith.mulf %703, %713 : vector<1x128xf32>
    %734 = arith.addf %732, %733 : vector<1x128xf32>
    %cst_287 = arith.constant 1.000000e+00 : f32
    %735 = vector.broadcast %cst_287 : f32 to vector<1x128xf32>
    %736 = arith.mulf %735, %734 : vector<1x128xf32>
    %737 = arith.addf %736, %721 : vector<1x128xf32>
    %738 = arith.addf %716, %719 : vector<1x128xf32>
    %cst_288 = arith.constant 0.00999999977 : f32
    %739 = vector.broadcast %cst_288 : f32 to vector<1x128xf32>
    %740 = arith.mulf %739, %738 : vector<1x128xf32>
    %741 = arith.subf %737, %740 : vector<1x128xf32>
    %cst_289 = arith.constant 0.000000e+00 : f32
    %742 = vector.broadcast %cst_289 : f32 to vector<3x128xf32>
    %743 = tpu.concatenate %699, %700, %703, %731, %741, %742 in 0 : vector<1x128xf32>, vector<1x128xf32>, vector<1x128xf32>, vector<1x128xf32>, vector<1x128xf32>, vector<3x128xf32> -> vector<8x128xf32>
    %c0_290 = arith.constant 0 : index
    %c0_291 = arith.constant 0 : index
    %744 = vector.load %arg8[%c0_290, %c0_291] : memref<8x128xf32, #tpu.memory_space<vmem>>, vector<8x128xf32>
    tpu.vector_store %arg8[%c0_290, %c0_291], %743 {strides = array<i32>} : memref<8x128xf32, #tpu.memory_space<vmem>>, vector<8x128xf32>,
    return
  }
  func.func @transform_0(%arg0: i32) -> (i32, i32) {
    %c0_i32 = arith.constant 0 : i32
    %c0_i32_0 = arith.constant 0 : i32
    return %c0_i32, %arg0 : i32, i32
  }
  func.func @transform_1(%arg0: i32) -> (i32, i32) {
    %c0_i32 = arith.constant 0 : i32
    %c0_i32_0 = arith.constant 0 : i32
    %c0_i32_1 = arith.constant 0 : i32
    return %c0_i32, %c0_i32_0 : i32, i32
  }
  func.func @transform_2(%arg0: i32) -> (i32, i32) {
    %c0_i32 = arith.constant 0 : i32
    %c0_i32_0 = arith.constant 0 : i32
    %c0_i32_1 = arith.constant 0 : i32
    return %c0_i32, %c0_i32_0 : i32, i32
  }
  func.func @transform_3(%arg0: i32) -> (i32, i32, i32) {
    %c0_i32 = arith.constant 0 : i32
    %c0_i32_0 = arith.constant 0 : i32
    %c0_i32_1 = arith.constant 0 : i32
    %c0_i32_2 = arith.constant 0 : i32
    return %c0_i32, %c0_i32_0, %c0_i32_1 : i32, i32, i32
  }
  func.func @transform_4(%arg0: i32) -> (i32, i32, i32) {
    %c0_i32 = arith.constant 0 : i32
    %c0_i32_0 = arith.constant 0 : i32
    %c0_i32_1 = arith.constant 0 : i32
    %c0_i32_2 = arith.constant 0 : i32
    return %c0_i32, %c0_i32_0, %c0_i32_1 : i32, i32, i32
  }
  func.func @transform_5(%arg0: i32) -> (i32, i32) {
    %c0_i32 = arith.constant 0 : i32
    %c0_i32_0 = arith.constant 0 : i32
    %c0_i32_1 = arith.constant 0 : i32
    return %c0_i32, %c0_i32_0 : i32, i32
  }
  func.func @transform_6(%arg0: i32) -> (i32, i32) {
    %c0_i32 = arith.constant 0 : i32
    %c0_i32_0 = arith.constant 0 : i32
    %c0_i32_1 = arith.constant 0 : i32
    return %c0_i32, %c0_i32_0 : i32, i32
  }
  func.func @transform_7(%arg0: i32) -> (i32, i32) {
    %c0_i32 = arith.constant 0 : i32
    %c0_i32_0 = arith.constant 0 : i32
    return %c0_i32, %arg0 : i32, i32
  }
}

</mosaic_0001>

<llo_original>
// kernel: tpu_custom_call.1
$region0: #{tpu_custom_call.1}
  #allocation0 [shape = 'u32[]', space=smem, size = 0x4, offset = 0x4, fixed_abs, tag = 'smem constant byte address 0x4 - core index']
  #allocation1 [shape = 'u32[72,128]{1,0:T(1,128)}', space=vmem, size = 0x9000, scoped, tag = 'internal scratch']
  #allocation2 [shape = 'f32[40,1280]{1,0:T(8,128)}', space=vmem, size = 0x32000, scoped, tag = 'scratch operand']
  #allocation3 [shape = 'f32[40,1280]{1,0:T(8,128)}', space=vmem, size = 0x32000, scoped, tag = 'scratch operand']
  %s0 = inlined_call_operand.vmem [shape: f32[2,384], index: 0, kind: input, shape index: {}]
  %s1 = inlined_call_operand.vmem [shape: f32[40,2], index: 1, kind: input, shape index: {}]
  %s2 = inlined_call_operand.vmem [shape: f32[40,1], index: 2, kind: input, shape index: {}]
  %s3 = inlined_call_operand.vmem [shape: f32[7,40,40], index: 3, kind: input, shape index: {}]
  %s4 = inlined_call_operand.vmem [shape: f32[7,40,1], index: 4, kind: input, shape index: {}]
  %s5 = inlined_call_operand.vmem [shape: f32[2,40], index: 5, kind: input, shape index: {}]
  %s6 = inlined_call_operand.vmem [shape: f32[2,1], index: 6, kind: input, shape index: {}]
  %s7 = inlined_call_operand.hbm [shape: f32[8,384], index: 7, kind: output, shape index: {}]
  %s8 = sld [smem:[#allocation0]]
  $region61: #{tpu_custom_call.1} parent=0
    _
  %s10 = ssub.s32 1, %s8
  %s11 = scalar_select 0, %s10, %s8
  $region1: #{tpu_custom_call.1} parent=0
    #allocation4 [shape = 'u8[8192]{0}', space=vmem, size = 0x2000, scoped, tag = 'output window, operand 0']
    #allocation5 [shape = 's32[2]{0}', space=sflag, size = 0x8, scoped, tag = 'scoped memory for tpu_custom_call.1']
    %12 = vsyncpa [#allocation5], 0
    %s13 = scalar_lea.sflag [#allocation5], 1
    %14 = vsyncpa %s13, 0
    loop: start=0, step=1, limit=5
    $region2: #{tpu_custom_call.1} parent=1 // loop_pre_header
      _
    $region3: #{tpu_custom_call.1} parent=1 // loop_header
      %s16 = sphi 0, %s20
      %p17 = scmp.ge.s32.totalorder %s16, 5
      %s26 = sphi 0, %s28
      %s29 = sphi 0, %s26
      %s30 = sphi 0, %s29
      %s46 = sphi 0, %s30
      %s50 = sphi 0, %s50
      %s52 = sphi 0, %s50
      %s53 = sphi 0, %s52
      %s67 = sphi 0, %s53
      %s71 = sphi 0, %s71
      %s73 = sphi 0, %s71
      %s74 = sphi 0, %s73
      %s88 = sphi 0, %s74
      %s92 = sphi 0, %s92
      %s94 = sphi 0, %s92
      %s95 = sphi 0, %s94
      %s109 = sphi 0, %s95
      %s113 = sphi 0, %s113
      %s115 = sphi 0, %s113
      %s116 = sphi 0, %s115
      %s130 = sphi 0, %s116
      %s134 = sphi 0, %s134
      %s136 = sphi 0, %s134
      %s137 = sphi 0, %s136
      %s151 = sphi 0, %s137
      %s155 = sphi 0, %s155
      %s157 = sphi 0, %s155
      %s158 = sphi 0, %s157
      %s172 = sphi 0, %s158
      %s178 = sphi 0, %s180
      %s181 = sphi 0, %s178
      %s182 = sphi 0, %s181
      %s198 = sphi 0, %s182
    $region4: #{tpu_custom_call.1} parent=1 // loop_header_branch
      %19 = sbr.rel (%p17) target = $region8
    $region5: #{tpu_custom_call.1} parent=1 // loop_body
      %s21 = ssub.s32 %s16, 1
      %s22 = ssub.s32 %s16, 2
      %s23 = sadd.s32 %s16, 1
      %s24 = ssub.s32 %s16, %s23
      %p25 = scmp.eq.s32.totalorder %s24, 0
      %s27 = sadd.s32 %s26, 1
      %s28 = scalar_select %p25, %s26, %s27
      %p31 = pneg %p25
      %p32 = scmp.eq.s32.totalorder %s16, 2
      %p33 = por %p31, %p32
      %p34 = scmp.ne.s32.totalorder %s26, %s29
      %p35 = scmp.eq.s32.totalorder %s16, 0
      %p36 = por %p34, %p35
      %p37 = scmp.ne.s32.totalorder %s26, %s29
      %p38 = scmp.eq.s32.totalorder %s21, 2
      %p39 = por %p37, %p38
      %p40 = scmp.ne.s32.totalorder %s29, %s30
      %p41 = scmp.eq.s32.totalorder %s21, 0
      %p42 = por %p40, %p41
      %p43 = scmp.ne.s32.totalorder %s29, %s30
      %p44 = scmp.eq.s32.totalorder %s22, 2
      %p45 = por %p43, %p44
      %p47 = scmp.ne.s32.totalorder %s30, %s46
      %p48 = scmp.eq.s32.totalorder %s22, 0
      %p49 = por %p47, %p48
      %s51 = sadd.s32 %s50, 1
      %p54 = scmp.eq.s32.totalorder %s16, 2
      %p55 = scmp.ne.s32.totalorder %s50, %s52
      %p56 = scmp.eq.s32.totalorder %s16, 0
      %p57 = por %p55, %p56
      %p58 = scmp.ne.s32.totalorder %s50, %s52
      %p59 = scmp.eq.s32.totalorder %s21, 2
      %p60 = por %p58, %p59
      %p61 = scmp.ne.s32.totalorder %s52, %s53
      %p62 = scmp.eq.s32.totalorder %s21, 0
      %p63 = por %p61, %p62
      %p64 = scmp.ne.s32.totalorder %s52, %s53
      %p65 = scmp.eq.s32.totalorder %s22, 2
      %p66 = por %p64, %p65
      %p68 = scmp.ne.s32.totalorder %s53, %s67
      %p69 = scmp.eq.s32.totalorder %s22, 0
      %p70 = por %p68, %p69
      %s72 = sadd.s32 %s71, 1
      %p75 = scmp.eq.s32.totalorder %s16, 2
      %p76 = scmp.ne.s32.totalorder %s71, %s73
      %p77 = scmp.eq.s32.totalorder %s16, 0
      %p78 = por %p76, %p77
      %p79 = scmp.ne.s32.totalorder %s71, %s73
      %p80 = scmp.eq.s32.totalorder %s21, 2
      %p81 = por %p79, %p80
      %p82 = scmp.ne.s32.totalorder %s73, %s74
      %p83 = scmp.eq.s32.totalorder %s21, 0
      %p84 = por %p82, %p83
      %p85 = scmp.ne.s32.totalorder %s73, %s74
      %p86 = scmp.eq.s32.totalorder %s22, 2
      %p87 = por %p85, %p86
      %p89 = scmp.ne.s32.totalorder %s74, %s88
      %p90 = scmp.eq.s32.totalorder %s22, 0
      %p91 = por %p89, %p90
      %s93 = sadd.s32 %s92, 1
      %p96 = scmp.eq.s32.totalorder %s16, 2
      %p97 = scmp.ne.s32.totalorder %s92, %s94
      %p98 = scmp.eq.s32.totalorder %s16, 0
      %p99 = por %p97, %p98
      %p100 = scmp.ne.s32.totalorder %s92, %s94
      %p101 = scmp.eq.s32.totalorder %s21, 2
      %p102 = por %p100, %p101
      %p103 = scmp.ne.s32.totalorder %s94, %s95
      %p104 = scmp.eq.s32.totalorder %s21, 0
      %p105 = por %p103, %p104
      %p106 = scmp.ne.s32.totalorder %s94, %s95
      %p107 = scmp.eq.s32.totalorder %s22, 2
      %p108 = por %p106, %p107
      %p110 = scmp.ne.s32.totalorder %s95, %s109
      %p111 = scmp.eq.s32.totalorder %s22, 0
      %p112 = por %p110, %p111
      %s114 = sadd.s32 %s113, 1
      %p117 = scmp.eq.s32.totalorder %s16, 2
      %p118 = scmp.ne.s32.totalorder %s113, %s115
      %p119 = scmp.eq.s32.totalorder %s16, 0
      %p120 = por %p118, %p119
      %p121 = scmp.ne.s32.totalorder %s113, %s115
      %p122 = scmp.eq.s32.totalorder %s21, 2
      %p123 = por %p121, %p122
      %p124 = scmp.ne.s32.totalorder %s115, %s116
      %p125 = scmp.eq.s32.totalorder %s21, 0
      %p126 = por %p124, %p125
      %p127 = scmp.ne.s32.totalorder %s115, %s116
      %p128 = scmp.eq.s32.totalorder %s22, 2
      %p129 = por %p127, %p128
      %p131 = scmp.ne.s32.totalorder %s116, %s130
      %p132 = scmp.eq.s32.totalorder %s22, 0
      %p133 = por %p131, %p132
      %s135 = sadd.s32 %s134, 1
      %p138 = scmp.eq.s32.totalorder %s16, 2
      %p139 = scmp.ne.s32.totalorder %s134, %s136
      %p140 = scmp.eq.s32.totalorder %s16, 0
      %p141 = por %p139, %p140
      %p142 = scmp.ne.s32.totalorder %s134, %s136
      %p143 = scmp.eq.s32.totalorder %s21, 2
      %p144 = por %p142, %p143
      %p145 = scmp.ne.s32.totalorder %s136, %s137
      %p146 = scmp.eq.s32.totalorder %s21, 0
      %p147 = por %p145, %p146
      %p148 = scmp.ne.s32.totalorder %s136, %s137
      %p149 = scmp.eq.s32.totalorder %s22, 2
      %p150 = por %p148, %p149
      %p152 = scmp.ne.s32.totalorder %s137, %s151
      %p153 = scmp.eq.s32.totalorder %s22, 0
      %p154 = por %p152, %p153
      %s156 = sadd.s32 %s155, 1
      %p159 = scmp.eq.s32.totalorder %s16, 2
      %p160 = scmp.ne.s32.totalorder %s155, %s157
      %p161 = scmp.eq.s32.totalorder %s16, 0
      %p162 = por %p160, %p161
      %p163 = scmp.ne.s32.totalorder %s155, %s157
      %p164 = scmp.eq.s32.totalorder %s21, 2
      %p165 = por %p163, %p164
      %p166 = scmp.ne.s32.totalorder %s157, %s158
      %p167 = scmp.eq.s32.totalorder %s21, 0
      %p168 = por %p166, %p167
      %p169 = scmp.ne.s32.totalorder %s157, %s158
      %p170 = scmp.eq.s32.totalorder %s22, 2
      %p171 = por %p169, %p170
      %p173 = scmp.ne.s32.totalorder %s158, %s172
      %p174 = scmp.eq.s32.totalorder %s22, 0
      %p175 = por %p173, %p174
      %s176 = ssub.s32 %s16, %s23
      %p177 = scmp.eq.s32.totalorder %s176, 0
      %s179 = sadd.s32 %s178, 1
      %s180 = scalar_select %p177, %s178, %s179
      %p183 = pneg %p177
      %p184 = scmp.eq.s32.totalorder %s16, 2
      %p185 = por %p183, %p184
      %p186 = scmp.ne.s32.totalorder %s178, %s181
      %p187 = scmp.eq.s32.totalorder %s16, 0
      %p188 = por %p186, %p187
      %p189 = scmp.ne.s32.totalorder %s178, %s181
      %p190 = scmp.eq.s32.totalorder %s21, 2
      %p191 = por %p189, %p190
      %p192 = scmp.ne.s32.totalorder %s181, %s182
      %p193 = scmp.eq.s32.totalorder %s21, 0
      %p194 = por %p192, %p193
      %p195 = scmp.ne.s32.totalorder %s181, %s182
      %p196 = scmp.eq.s32.totalorder %s22, 2
      %p197 = por %p195, %p196
      %p199 = scmp.ne.s32.totalorder %s182, %s198
      %p200 = scmp.eq.s32.totalorder %s22, 0
      %p201 = por %p199, %p200
      %p202 = scmp.le.s32.totalorder 1, %s16
      %p203 = scmp.lt.s32.totalorder %s16, 4
      %p204 = pnand %p202, %p203
      %p205 = pneg %p204
      // Predicated region
      $region9: #{tpu_custom_call.1} parent=5 // pred_check
        _
      $region10: #{tpu_custom_call.1} parent=5 // pred_check_branch
        %207 = sbr.rel (%p204) target = $region12
      $region11: #{tpu_custom_call.1} parent=5 // pred_region
        %s208 = ssub.s32 %s16, 1
        // Predicated region
        $region13: #{tpu_custom_call.1} parent=11 // pred_check
          %p209 = pneg %p63
        $region14: #{tpu_custom_call.1} parent=11 // pred_check_branch
          %211 = sbr.rel (%p209) target = $region16
        $region15: #{tpu_custom_call.1} parent=11 // pred_region
          _
        $region16: #{tpu_custom_call.1} parent=11 // pred_fallthru
          _
        // Predicated region
        $region17: #{tpu_custom_call.1} parent=11 // pred_check
          %p212 = pneg %p84
        $region18: #{tpu_custom_call.1} parent=11 // pred_check_branch
          %214 = sbr.rel (%p212) target = $region20
        $region19: #{tpu_custom_call.1} parent=11 // pred_region
          _
        $region20: #{tpu_custom_call.1} parent=11 // pred_fallthru
          _
        // Predicated region
        $region21: #{tpu_custom_call.1} parent=11 // pred_check
          %p215 = pneg %p105
        $region22: #{tpu_custom_call.1} parent=11 // pred_check_branch
          %217 = sbr.rel (%p215) target = $region24
        $region23: #{tpu_custom_call.1} parent=11 // pred_region
          _
        $region24: #{tpu_custom_call.1} parent=11 // pred_fallthru
          _
        // Predicated region
        $region25: #{tpu_custom_call.1} parent=11 // pred_check
          %p218 = pneg %p126
        $region26: #{tpu_custom_call.1} parent=11 // pred_check_branch
          %220 = sbr.rel (%p218) target = $region28
        $region27: #{tpu_custom_call.1} parent=11 // pred_region
          _
        $region28: #{tpu_custom_call.1} parent=11 // pred_fallthru
          _
        // Predicated region
        $region29: #{tpu_custom_call.1} parent=11 // pred_check
          %p221 = pneg %p147
        $region30: #{tpu_custom_call.1} parent=11 // pred_check_branch
          %223 = sbr.rel (%p221) target = $region32
        $region31: #{tpu_custom_call.1} parent=11 // pred_region
          _
        $region32: #{tpu_custom_call.1} parent=11 // pred_fallthru
          _
        // Predicated region
        $region33: #{tpu_custom_call.1} parent=11 // pred_check
          %p224 = pneg %p168
        $region34: #{tpu_custom_call.1} parent=11 // pred_check_branch
          %226 = sbr.rel (%p224) target = $region36
        $region35: #{tpu_custom_call.1} parent=11 // pred_region
          _
        $region36: #{tpu_custom_call.1} parent=11 // pred_fallthru
          _
      $region12: #{tpu_custom_call.1} parent=5 // pred_fallthru
        _
      %p227 = scmp.lt.s32.totalorder %s16, 3
      // Predicated region
      $region37: #{tpu_custom_call.1} parent=5 // pred_check
        %p228 = pneg %p227
      $region38: #{tpu_custom_call.1} parent=5 // pred_check_branch
        %230 = sbr.rel (%p228) target = $region40
      $region39: #{tpu_custom_call.1} parent=5 // pred_region
        // Predicated region
        $region41: #{tpu_custom_call.1} parent=39 // pred_check
          %p231 = pneg %p36
        $region42: #{tpu_custom_call.1} parent=39 // pred_check_branch
          %233 = sbr.rel (%p231) target = $region44
        $region43: #{tpu_custom_call.1} parent=39 // pred_region
          %p234 = scmp.lt.s32.totalorder %s16, 2
          %s235 = scalar_select %p234, %s16, 2
          %s236 = smul.addr %s235, 2
          %s237 = scalar_lea.vmem %s0, %s236
        $region44: #{tpu_custom_call.1} parent=39 // pred_fallthru
          _
      $region40: #{tpu_custom_call.1} parent=5 // pred_fallthru
        _
      %p238 = scmp.le.s32.totalorder 1, %s16
      %p239 = scmp.lt.s32.totalorder %s16, 4
      %p240 = pnand %p238, %p239
      %p241 = pneg %p240
      // Predicated region
      $region45: #{tpu_custom_call.1} parent=5 // pred_check
        _
      $region46: #{tpu_custom_call.1} parent=5 // pred_check_branch
        %243 = sbr.rel (%p240) target = $region48
      $region47: #{tpu_custom_call.1} parent=5 // pred_region
        %s244 = ssub.s32 %s16, 1
        %p245 = scmp.lt.s32.totalorder %s21, 2
        %s246 = scalar_select %p245, %s21, 2
        %s247 = smul.addr %s246, 2
        %s248 = scalar_lea.vmem %s0, %s247
        %p249 = pneg %p42
        %p250 = pneg %p39
        %p251 = pneg %p63
        %p252 = pneg %p60
        %p253 = pneg %p84
        %p254 = pneg %p81
        %p255 = pneg %p105
        %p256 = pneg %p102
        %p257 = pneg %p126
        %p258 = pneg %p123
        %p259 = pneg %p147
        %p260 = pneg %p144
        %p261 = pneg %p168
        %p262 = pneg %p165
        %p263 = pneg %p194
        %p264 = pneg %p191
        %s265 = sand.u32 %s181, 1
        %s266 = scalar_lea.sflag [#allocation5], %s265
        %s267 = sand.u32 %s181, 1
        %s268 = smul.addr %s267, 8
        %s269 = scalar_lea.vmem [#allocation4], %s268
        %p270 = scmp.lt.s32.totalorder %s21, 2
        %s271 = scalar_select %p270, %s21, 2
        %s272 = smul.addr %s271, 2
        %s273 = scalar_lea.vmem %s0, %s272
        %v274 = vld [vmem:[%s273] sm:$0x3]
        %v275 = vld [vmem:[%s1] sm:$0xff]
        %v276 = vld [vmem:[%s1 + $0x8] sm:$0xff]
        %v277 = vld [vmem:[%s1 + $0x10] sm:$0xff]
        %v278 = vld [vmem:[%s1 + $0x18] sm:$0xff]
        %v279 = vld [vmem:[%s1 + $0x20] sm:$0xff]
        %v280 = vld [vmem:[%s2] sm:$0xff]
        %v281 = vld [vmem:[%s2 + $0x8] sm:$0xff]
        %v282 = vld [vmem:[%s2 + $0x10] sm:$0xff]
        %v283 = vld [vmem:[%s2 + $0x18] sm:$0xff]
        %v284 = vld [vmem:[%s2 + $0x20] sm:$0xff]
        %286 = vset.pattern.permute.xlu0 0
        %287 = vperm.xlu0 %286, %v280
        %v288 = vpop.permute.xlu0 %287
        %291 = vset.pattern.permute.xlu0 0
        %292 = vperm.xlu0 %291, %v281
        %v293 = vpop.permute.xlu0 %292
        %296 = vset.pattern.permute.xlu0 0
        %297 = vperm.xlu0 %296, %v282
        %v298 = vpop.permute.xlu0 %297
        %301 = vset.pattern.permute.xlu0 0
        %302 = vperm.xlu0 %301, %v283
        %v303 = vpop.permute.xlu0 %302
        %306 = vset.pattern.permute.xlu0 0
        %307 = vperm.xlu0 %306, %v284
        %v308 = vpop.permute.xlu0 %307
        %vm310 = vcmask 15360
        %v312 = vsel %vm310, %v275, 0
        %v315 = vsel %vm310, %v276, 0
        %v318 = vsel %vm310, %v277, 0
        %v321 = vsel %vm310, %v278, 0
        %v324 = vsel %vm310, %v279, 0
        %vm326 = vcmask 1041408
        %v328 = vsel %vm326, %v274, 0
        %330 = vmatpush.msra.mxu0 0.0
        %331 = vmatpush.msra.mxu0 0.0
        %332 = vmatpush.msra.mxu0 0.0
        %333 = vmatpush.msra.mxu0 0.0
        %334 = vmatpush.msra.mxu0 0.0
        %335 = vmatpush.msra.mxu0 0.0
        %336 = vmatpush.msra.mxu0 0.0
        %337 = vmatpush.msra.mxu0 0.0
        %338 = vmatpush.msra.mxu0 0.0
        %339 = vmatpush.msra.mxu0 0.0
        %340 = vmatpush.msra.mxu0 0.0
        %341 = vmatpush.msra.mxu0 0.0
        %342 = vmatpush.msra.mxu0 0.0
        %343 = vmatpush.msra.mxu0 0.0
        %344 = vmatpush.msra.mxu0 0.0
        %345 = vmatpush.msra.mxu0 %v328
        %346 = vmatmul.f32.gmra.mxu0 %v312
        %v347 = vpop.f32.mrf.mxu0
        %v348 = vadd.f32 %v288, %v347
        %349 = vmatmul.f32.gmra.mxu0 %v315
        %v350 = vpop.f32.mrf.mxu0
        %v351 = vadd.f32 %v293, %v350
        %352 = vmatmul.f32.gmra.mxu0 %v318
        %v353 = vpop.f32.mrf.mxu0
        %v354 = vadd.f32 %v298, %v353
        %355 = vmatmul.f32.gmra.mxu0 %v321
        %v356 = vpop.f32.mrf.mxu0
        %v357 = vadd.f32 %v303, %v356
        %358 = vmatmul.f32.gmra.mxu0 %v324
        %v359 = vpop.f32.mrf.mxu0
        %v360 = vadd.f32 %v308, %v359
        %361 = vdwg.mxu0
        %v362 = vtanh.pop %v348
        %v363 = vtanh.pop %v351
        %v364 = vtanh.pop %v354
        %v365 = vtanh.pop %v357
        %v366 = vtanh.pop %v360
        %v367 = vmul.f32 %v362, %v362
        %v368 = vmul.f32 %v363, %v363
        %v369 = vmul.f32 %v364, %v364
        %v370 = vmul.f32 %v365, %v365
        %v371 = vmul.f32 %v366, %v366
        %v372 = vsub.f32 1.0, %v367
        %v373 = vsub.f32 1.0, %v368
        %v374 = vsub.f32 1.0, %v369
        %v375 = vsub.f32 1.0, %v370
        %v376 = vsub.f32 1.0, %v371
        %v377 = vmul.f32 %v362, %v372
        %v378 = vmul.f32 %v363, %v373
        %v379 = vmul.f32 %v364, %v374
        %v380 = vmul.f32 %v365, %v375
        %v381 = vmul.f32 %v366, %v376
        %v382 = vmul.f32 %v377, -2.0
        %v383 = vmul.f32 %v378, -2.0
        %v384 = vmul.f32 %v379, -2.0
        %v385 = vmul.f32 %v380, -2.0
        %v386 = vmul.f32 %v381, -2.0
        %v387 = vmul.f32 %v372, 2.0
        %v388 = vmul.f32 %v373, 2.0
        %v389 = vmul.f32 %v374, 2.0
        %v390 = vmul.f32 %v375, 2.0
        %v391 = vmul.f32 %v376, 2.0
        %v392 = vmul.f32 %v367, 2.0
        %v393 = vmul.f32 %v368, 2.0
        %v394 = vmul.f32 %v369, 2.0
        %v395 = vmul.f32 %v370, 2.0
        %v396 = vmul.f32 %v371, 2.0
        %v397 = vsub.f32 %v392, %v372
        %v398 = vsub.f32 %v393, %v373
        %v399 = vsub.f32 %v394, %v374
        %v400 = vsub.f32 %v395, %v375
        %v401 = vsub.f32 %v396, %v376
        %v402 = vmul.f32 %v387, %v397
        %v403 = vmul.f32 %v388, %v398
        %v404 = vmul.f32 %v389, %v399
        %v405 = vmul.f32 %v390, %v400
        %v406 = vmul.f32 %v391, %v401
        %v407 = vmul.f32 %v275, %v275
        %v408 = vmul.f32 %v276, %v276
        %v409 = vmul.f32 %v277, %v277
        %v410 = vmul.f32 %v278, %v278
        %v411 = vmul.f32 %v279, %v279
        %412 = vrot.lane.b32.xlu0 %v275, 127
        %v413 = vpop.permute.xlu0 %412
        %414 = vrot.lane.b32.xlu0 %v276, 127
        %v415 = vpop.permute.xlu0 %414
        %416 = vrot.lane.b32.xlu0 %v277, 127
        %v417 = vpop.permute.xlu0 %416
        %418 = vrot.lane.b32.xlu0 %v278, 127
        %v419 = vpop.permute.xlu0 %418
        %420 = vrot.lane.b32.xlu0 %v279, 127
        %v421 = vpop.permute.xlu0 %420
        %v427 = vmul.f32 %v275, %v413
        %v428 = vmul.f32 %v276, %v415
        %v429 = vmul.f32 %v277, %v417
        %v430 = vmul.f32 %v278, %v419
        %v431 = vmul.f32 %v279, %v421
        %432 = vst [vmem:[#allocation2] sm:$0xff] %v362
        %433 = vst [vmem:[#allocation2 + $0x50] sm:$0xff] %v363
        %434 = vst [vmem:[#allocation2 + $0xa0] sm:$0xff] %v364
        %435 = vst [vmem:[#allocation2 + $0xf0] sm:$0xff] %v365
        %436 = vst [vmem:[#allocation2 + $0x140] sm:$0xff] %v366
        %437 = vset.pattern.permute.xlu0 0
        %438 = vperm.xlu0 %437, %v275
        %v439 = vpop.permute.xlu0 %438
        %441 = vset.pattern.permute.xlu0 0
        %442 = vperm.xlu0 %441, %v276
        %v443 = vpop.permute.xlu0 %442
        %445 = vset.pattern.permute.xlu0 0
        %446 = vperm.xlu0 %445, %v277
        %v447 = vpop.permute.xlu0 %446
        %449 = vset.pattern.permute.xlu0 0
        %450 = vperm.xlu0 %449, %v278
        %v451 = vpop.permute.xlu0 %450
        %453 = vset.pattern.permute.xlu0 0
        %454 = vperm.xlu0 %453, %v279
        %v455 = vpop.permute.xlu0 %454
        %v457 = vmul.f32 %v372, %v439
        %v458 = vmul.f32 %v373, %v443
        %v459 = vmul.f32 %v374, %v447
        %v460 = vmul.f32 %v375, %v451
        %v461 = vmul.f32 %v376, %v455
        %462 = vst [vmem:[#allocation2 + $0x8] sm:$0xff] %v457
        %463 = vst [vmem:[#allocation2 + $0x58] sm:$0xff] %v458
        %464 = vst [vmem:[#allocation2 + $0xa8] sm:$0xff] %v459
        %465 = vst [vmem:[#allocation2 + $0xf8] sm:$0xff] %v460
        %466 = vst [vmem:[#allocation2 + $0x148] sm:$0xff] %v461
        %467 = vset.pattern.permute.xlu0 1
        %468 = vperm.xlu0 %467, %v275
        %v469 = vpop.permute.xlu0 %468
        %471 = vset.pattern.permute.xlu0 1
        %472 = vperm.xlu0 %471, %v276
        %v473 = vpop.permute.xlu0 %472
        %475 = vset.pattern.permute.xlu0 1
        %476 = vperm.xlu0 %475, %v277
        %v477 = vpop.permute.xlu0 %476
        %479 = vset.pattern.permute.xlu0 1
        %480 = vperm.xlu0 %479, %v278
        %v481 = vpop.permute.xlu0 %480
        %483 = vset.pattern.permute.xlu0 1
        %484 = vperm.xlu0 %483, %v279
        %v485 = vpop.permute.xlu0 %484
        %v487 = vmul.f32 %v372, %v469
        %v488 = vmul.f32 %v373, %v473
        %v489 = vmul.f32 %v374, %v477
        %v490 = vmul.f32 %v375, %v481
        %v491 = vmul.f32 %v376, %v485
        %492 = vst [vmem:[#allocation2 + $0x10] sm:$0xff] %v487
        %493 = vst [vmem:[#allocation2 + $0x60] sm:$0xff] %v488
        %494 = vst [vmem:[#allocation2 + $0xb0] sm:$0xff] %v489
        %495 = vst [vmem:[#allocation2 + $0x100] sm:$0xff] %v490
        %496 = vst [vmem:[#allocation2 + $0x150] sm:$0xff] %v491
        %498 = vset.pattern.permute.xlu0 0
        %499 = vperm.xlu0 %498, %v407
        %v500 = vpop.permute.xlu0 %499
        %503 = vset.pattern.permute.xlu0 0
        %504 = vperm.xlu0 %503, %v408
        %v505 = vpop.permute.xlu0 %504
        %508 = vset.pattern.permute.xlu0 0
        %509 = vperm.xlu0 %508, %v409
        %v510 = vpop.permute.xlu0 %509
        %513 = vset.pattern.permute.xlu0 0
        %514 = vperm.xlu0 %513, %v410
        %v515 = vpop.permute.xlu0 %514
        %518 = vset.pattern.permute.xlu0 0
        %519 = vperm.xlu0 %518, %v411
        %v520 = vpop.permute.xlu0 %519
        %v522 = vmul.f32 %v382, %v500
        %v523 = vmul.f32 %v383, %v505
        %v524 = vmul.f32 %v384, %v510
        %v525 = vmul.f32 %v385, %v515
        %v526 = vmul.f32 %v386, %v520
        %527 = vst [vmem:[#allocation2 + $0x18] sm:$0xff] %v522
        %528 = vst [vmem:[#allocation2 + $0x68] sm:$0xff] %v523
        %529 = vst [vmem:[#allocation2 + $0xb8] sm:$0xff] %v524
        %530 = vst [vmem:[#allocation2 + $0x108] sm:$0xff] %v525
        %531 = vst [vmem:[#allocation2 + $0x158] sm:$0xff] %v526
        %533 = vset.pattern.permute.xlu0 0
        %534 = vperm.xlu0 %533, %v427
        %v535 = vpop.permute.xlu0 %534
        %538 = vset.pattern.permute.xlu0 0
        %539 = vperm.xlu0 %538, %v428
        %v540 = vpop.permute.xlu0 %539
        %543 = vset.pattern.permute.xlu0 0
        %544 = vperm.xlu0 %543, %v429
        %v545 = vpop.permute.xlu0 %544
        %548 = vset.pattern.permute.xlu0 0
        %549 = vperm.xlu0 %548, %v430
        %v550 = vpop.permute.xlu0 %549
        %553 = vset.pattern.permute.xlu0 0
        %554 = vperm.xlu0 %553, %v431
        %v555 = vpop.permute.xlu0 %554
        %v557 = vmul.f32 %v382, %v535
        %v558 = vmul.f32 %v383, %v540
        %v559 = vmul.f32 %v384, %v545
        %v560 = vmul.f32 %v385, %v550
        %v561 = vmul.f32 %v386, %v555
        %562 = vst [vmem:[#allocation2 + $0x20] sm:$0xff] %v557
        %563 = vst [vmem:[#allocation2 + $0x70] sm:$0xff] %v558
        %564 = vst [vmem:[#allocation2 + $0xc0] sm:$0xff] %v559
        %565 = vst [vmem:[#allocation2 + $0x110] sm:$0xff] %v560
        %566 = vst [vmem:[#allocation2 + $0x160] sm:$0xff] %v561
        %567 = vset.pattern.permute.xlu0 1
        %568 = vperm.xlu0 %567, %v407
        %v569 = vpop.permute.xlu0 %568
        %571 = vset.pattern.permute.xlu0 1
        %572 = vperm.xlu0 %571, %v408
        %v573 = vpop.permute.xlu0 %572
        %575 = vset.pattern.permute.xlu0 1
        %576 = vperm.xlu0 %575, %v409
        %v577 = vpop.permute.xlu0 %576
        %579 = vset.pattern.permute.xlu0 1
        %580 = vperm.xlu0 %579, %v410
        %v581 = vpop.permute.xlu0 %580
        %583 = vset.pattern.permute.xlu0 1
        %584 = vperm.xlu0 %583, %v411
        %v585 = vpop.permute.xlu0 %584
        %v587 = vmul.f32 %v382, %v569
        %v588 = vmul.f32 %v383, %v573
        %v589 = vmul.f32 %v384, %v577
        %v590 = vmul.f32 %v385, %v581
        %v591 = vmul.f32 %v386, %v585
        %592 = vst [vmem:[#allocation2 + $0x28] sm:$0xff] %v587
        %593 = vst [vmem:[#allocation2 + $0x78] sm:$0xff] %v588
        %594 = vst [vmem:[#allocation2 + $0xc8] sm:$0xff] %v589
        %595 = vst [vmem:[#allocation2 + $0x118] sm:$0xff] %v590
        %596 = vst [vmem:[#allocation2 + $0x168] sm:$0xff] %v591
        %v597 = vmul.f32 %v407, %v275
        %v598 = vmul.f32 %v408, %v276
        %v599 = vmul.f32 %v409, %v277
        %v600 = vmul.f32 %v410, %v278
        %v601 = vmul.f32 %v411, %v279
        %603 = vset.pattern.permute.xlu0 0
        %604 = vperm.xlu0 %603, %v597
        %v605 = vpop.permute.xlu0 %604
        %608 = vset.pattern.permute.xlu0 0
        %609 = vperm.xlu0 %608, %v598
        %v610 = vpop.permute.xlu0 %609
        %613 = vset.pattern.permute.xlu0 0
        %614 = vperm.xlu0 %613, %v599
        %v615 = vpop.permute.xlu0 %614
        %618 = vset.pattern.permute.xlu0 0
        %619 = vperm.xlu0 %618, %v600
        %v620 = vpop.permute.xlu0 %619
        %623 = vset.pattern.permute.xlu0 0
        %624 = vperm.xlu0 %623, %v601
        %v625 = vpop.permute.xlu0 %624
        %v627 = vmul.f32 %v402, %v605
        %v628 = vmul.f32 %v403, %v610
        %v629 = vmul.f32 %v404, %v615
        %v630 = vmul.f32 %v405, %v620
        %v631 = vmul.f32 %v406, %v625
        %632 = vst [vmem:[#allocation2 + $0x30] sm:$0xff] %v627
        %633 = vst [vmem:[#allocation2 + $0x80] sm:$0xff] %v628
        %634 = vst [vmem:[#allocation2 + $0xd0] sm:$0xff] %v629
        %635 = vst [vmem:[#allocation2 + $0x120] sm:$0xff] %v630
        %636 = vst [vmem:[#allocation2 + $0x170] sm:$0xff] %v631
        %v637 = vmul.f32 %v407, %v413
        %v638 = vmul.f32 %v408, %v415
        %v639 = vmul.f32 %v409, %v417
        %v640 = vmul.f32 %v410, %v419
        %v641 = vmul.f32 %v411, %v421
        %643 = vset.pattern.permute.xlu0 0
        %644 = vperm.xlu0 %643, %v637
        %v645 = vpop.permute.xlu0 %644
        %648 = vset.pattern.permute.xlu0 0
        %649 = vperm.xlu0 %648, %v638
        %v650 = vpop.permute.xlu0 %649
        %653 = vset.pattern.permute.xlu0 0
        %654 = vperm.xlu0 %653, %v639
        %v655 = vpop.permute.xlu0 %654
        %658 = vset.pattern.permute.xlu0 0
        %659 = vperm.xlu0 %658, %v640
        %v660 = vpop.permute.xlu0 %659
        %663 = vset.pattern.permute.xlu0 0
        %664 = vperm.xlu0 %663, %v641
        %v665 = vpop.permute.xlu0 %664
        %v667 = vmul.f32 %v402, %v645
        %v668 = vmul.f32 %v403, %v650
        %v669 = vmul.f32 %v404, %v655
        %v670 = vmul.f32 %v405, %v660
        %v671 = vmul.f32 %v406, %v665
        %672 = vst [vmem:[#allocation2 + $0x38] sm:$0xff] %v667
        %673 = vst [vmem:[#allocation2 + $0x88] sm:$0xff] %v668
        %674 = vst [vmem:[#allocation2 + $0xd8] sm:$0xff] %v669
        %675 = vst [vmem:[#allocation2 + $0x128] sm:$0xff] %v670
        %676 = vst [vmem:[#allocation2 + $0x178] sm:$0xff] %v671
        %677 = vrot.lane.b32.xlu0 %v407, 127
        %v678 = vpop.permute.xlu0 %677
        %679 = vrot.lane.b32.xlu0 %v408, 127
        %v680 = vpop.permute.xlu0 %679
        %681 = vrot.lane.b32.xlu0 %v409, 127
        %v682 = vpop.permute.xlu0 %681
        %683 = vrot.lane.b32.xlu0 %v410, 127
        %v684 = vpop.permute.xlu0 %683
        %685 = vrot.lane.b32.xlu0 %v411, 127
        %v686 = vpop.permute.xlu0 %685
        %v692 = vmul.f32 %v275, %v678
        %v693 = vmul.f32 %v276, %v680
        %v694 = vmul.f32 %v277, %v682
        %v695 = vmul.f32 %v278, %v684
        %v696 = vmul.f32 %v279, %v686
        %698 = vset.pattern.permute.xlu0 0
        %699 = vperm.xlu0 %698, %v692
        %v700 = vpop.permute.xlu0 %699
        %703 = vset.pattern.permute.xlu0 0
        %704 = vperm.xlu0 %703, %v693
        %v705 = vpop.permute.xlu0 %704
        %708 = vset.pattern.permute.xlu0 0
        %709 = vperm.xlu0 %708, %v694
        %v710 = vpop.permute.xlu0 %709
        %713 = vset.pattern.permute.xlu0 0
        %714 = vperm.xlu0 %713, %v695
        %v715 = vpop.permute.xlu0 %714
        %718 = vset.pattern.permute.xlu0 0
        %719 = vperm.xlu0 %718, %v696
        %v720 = vpop.permute.xlu0 %719
        %v722 = vmul.f32 %v402, %v700
        %v723 = vmul.f32 %v403, %v705
        %v724 = vmul.f32 %v404, %v710
        %v725 = vmul.f32 %v405, %v715
        %v726 = vmul.f32 %v406, %v720
        %727 = vst [vmem:[#allocation2 + $0x40] sm:$0xff] %v722
        %728 = vst [vmem:[#allocation2 + $0x90] sm:$0xff] %v723
        %729 = vst [vmem:[#allocation2 + $0xe0] sm:$0xff] %v724
        %730 = vst [vmem:[#allocation2 + $0x130] sm:$0xff] %v725
        %731 = vst [vmem:[#allocation2 + $0x180] sm:$0xff] %v726
        %732 = vset.pattern.permute.xlu0 1
        %733 = vperm.xlu0 %732, %v597
        %v734 = vpop.permute.xlu0 %733
        %736 = vset.pattern.permute.xlu0 1
        %737 = vperm.xlu0 %736, %v598
        %v738 = vpop.permute.xlu0 %737
        %740 = vset.pattern.permute.xlu0 1
        %741 = vperm.xlu0 %740, %v599
        %v742 = vpop.permute.xlu0 %741
        %744 = vset.pattern.permute.xlu0 1
        %745 = vperm.xlu0 %744, %v600
        %v746 = vpop.permute.xlu0 %745
        %748 = vset.pattern.permute.xlu0 1
        %749 = vperm.xlu0 %748, %v601
        %v750 = vpop.permute.xlu0 %749
        %v752 = vmul.f32 %v402, %v734
        %v753 = vmul.f32 %v403, %v738
        %v754 = vmul.f32 %v404, %v742
        %v755 = vmul.f32 %v405, %v746
        %v756 = vmul.f32 %v406, %v750
        %757 = vst [vmem:[#allocation2 + $0x48] sm:$0xff] %v752
        %758 = vst [vmem:[#allocation2 + $0x98] sm:$0xff] %v753
        %759 = vst [vmem:[#allocation2 + $0xe8] sm:$0xff] %v754
        %760 = vst [vmem:[#allocation2 + $0x138] sm:$0xff] %v755
        %761 = vst [vmem:[#allocation2 + $0x188] sm:$0xff] %v756
        %v762 = vld [vmem:[%s3] sm:$0xff]
        %v763 = vld [vmem:[%s3 + $0x8] sm:$0xff]
        %v764 = vld [vmem:[%s3 + $0x10] sm:$0xff]
        %v765 = vld [vmem:[%s3 + $0x18] sm:$0xff]
        %v766 = vld [vmem:[%s3 + $0x20] sm:$0xff]
        %v767 = vld [vmem:[%s4] sm:$0xff]
        %v768 = vld [vmem:[%s4 + $0x8] sm:$0xff]
        %v769 = vld [vmem:[%s4 + $0x10] sm:$0xff]
        %v770 = vld [vmem:[%s4 + $0x18] sm:$0xff]
        %v771 = vld [vmem:[%s4 + $0x20] sm:$0xff]
        %v772 = vld [vmem:[#allocation2] sm:$0xff]
        %v773 = vld [vmem:[#allocation2 + $0x8] sm:$0xff]
        %v774 = vld [vmem:[#allocation2 + $0x10] sm:$0xff]
        %v775 = vld [vmem:[#allocation2 + $0x18] sm:$0xff]
        %v776 = vld [vmem:[#allocation2 + $0x20] sm:$0xff]
        %v777 = vld [vmem:[#allocation2 + $0x28] sm:$0xff]
        %v778 = vld [vmem:[#allocation2 + $0x30] sm:$0xff]
        %v779 = vld [vmem:[#allocation2 + $0x38] sm:$0xff]
        %v780 = vld [vmem:[#allocation2 + $0x40] sm:$0xff]
        %v781 = vld [vmem:[#allocation2 + $0x48] sm:$0xff]
        %v782 = vld [vmem:[#allocation2 + $0x50] sm:$0xff]
        %v783 = vld [vmem:[#allocation2 + $0x58] sm:$0xff]
        %v784 = vld [vmem:[#allocation2 + $0x60] sm:$0xff]
        %v785 = vld [vmem:[#allocation2 + $0x68] sm:$0xff]
        %v786 = vld [vmem:[#allocation2 + $0x70] sm:$0xff]
        %v787 = vld [vmem:[#allocation2 + $0x78] sm:$0xff]
        %v788 = vld [vmem:[#allocation2 + $0x80] sm:$0xff]
        %v789 = vld [vmem:[#allocation2 + $0x88] sm:$0xff]
        %v790 = vld [vmem:[#allocation2 + $0x90] sm:$0xff]
        %v791 = vld [vmem:[#allocation2 + $0x98] sm:$0xff]
        %v792 = vld [vmem:[#allocation2 + $0xa0] sm:$0xff]
        %v793 = vld [vmem:[#allocation2 + $0xa8] sm:$0xff]
        %v794 = vld [vmem:[#allocation2 + $0xb0] sm:$0xff]
        %v795 = vld [vmem:[#allocation2 + $0xb8] sm:$0xff]
        %v796 = vld [vmem:[#allocation2 + $0xc0] sm:$0xff]
        %v797 = vld [vmem:[#allocation2 + $0xc8] sm:$0xff]
        %v798 = vld [vmem:[#allocation2 + $0xd0] sm:$0xff]
        %v799 = vld [vmem:[#allocation2 + $0xd8] sm:$0xff]
        %v800 = vld [vmem:[#allocation2 + $0xe0] sm:$0xff]
        %v801 = vld [vmem:[#allocation2 + $0xe8] sm:$0xff]
        %v802 = vld [vmem:[#allocation2 + $0xf0] sm:$0xff]
        %v803 = vld [vmem:[#allocation2 + $0xf8] sm:$0xff]
        %v804 = vld [vmem:[#allocation2 + $0x100] sm:$0xff]
        %v805 = vld [vmem:[#allocation2 + $0x108] sm:$0xff]
        %v806 = vld [vmem:[#allocation2 + $0x110] sm:$0xff]
        %v807 = vld [vmem:[#allocation2 + $0x118] sm:$0xff]
        %v808 = vld [vmem:[#allocation2 + $0x120] sm:$0xff]
        %v809 = vld [vmem:[#allocation2 + $0x128] sm:$0xff]
        %v810 = vld [vmem:[#allocation2 + $0x130] sm:$0xff]
        %v811 = vld [vmem:[#allocation2 + $0x138] sm:$0xff]
        %v812 = vld [vmem:[#allocation2 + $0x140] sm:$0xff]
        %v813 = vld [vmem:[#allocation2 + $0x148] sm:$0xff]
        %v814 = vld [vmem:[#allocation2 + $0x150] sm:$0xff]
        %v815 = vld [vmem:[#allocation2 + $0x158] sm:$0xff]
        %v816 = vld [vmem:[#allocation2 + $0x160] sm:$0xff]
        %v817 = vld [vmem:[#allocation2 + $0x168] sm:$0xff]
        %v818 = vld [vmem:[#allocation2 + $0x170] sm:$0xff]
        %v819 = vld [vmem:[#allocation2 + $0x178] sm:$0xff]
        %v820 = vld [vmem:[#allocation2 + $0x180] sm:$0xff]
        %v821 = vld [vmem:[#allocation2 + $0x188] sm:$0xff]
        %vm822 = vcmask 326656
        %v824 = vsel %vm822, %v762, 0
        %v827 = vsel %vm822, %v763, 0
        %v830 = vsel %vm822, %v764, 0
        %v833 = vsel %vm822, %v765, 0
        %v836 = vsel %vm822, %v766, 0
        %838 = vmatpush.msra.mxu0 0.0
        %839 = vmatpush.msra.mxu0 0.0
        %840 = vmatpush.msra.mxu0 0.0
        %841 = vmatpush.msra.mxu0 0.0
        %842 = vmatpush.msra.mxu0 0.0
        %843 = vmatpush.msra.mxu0 0.0
        %844 = vmatpush.msra.mxu0 0.0
        %845 = vmatpush.msra.mxu0 0.0
        %846 = vmatpush.msra.mxu0 0.0
        %847 = vmatpush.msra.mxu0 0.0
        %848 = vmatpush.msra.mxu0 0.0
        %849 = vmatpush.msra.mxu0 %v812
        %850 = vmatpush.msra.mxu0 %v802
        %851 = vmatpush.msra.mxu0 %v792
        %852 = vmatpush.msra.mxu0 %v782
        %853 = vmatpush.msra.mxu0 %v772
        %854 = vmatmul.f32.gmra.mxu0 %v824
        %v855 = vpop.f32.mrf.mxu0
        %v856 = vadd.f32 0.0, %v855
        %857 = vmatmul.f32.gmra.mxu0 %v827
        %v858 = vpop.f32.mrf.mxu0
        %v859 = vadd.f32 0.0, %v858
        %860 = vmatmul.f32.gmra.mxu0 %v830
        %v861 = vpop.f32.mrf.mxu0
        %v862 = vadd.f32 0.0, %v861
        %863 = vmatmul.f32.gmra.mxu0 %v833
        %v864 = vpop.f32.mrf.mxu0
        %v865 = vadd.f32 0.0, %v864
        %866 = vmatmul.f32.gmra.mxu0 %v836
        %v867 = vpop.f32.mrf.mxu0
        %v868 = vadd.f32 0.0, %v867
        %869 = vdwg.mxu0
        %870 = vmatpush.msra.mxu0 0.0
        %871 = vmatpush.msra.mxu0 0.0
        %872 = vmatpush.msra.mxu0 0.0
        %873 = vmatpush.msra.mxu0 0.0
        %874 = vmatpush.msra.mxu0 0.0
        %875 = vmatpush.msra.mxu0 0.0
        %876 = vmatpush.msra.mxu0 0.0
        %877 = vmatpush.msra.mxu0 0.0
        %878 = vmatpush.msra.mxu0 0.0
        %879 = vmatpush.msra.mxu0 0.0
        %880 = vmatpush.msra.mxu0 0.0
        %881 = vmatpush.msra.mxu0 %v813
        %882 = vmatpush.msra.mxu0 %v803
        %883 = vmatpush.msra.mxu0 %v793
        %884 = vmatpush.msra.mxu0 %v783
        %885 = vmatpush.msra.mxu0 %v773
        %886 = vmatmul.f32.gmra.mxu0 %v824
        %v887 = vpop.f32.mrf.mxu0
        %v888 = vadd.f32 0.0, %v887
        %889 = vmatmul.f32.gmra.mxu0 %v827
        %v890 = vpop.f32.mrf.mxu0
        %v891 = vadd.f32 0.0, %v890
        %892 = vmatmul.f32.gmra.mxu0 %v830
        %v893 = vpop.f32.mrf.mxu0
        %v894 = vadd.f32 0.0, %v893
        %895 = vmatmul.f32.gmra.mxu0 %v833
        %v896 = vpop.f32.mrf.mxu0
        %v897 = vadd.f32 0.0, %v896
        %898 = vmatmul.f32.gmra.mxu0 %v836
        %v899 = vpop.f32.mrf.mxu0
        %v900 = vadd.f32 0.0, %v899
        %901 = vdwg.mxu0
        %902 = vmatpush.msra.mxu0 0.0
        %903 = vmatpush.msra.mxu0 0.0
        %904 = vmatpush.msra.mxu0 0.0
        %905 = vmatpush.msra.mxu0 0.0
        %906 = vmatpush.msra.mxu0 0.0
        %907 = vmatpush.msra.mxu0 0.0
        %908 = vmatpush.msra.mxu0 0.0
        %909 = vmatpush.msra.mxu0 0.0
        %910 = vmatpush.msra.mxu0 0.0
        %911 = vmatpush.msra.mxu0 0.0
        %912 = vmatpush.msra.mxu0 0.0
        %913 = vmatpush.msra.mxu0 %v814
        %914 = vmatpush.msra.mxu0 %v804
        %915 = vmatpush.msra.mxu0 %v794
        %916 = vmatpush.msra.mxu0 %v784
        %917 = vmatpush.msra.mxu0 %v774
        %918 = vmatmul.f32.gmra.mxu0 %v824
        %v919 = vpop.f32.mrf.mxu0
        %v920 = vadd.f32 0.0, %v919
        %921 = vmatmul.f32.gmra.mxu0 %v827
        %v922 = vpop.f32.mrf.mxu0
        %v923 = vadd.f32 0.0, %v922
        %924 = vmatmul.f32.gmra.mxu0 %v830
        %v925 = vpop.f32.mrf.mxu0
        %v926 = vadd.f32 0.0, %v925
        %927 = vmatmul.f32.gmra.mxu0 %v833
        %v928 = vpop.f32.mrf.mxu0
        %v929 = vadd.f32 0.0, %v928
        %930 = vmatmul.f32.gmra.mxu0 %v836
        %v931 = vpop.f32.mrf.mxu0
        %v932 = vadd.f32 0.0, %v931
        %933 = vdwg.mxu0
        %934 = vmatpush.msra.mxu0 0.0
        %935 = vmatpush.msra.mxu0 0.0
        %936 = vmatpush.msra.mxu0 0.0
        %937 = vmatpush.msra.mxu0 0.0
        %938 = vmatpush.msra.mxu0 0.0
        %939 = vmatpush.msra.mxu0 0.0
        %940 = vmatpush.msra.mxu0 0.0
        %941 = vmatpush.msra.mxu0 0.0
        %942 = vmatpush.msra.mxu0 0.0
        %943 = vmatpush.msra.mxu0 0.0
        %944 = vmatpush.msra.mxu0 0.0
        %945 = vmatpush.msra.mxu0 %v815
        %946 = vmatpush.msra.mxu0 %v805
        %947 = vmatpush.msra.mxu0 %v795
        %948 = vmatpush.msra.mxu0 %v785
        %949 = vmatpush.msra.mxu0 %v775
        %950 = vmatmul.f32.gmra.mxu0 %v824
        %v951 = vpop.f32.mrf.mxu0
        %v952 = vadd.f32 0.0, %v951
        %953 = vmatmul.f32.gmra.mxu0 %v827
        %v954 = vpop.f32.mrf.mxu0
        %v955 = vadd.f32 0.0, %v954
        %956 = vmatmul.f32.gmra.mxu0 %v830
        %v957 = vpop.f32.mrf.mxu0
        %v958 = vadd.f32 0.0, %v957
        %959 = vmatmul.f32.gmra.mxu0 %v833
        %v960 = vpop.f32.mrf.mxu0
        %v961 = vadd.f32 0.0, %v960
        %962 = vmatmul.f32.gmra.mxu0 %v836
        %v963 = vpop.f32.mrf.mxu0
        %v964 = vadd.f32 0.0, %v963
        %965 = vdwg.mxu0
        %966 = vmatpush.msra.mxu0 0.0
        %967 = vmatpush.msra.mxu0 0.0
        %968 = vmatpush.msra.mxu0 0.0
        %969 = vmatpush.msra.mxu0 0.0
        %970 = vmatpush.msra.mxu0 0.0
        %971 = vmatpush.msra.mxu0 0.0
        %972 = vmatpush.msra.mxu0 0.0
        %973 = vmatpush.msra.mxu0 0.0
        %974 = vmatpush.msra.mxu0 0.0
        %975 = vmatpush.msra.mxu0 0.0
        %976 = vmatpush.msra.mxu0 0.0
        %977 = vmatpush.msra.mxu0 %v816
        %978 = vmatpush.msra.mxu0 %v806
        %979 = vmatpush.msra.mxu0 %v796
        %980 = vmatpush.msra.mxu0 %v786
        %981 = vmatpush.msra.mxu0 %v776
        %982 = vmatmul.f32.gmra.mxu0 %v824
        %v983 = vpop.f32.mrf.mxu0
        %v984 = vadd.f32 0.0, %v983
        %985 = vmatmul.f32.gmra.mxu0 %v827
        %v986 = vpop.f32.mrf.mxu0
        %v987 = vadd.f32 0.0, %v986
        %988 = vmatmul.f32.gmra.mxu0 %v830
        %v989 = vpop.f32.mrf.mxu0
        %v990 = vadd.f32 0.0, %v989
        %991 = vmatmul.f32.gmra.mxu0 %v833
        %v992 = vpop.f32.mrf.mxu0
        %v993 = vadd.f32 0.0, %v992
        %994 = vmatmul.f32.gmra.mxu0 %v836
        %v995 = vpop.f32.mrf.mxu0
        %v996 = vadd.f32 0.0, %v995
        %997 = vdwg.mxu0
        %998 = vmatpush.msra.mxu0 0.0
        %999 = vmatpush.msra.mxu0 0.0
        %1000 = vmatpush.msra.mxu0 0.0
        %1001 = vmatpush.msra.mxu0 0.0
        %1002 = vmatpush.msra.mxu0 0.0
        %1003 = vmatpush.msra.mxu0 0.0
        %1004 = vmatpush.msra.mxu0 0.0
        %1005 = vmatpush.msra.mxu0 0.0
        %1006 = vmatpush.msra.mxu0 0.0
        %1007 = vmatpush.msra.mxu0 0.0
        %1008 = vmatpush.msra.mxu0 0.0
        %1009 = vmatpush.msra.mxu0 %v817
        %1010 = vmatpush.msra.mxu0 %v807
        %1011 = vmatpush.msra.mxu0 %v797
        %1012 = vmatpush.msra.mxu0 %v787
        %1013 = vmatpush.msra.mxu0 %v777
        %1014 = vmatmul.f32.gmra.mxu0 %v824
        %v1015 = vpop.f32.mrf.mxu0
        %v1016 = vadd.f32 0.0, %v1015
        %1017 = vmatmul.f32.gmra.mxu0 %v827
        %v1018 = vpop.f32.mrf.mxu0
        %v1019 = vadd.f32 0.0, %v1018
        %1020 = vmatmul.f32.gmra.mxu0 %v830
        %v1021 = vpop.f32.mrf.mxu0
        %v1022 = vadd.f32 0.0, %v1021
        %1023 = vmatmul.f32.gmra.mxu0 %v833
        %v1024 = vpop.f32.mrf.mxu0
        %v1025 = vadd.f32 0.0, %v1024
        %1026 = vmatmul.f32.gmra.mxu0 %v836
        %v1027 = vpop.f32.mrf.mxu0
        %v1028 = vadd.f32 0.0, %v1027
        %1029 = vdwg.mxu0
        %1030 = vmatpush.msra.mxu0 0.0
        %1031 = vmatpush.msra.mxu0 0.0
        %1032 = vmatpush.msra.mxu0 0.0
        %1033 = vmatpush.msra.mxu0 0.0
        %1034 = vmatpush.msra.mxu0 0.0
        %1035 = vmatpush.msra.mxu0 0.0
        %1036 = vmatpush.msra.mxu0 0.0
        %1037 = vmatpush.msra.mxu0 0.0
        %1038 = vmatpush.msra.mxu0 0.0
        %1039 = vmatpush.msra.mxu0 0.0
        %1040 = vmatpush.msra.mxu0 0.0
        %1041 = vmatpush.msra.mxu0 %v818
        %1042 = vmatpush.msra.mxu0 %v808
        %1043 = vmatpush.msra.mxu0 %v798
        %1044 = vmatpush.msra.mxu0 %v788
        %1045 = vmatpush.msra.mxu0 %v778
        %1046 = vmatmul.f32.gmra.mxu0 %v824
        %v1047 = vpop.f32.mrf.mxu0
        %v1048 = vadd.f32 0.0, %v1047
        %1049 = vmatmul.f32.gmra.mxu0 %v827
        %v1050 = vpop.f32.mrf.mxu0
        %v1051 = vadd.f32 0.0, %v1050
        %1052 = vmatmul.f32.gmra.mxu0 %v830
        %v1053 = vpop.f32.mrf.mxu0
        %v1054 = vadd.f32 0.0, %v1053
        %1055 = vmatmul.f32.gmra.mxu0 %v833
        %v1056 = vpop.f32.mrf.mxu0
        %v1057 = vadd.f32 0.0, %v1056
        %1058 = vmatmul.f32.gmra.mxu0 %v836
        %v1059 = vpop.f32.mrf.mxu0
        %v1060 = vadd.f32 0.0, %v1059
        %1061 = vdwg.mxu0
        %1062 = vmatpush.msra.mxu0 0.0
        %1063 = vmatpush.msra.mxu0 0.0
        %1064 = vmatpush.msra.mxu0 0.0
        %1065 = vmatpush.msra.mxu0 0.0
        %1066 = vmatpush.msra.mxu0 0.0
        %1067 = vmatpush.msra.mxu0 0.0
        %1068 = vmatpush.msra.mxu0 0.0
        %1069 = vmatpush.msra.mxu0 0.0
        %1070 = vmatpush.msra.mxu0 0.0
        %1071 = vmatpush.msra.mxu0 0.0
        %1072 = vmatpush.msra.mxu0 0.0
        %1073 = vmatpush.msra.mxu0 %v819
        %1074 = vmatpush.msra.mxu0 %v809
        %1075 = vmatpush.msra.mxu0 %v799
        %1076 = vmatpush.msra.mxu0 %v789
        %1077 = vmatpush.msra.mxu0 %v779
        %1078 = vmatmul.f32.gmra.mxu0 %v824
        %v1079 = vpop.f32.mrf.mxu0
        %v1080 = vadd.f32 0.0, %v1079
        %1081 = vmatmul.f32.gmra.mxu0 %v827
        %v1082 = vpop.f32.mrf.mxu0
        %v1083 = vadd.f32 0.0, %v1082
        %1084 = vmatmul.f32.gmra.mxu0 %v830
        %v1085 = vpop.f32.mrf.mxu0
        %v1086 = vadd.f32 0.0, %v1085
        %1087 = vmatmul.f32.gmra.mxu0 %v833
        %v1088 = vpop.f32.mrf.mxu0
        %v1089 = vadd.f32 0.0, %v1088
        %1090 = vmatmul.f32.gmra.mxu0 %v836
        %v1091 = vpop.f32.mrf.mxu0
        %v1092 = vadd.f32 0.0, %v1091
        %1093 = vdwg.mxu0
        %1094 = vmatpush.msra.mxu0 0.0
        %1095 = vmatpush.msra.mxu0 0.0
        %1096 = vmatpush.msra.mxu0 0.0
        %1097 = vmatpush.msra.mxu0 0.0
        %1098 = vmatpush.msra.mxu0 0.0
        %1099 = vmatpush.msra.mxu0 0.0
        %1100 = vmatpush.msra.mxu0 0.0
        %1101 = vmatpush.msra.mxu0 0.0
        %1102 = vmatpush.msra.mxu0 0.0
        %1103 = vmatpush.msra.mxu0 0.0
        %1104 = vmatpush.msra.mxu0 0.0
        %1105 = vmatpush.msra.mxu0 %v820
        %1106 = vmatpush.msra.mxu0 %v810
        %1107 = vmatpush.msra.mxu0 %v800
        %1108 = vmatpush.msra.mxu0 %v790
        %1109 = vmatpush.msra.mxu0 %v780
        %1110 = vmatmul.f32.gmra.mxu0 %v824
        %v1111 = vpop.f32.mrf.mxu0
        %v1112 = vadd.f32 0.0, %v1111
        %1113 = vmatmul.f32.gmra.mxu0 %v827
        %v1114 = vpop.f32.mrf.mxu0
        %v1115 = vadd.f32 0.0, %v1114
        %1116 = vmatmul.f32.gmra.mxu0 %v830
        %v1117 = vpop.f32.mrf.mxu0
        %v1118 = vadd.f32 0.0, %v1117
        %1119 = vmatmul.f32.gmra.mxu0 %v833
        %v1120 = vpop.f32.mrf.mxu0
        %v1121 = vadd.f32 0.0, %v1120
        %1122 = vmatmul.f32.gmra.mxu0 %v836
        %v1123 = vpop.f32.mrf.mxu0
        %v1124 = vadd.f32 0.0, %v1123
        %1125 = vdwg.mxu0
        %1126 = vmatpush.msra.mxu0 0.0
        %1127 = vmatpush.msra.mxu0 0.0
        %1128 = vmatpush.msra.mxu0 0.0
        %1129 = vmatpush.msra.mxu0 0.0
        %1130 = vmatpush.msra.mxu0 0.0
        %1131 = vmatpush.msra.mxu0 0.0
        %1132 = vmatpush.msra.mxu0 0.0
        %1133 = vmatpush.msra.mxu0 0.0
        %1134 = vmatpush.msra.mxu0 0.0
        %1135 = vmatpush.msra.mxu0 0.0
        %1136 = vmatpush.msra.mxu0 0.0
        %1137 = vmatpush.msra.mxu0 %v821
        %1138 = vmatpush.msra.mxu0 %v811
        %1139 = vmatpush.msra.mxu0 %v801
        %1140 = vmatpush.msra.mxu0 %v791
        %1141 = vmatpush.msra.mxu0 %v781
        %1142 = vmatmul.f32.gmra.mxu0 %v824
        %v1143 = vpop.f32.mrf.mxu0
        %v1144 = vadd.f32 0.0, %v1143
        %1145 = vmatmul.f32.gmra.mxu0 %v827
        %v1146 = vpop.f32.mrf.mxu0
        %v1147 = vadd.f32 0.0, %v1146
        %1148 = vmatmul.f32.gmra.mxu0 %v830
        %v1149 = vpop.f32.mrf.mxu0
        %v1150 = vadd.f32 0.0, %v1149
        %1151 = vmatmul.f32.gmra.mxu0 %v833
        %v1152 = vpop.f32.mrf.mxu0
        %v1153 = vadd.f32 0.0, %v1152
        %1154 = vmatmul.f32.gmra.mxu0 %v836
        %v1155 = vpop.f32.mrf.mxu0
        %v1156 = vadd.f32 0.0, %v1155
        %1157 = vdwg.mxu0
        %1159 = vset.pattern.permute.xlu0 0
        %1160 = vperm.xlu0 %1159, %v767
        %v1161 = vpop.permute.xlu0 %1160
        %1164 = vset.pattern.permute.xlu0 0
        %1165 = vperm.xlu0 %1164, %v768
        %v1166 = vpop.permute.xlu0 %1165
        %1169 = vset.pattern.permute.xlu0 0
        %1170 = vperm.xlu0 %1169, %v769
        %v1171 = vpop.permute.xlu0 %1170
        %1174 = vset.pattern.permute.xlu0 0
        %1175 = vperm.xlu0 %1174, %v770
        %v1176 = vpop.permute.xlu0 %1175
        %1179 = vset.pattern.permute.xlu0 0
        %1180 = vperm.xlu0 %1179, %v771
        %v1181 = vpop.permute.xlu0 %1180
        %v1183 = vadd.f32 %v856, %v1161
        %v1184 = vadd.f32 %v859, %v1166
        %v1185 = vadd.f32 %v862, %v1171
        %v1186 = vadd.f32 %v865, %v1176
        %v1187 = vadd.f32 %v868, %v1181
        %v1188 = vtanh.pop %v1183
        %v1189 = vtanh.pop %v1184
        %v1190 = vtanh.pop %v1185
        %v1191 = vtanh.pop %v1186
        %v1192 = vtanh.pop %v1187
        %v1193 = vmul.f32 %v1188, %v1188
        %v1194 = vmul.f32 %v1189, %v1189
        %v1195 = vmul.f32 %v1190, %v1190
        %v1196 = vmul.f32 %v1191, %v1191
        %v1197 = vmul.f32 %v1192, %v1192
        %v1198 = vsub.f32 1.0, %v1193
        %v1199 = vsub.f32 1.0, %v1194
        %v1200 = vsub.f32 1.0, %v1195
        %v1201 = vsub.f32 1.0, %v1196
        %v1202 = vsub.f32 1.0, %v1197
        %v1203 = vmul.f32 %v1188, %v1198
        %v1204 = vmul.f32 %v1189, %v1199
        %v1205 = vmul.f32 %v1190, %v1200
        %v1206 = vmul.f32 %v1191, %v1201
        %v1207 = vmul.f32 %v1192, %v1202
        %v1208 = vmul.f32 %v1203, -2.0
        %v1209 = vmul.f32 %v1204, -2.0
        %v1210 = vmul.f32 %v1205, -2.0
        %v1211 = vmul.f32 %v1206, -2.0
        %v1212 = vmul.f32 %v1207, -2.0
        %v1213 = vmul.f32 %v1198, 2.0
        %v1214 = vmul.f32 %v1199, 2.0
        %v1215 = vmul.f32 %v1200, 2.0
        %v1216 = vmul.f32 %v1201, 2.0
        %v1217 = vmul.f32 %v1202, 2.0
        %v1218 = vmul.f32 %v1193, 2.0
        %v1219 = vmul.f32 %v1194, 2.0
        %v1220 = vmul.f32 %v1195, 2.0
        %v1221 = vmul.f32 %v1196, 2.0
        %v1222 = vmul.f32 %v1197, 2.0
        %v1223 = vsub.f32 %v1218, %v1198
        %v1224 = vsub.f32 %v1219, %v1199
        %v1225 = vsub.f32 %v1220, %v1200
        %v1226 = vsub.f32 %v1221, %v1201
        %v1227 = vsub.f32 %v1222, %v1202
        %v1228 = vmul.f32 %v1213, %v1223
        %v1229 = vmul.f32 %v1214, %v1224
        %v1230 = vmul.f32 %v1215, %v1225
        %v1231 = vmul.f32 %v1216, %v1226
        %v1232 = vmul.f32 %v1217, %v1227
        %v1233 = vmul.f32 %v1208, %v888
        %v1234 = vmul.f32 %v1209, %v891
        %v1235 = vmul.f32 %v1210, %v894
        %v1236 = vmul.f32 %v1211, %v897
        %v1237 = vmul.f32 %v1212, %v900
        %v1238 = vmul.f32 %v1208, %v920
        %v1239 = vmul.f32 %v1209, %v923
        %v1240 = vmul.f32 %v1210, %v926
        %v1241 = vmul.f32 %v1211, %v929
        %v1242 = vmul.f32 %v1212, %v932
        %v1243 = vmul.f32 %v1228, %v888
        %v1244 = vmul.f32 %v1229, %v891
        %v1245 = vmul.f32 %v1230, %v894
        %v1246 = vmul.f32 %v1231, %v897
        %v1247 = vmul.f32 %v1232, %v900
        %v1248 = vmul.f32 %v888, %v888
        %v1249 = vmul.f32 %v891, %v891
        %v1250 = vmul.f32 %v894, %v894
        %v1251 = vmul.f32 %v897, %v897
        %v1252 = vmul.f32 %v900, %v900
        %v1253 = vmul.f32 %v920, %v920
        %v1254 = vmul.f32 %v923, %v923
        %v1255 = vmul.f32 %v926, %v926
        %v1256 = vmul.f32 %v929, %v929
        %v1257 = vmul.f32 %v932, %v932
        %v1258 = vmul.f32 %v888, %v920
        %v1259 = vmul.f32 %v891, %v923
        %v1260 = vmul.f32 %v894, %v926
        %v1261 = vmul.f32 %v897, %v929
        %v1262 = vmul.f32 %v900, %v932
        %1263 = vst [vmem:[#allocation3] sm:$0xff] %v1188
        %1264 = vst [vmem:[#allocation3 + $0x50] sm:$0xff] %v1189
        %1265 = vst [vmem:[#allocation3 + $0xa0] sm:$0xff] %v1190
        %1266 = vst [vmem:[#allocation3 + $0xf0] sm:$0xff] %v1191
        %1267 = vst [vmem:[#allocation3 + $0x140] sm:$0xff] %v1192
        %v1268 = vmul.f32 %v1198, %v888
        %v1269 = vmul.f32 %v1199, %v891
        %v1270 = vmul.f32 %v1200, %v894
        %v1271 = vmul.f32 %v1201, %v897
        %v1272 = vmul.f32 %v1202, %v900
        %1273 = vst [vmem:[#allocation3 + $0x8] sm:$0xff] %v1268
        %1274 = vst [vmem:[#allocation3 + $0x58] sm:$0xff] %v1269
        %1275 = vst [vmem:[#allocation3 + $0xa8] sm:$0xff] %v1270
        %1276 = vst [vmem:[#allocation3 + $0xf8] sm:$0xff] %v1271
        %1277 = vst [vmem:[#allocation3 + $0x148] sm:$0xff] %v1272
        %v1278 = vmul.f32 %v1198, %v920
        %v1279 = vmul.f32 %v1199, %v923
        %v1280 = vmul.f32 %v1200, %v926
        %v1281 = vmul.f32 %v1201, %v929
        %v1282 = vmul.f32 %v1202, %v932
        %1283 = vst [vmem:[#allocation3 + $0x10] sm:$0xff] %v1278
        %1284 = vst [vmem:[#allocation3 + $0x60] sm:$0xff] %v1279
        %1285 = vst [vmem:[#allocation3 + $0xb0] sm:$0xff] %v1280
        %1286 = vst [vmem:[#allocation3 + $0x100] sm:$0xff] %v1281
        %1287 = vst [vmem:[#allocation3 + $0x150] sm:$0xff] %v1282
        %v1288 = vmul.f32 %v1233, %v888
        %v1289 = vmul.f32 %v1234, %v891
        %v1290 = vmul.f32 %v1235, %v894
        %v1291 = vmul.f32 %v1236, %v897
        %v1292 = vmul.f32 %v1237, %v900
        %v1293 = vmul.f32 %v1198, %v952
        %v1294 = vmul.f32 %v1199, %v955
        %v1295 = vmul.f32 %v1200, %v958
        %v1296 = vmul.f32 %v1201, %v961
        %v1297 = vmul.f32 %v1202, %v964
        %v1298 = vadd.f32 %v1288, %v1293
        %v1299 = vadd.f32 %v1289, %v1294
        %v1300 = vadd.f32 %v1290, %v1295
        %v1301 = vadd.f32 %v1291, %v1296
        %v1302 = vadd.f32 %v1292, %v1297
        %1303 = vst [vmem:[#allocation3 + $0x18] sm:$0xff] %v1298
        %1304 = vst [vmem:[#allocation3 + $0x68] sm:$0xff] %v1299
        %1305 = vst [vmem:[#allocation3 + $0xb8] sm:$0xff] %v1300
        %1306 = vst [vmem:[#allocation3 + $0x108] sm:$0xff] %v1301
        %1307 = vst [vmem:[#allocation3 + $0x158] sm:$0xff] %v1302
        %v1308 = vmul.f32 %v1233, %v920
        %v1309 = vmul.f32 %v1234, %v923
        %v1310 = vmul.f32 %v1235, %v926
        %v1311 = vmul.f32 %v1236, %v929
        %v1312 = vmul.f32 %v1237, %v932
        %v1313 = vmul.f32 %v1198, %v984
        %v1314 = vmul.f32 %v1199, %v987
        %v1315 = vmul.f32 %v1200, %v990
        %v1316 = vmul.f32 %v1201, %v993
        %v1317 = vmul.f32 %v1202, %v996
        %v1318 = vadd.f32 %v1308, %v1313
        %v1319 = vadd.f32 %v1309, %v1314
        %v1320 = vadd.f32 %v1310, %v1315
        %v1321 = vadd.f32 %v1311, %v1316
        %v1322 = vadd.f32 %v1312, %v1317
        %1323 = vst [vmem:[#allocation3 + $0x20] sm:$0xff] %v1318
        %1324 = vst [vmem:[#allocation3 + $0x70] sm:$0xff] %v1319
        %1325 = vst [vmem:[#allocation3 + $0xc0] sm:$0xff] %v1320
        %1326 = vst [vmem:[#allocation3 + $0x110] sm:$0xff] %v1321
        %1327 = vst [vmem:[#allocation3 + $0x160] sm:$0xff] %v1322
        %v1328 = vmul.f32 %v1238, %v920
        %v1329 = vmul.f32 %v1239, %v923
        %v1330 = vmul.f32 %v1240, %v926
        %v1331 = vmul.f32 %v1241, %v929
        %v1332 = vmul.f32 %v1242, %v932
        %v1333 = vmul.f32 %v1198, %v1016
        %v1334 = vmul.f32 %v1199, %v1019
        %v1335 = vmul.f32 %v1200, %v1022
        %v1336 = vmul.f32 %v1201, %v1025
        %v1337 = vmul.f32 %v1202, %v1028
        %v1338 = vadd.f32 %v1328, %v1333
        %v1339 = vadd.f32 %v1329, %v1334
        %v1340 = vadd.f32 %v1330, %v1335
        %v1341 = vadd.f32 %v1331, %v1336
        %v1342 = vadd.f32 %v1332, %v1337
        %1343 = vst [vmem:[#allocation3 + $0x28] sm:$0xff] %v1338
        %1344 = vst [vmem:[#allocation3 + $0x78] sm:$0xff] %v1339
        %1345 = vst [vmem:[#allocation3 + $0xc8] sm:$0xff] %v1340
        %1346 = vst [vmem:[#allocation3 + $0x118] sm:$0xff] %v1341
        %1347 = vst [vmem:[#allocation3 + $0x168] sm:$0xff] %v1342
        %v1348 = vmul.f32 %v1243, %v1248
        %v1349 = vmul.f32 %v1244, %v1249
        %v1350 = vmul.f32 %v1245, %v1250
        %v1351 = vmul.f32 %v1246, %v1251
        %v1352 = vmul.f32 %v1247, %v1252
        %v1353 = vmul.f32 %v1233, %v952
        %v1354 = vmul.f32 %v1234, %v955
        %v1355 = vmul.f32 %v1235, %v958
        %v1356 = vmul.f32 %v1236, %v961
        %v1357 = vmul.f32 %v1237, %v964
        %v1358 = vmul.f32 %v1353, 3.0
        %v1359 = vmul.f32 %v1354, 3.0
        %v1360 = vmul.f32 %v1355, 3.0
        %v1361 = vmul.f32 %v1356, 3.0
        %v1362 = vmul.f32 %v1357, 3.0
        %v1363 = vadd.f32 %v1348, %v1358
        %v1364 = vadd.f32 %v1349, %v1359
        %v1365 = vadd.f32 %v1350, %v1360
        %v1366 = vadd.f32 %v1351, %v1361
        %v1367 = vadd.f32 %v1352, %v1362
        %v1368 = vmul.f32 %v1198, %v1048
        %v1369 = vmul.f32 %v1199, %v1051
        %v1370 = vmul.f32 %v1200, %v1054
        %v1371 = vmul.f32 %v1201, %v1057
        %v1372 = vmul.f32 %v1202, %v1060
        %v1373 = vadd.f32 %v1363, %v1368
        %v1374 = vadd.f32 %v1364, %v1369
        %v1375 = vadd.f32 %v1365, %v1370
        %v1376 = vadd.f32 %v1366, %v1371
        %v1377 = vadd.f32 %v1367, %v1372
        %1378 = vst [vmem:[#allocation3 + $0x30] sm:$0xff] %v1373
        %1379 = vst [vmem:[#allocation3 + $0x80] sm:$0xff] %v1374
        %1380 = vst [vmem:[#allocation3 + $0xd0] sm:$0xff] %v1375
        %1381 = vst [vmem:[#allocation3 + $0x120] sm:$0xff] %v1376
        %1382 = vst [vmem:[#allocation3 + $0x170] sm:$0xff] %v1377
        %v1383 = vmul.f32 %v1243, %v1258
        %v1384 = vmul.f32 %v1244, %v1259
        %v1385 = vmul.f32 %v1245, %v1260
        %v1386 = vmul.f32 %v1246, %v1261
        %v1387 = vmul.f32 %v1247, %v1262
        %v1388 = vmul.f32 %v1233, %v984
        %v1389 = vmul.f32 %v1234, %v987
        %v1390 = vmul.f32 %v1235, %v990
        %v1391 = vmul.f32 %v1236, %v993
        %v1392 = vmul.f32 %v1237, %v996
        %v1393 = vmul.f32 %v1388, 2.0
        %v1394 = vmul.f32 %v1389, 2.0
        %v1395 = vmul.f32 %v1390, 2.0
        %v1396 = vmul.f32 %v1391, 2.0
        %v1397 = vmul.f32 %v1392, 2.0
        %v1398 = vadd.f32 %v1383, %v1393
        %v1399 = vadd.f32 %v1384, %v1394
        %v1400 = vadd.f32 %v1385, %v1395
        %v1401 = vadd.f32 %v1386, %v1396
        %v1402 = vadd.f32 %v1387, %v1397
        %v1403 = vmul.f32 %v1238, %v952
        %v1404 = vmul.f32 %v1239, %v955
        %v1405 = vmul.f32 %v1240, %v958
        %v1406 = vmul.f32 %v1241, %v961
        %v1407 = vmul.f32 %v1242, %v964
        %v1408 = vadd.f32 %v1398, %v1403
        %v1409 = vadd.f32 %v1399, %v1404
        %v1410 = vadd.f32 %v1400, %v1405
        %v1411 = vadd.f32 %v1401, %v1406
        %v1412 = vadd.f32 %v1402, %v1407
        %v1413 = vmul.f32 %v1198, %v1080
        %v1414 = vmul.f32 %v1199, %v1083
        %v1415 = vmul.f32 %v1200, %v1086
        %v1416 = vmul.f32 %v1201, %v1089
        %v1417 = vmul.f32 %v1202, %v1092
        %v1418 = vadd.f32 %v1408, %v1413
        %v1419 = vadd.f32 %v1409, %v1414
        %v1420 = vadd.f32 %v1410, %v1415
        %v1421 = vadd.f32 %v1411, %v1416
        %v1422 = vadd.f32 %v1412, %v1417
        %1423 = vst [vmem:[#allocation3 + $0x38] sm:$0xff] %v1418
        %1424 = vst [vmem:[#allocation3 + $0x88] sm:$0xff] %v1419
        %1425 = vst [vmem:[#allocation3 + $0xd8] sm:$0xff] %v1420
        %1426 = vst [vmem:[#allocation3 + $0x128] sm:$0xff] %v1421
        %1427 = vst [vmem:[#allocation3 + $0x178] sm:$0xff] %v1422
        %v1428 = vmul.f32 %v1243, %v1253
        %v1429 = vmul.f32 %v1244, %v1254
        %v1430 = vmul.f32 %v1245, %v1255
        %v1431 = vmul.f32 %v1246, %v1256
        %v1432 = vmul.f32 %v1247, %v1257
        %v1433 = vmul.f32 %v1233, %v1016
        %v1434 = vmul.f32 %v1234, %v1019
        %v1435 = vmul.f32 %v1235, %v1022
        %v1436 = vmul.f32 %v1236, %v1025
        %v1437 = vmul.f32 %v1237, %v1028
        %v1438 = vadd.f32 %v1428, %v1433
        %v1439 = vadd.f32 %v1429, %v1434
        %v1440 = vadd.f32 %v1430, %v1435
        %v1441 = vadd.f32 %v1431, %v1436
        %v1442 = vadd.f32 %v1432, %v1437
        %v1443 = vmul.f32 %v1238, %v984
        %v1444 = vmul.f32 %v1239, %v987
        %v1445 = vmul.f32 %v1240, %v990
        %v1446 = vmul.f32 %v1241, %v993
        %v1447 = vmul.f32 %v1242, %v996
        %v1448 = vmul.f32 %v1443, 2.0
        %v1449 = vmul.f32 %v1444, 2.0
        %v1450 = vmul.f32 %v1445, 2.0
        %v1451 = vmul.f32 %v1446, 2.0
        %v1452 = vmul.f32 %v1447, 2.0
        %v1453 = vadd.f32 %v1438, %v1448
        %v1454 = vadd.f32 %v1439, %v1449
        %v1455 = vadd.f32 %v1440, %v1450
        %v1456 = vadd.f32 %v1441, %v1451
        %v1457 = vadd.f32 %v1442, %v1452
        %v1458 = vmul.f32 %v1198, %v1112
        %v1459 = vmul.f32 %v1199, %v1115
        %v1460 = vmul.f32 %v1200, %v1118
        %v1461 = vmul.f32 %v1201, %v1121
        %v1462 = vmul.f32 %v1202, %v1124
        %v1463 = vadd.f32 %v1453, %v1458
        %v1464 = vadd.f32 %v1454, %v1459
        %v1465 = vadd.f32 %v1455, %v1460
        %v1466 = vadd.f32 %v1456, %v1461
        %v1467 = vadd.f32 %v1457, %v1462
        %1468 = vst [vmem:[#allocation3 + $0x40] sm:$0xff] %v1463
        %1469 = vst [vmem:[#allocation3 + $0x90] sm:$0xff] %v1464
        %1470 = vst [vmem:[#allocation3 + $0xe0] sm:$0xff] %v1465
        %1471 = vst [vmem:[#allocation3 + $0x130] sm:$0xff] %v1466
        %1472 = vst [vmem:[#allocation3 + $0x180] sm:$0xff] %v1467
        %v1473 = vmul.f32 %v1253, %v920
        %v1474 = vmul.f32 %v1254, %v923
        %v1475 = vmul.f32 %v1255, %v926
        %v1476 = vmul.f32 %v1256, %v929
        %v1477 = vmul.f32 %v1257, %v932
        %v1478 = vmul.f32 %v1228, %v1473
        %v1479 = vmul.f32 %v1229, %v1474
        %v1480 = vmul.f32 %v1230, %v1475
        %v1481 = vmul.f32 %v1231, %v1476
        %v1482 = vmul.f32 %v1232, %v1477
        %v1483 = vmul.f32 %v1238, %v1016
        %v1484 = vmul.f32 %v1239, %v1019
        %v1485 = vmul.f32 %v1240, %v1022
        %v1486 = vmul.f32 %v1241, %v1025
        %v1487 = vmul.f32 %v1242, %v1028
        %v1488 = vmul.f32 %v1483, 3.0
        %v1489 = vmul.f32 %v1484, 3.0
        %v1490 = vmul.f32 %v1485, 3.0
        %v1491 = vmul.f32 %v1486, 3.0
        %v1492 = vmul.f32 %v1487, 3.0
        %v1493 = vadd.f32 %v1478, %v1488
        %v1494 = vadd.f32 %v1479, %v1489
        %v1495 = vadd.f32 %v1480, %v1490
        %v1496 = vadd.f32 %v1481, %v1491
        %v1497 = vadd.f32 %v1482, %v1492
        %v1498 = vmul.f32 %v1198, %v1144
        %v1499 = vmul.f32 %v1199, %v1147
        %v1500 = vmul.f32 %v1200, %v1150
        %v1501 = vmul.f32 %v1201, %v1153
        %v1502 = vmul.f32 %v1202, %v1156
        %v1503 = vadd.f32 %v1493, %v1498
        %v1504 = vadd.f32 %v1494, %v1499
        %v1505 = vadd.f32 %v1495, %v1500
        %v1506 = vadd.f32 %v1496, %v1501
        %v1507 = vadd.f32 %v1497, %v1502
        %1508 = vst [vmem:[#allocation3 + $0x48] sm:$0xff] %v1503
        %1509 = vst [vmem:[#allocation3 + $0x98] sm:$0xff] %v1504
        %1510 = vst [vmem:[#allocation3 + $0xe8] sm:$0xff] %v1505
        %1511 = vst [vmem:[#allocation3 + $0x138] sm:$0xff] %v1506
        %1512 = vst [vmem:[#allocation3 + $0x188] sm:$0xff] %v1507
        %s1513 = scalar_lea.vmem %s3, 40
        %v1514 = vld [vmem:[%s1513] sm:$0xff]
        %v1515 = vld [vmem:[%s1513 + $0x8] sm:$0xff]
        %v1516 = vld [vmem:[%s1513 + $0x10] sm:$0xff]
        %v1517 = vld [vmem:[%s1513 + $0x18] sm:$0xff]
        %v1518 = vld [vmem:[%s1513 + $0x20] sm:$0xff]
        %s1519 = scalar_lea.vmem %s4, 40
        %v1520 = vld [vmem:[%s1519] sm:$0xff]
        %v1521 = vld [vmem:[%s1519 + $0x8] sm:$0xff]
        %v1522 = vld [vmem:[%s1519 + $0x10] sm:$0xff]
        %v1523 = vld [vmem:[%s1519 + $0x18] sm:$0xff]
        %v1524 = vld [vmem:[%s1519 + $0x20] sm:$0xff]
        %v1525 = vld [vmem:[#allocation3] sm:$0xff]
        %v1526 = vld [vmem:[#allocation3 + $0x8] sm:$0xff]
        %v1527 = vld [vmem:[#allocation3 + $0x10] sm:$0xff]
        %v1528 = vld [vmem:[#allocation3 + $0x18] sm:$0xff]
        %v1529 = vld [vmem:[#allocation3 + $0x20] sm:$0xff]
        %v1530 = vld [vmem:[#allocation3 + $0x28] sm:$0xff]
        %v1531 = vld [vmem:[#allocation3 + $0x30] sm:$0xff]
        %v1532 = vld [vmem:[#allocation3 + $0x38] sm:$0xff]
        %v1533 = vld [vmem:[#allocation3 + $0x40] sm:$0xff]
        %v1534 = vld [vmem:[#allocation3 + $0x48] sm:$0xff]
        %v1535 = vld [vmem:[#allocation3 + $0x50] sm:$0xff]
        %v1536 = vld [vmem:[#allocation3 + $0x58] sm:$0xff]
        %v1537 = vld [vmem:[#allocation3 + $0x60] sm:$0xff]
        %v1538 = vld [vmem:[#allocation3 + $0x68] sm:$0xff]
        %v1539 = vld [vmem:[#allocation3 + $0x70] sm:$0xff]
        %v1540 = vld [vmem:[#allocation3 + $0x78] sm:$0xff]
        %v1541 = vld [vmem:[#allocation3 + $0x80] sm:$0xff]
        %v1542 = vld [vmem:[#allocation3 + $0x88] sm:$0xff]
        %v1543 = vld [vmem:[#allocation3 + $0x90] sm:$0xff]
        %v1544 = vld [vmem:[#allocation3 + $0x98] sm:$0xff]
        %v1545 = vld [vmem:[#allocation3 + $0xa0] sm:$0xff]
        %v1546 = vld [vmem:[#allocation3 + $0xa8] sm:$0xff]
        %v1547 = vld [vmem:[#allocation3 + $0xb0] sm:$0xff]
        %v1548 = vld [vmem:[#allocation3 + $0xb8] sm:$0xff]
        %v1549 = vld [vmem:[#allocation3 + $0xc0] sm:$0xff]
        %v1550 = vld [vmem:[#allocation3 + $0xc8] sm:$0xff]
        %v1551 = vld [vmem:[#allocation3 + $0xd0] sm:$0xff]
        %v1552 = vld [vmem:[#allocation3 + $0xd8] sm:$0xff]
        %v1553 = vld [vmem:[#allocation3 + $0xe0] sm:$0xff]
        %v1554 = vld [vmem:[#allocation3 + $0xe8] sm:$0xff]
        %v1555 = vld [vmem:[#allocation3 + $0xf0] sm:$0xff]
        %v1556 = vld [vmem:[#allocation3 + $0xf8] sm:$0xff]
        %v1557 = vld [vmem:[#allocation3 + $0x100] sm:$0xff]
        %v1558 = vld [vmem:[#allocation3 + $0x108] sm:$0xff]
        %v1559 = vld [vmem:[#allocation3 + $0x110] sm:$0xff]
        %v1560 = vld [vmem:[#allocation3 + $0x118] sm:$0xff]
        %v1561 = vld [vmem:[#allocation3 + $0x120] sm:$0xff]
        %v1562 = vld [vmem:[#allocation3 + $0x128] sm:$0xff]
        %v1563 = vld [vmem:[#allocation3 + $0x130] sm:$0xff]
        %v1564 = vld [vmem:[#allocation3 + $0x138] sm:$0xff]
        %v1565 = vld [vmem:[#allocation3 + $0x140] sm:$0xff]
        %v1566 = vld [vmem:[#allocation3 + $0x148] sm:$0xff]
        %v1567 = vld [vmem:[#allocation3 + $0x150] sm:$0xff]
        %v1568 = vld [vmem:[#allocation3 + $0x158] sm:$0xff]
        %v1569 = vld [vmem:[#allocation3 + $0x160] sm:$0xff]
        %v1570 = vld [vmem:[#allocation3 + $0x168] sm:$0xff]
        %v1571 = vld [vmem:[#allocation3 + $0x170] sm:$0xff]
        %v1572 = vld [vmem:[#allocation3 + $0x178] sm:$0xff]
        %v1573 = vld [vmem:[#allocation3 + $0x180] sm:$0xff]
        %v1574 = vld [vmem:[#allocation3 + $0x188] sm:$0xff]
        %v1576 = vsel %vm822, %v1514, 0
        %v1579 = vsel %vm822, %v1515, 0
        %v1582 = vsel %vm822, %v1516, 0
        %v1585 = vsel %vm822, %v1517, 0
        %v1588 = vsel %vm822, %v1518, 0
        %1590 = vmatpush.msra.mxu0 0.0
        %1591 = vmatpush.msra.mxu0 0.0
        %1592 = vmatpush.msra.mxu0 0.0
        %1593 = vmatpush.msra.mxu0 0.0
        %1594 = vmatpush.msra.mxu0 0.0
        %1595 = vmatpush.msra.mxu0 0.0
        %1596 = vmatpush.msra.mxu0 0.0
        %1597 = vmatpush.msra.mxu0 0.0
        %1598 = vmatpush.msra.mxu0 0.0
        %1599 = vmatpush.msra.mxu0 0.0
        %1600 = vmatpush.msra.mxu0 0.0
        %1601 = vmatpush.msra.mxu0 %v1565
        %1602 = vmatpush.msra.mxu0 %v1555
        %1603 = vmatpush.msra.mxu0 %v1545
        %1604 = vmatpush.msra.mxu0 %v1535
        %1605 = vmatpush.msra.mxu0 %v1525
        %1606 = vmatmul.f32.gmra.mxu0 %v1576
        %v1607 = vpop.f32.mrf.mxu0
        %v1608 = vadd.f32 0.0, %v1607
        %1609 = vmatmul.f32.gmra.mxu0 %v1579
        %v1610 = vpop.f32.mrf.mxu0
        %v1611 = vadd.f32 0.0, %v1610
        %1612 = vmatmul.f32.gmra.mxu0 %v1582
        %v1613 = vpop.f32.mrf.mxu0
        %v1614 = vadd.f32 0.0, %v1613
        %1615 = vmatmul.f32.gmra.mxu0 %v1585
        %v1616 = vpop.f32.mrf.mxu0
        %v1617 = vadd.f32 0.0, %v1616
        %1618 = vmatmul.f32.gmra.mxu0 %v1588
        %v1619 = vpop.f32.mrf.mxu0
        %v1620 = vadd.f32 0.0, %v1619
        %1621 = vdwg.mxu0
        %1622 = vmatpush.msra.mxu0 0.0
        %1623 = vmatpush.msra.mxu0 0.0
        %1624 = vmatpush.msra.mxu0 0.0
        %1625 = vmatpush.msra.mxu0 0.0
        %1626 = vmatpush.msra.mxu0 0.0
        %1627 = vmatpush.msra.mxu0 0.0
        %1628 = vmatpush.msra.mxu0 0.0
        %1629 = vmatpush.msra.mxu0 0.0
        %1630 = vmatpush.msra.mxu0 0.0
        %1631 = vmatpush.msra.mxu0 0.0
        %1632 = vmatpush.msra.mxu0 0.0
        %1633 = vmatpush.msra.mxu0 %v1566
        %1634 = vmatpush.msra.mxu0 %v1556
        %1635 = vmatpush.msra.mxu0 %v1546
        %1636 = vmatpush.msra.mxu0 %v1536
        %1637 = vmatpush.msra.mxu0 %v1526
        %1638 = vmatmul.f32.gmra.mxu0 %v1576
        %v1639 = vpop.f32.mrf.mxu0
        %v1640 = vadd.f32 0.0, %v1639
        %1641 = vmatmul.f32.gmra.mxu0 %v1579
        %v1642 = vpop.f32.mrf.mxu0
        %v1643 = vadd.f32 0.0, %v1642
        %1644 = vmatmul.f32.gmra.mxu0 %v1582
        %v1645 = vpop.f32.mrf.mxu0
        %v1646 = vadd.f32 0.0, %v1645
        %1647 = vmatmul.f32.gmra.mxu0 %v1585
        %v1648 = vpop.f32.mrf.mxu0
        %v1649 = vadd.f32 0.0, %v1648
        %1650 = vmatmul.f32.gmra.mxu0 %v1588
        %v1651 = vpop.f32.mrf.mxu0
        %v1652 = vadd.f32 0.0, %v1651
        %1653 = vdwg.mxu0
        %1654 = vmatpush.msra.mxu0 0.0
        %1655 = vmatpush.msra.mxu0 0.0
        %1656 = vmatpush.msra.mxu0 0.0
        %1657 = vmatpush.msra.mxu0 0.0
        %1658 = vmatpush.msra.mxu0 0.0
        %1659 = vmatpush.msra.mxu0 0.0
        %1660 = vmatpush.msra.mxu0 0.0
        %1661 = vmatpush.msra.mxu0 0.0
        %1662 = vmatpush.msra.mxu0 0.0
        %1663 = vmatpush.msra.mxu0 0.0
        %1664 = vmatpush.msra.mxu0 0.0
        %1665 = vmatpush.msra.mxu0 %v1567
        %1666 = vmatpush.msra.mxu0 %v1557
        %1667 = vmatpush.msra.mxu0 %v1547
        %1668 = vmatpush.msra.mxu0 %v1537
        %1669 = vmatpush.msra.mxu0 %v1527
        %1670 = vmatmul.f32.gmra.mxu0 %v1576
        %v1671 = vpop.f32.mrf.mxu0
        %v1672 = vadd.f32 0.0, %v1671
        %1673 = vmatmul.f32.gmra.mxu0 %v1579
        %v1674 = vpop.f32.mrf.mxu0
        %v1675 = vadd.f32 0.0, %v1674
        %1676 = vmatmul.f32.gmra.mxu0 %v1582
        %v1677 = vpop.f32.mrf.mxu0
        %v1678 = vadd.f32 0.0, %v1677
        %1679 = vmatmul.f32.gmra.mxu0 %v1585
        %v1680 = vpop.f32.mrf.mxu0
        %v1681 = vadd.f32 0.0, %v1680
        %1682 = vmatmul.f32.gmra.mxu0 %v1588
        %v1683 = vpop.f32.mrf.mxu0
        %v1684 = vadd.f32 0.0, %v1683
        %1685 = vdwg.mxu0
        %1686 = vmatpush.msra.mxu0 0.0
        %1687 = vmatpush.msra.mxu0 0.0
        %1688 = vmatpush.msra.mxu0 0.0
        %1689 = vmatpush.msra.mxu0 0.0
        %1690 = vmatpush.msra.mxu0 0.0
        %1691 = vmatpush.msra.mxu0 0.0
        %1692 = vmatpush.msra.mxu0 0.0
        %1693 = vmatpush.msra.mxu0 0.0
        %1694 = vmatpush.msra.mxu0 0.0
        %1695 = vmatpush.msra.mxu0 0.0
        %1696 = vmatpush.msra.mxu0 0.0
        %1697 = vmatpush.msra.mxu0 %v1568
        %1698 = vmatpush.msra.mxu0 %v1558
        %1699 = vmatpush.msra.mxu0 %v1548
        %1700 = vmatpush.msra.mxu0 %v1538
        %1701 = vmatpush.msra.mxu0 %v1528
        %1702 = vmatmul.f32.gmra.mxu0 %v1576
        %v1703 = vpop.f32.mrf.mxu0
        %v1704 = vadd.f32 0.0, %v1703
        %1705 = vmatmul.f32.gmra.mxu0 %v1579
        %v1706 = vpop.f32.mrf.mxu0
        %v1707 = vadd.f32 0.0, %v1706
        %1708 = vmatmul.f32.gmra.mxu0 %v1582
        %v1709 = vpop.f32.mrf.mxu0
        %v1710 = vadd.f32 0.0, %v1709
        %1711 = vmatmul.f32.gmra.mxu0 %v1585
        %v1712 = vpop.f32.mrf.mxu0
        %v1713 = vadd.f32 0.0, %v1712
        %1714 = vmatmul.f32.gmra.mxu0 %v1588
        %v1715 = vpop.f32.mrf.mxu0
        %v1716 = vadd.f32 0.0, %v1715
        %1717 = vdwg.mxu0
        %1718 = vmatpush.msra.mxu0 0.0
        %1719 = vmatpush.msra.mxu0 0.0
        %1720 = vmatpush.msra.mxu0 0.0
        %1721 = vmatpush.msra.mxu0 0.0
        %1722 = vmatpush.msra.mxu0 0.0
        %1723 = vmatpush.msra.mxu0 0.0
        %1724 = vmatpush.msra.mxu0 0.0
        %1725 = vmatpush.msra.mxu0 0.0
        %1726 = vmatpush.msra.mxu0 0.0
        %1727 = vmatpush.msra.mxu0 0.0
        %1728 = vmatpush.msra.mxu0 0.0
        %1729 = vmatpush.msra.mxu0 %v1569
        %1730 = vmatpush.msra.mxu0 %v1559
        %1731 = vmatpush.msra.mxu0 %v1549
        %1732 = vmatpush.msra.mxu0 %v1539
        %1733 = vmatpush.msra.mxu0 %v1529
        %1734 = vmatmul.f32.gmra.mxu0 %v1576
        %v1735 = vpop.f32.mrf.mxu0
        %v1736 = vadd.f32 0.0, %v1735
        %1737 = vmatmul.f32.gmra.mxu0 %v1579
        %v1738 = vpop.f32.mrf.mxu0
        %v1739 = vadd.f32 0.0, %v1738
        %1740 = vmatmul.f32.gmra.mxu0 %v1582
        %v1741 = vpop.f32.mrf.mxu0
        %v1742 = vadd.f32 0.0, %v1741
        %1743 = vmatmul.f32.gmra.mxu0 %v1585
        %v1744 = vpop.f32.mrf.mxu0
        %v1745 = vadd.f32 0.0, %v1744
        %1746 = vmatmul.f32.gmra.mxu0 %v1588
        %v1747 = vpop.f32.mrf.mxu0
        %v1748 = vadd.f32 0.0, %v1747
        %1749 = vdwg.mxu0
        %1750 = vmatpush.msra.mxu0 0.0
        %1751 = vmatpush.msra.mxu0 0.0
        %1752 = vmatpush.msra.mxu0 0.0
        %1753 = vmatpush.msra.mxu0 0.0
        %1754 = vmatpush.msra.mxu0 0.0
        %1755 = vmatpush.msra.mxu0 0.0
        %1756 = vmatpush.msra.mxu0 0.0
        %1757 = vmatpush.msra.mxu0 0.0
        %1758 = vmatpush.msra.mxu0 0.0
        %1759 = vmatpush.msra.mxu0 0.0
        %1760 = vmatpush.msra.mxu0 0.0
        %1761 = vmatpush.msra.mxu0 %v1570
        %1762 = vmatpush.msra.mxu0 %v1560
        %1763 = vmatpush.msra.mxu0 %v1550
        %1764 = vmatpush.msra.mxu0 %v1540
        %1765 = vmatpush.msra.mxu0 %v1530
        %1766 = vmatmul.f32.gmra.mxu0 %v1576
        %v1767 = vpop.f32.mrf.mxu0
        %v1768 = vadd.f32 0.0, %v1767
        %1769 = vmatmul.f32.gmra.mxu0 %v1579
        %v1770 = vpop.f32.mrf.mxu0
        %v1771 = vadd.f32 0.0, %v1770
        %1772 = vmatmul.f32.gmra.mxu0 %v1582
        %v1773 = vpop.f32.mrf.mxu0
        %v1774 = vadd.f32 0.0, %v1773
        %1775 = vmatmul.f32.gmra.mxu0 %v1585
        %v1776 = vpop.f32.mrf.mxu0
        %v1777 = vadd.f32 0.0, %v1776
        %1778 = vmatmul.f32.gmra.mxu0 %v1588
        %v1779 = vpop.f32.mrf.mxu0
        %v1780 = vadd.f32 0.0, %v1779
        %1781 = vdwg.mxu0
        %1782 = vmatpush.msra.mxu0 0.0
        %1783 = vmatpush.msra.mxu0 0.0
        %1784 = vmatpush.msra.mxu0 0.0
        %1785 = vmatpush.msra.mxu0 0.0
        %1786 = vmatpush.msra.mxu0 0.0
        %1787 = vmatpush.msra.mxu0 0.0
        %1788 = vmatpush.msra.mxu0 0.0
        %1789 = vmatpush.msra.mxu0 0.0
        %1790 = vmatpush.msra.mxu0 0.0
        %1791 = vmatpush.msra.mxu0 0.0
        %1792 = vmatpush.msra.mxu0 0.0
        %1793 = vmatpush.msra.mxu0 %v1571
        %1794 = vmatpush.msra.mxu0 %v1561
        %1795 = vmatpush.msra.mxu0 %v1551
        %1796 = vmatpush.msra.mxu0 %v1541
        %1797 = vmatpush.msra.mxu0 %v1531
        %1798 = vmatmul.f32.gmra.mxu0 %v1576
        %v1799 = vpop.f32.mrf.mxu0
        %v1800 = vadd.f32 0.0, %v1799
        %1801 = vmatmul.f32.gmra.mxu0 %v1579
        %v1802 = vpop.f32.mrf.mxu0
        %v1803 = vadd.f32 0.0, %v1802
        %1804 = vmatmul.f32.gmra.mxu0 %v1582
        %v1805 = vpop.f32.mrf.mxu0
        %v1806 = vadd.f32 0.0, %v1805
        %1807 = vmatmul.f32.gmra.mxu0 %v1585
        %v1808 = vpop.f32.mrf.mxu0
        %v1809 = vadd.f32 0.0, %v1808
        %1810 = vmatmul.f32.gmra.mxu0 %v1588
        %v1811 = vpop.f32.mrf.mxu0
        %v1812 = vadd.f32 0.0, %v1811
        %1813 = vdwg.mxu0
        %1814 = vmatpush.msra.mxu0 0.0
        %1815 = vmatpush.msra.mxu0 0.0
        %1816 = vmatpush.msra.mxu0 0.0
        %1817 = vmatpush.msra.mxu0 0.0
        %1818 = vmatpush.msra.mxu0 0.0
        %1819 = vmatpush.msra.mxu0 0.0
        %1820 = vmatpush.msra.mxu0 0.0
        %1821 = vmatpush.msra.mxu0 0.0
        %1822 = vmatpush.msra.mxu0 0.0
        %1823 = vmatpush.msra.mxu0 0.0
        %1824 = vmatpush.msra.mxu0 0.0
        %1825 = vmatpush.msra.mxu0 %v1572
        %1826 = vmatpush.msra.mxu0 %v1562
        %1827 = vmatpush.msra.mxu0 %v1552
        %1828 = vmatpush.msra.mxu0 %v1542
        %1829 = vmatpush.msra.mxu0 %v1532
        %1830 = vmatmul.f32.gmra.mxu0 %v1576
        %v1831 = vpop.f32.mrf.mxu0
        %v1832 = vadd.f32 0.0, %v1831
        %1833 = vmatmul.f32.gmra.mxu0 %v1579
        %v1834 = vpop.f32.mrf.mxu0
        %v1835 = vadd.f32 0.0, %v1834
        %1836 = vmatmul.f32.gmra.mxu0 %v1582
        %v1837 = vpop.f32.mrf.mxu0
        %v1838 = vadd.f32 0.0, %v1837
        %1839 = vmatmul.f32.gmra.mxu0 %v1585
        %v1840 = vpop.f32.mrf.mxu0
        %v1841 = vadd.f32 0.0, %v1840
        %1842 = vmatmul.f32.gmra.mxu0 %v1588
        %v1843 = vpop.f32.mrf.mxu0
        %v1844 = vadd.f32 0.0, %v1843
        %1845 = vdwg.mxu0
        %1846 = vmatpush.msra.mxu0 0.0
        %1847 = vmatpush.msra.mxu0 0.0
        %1848 = vmatpush.msra.mxu0 0.0
        %1849 = vmatpush.msra.mxu0 0.0
        %1850 = vmatpush.msra.mxu0 0.0
        %1851 = vmatpush.msra.mxu0 0.0
        %1852 = vmatpush.msra.mxu0 0.0
        %1853 = vmatpush.msra.mxu0 0.0
        %1854 = vmatpush.msra.mxu0 0.0
        %1855 = vmatpush.msra.mxu0 0.0
        %1856 = vmatpush.msra.mxu0 0.0
        %1857 = vmatpush.msra.mxu0 %v1573
        %1858 = vmatpush.msra.mxu0 %v1563
        %1859 = vmatpush.msra.mxu0 %v1553
        %1860 = vmatpush.msra.mxu0 %v1543
        %1861 = vmatpush.msra.mxu0 %v1533
        %1862 = vmatmul.f32.gmra.mxu0 %v1576
        %v1863 = vpop.f32.mrf.mxu0
        %v1864 = vadd.f32 0.0, %v1863
        %1865 = vmatmul.f32.gmra.mxu0 %v1579
        %v1866 = vpop.f32.mrf.mxu0
        %v1867 = vadd.f32 0.0, %v1866
        %1868 = vmatmul.f32.gmra.mxu0 %v1582
        %v1869 = vpop.f32.mrf.mxu0
        %v1870 = vadd.f32 0.0, %v1869
        %1871 = vmatmul.f32.gmra.mxu0 %v1585
        %v1872 = vpop.f32.mrf.mxu0
        %v1873 = vadd.f32 0.0, %v1872
        %1874 = vmatmul.f32.gmra.mxu0 %v1588
        %v1875 = vpop.f32.mrf.mxu0
        %v1876 = vadd.f32 0.0, %v1875
        %1877 = vdwg.mxu0
        %1878 = vmatpush.msra.mxu0 0.0
        %1879 = vmatpush.msra.mxu0 0.0
        %1880 = vmatpush.msra.mxu0 0.0
        %1881 = vmatpush.msra.mxu0 0.0
        %1882 = vmatpush.msra.mxu0 0.0
        %1883 = vmatpush.msra.mxu0 0.0
        %1884 = vmatpush.msra.mxu0 0.0
        %1885 = vmatpush.msra.mxu0 0.0
        %1886 = vmatpush.msra.mxu0 0.0
        %1887 = vmatpush.msra.mxu0 0.0
        %1888 = vmatpush.msra.mxu0 0.0
        %1889 = vmatpush.msra.mxu0 %v1574
        %1890 = vmatpush.msra.mxu0 %v1564
        %1891 = vmatpush.msra.mxu0 %v1554
        %1892 = vmatpush.msra.mxu0 %v1544
        %1893 = vmatpush.msra.mxu0 %v1534
        %1894 = vmatmul.f32.gmra.mxu0 %v1576
        %v1895 = vpop.f32.mrf.mxu0
        %v1896 = vadd.f32 0.0, %v1895
        %1897 = vmatmul.f32.gmra.mxu0 %v1579
        %v1898 = vpop.f32.mrf.mxu0
        %v1899 = vadd.f32 0.0, %v1898
        %1900 = vmatmul.f32.gmra.mxu0 %v1582
        %v1901 = vpop.f32.mrf.mxu0
        %v1902 = vadd.f32 0.0, %v1901
        %1903 = vmatmul.f32.gmra.mxu0 %v1585
        %v1904 = vpop.f32.mrf.mxu0
        %v1905 = vadd.f32 0.0, %v1904
        %1906 = vmatmul.f32.gmra.mxu0 %v1588
        %v1907 = vpop.f32.mrf.mxu0
        %v1908 = vadd.f32 0.0, %v1907
        %1909 = vdwg.mxu0
        %1911 = vset.pattern.permute.xlu0 0
        %1912 = vperm.xlu0 %1911, %v1520
        %v1913 = vpop.permute.xlu0 %1912
        %1916 = vset.pattern.permute.xlu0 0
        %1917 = vperm.xlu0 %1916, %v1521
        %v1918 = vpop.permute.xlu0 %1917
        %1921 = vset.pattern.permute.xlu0 0
        %1922 = vperm.xlu0 %1921, %v1522
        %v1923 = vpop.permute.xlu0 %1922
        %1926 = vset.pattern.permute.xlu0 0
        %1927 = vperm.xlu0 %1926, %v1523
        %v1928 = vpop.permute.xlu0 %1927
        %1931 = vset.pattern.permute.xlu0 0
        %1932 = vperm.xlu0 %1931, %v1524
        %v1933 = vpop.permute.xlu0 %1932
        %v1935 = vadd.f32 %v1608, %v1913
        %v1936 = vadd.f32 %v1611, %v1918
        %v1937 = vadd.f32 %v1614, %v1923
        %v1938 = vadd.f32 %v1617, %v1928
        %v1939 = vadd.f32 %v1620, %v1933
        %v1940 = vtanh.pop %v1935
        %v1941 = vtanh.pop %v1936
        %v1942 = vtanh.pop %v1937
        %v1943 = vtanh.pop %v1938
        %v1944 = vtanh.pop %v1939
        %v1945 = vmul.f32 %v1940, %v1940
        %v1946 = vmul.f32 %v1941, %v1941
        %v1947 = vmul.f32 %v1942, %v1942
        %v1948 = vmul.f32 %v1943, %v1943
        %v1949 = vmul.f32 %v1944, %v1944
        %v1950 = vsub.f32 1.0, %v1945
        %v1951 = vsub.f32 1.0, %v1946
        %v1952 = vsub.f32 1.0, %v1947
        %v1953 = vsub.f32 1.0, %v1948
        %v1954 = vsub.f32 1.0, %v1949
        %v1955 = vmul.f32 %v1940, %v1950
        %v1956 = vmul.f32 %v1941, %v1951
        %v1957 = vmul.f32 %v1942, %v1952
        %v1958 = vmul.f32 %v1943, %v1953
        %v1959 = vmul.f32 %v1944, %v1954
        %v1960 = vmul.f32 %v1955, -2.0
        %v1961 = vmul.f32 %v1956, -2.0
        %v1962 = vmul.f32 %v1957, -2.0
        %v1963 = vmul.f32 %v1958, -2.0
        %v1964 = vmul.f32 %v1959, -2.0
        %v1965 = vmul.f32 %v1950, 2.0
        %v1966 = vmul.f32 %v1951, 2.0
        %v1967 = vmul.f32 %v1952, 2.0
        %v1968 = vmul.f32 %v1953, 2.0
        %v1969 = vmul.f32 %v1954, 2.0
        %v1970 = vmul.f32 %v1945, 2.0
        %v1971 = vmul.f32 %v1946, 2.0
        %v1972 = vmul.f32 %v1947, 2.0
        %v1973 = vmul.f32 %v1948, 2.0
        %v1974 = vmul.f32 %v1949, 2.0
        %v1975 = vsub.f32 %v1970, %v1950
        %v1976 = vsub.f32 %v1971, %v1951
        %v1977 = vsub.f32 %v1972, %v1952
        %v1978 = vsub.f32 %v1973, %v1953
        %v1979 = vsub.f32 %v1974, %v1954
        %v1980 = vmul.f32 %v1965, %v1975
        %v1981 = vmul.f32 %v1966, %v1976
        %v1982 = vmul.f32 %v1967, %v1977
        %v1983 = vmul.f32 %v1968, %v1978
        %v1984 = vmul.f32 %v1969, %v1979
        %v1985 = vmul.f32 %v1960, %v1640
        %v1986 = vmul.f32 %v1961, %v1643
        %v1987 = vmul.f32 %v1962, %v1646
        %v1988 = vmul.f32 %v1963, %v1649
        %v1989 = vmul.f32 %v1964, %v1652
        %v1990 = vmul.f32 %v1960, %v1672
        %v1991 = vmul.f32 %v1961, %v1675
        %v1992 = vmul.f32 %v1962, %v1678
        %v1993 = vmul.f32 %v1963, %v1681
        %v1994 = vmul.f32 %v1964, %v1684
        %v1995 = vmul.f32 %v1980, %v1640
        %v1996 = vmul.f32 %v1981, %v1643
        %v1997 = vmul.f32 %v1982, %v1646
        %v1998 = vmul.f32 %v1983, %v1649
        %v1999 = vmul.f32 %v1984, %v1652
        %v2000 = vmul.f32 %v1640, %v1640
        %v2001 = vmul.f32 %v1643, %v1643
        %v2002 = vmul.f32 %v1646, %v1646
        %v2003 = vmul.f32 %v1649, %v1649
        %v2004 = vmul.f32 %v1652, %v1652
        %v2005 = vmul.f32 %v1672, %v1672
        %v2006 = vmul.f32 %v1675, %v1675
        %v2007 = vmul.f32 %v1678, %v1678
        %v2008 = vmul.f32 %v1681, %v1681
        %v2009 = vmul.f32 %v1684, %v1684
        %v2010 = vmul.f32 %v1640, %v1672
        %v2011 = vmul.f32 %v1643, %v1675
        %v2012 = vmul.f32 %v1646, %v1678
        %v2013 = vmul.f32 %v1649, %v1681
        %v2014 = vmul.f32 %v1652, %v1684
        %2015 = vst [vmem:[#allocation2] sm:$0xff] %v1940
        %2016 = vst [vmem:[#allocation2 + $0x50] sm:$0xff] %v1941
        %2017 = vst [vmem:[#allocation2 + $0xa0] sm:$0xff] %v1942
        %2018 = vst [vmem:[#allocation2 + $0xf0] sm:$0xff] %v1943
        %2019 = vst [vmem:[#allocation2 + $0x140] sm:$0xff] %v1944
        %v2020 = vmul.f32 %v1950, %v1640
        %v2021 = vmul.f32 %v1951, %v1643
        %v2022 = vmul.f32 %v1952, %v1646
        %v2023 = vmul.f32 %v1953, %v1649
        %v2024 = vmul.f32 %v1954, %v1652
        %2025 = vst [vmem:[#allocation2 + $0x8] sm:$0xff] %v2020
        %2026 = vst [vmem:[#allocation2 + $0x58] sm:$0xff] %v2021
        %2027 = vst [vmem:[#allocation2 + $0xa8] sm:$0xff] %v2022
        %2028 = vst [vmem:[#allocation2 + $0xf8] sm:$0xff] %v2023
        %2029 = vst [vmem:[#allocation2 + $0x148] sm:$0xff] %v2024
        %v2030 = vmul.f32 %v1950, %v1672
        %v2031 = vmul.f32 %v1951, %v1675
        %v2032 = vmul.f32 %v1952, %v1678
        %v2033 = vmul.f32 %v1953, %v1681
        %v2034 = vmul.f32 %v1954, %v1684
        %2035 = vst [vmem:[#allocation2 + $0x10] sm:$0xff] %v2030
        %2036 = vst [vmem:[#allocation2 + $0x60] sm:$0xff] %v2031
        %2037 = vst [vmem:[#allocation2 + $0xb0] sm:$0xff] %v2032
        %2038 = vst [vmem:[#allocation2 + $0x100] sm:$0xff] %v2033
        %2039 = vst [vmem:[#allocation2 + $0x150] sm:$0xff] %v2034
        %v2040 = vmul.f32 %v1985, %v1640
        %v2041 = vmul.f32 %v1986, %v1643
        %v2042 = vmul.f32 %v1987, %v1646
        %v2043 = vmul.f32 %v1988, %v1649
        %v2044 = vmul.f32 %v1989, %v1652
        %v2045 = vmul.f32 %v1950, %v1704
        %v2046 = vmul.f32 %v1951, %v1707
        %v2047 = vmul.f32 %v1952, %v1710
        %v2048 = vmul.f32 %v1953, %v1713
        %v2049 = vmul.f32 %v1954, %v1716
        %v2050 = vadd.f32 %v2040, %v2045
        %v2051 = vadd.f32 %v2041, %v2046
        %v2052 = vadd.f32 %v2042, %v2047
        %v2053 = vadd.f32 %v2043, %v2048
        %v2054 = vadd.f32 %v2044, %v2049
        %2055 = vst [vmem:[#allocation2 + $0x18] sm:$0xff] %v2050
        %2056 = vst [vmem:[#allocation2 + $0x68] sm:$0xff] %v2051
        %2057 = vst [vmem:[#allocation2 + $0xb8] sm:$0xff] %v2052
        %2058 = vst [vmem:[#allocation2 + $0x108] sm:$0xff] %v2053
        %2059 = vst [vmem:[#allocation2 + $0x158] sm:$0xff] %v2054
        %v2060 = vmul.f32 %v1985, %v1672
        %v2061 = vmul.f32 %v1986, %v1675
        %v2062 = vmul.f32 %v1987, %v1678
        %v2063 = vmul.f32 %v1988, %v1681
        %v2064 = vmul.f32 %v1989, %v1684
        %v2065 = vmul.f32 %v1950, %v1736
        %v2066 = vmul.f32 %v1951, %v1739
        %v2067 = vmul.f32 %v1952, %v1742
        %v2068 = vmul.f32 %v1953, %v1745
        %v2069 = vmul.f32 %v1954, %v1748
        %v2070 = vadd.f32 %v2060, %v2065
        %v2071 = vadd.f32 %v2061, %v2066
        %v2072 = vadd.f32 %v2062, %v2067
        %v2073 = vadd.f32 %v2063, %v2068
        %v2074 = vadd.f32 %v2064, %v2069
        %2075 = vst [vmem:[#allocation2 + $0x20] sm:$0xff] %v2070
        %2076 = vst [vmem:[#allocation2 + $0x70] sm:$0xff] %v2071
        %2077 = vst [vmem:[#allocation2 + $0xc0] sm:$0xff] %v2072
        %2078 = vst [vmem:[#allocation2 + $0x110] sm:$0xff] %v2073
        %2079 = vst [vmem:[#allocation2 + $0x160] sm:$0xff] %v2074
        %v2080 = vmul.f32 %v1990, %v1672
        %v2081 = vmul.f32 %v1991, %v1675
        %v2082 = vmul.f32 %v1992, %v1678
        %v2083 = vmul.f32 %v1993, %v1681
        %v2084 = vmul.f32 %v1994, %v1684
        %v2085 = vmul.f32 %v1950, %v1768
        %v2086 = vmul.f32 %v1951, %v1771
        %v2087 = vmul.f32 %v1952, %v1774
        %v2088 = vmul.f32 %v1953, %v1777
        %v2089 = vmul.f32 %v1954, %v1780
        %v2090 = vadd.f32 %v2080, %v2085
        %v2091 = vadd.f32 %v2081, %v2086
        %v2092 = vadd.f32 %v2082, %v2087
        %v2093 = vadd.f32 %v2083, %v2088
        %v2094 = vadd.f32 %v2084, %v2089
        %2095 = vst [vmem:[#allocation2 + $0x28] sm:$0xff] %v2090
        %2096 = vst [vmem:[#allocation2 + $0x78] sm:$0xff] %v2091
        %2097 = vst [vmem:[#allocation2 + $0xc8] sm:$0xff] %v2092
        %2098 = vst [vmem:[#allocation2 + $0x118] sm:$0xff] %v2093
        %2099 = vst [vmem:[#allocation2 + $0x168] sm:$0xff] %v2094
        %v2100 = vmul.f32 %v1995, %v2000
        %v2101 = vmul.f32 %v1996, %v2001
        %v2102 = vmul.f32 %v1997, %v2002
        %v2103 = vmul.f32 %v1998, %v2003
        %v2104 = vmul.f32 %v1999, %v2004
        %v2105 = vmul.f32 %v1985, %v1704
        %v2106 = vmul.f32 %v1986, %v1707
        %v2107 = vmul.f32 %v1987, %v1710
        %v2108 = vmul.f32 %v1988, %v1713
        %v2109 = vmul.f32 %v1989, %v1716
        %v2110 = vmul.f32 %v2105, 3.0
        %v2111 = vmul.f32 %v2106, 3.0
        %v2112 = vmul.f32 %v2107, 3.0
        %v2113 = vmul.f32 %v2108, 3.0
        %v2114 = vmul.f32 %v2109, 3.0
        %v2115 = vadd.f32 %v2100, %v2110
        %v2116 = vadd.f32 %v2101, %v2111
        %v2117 = vadd.f32 %v2102, %v2112
        %v2118 = vadd.f32 %v2103, %v2113
        %v2119 = vadd.f32 %v2104, %v2114
        %v2120 = vmul.f32 %v1950, %v1800
        %v2121 = vmul.f32 %v1951, %v1803
        %v2122 = vmul.f32 %v1952, %v1806
        %v2123 = vmul.f32 %v1953, %v1809
        %v2124 = vmul.f32 %v1954, %v1812
        %v2125 = vadd.f32 %v2115, %v2120
        %v2126 = vadd.f32 %v2116, %v2121
        %v2127 = vadd.f32 %v2117, %v2122
        %v2128 = vadd.f32 %v2118, %v2123
        %v2129 = vadd.f32 %v2119, %v2124
        %2130 = vst [vmem:[#allocation2 + $0x30] sm:$0xff] %v2125
        %2131 = vst [vmem:[#allocation2 + $0x80] sm:$0xff] %v2126
        %2132 = vst [vmem:[#allocation2 + $0xd0] sm:$0xff] %v2127
        %2133 = vst [vmem:[#allocation2 + $0x120] sm:$0xff] %v2128
        %2134 = vst [vmem:[#allocation2 + $0x170] sm:$0xff] %v2129
        %v2135 = vmul.f32 %v1995, %v2010
        %v2136 = vmul.f32 %v1996, %v2011
        %v2137 = vmul.f32 %v1997, %v2012
        %v2138 = vmul.f32 %v1998, %v2013
        %v2139 = vmul.f32 %v1999, %v2014
        %v2140 = vmul.f32 %v1985, %v1736
        %v2141 = vmul.f32 %v1986, %v1739
        %v2142 = vmul.f32 %v1987, %v1742
        %v2143 = vmul.f32 %v1988, %v1745
        %v2144 = vmul.f32 %v1989, %v1748
        %v2145 = vmul.f32 %v2140, 2.0
        %v2146 = vmul.f32 %v2141, 2.0
        %v2147 = vmul.f32 %v2142, 2.0
        %v2148 = vmul.f32 %v2143, 2.0
        %v2149 = vmul.f32 %v2144, 2.0
        %v2150 = vadd.f32 %v2135, %v2145
        %v2151 = vadd.f32 %v2136, %v2146
        %v2152 = vadd.f32 %v2137, %v2147
        %v2153 = vadd.f32 %v2138, %v2148
        %v2154 = vadd.f32 %v2139, %v2149
        %v2155 = vmul.f32 %v1990, %v1704
        %v2156 = vmul.f32 %v1991, %v1707
        %v2157 = vmul.f32 %v1992, %v1710
        %v2158 = vmul.f32 %v1993, %v1713
        %v2159 = vmul.f32 %v1994, %v1716
        %v2160 = vadd.f32 %v2150, %v2155
        %v2161 = vadd.f32 %v2151, %v2156
        %v2162 = vadd.f32 %v2152, %v2157
        %v2163 = vadd.f32 %v2153, %v2158
        %v2164 = vadd.f32 %v2154, %v2159
        %v2165 = vmul.f32 %v1950, %v1832
        %v2166 = vmul.f32 %v1951, %v1835
        %v2167 = vmul.f32 %v1952, %v1838
        %v2168 = vmul.f32 %v1953, %v1841
        %v2169 = vmul.f32 %v1954, %v1844
        %v2170 = vadd.f32 %v2160, %v2165
        %v2171 = vadd.f32 %v2161, %v2166
        %v2172 = vadd.f32 %v2162, %v2167
        %v2173 = vadd.f32 %v2163, %v2168
        %v2174 = vadd.f32 %v2164, %v2169
        %2175 = vst [vmem:[#allocation2 + $0x38] sm:$0xff] %v2170
        %2176 = vst [vmem:[#allocation2 + $0x88] sm:$0xff] %v2171
        %2177 = vst [vmem:[#allocation2 + $0xd8] sm:$0xff] %v2172
        %2178 = vst [vmem:[#allocation2 + $0x128] sm:$0xff] %v2173
        %2179 = vst [vmem:[#allocation2 + $0x178] sm:$0xff] %v2174
        %v2180 = vmul.f32 %v1995, %v2005
        %v2181 = vmul.f32 %v1996, %v2006
        %v2182 = vmul.f32 %v1997, %v2007
        %v2183 = vmul.f32 %v1998, %v2008
        %v2184 = vmul.f32 %v1999, %v2009
        %v2185 = vmul.f32 %v1985, %v1768
        %v2186 = vmul.f32 %v1986, %v1771
        %v2187 = vmul.f32 %v1987, %v1774
        %v2188 = vmul.f32 %v1988, %v1777
        %v2189 = vmul.f32 %v1989, %v1780
        %v2190 = vadd.f32 %v2180, %v2185
        %v2191 = vadd.f32 %v2181, %v2186
        %v2192 = vadd.f32 %v2182, %v2187
        %v2193 = vadd.f32 %v2183, %v2188
        %v2194 = vadd.f32 %v2184, %v2189
        %v2195 = vmul.f32 %v1990, %v1736
        %v2196 = vmul.f32 %v1991, %v1739
        %v2197 = vmul.f32 %v1992, %v1742
        %v2198 = vmul.f32 %v1993, %v1745
        %v2199 = vmul.f32 %v1994, %v1748
        %v2200 = vmul.f32 %v2195, 2.0
        %v2201 = vmul.f32 %v2196, 2.0
        %v2202 = vmul.f32 %v2197, 2.0
        %v2203 = vmul.f32 %v2198, 2.0
        %v2204 = vmul.f32 %v2199, 2.0
        %v2205 = vadd.f32 %v2190, %v2200
        %v2206 = vadd.f32 %v2191, %v2201
        %v2207 = vadd.f32 %v2192, %v2202
        %v2208 = vadd.f32 %v2193, %v2203
        %v2209 = vadd.f32 %v2194, %v2204
        %v2210 = vmul.f32 %v1950, %v1864
        %v2211 = vmul.f32 %v1951, %v1867
        %v2212 = vmul.f32 %v1952, %v1870
        %v2213 = vmul.f32 %v1953, %v1873
        %v2214 = vmul.f32 %v1954, %v1876
        %v2215 = vadd.f32 %v2205, %v2210
        %v2216 = vadd.f32 %v2206, %v2211
        %v2217 = vadd.f32 %v2207, %v2212
        %v2218 = vadd.f32 %v2208, %v2213
        %v2219 = vadd.f32 %v2209, %v2214
        %2220 = vst [vmem:[#allocation2 + $0x40] sm:$0xff] %v2215
        %2221 = vst [vmem:[#allocation2 + $0x90] sm:$0xff] %v2216
        %2222 = vst [vmem:[#allocation2 + $0xe0] sm:$0xff] %v2217
        %2223 = vst [vmem:[#allocation2 + $0x130] sm:$0xff] %v2218
        %2224 = vst [vmem:[#allocation2 + $0x180] sm:$0xff] %v2219
        %v2225 = vmul.f32 %v2005, %v1672
        %v2226 = vmul.f32 %v2006, %v1675
        %v2227 = vmul.f32 %v2007, %v1678
        %v2228 = vmul.f32 %v2008, %v1681
        %v2229 = vmul.f32 %v2009, %v1684
        %v2230 = vmul.f32 %v1980, %v2225
        %v2231 = vmul.f32 %v1981, %v2226
        %v2232 = vmul.f32 %v1982, %v2227
        %v2233 = vmul.f32 %v1983, %v2228
        %v2234 = vmul.f32 %v1984, %v2229
        %v2235 = vmul.f32 %v1990, %v1768
        %v2236 = vmul.f32 %v1991, %v1771
        %v2237 = vmul.f32 %v1992, %v1774
        %v2238 = vmul.f32 %v1993, %v1777
        %v2239 = vmul.f32 %v1994, %v1780
        %v2240 = vmul.f32 %v2235, 3.0
        %v2241 = vmul.f32 %v2236, 3.0
        %v2242 = vmul.f32 %v2237, 3.0
        %v2243 = vmul.f32 %v2238, 3.0
        %v2244 = vmul.f32 %v2239, 3.0
        %v2245 = vadd.f32 %v2230, %v2240
        %v2246 = vadd.f32 %v2231, %v2241
        %v2247 = vadd.f32 %v2232, %v2242
        %v2248 = vadd.f32 %v2233, %v2243
        %v2249 = vadd.f32 %v2234, %v2244
        %v2250 = vmul.f32 %v1950, %v1896
        %v2251 = vmul.f32 %v1951, %v1899
        %v2252 = vmul.f32 %v1952, %v1902
        %v2253 = vmul.f32 %v1953, %v1905
        %v2254 = vmul.f32 %v1954, %v1908
        %v2255 = vadd.f32 %v2245, %v2250
        %v2256 = vadd.f32 %v2246, %v2251
        %v2257 = vadd.f32 %v2247, %v2252
        %v2258 = vadd.f32 %v2248, %v2253
        %v2259 = vadd.f32 %v2249, %v2254
        %2260 = vst [vmem:[#allocation2 + $0x48] sm:$0xff] %v2255
        %2261 = vst [vmem:[#allocation2 + $0x98] sm:$0xff] %v2256
        %2262 = vst [vmem:[#allocation2 + $0xe8] sm:$0xff] %v2257
        %2263 = vst [vmem:[#allocation2 + $0x138] sm:$0xff] %v2258
        %2264 = vst [vmem:[#allocation2 + $0x188] sm:$0xff] %v2259
        %s2265 = scalar_lea.vmem %s3, 80
        %v2266 = vld [vmem:[%s2265] sm:$0xff]
        %v2267 = vld [vmem:[%s2265 + $0x8] sm:$0xff]
        %v2268 = vld [vmem:[%s2265 + $0x10] sm:$0xff]
        %v2269 = vld [vmem:[%s2265 + $0x18] sm:$0xff]
        %v2270 = vld [vmem:[%s2265 + $0x20] sm:$0xff]
        %s2271 = scalar_lea.vmem %s4, 80
        %v2272 = vld [vmem:[%s2271] sm:$0xff]
        %v2273 = vld [vmem:[%s2271 + $0x8] sm:$0xff]
        %v2274 = vld [vmem:[%s2271 + $0x10] sm:$0xff]
        %v2275 = vld [vmem:[%s2271 + $0x18] sm:$0xff]
        %v2276 = vld [vmem:[%s2271 + $0x20] sm:$0xff]
        %v2277 = vld [vmem:[#allocation2] sm:$0xff]
        %v2278 = vld [vmem:[#allocation2 + $0x8] sm:$0xff]
        %v2279 = vld [vmem:[#allocation2 + $0x10] sm:$0xff]
        %v2280 = vld [vmem:[#allocation2 + $0x18] sm:$0xff]
        %v2281 = vld [vmem:[#allocation2 + $0x20] sm:$0xff]
        %v2282 = vld [vmem:[#allocation2 + $0x28] sm:$0xff]
        %v2283 = vld [vmem:[#allocation2 + $0x30] sm:$0xff]
        %v2284 = vld [vmem:[#allocation2 + $0x38] sm:$0xff]
        %v2285 = vld [vmem:[#allocation2 + $0x40] sm:$0xff]
        %v2286 = vld [vmem:[#allocation2 + $0x48] sm:$0xff]
        %v2287 = vld [vmem:[#allocation2 + $0x50] sm:$0xff]
        %v2288 = vld [vmem:[#allocation2 + $0x58] sm:$0xff]
        %v2289 = vld [vmem:[#allocation2 + $0x60] sm:$0xff]
        %v2290 = vld [vmem:[#allocation2 + $0x68] sm:$0xff]
        %v2291 = vld [vmem:[#allocation2 + $0x70] sm:$0xff]
        %v2292 = vld [vmem:[#allocation2 + $0x78] sm:$0xff]
        %v2293 = vld [vmem:[#allocation2 + $0x80] sm:$0xff]
        %v2294 = vld [vmem:[#allocation2 + $0x88] sm:$0xff]
        %v2295 = vld [vmem:[#allocation2 + $0x90] sm:$0xff]
        %v2296 = vld [vmem:[#allocation2 + $0x98] sm:$0xff]
        %v2297 = vld [vmem:[#allocation2 + $0xa0] sm:$0xff]
        %v2298 = vld [vmem:[#allocation2 + $0xa8] sm:$0xff]
        %v2299 = vld [vmem:[#allocation2 + $0xb0] sm:$0xff]
        %v2300 = vld [vmem:[#allocation2 + $0xb8] sm:$0xff]
        %v2301 = vld [vmem:[#allocation2 + $0xc0] sm:$0xff]
        %v2302 = vld [vmem:[#allocation2 + $0xc8] sm:$0xff]
        %v2303 = vld [vmem:[#allocation2 + $0xd0] sm:$0xff]
        %v2304 = vld [vmem:[#allocation2 + $0xd8] sm:$0xff]
        %v2305 = vld [vmem:[#allocation2 + $0xe0] sm:$0xff]
        %v2306 = vld [vmem:[#allocation2 + $0xe8] sm:$0xff]
        %v2307 = vld [vmem:[#allocation2 + $0xf0] sm:$0xff]
        %v2308 = vld [vmem:[#allocation2 + $0xf8] sm:$0xff]
        %v2309 = vld [vmem:[#allocation2 + $0x100] sm:$0xff]
        %v2310 = vld [vmem:[#allocation2 + $0x108] sm:$0xff]
        %v2311 = vld [vmem:[#allocation2 + $0x110] sm:$0xff]
        %v2312 = vld [vmem:[#allocation2 + $0x118] sm:$0xff]
        %v2313 = vld [vmem:[#allocation2 + $0x120] sm:$0xff]
        %v2314 = vld [vmem:[#allocation2 + $0x128] sm:$0xff]
        %v2315 = vld [vmem:[#allocation2 + $0x130] sm:$0xff]
        %v2316 = vld [vmem:[#allocation2 + $0x138] sm:$0xff]
        %v2317 = vld [vmem:[#allocation2 + $0x140] sm:$0xff]
        %v2318 = vld [vmem:[#allocation2 + $0x148] sm:$0xff]
        %v2319 = vld [vmem:[#allocation2 + $0x150] sm:$0xff]
        %v2320 = vld [vmem:[#allocation2 + $0x158] sm:$0xff]
        %v2321 = vld [vmem:[#allocation2 + $0x160] sm:$0xff]
        %v2322 = vld [vmem:[#allocation2 + $0x168] sm:$0xff]
        %v2323 = vld [vmem:[#allocation2 + $0x170] sm:$0xff]
        %v2324 = vld [vmem:[#allocation2 + $0x178] sm:$0xff]
        %v2325 = vld [vmem:[#allocation2 + $0x180] sm:$0xff]
        %v2326 = vld [vmem:[#allocation2 + $0x188] sm:$0xff]
        %v2328 = vsel %vm822, %v2266, 0
        %v2331 = vsel %vm822, %v2267, 0
        %v2334 = vsel %vm822, %v2268, 0
        %v2337 = vsel %vm822, %v2269, 0
        %v2340 = vsel %vm822, %v2270, 0
        %2342 = vmatpush.msra.mxu0 0.0
        %2343 = vmatpush.msra.mxu0 0.0
        %2344 = vmatpush.msra.mxu0 0.0
        %2345 = vmatpush.msra.mxu0 0.0
        %2346 = vmatpush.msra.mxu0 0.0
        %2347 = vmatpush.msra.mxu0 0.0
        %2348 = vmatpush.msra.mxu0 0.0
        %2349 = vmatpush.msra.mxu0 0.0
        %2350 = vmatpush.msra.mxu0 0.0
        %2351 = vmatpush.msra.mxu0 0.0
        %2352 = vmatpush.msra.mxu0 0.0
        %2353 = vmatpush.msra.mxu0 %v2317
        %2354 = vmatpush.msra.mxu0 %v2307
        %2355 = vmatpush.msra.mxu0 %v2297
        %2356 = vmatpush.msra.mxu0 %v2287
        %2357 = vmatpush.msra.mxu0 %v2277
        %2358 = vmatmul.f32.gmra.mxu0 %v2328
        %v2359 = vpop.f32.mrf.mxu0
        %v2360 = vadd.f32 0.0, %v2359
        %2361 = vmatmul.f32.gmra.mxu0 %v2331
        %v2362 = vpop.f32.mrf.mxu0
        %v2363 = vadd.f32 0.0, %v2362
        %2364 = vmatmul.f32.gmra.mxu0 %v2334
        %v2365 = vpop.f32.mrf.mxu0
        %v2366 = vadd.f32 0.0, %v2365
        %2367 = vmatmul.f32.gmra.mxu0 %v2337
        %v2368 = vpop.f32.mrf.mxu0
        %v2369 = vadd.f32 0.0, %v2368
        %2370 = vmatmul.f32.gmra.mxu0 %v2340
        %v2371 = vpop.f32.mrf.mxu0
        %v2372 = vadd.f32 0.0, %v2371
        %2373 = vdwg.mxu0
        %2374 = vmatpush.msra.mxu0 0.0
        %2375 = vmatpush.msra.mxu0 0.0
        %2376 = vmatpush.msra.mxu0 0.0
        %2377 = vmatpush.msra.mxu0 0.0
        %2378 = vmatpush.msra.mxu0 0.0
        %2379 = vmatpush.msra.mxu0 0.0
        %2380 = vmatpush.msra.mxu0 0.0
        %2381 = vmatpush.msra.mxu0 0.0
        %2382 = vmatpush.msra.mxu0 0.0
        %2383 = vmatpush.msra.mxu0 0.0
        %2384 = vmatpush.msra.mxu0 0.0
        %2385 = vmatpush.msra.mxu0 %v2318
        %2386 = vmatpush.msra.mxu0 %v2308
        %2387 = vmatpush.msra.mxu0 %v2298
        %2388 = vmatpush.msra.mxu0 %v2288
        %2389 = vmatpush.msra.mxu0 %v2278
        %2390 = vmatmul.f32.gmra.mxu0 %v2328
        %v2391 = vpop.f32.mrf.mxu0
        %v2392 = vadd.f32 0.0, %v2391
        %2393 = vmatmul.f32.gmra.mxu0 %v2331
        %v2394 = vpop.f32.mrf.mxu0
        %v2395 = vadd.f32 0.0, %v2394
        %2396 = vmatmul.f32.gmra.mxu0 %v2334
        %v2397 = vpop.f32.mrf.mxu0
        %v2398 = vadd.f32 0.0, %v2397
        %2399 = vmatmul.f32.gmra.mxu0 %v2337
        %v2400 = vpop.f32.mrf.mxu0
        %v2401 = vadd.f32 0.0, %v2400
        %2402 = vmatmul.f32.gmra.mxu0 %v2340
        %v2403 = vpop.f32.mrf.mxu0
        %v2404 = vadd.f32 0.0, %v2403
        %2405 = vdwg.mxu0
        %2406 = vmatpush.msra.mxu0 0.0
        %2407 = vmatpush.msra.mxu0 0.0
        %2408 = vmatpush.msra.mxu0 0.0
        %2409 = vmatpush.msra.mxu0 0.0
        %2410 = vmatpush.msra.mxu0 0.0
        %2411 = vmatpush.msra.mxu0 0.0
        %2412 = vmatpush.msra.mxu0 0.0
        %2413 = vmatpush.msra.mxu0 0.0
        %2414 = vmatpush.msra.mxu0 0.0
        %2415 = vmatpush.msra.mxu0 0.0
        %2416 = vmatpush.msra.mxu0 0.0
        %2417 = vmatpush.msra.mxu0 %v2319
        %2418 = vmatpush.msra.mxu0 %v2309
        %2419 = vmatpush.msra.mxu0 %v2299
        %2420 = vmatpush.msra.mxu0 %v2289
        %2421 = vmatpush.msra.mxu0 %v2279
        %2422 = vmatmul.f32.gmra.mxu0 %v2328
        %v2423 = vpop.f32.mrf.mxu0
        %v2424 = vadd.f32 0.0, %v2423
        %2425 = vmatmul.f32.gmra.mxu0 %v2331
        %v2426 = vpop.f32.mrf.mxu0
        %v2427 = vadd.f32 0.0, %v2426
        %2428 = vmatmul.f32.gmra.mxu0 %v2334
        %v2429 = vpop.f32.mrf.mxu0
        %v2430 = vadd.f32 0.0, %v2429
        %2431 = vmatmul.f32.gmra.mxu0 %v2337
        %v2432 = vpop.f32.mrf.mxu0
        %v2433 = vadd.f32 0.0, %v2432
        %2434 = vmatmul.f32.gmra.mxu0 %v2340
        %v2435 = vpop.f32.mrf.mxu0
        %v2436 = vadd.f32 0.0, %v2435
        %2437 = vdwg.mxu0
        %2438 = vmatpush.msra.mxu0 0.0
        %2439 = vmatpush.msra.mxu0 0.0
        %2440 = vmatpush.msra.mxu0 0.0
        %2441 = vmatpush.msra.mxu0 0.0
        %2442 = vmatpush.msra.mxu0 0.0
        %2443 = vmatpush.msra.mxu0 0.0
        %2444 = vmatpush.msra.mxu0 0.0
        %2445 = vmatpush.msra.mxu0 0.0
        %2446 = vmatpush.msra.mxu0 0.0
        %2447 = vmatpush.msra.mxu0 0.0
        %2448 = vmatpush.msra.mxu0 0.0
        %2449 = vmatpush.msra.mxu0 %v2320
        %2450 = vmatpush.msra.mxu0 %v2310
        %2451 = vmatpush.msra.mxu0 %v2300
        %2452 = vmatpush.msra.mxu0 %v2290
        %2453 = vmatpush.msra.mxu0 %v2280
        %2454 = vmatmul.f32.gmra.mxu0 %v2328
        %v2455 = vpop.f32.mrf.mxu0
        %v2456 = vadd.f32 0.0, %v2455
        %2457 = vmatmul.f32.gmra.mxu0 %v2331
        %v2458 = vpop.f32.mrf.mxu0
        %v2459 = vadd.f32 0.0, %v2458
        %2460 = vmatmul.f32.gmra.mxu0 %v2334
        %v2461 = vpop.f32.mrf.mxu0
        %v2462 = vadd.f32 0.0, %v2461
        %2463 = vmatmul.f32.gmra.mxu0 %v2337
        %v2464 = vpop.f32.mrf.mxu0
        %v2465 = vadd.f32 0.0, %v2464
        %2466 = vmatmul.f32.gmra.mxu0 %v2340
        %v2467 = vpop.f32.mrf.mxu0
        %v2468 = vadd.f32 0.0, %v2467
        %2469 = vdwg.mxu0
        %2470 = vmatpush.msra.mxu0 0.0
        %2471 = vmatpush.msra.mxu0 0.0
        %2472 = vmatpush.msra.mxu0 0.0
        %2473 = vmatpush.msra.mxu0 0.0
        %2474 = vmatpush.msra.mxu0 0.0
        %2475 = vmatpush.msra.mxu0 0.0
        %2476 = vmatpush.msra.mxu0 0.0
        %2477 = vmatpush.msra.mxu0 0.0
        %2478 = vmatpush.msra.mxu0 0.0
        %2479 = vmatpush.msra.mxu0 0.0
        %2480 = vmatpush.msra.mxu0 0.0
        %2481 = vmatpush.msra.mxu0 %v2321
        %2482 = vmatpush.msra.mxu0 %v2311
        %2483 = vmatpush.msra.mxu0 %v2301
        %2484 = vmatpush.msra.mxu0 %v2291
        %2485 = vmatpush.msra.mxu0 %v2281
        %2486 = vmatmul.f32.gmra.mxu0 %v2328
        %v2487 = vpop.f32.mrf.mxu0
        %v2488 = vadd.f32 0.0, %v2487
        %2489 = vmatmul.f32.gmra.mxu0 %v2331
        %v2490 = vpop.f32.mrf.mxu0
        %v2491 = vadd.f32 0.0, %v2490
        %2492 = vmatmul.f32.gmra.mxu0 %v2334
        %v2493 = vpop.f32.mrf.mxu0
        %v2494 = vadd.f32 0.0, %v2493
        %2495 = vmatmul.f32.gmra.mxu0 %v2337
        %v2496 = vpop.f32.mrf.mxu0
        %v2497 = vadd.f32 0.0, %v2496
        %2498 = vmatmul.f32.gmra.mxu0 %v2340
        %v2499 = vpop.f32.mrf.mxu0
        %v2500 = vadd.f32 0.0, %v2499
        %2501 = vdwg.mxu0
        %2502 = vmatpush.msra.mxu0 0.0
        %2503 = vmatpush.msra.mxu0 0.0
        %2504 = vmatpush.msra.mxu0 0.0
        %2505 = vmatpush.msra.mxu0 0.0
        %2506 = vmatpush.msra.mxu0 0.0
        %2507 = vmatpush.msra.mxu0 0.0
        %2508 = vmatpush.msra.mxu0 0.0
        %2509 = vmatpush.msra.mxu0 0.0
        %2510 = vmatpush.msra.mxu0 0.0
        %2511 = vmatpush.msra.mxu0 0.0
        %2512 = vmatpush.msra.mxu0 0.0
        %2513 = vmatpush.msra.mxu0 %v2322
        %2514 = vmatpush.msra.mxu0 %v2312
        %2515 = vmatpush.msra.mxu0 %v2302
        %2516 = vmatpush.msra.mxu0 %v2292
        %2517 = vmatpush.msra.mxu0 %v2282
        %2518 = vmatmul.f32.gmra.mxu0 %v2328
        %v2519 = vpop.f32.mrf.mxu0
        %v2520 = vadd.f32 0.0, %v2519
        %2521 = vmatmul.f32.gmra.mxu0 %v2331
        %v2522 = vpop.f32.mrf.mxu0
        %v2523 = vadd.f32 0.0, %v2522
        %2524 = vmatmul.f32.gmra.mxu0 %v2334
        %v2525 = vpop.f32.mrf.mxu0
        %v2526 = vadd.f32 0.0, %v2525
        %2527 = vmatmul.f32.gmra.mxu0 %v2337
        %v2528 = vpop.f32.mrf.mxu0
        %v2529 = vadd.f32 0.0, %v2528
        %2530 = vmatmul.f32.gmra.mxu0 %v2340
        %v2531 = vpop.f32.mrf.mxu0
        %v2532 = vadd.f32 0.0, %v2531
        %2533 = vdwg.mxu0
        %2534 = vmatpush.msra.mxu0 0.0
        %2535 = vmatpush.msra.mxu0 0.0
        %2536 = vmatpush.msra.mxu0 0.0
        %2537 = vmatpush.msra.mxu0 0.0
        %2538 = vmatpush.msra.mxu0 0.0
        %2539 = vmatpush.msra.mxu0 0.0
        %2540 = vmatpush.msra.mxu0 0.0
        %2541 = vmatpush.msra.mxu0 0.0
        %2542 = vmatpush.msra.mxu0 0.0
        %2543 = vmatpush.msra.mxu0 0.0
        %2544 = vmatpush.msra.mxu0 0.0
        %2545 = vmatpush.msra.mxu0 %v2323
        %2546 = vmatpush.msra.mxu0 %v2313
        %2547 = vmatpush.msra.mxu0 %v2303
        %2548 = vmatpush.msra.mxu0 %v2293
        %2549 = vmatpush.msra.mxu0 %v2283
        %2550 = vmatmul.f32.gmra.mxu0 %v2328
        %v2551 = vpop.f32.mrf.mxu0
        %v2552 = vadd.f32 0.0, %v2551
        %2553 = vmatmul.f32.gmra.mxu0 %v2331
        %v2554 = vpop.f32.mrf.mxu0
        %v2555 = vadd.f32 0.0, %v2554
        %2556 = vmatmul.f32.gmra.mxu0 %v2334
        %v2557 = vpop.f32.mrf.mxu0
        %v2558 = vadd.f32 0.0, %v2557
        %2559 = vmatmul.f32.gmra.mxu0 %v2337
        %v2560 = vpop.f32.mrf.mxu0
        %v2561 = vadd.f32 0.0, %v2560
        %2562 = vmatmul.f32.gmra.mxu0 %v2340
        %v2563 = vpop.f32.mrf.mxu0
        %v2564 = vadd.f32 0.0, %v2563
        %2565 = vdwg.mxu0
        %2566 = vmatpush.msra.mxu0 0.0
        %2567 = vmatpush.msra.mxu0 0.0
        %2568 = vmatpush.msra.mxu0 0.0
        %2569 = vmatpush.msra.mxu0 0.0
        %2570 = vmatpush.msra.mxu0 0.0
        %2571 = vmatpush.msra.mxu0 0.0
        %2572 = vmatpush.msra.mxu0 0.0
        %2573 = vmatpush.msra.mxu0 0.0
        %2574 = vmatpush.msra.mxu0 0.0
        %2575 = vmatpush.msra.mxu0 0.0
        %2576 = vmatpush.msra.mxu0 0.0
        %2577 = vmatpush.msra.mxu0 %v2324
        %2578 = vmatpush.msra.mxu0 %v2314
        %2579 = vmatpush.msra.mxu0 %v2304
        %2580 = vmatpush.msra.mxu0 %v2294
        %2581 = vmatpush.msra.mxu0 %v2284
        %2582 = vmatmul.f32.gmra.mxu0 %v2328
        %v2583 = vpop.f32.mrf.mxu0
        %v2584 = vadd.f32 0.0, %v2583
        %2585 = vmatmul.f32.gmra.mxu0 %v2331
        %v2586 = vpop.f32.mrf.mxu0
        %v2587 = vadd.f32 0.0, %v2586
        %2588 = vmatmul.f32.gmra.mxu0 %v2334
        %v2589 = vpop.f32.mrf.mxu0
        %v2590 = vadd.f32 0.0, %v2589
        %2591 = vmatmul.f32.gmra.mxu0 %v2337
        %v2592 = vpop.f32.mrf.mxu0
        %v2593 = vadd.f32 0.0, %v2592
        %2594 = vmatmul.f32.gmra.mxu0 %v2340
        %v2595 = vpop.f32.mrf.mxu0
        %v2596 = vadd.f32 0.0, %v2595
        %2597 = vdwg.mxu0
        %2598 = vmatpush.msra.mxu0 0.0
        %2599 = vmatpush.msra.mxu0 0.0
        %2600 = vmatpush.msra.mxu0 0.0
        %2601 = vmatpush.msra.mxu0 0.0
        %2602 = vmatpush.msra.mxu0 0.0
        %2603 = vmatpush.msra.mxu0 0.0
        %2604 = vmatpush.msra.mxu0 0.0
        %2605 = vmatpush.msra.mxu0 0.0
        %2606 = vmatpush.msra.mxu0 0.0
        %2607 = vmatpush.msra.mxu0 0.0
        %2608 = vmatpush.msra.mxu0 0.0
        %2609 = vmatpush.msra.mxu0 %v2325
        %2610 = vmatpush.msra.mxu0 %v2315
        %2611 = vmatpush.msra.mxu0 %v2305
        %2612 = vmatpush.msra.mxu0 %v2295
        %2613 = vmatpush.msra.mxu0 %v2285
        %2614 = vmatmul.f32.gmra.mxu0 %v2328
        %v2615 = vpop.f32.mrf.mxu0
        %v2616 = vadd.f32 0.0, %v2615
        %2617 = vmatmul.f32.gmra.mxu0 %v2331
        %v2618 = vpop.f32.mrf.mxu0
        %v2619 = vadd.f32 0.0, %v2618
        %2620 = vmatmul.f32.gmra.mxu0 %v2334
        %v2621 = vpop.f32.mrf.mxu0
        %v2622 = vadd.f32 0.0, %v2621
        %2623 = vmatmul.f32.gmra.mxu0 %v2337
        %v2624 = vpop.f32.mrf.mxu0
        %v2625 = vadd.f32 0.0, %v2624
        %2626 = vmatmul.f32.gmra.mxu0 %v2340
        %v2627 = vpop.f32.mrf.mxu0
        %v2628 = vadd.f32 0.0, %v2627
        %2629 = vdwg.mxu0
        %2630 = vmatpush.msra.mxu0 0.0
        %2631 = vmatpush.msra.mxu0 0.0
        %2632 = vmatpush.msra.mxu0 0.0
        %2633 = vmatpush.msra.mxu0 0.0
        %2634 = vmatpush.msra.mxu0 0.0
        %2635 = vmatpush.msra.mxu0 0.0
        %2636 = vmatpush.msra.mxu0 0.0
        %2637 = vmatpush.msra.mxu0 0.0
        %2638 = vmatpush.msra.mxu0 0.0
        %2639 = vmatpush.msra.mxu0 0.0
        %2640 = vmatpush.msra.mxu0 0.0
        %2641 = vmatpush.msra.mxu0 %v2326
        %2642 = vmatpush.msra.mxu0 %v2316
        %2643 = vmatpush.msra.mxu0 %v2306
        %2644 = vmatpush.msra.mxu0 %v2296
        %2645 = vmatpush.msra.mxu0 %v2286
        %2646 = vmatmul.f32.gmra.mxu0 %v2328
        %v2647 = vpop.f32.mrf.mxu0
        %v2648 = vadd.f32 0.0, %v2647
        %2649 = vmatmul.f32.gmra.mxu0 %v2331
        %v2650 = vpop.f32.mrf.mxu0
        %v2651 = vadd.f32 0.0, %v2650
        %2652 = vmatmul.f32.gmra.mxu0 %v2334
        %v2653 = vpop.f32.mrf.mxu0
        %v2654 = vadd.f32 0.0, %v2653
        %2655 = vmatmul.f32.gmra.mxu0 %v2337
        %v2656 = vpop.f32.mrf.mxu0
        %v2657 = vadd.f32 0.0, %v2656
        %2658 = vmatmul.f32.gmra.mxu0 %v2340
        %v2659 = vpop.f32.mrf.mxu0
        %v2660 = vadd.f32 0.0, %v2659
        %2661 = vdwg.mxu0
        %2663 = vset.pattern.permute.xlu0 0
        %2664 = vperm.xlu0 %2663, %v2272
        %v2665 = vpop.permute.xlu0 %2664
        %2668 = vset.pattern.permute.xlu0 0
        %2669 = vperm.xlu0 %2668, %v2273
        %v2670 = vpop.permute.xlu0 %2669
        %2673 = vset.pattern.permute.xlu0 0
        %2674 = vperm.xlu0 %2673, %v2274
        %v2675 = vpop.permute.xlu0 %2674
        %2678 = vset.pattern.permute.xlu0 0
        %2679 = vperm.xlu0 %2678, %v2275
        %v2680 = vpop.permute.xlu0 %2679
        %2683 = vset.pattern.permute.xlu0 0
        %2684 = vperm.xlu0 %2683, %v2276
        %v2685 = vpop.permute.xlu0 %2684
        %v2687 = vadd.f32 %v2360, %v2665
        %v2688 = vadd.f32 %v2363, %v2670
        %v2689 = vadd.f32 %v2366, %v2675
        %v2690 = vadd.f32 %v2369, %v2680
        %v2691 = vadd.f32 %v2372, %v2685
        %v2692 = vtanh.pop %v2687
        %v2693 = vtanh.pop %v2688
        %v2694 = vtanh.pop %v2689
        %v2695 = vtanh.pop %v2690
        %v2696 = vtanh.pop %v2691
        %v2697 = vmul.f32 %v2692, %v2692
        %v2698 = vmul.f32 %v2693, %v2693
        %v2699 = vmul.f32 %v2694, %v2694
        %v2700 = vmul.f32 %v2695, %v2695
        %v2701 = vmul.f32 %v2696, %v2696
        %v2702 = vsub.f32 1.0, %v2697
        %v2703 = vsub.f32 1.0, %v2698
        %v2704 = vsub.f32 1.0, %v2699
        %v2705 = vsub.f32 1.0, %v2700
        %v2706 = vsub.f32 1.0, %v2701
        %v2707 = vmul.f32 %v2692, %v2702
        %v2708 = vmul.f32 %v2693, %v2703
        %v2709 = vmul.f32 %v2694, %v2704
        %v2710 = vmul.f32 %v2695, %v2705
        %v2711 = vmul.f32 %v2696, %v2706
        %v2712 = vmul.f32 %v2707, -2.0
        %v2713 = vmul.f32 %v2708, -2.0
        %v2714 = vmul.f32 %v2709, -2.0
        %v2715 = vmul.f32 %v2710, -2.0
        %v2716 = vmul.f32 %v2711, -2.0
        %v2717 = vmul.f32 %v2702, 2.0
        %v2718 = vmul.f32 %v2703, 2.0
        %v2719 = vmul.f32 %v2704, 2.0
        %v2720 = vmul.f32 %v2705, 2.0
        %v2721 = vmul.f32 %v2706, 2.0
        %v2722 = vmul.f32 %v2697, 2.0
        %v2723 = vmul.f32 %v2698, 2.0
        %v2724 = vmul.f32 %v2699, 2.0
        %v2725 = vmul.f32 %v2700, 2.0
        %v2726 = vmul.f32 %v2701, 2.0
        %v2727 = vsub.f32 %v2722, %v2702
        %v2728 = vsub.f32 %v2723, %v2703
        %v2729 = vsub.f32 %v2724, %v2704
        %v2730 = vsub.f32 %v2725, %v2705
        %v2731 = vsub.f32 %v2726, %v2706
        %v2732 = vmul.f32 %v2717, %v2727
        %v2733 = vmul.f32 %v2718, %v2728
        %v2734 = vmul.f32 %v2719, %v2729
        %v2735 = vmul.f32 %v2720, %v2730
        %v2736 = vmul.f32 %v2721, %v2731
        %v2737 = vmul.f32 %v2712, %v2392
        %v2738 = vmul.f32 %v2713, %v2395
        %v2739 = vmul.f32 %v2714, %v2398
        %v2740 = vmul.f32 %v2715, %v2401
        %v2741 = vmul.f32 %v2716, %v2404
        %v2742 = vmul.f32 %v2712, %v2424
        %v2743 = vmul.f32 %v2713, %v2427
        %v2744 = vmul.f32 %v2714, %v2430
        %v2745 = vmul.f32 %v2715, %v2433
        %v2746 = vmul.f32 %v2716, %v2436
        %v2747 = vmul.f32 %v2732, %v2392
        %v2748 = vmul.f32 %v2733, %v2395
        %v2749 = vmul.f32 %v2734, %v2398
        %v2750 = vmul.f32 %v2735, %v2401
        %v2751 = vmul.f32 %v2736, %v2404
        %v2752 = vmul.f32 %v2392, %v2392
        %v2753 = vmul.f32 %v2395, %v2395
        %v2754 = vmul.f32 %v2398, %v2398
        %v2755 = vmul.f32 %v2401, %v2401
        %v2756 = vmul.f32 %v2404, %v2404
        %v2757 = vmul.f32 %v2424, %v2424
        %v2758 = vmul.f32 %v2427, %v2427
        %v2759 = vmul.f32 %v2430, %v2430
        %v2760 = vmul.f32 %v2433, %v2433
        %v2761 = vmul.f32 %v2436, %v2436
        %v2762 = vmul.f32 %v2392, %v2424
        %v2763 = vmul.f32 %v2395, %v2427
        %v2764 = vmul.f32 %v2398, %v2430
        %v2765 = vmul.f32 %v2401, %v2433
        %v2766 = vmul.f32 %v2404, %v2436
        %2767 = vst [vmem:[#allocation3] sm:$0xff] %v2692
        %2768 = vst [vmem:[#allocation3 + $0x50] sm:$0xff] %v2693
        %2769 = vst [vmem:[#allocation3 + $0xa0] sm:$0xff] %v2694
        %2770 = vst [vmem:[#allocation3 + $0xf0] sm:$0xff] %v2695
        %2771 = vst [vmem:[#allocation3 + $0x140] sm:$0xff] %v2696
        %v2772 = vmul.f32 %v2702, %v2392
        %v2773 = vmul.f32 %v2703, %v2395
        %v2774 = vmul.f32 %v2704, %v2398
        %v2775 = vmul.f32 %v2705, %v2401
        %v2776 = vmul.f32 %v2706, %v2404
        %2777 = vst [vmem:[#allocation3 + $0x8] sm:$0xff] %v2772
        %2778 = vst [vmem:[#allocation3 + $0x58] sm:$0xff] %v2773
        %2779 = vst [vmem:[#allocation3 + $0xa8] sm:$0xff] %v2774
        %2780 = vst [vmem:[#allocation3 + $0xf8] sm:$0xff] %v2775
        %2781 = vst [vmem:[#allocation3 + $0x148] sm:$0xff] %v2776
        %v2782 = vmul.f32 %v2702, %v2424
        %v2783 = vmul.f32 %v2703, %v2427
        %v2784 = vmul.f32 %v2704, %v2430
        %v2785 = vmul.f32 %v2705, %v2433
        %v2786 = vmul.f32 %v2706, %v2436
        %2787 = vst [vmem:[#allocation3 + $0x10] sm:$0xff] %v2782
        %2788 = vst [vmem:[#allocation3 + $0x60] sm:$0xff] %v2783
        %2789 = vst [vmem:[#allocation3 + $0xb0] sm:$0xff] %v2784
        %2790 = vst [vmem:[#allocation3 + $0x100] sm:$0xff] %v2785
        %2791 = vst [vmem:[#allocation3 + $0x150] sm:$0xff] %v2786
        %v2792 = vmul.f32 %v2737, %v2392
        %v2793 = vmul.f32 %v2738, %v2395
        %v2794 = vmul.f32 %v2739, %v2398
        %v2795 = vmul.f32 %v2740, %v2401
        %v2796 = vmul.f32 %v2741, %v2404
        %v2797 = vmul.f32 %v2702, %v2456
        %v2798 = vmul.f32 %v2703, %v2459
        %v2799 = vmul.f32 %v2704, %v2462
        %v2800 = vmul.f32 %v2705, %v2465
        %v2801 = vmul.f32 %v2706, %v2468
        %v2802 = vadd.f32 %v2792, %v2797
        %v2803 = vadd.f32 %v2793, %v2798
        %v2804 = vadd.f32 %v2794, %v2799
        %v2805 = vadd.f32 %v2795, %v2800
        %v2806 = vadd.f32 %v2796, %v2801
        %2807 = vst [vmem:[#allocation3 + $0x18] sm:$0xff] %v2802
        %2808 = vst [vmem:[#allocation3 + $0x68] sm:$0xff] %v2803
        %2809 = vst [vmem:[#allocation3 + $0xb8] sm:$0xff] %v2804
        %2810 = vst [vmem:[#allocation3 + $0x108] sm:$0xff] %v2805
        %2811 = vst [vmem:[#allocation3 + $0x158] sm:$0xff] %v2806
        %v2812 = vmul.f32 %v2737, %v2424
        %v2813 = vmul.f32 %v2738, %v2427
        %v2814 = vmul.f32 %v2739, %v2430
        %v2815 = vmul.f32 %v2740, %v2433
        %v2816 = vmul.f32 %v2741, %v2436
        %v2817 = vmul.f32 %v2702, %v2488
        %v2818 = vmul.f32 %v2703, %v2491
        %v2819 = vmul.f32 %v2704, %v2494
        %v2820 = vmul.f32 %v2705, %v2497
        %v2821 = vmul.f32 %v2706, %v2500
        %v2822 = vadd.f32 %v2812, %v2817
        %v2823 = vadd.f32 %v2813, %v2818
        %v2824 = vadd.f32 %v2814, %v2819
        %v2825 = vadd.f32 %v2815, %v2820
        %v2826 = vadd.f32 %v2816, %v2821
        %2827 = vst [vmem:[#allocation3 + $0x20] sm:$0xff] %v2822
        %2828 = vst [vmem:[#allocation3 + $0x70] sm:$0xff] %v2823
        %2829 = vst [vmem:[#allocation3 + $0xc0] sm:$0xff] %v2824
        %2830 = vst [vmem:[#allocation3 + $0x110] sm:$0xff] %v2825
        %2831 = vst [vmem:[#allocation3 + $0x160] sm:$0xff] %v2826
        %v2832 = vmul.f32 %v2742, %v2424
        %v2833 = vmul.f32 %v2743, %v2427
        %v2834 = vmul.f32 %v2744, %v2430
        %v2835 = vmul.f32 %v2745, %v2433
        %v2836 = vmul.f32 %v2746, %v2436
        %v2837 = vmul.f32 %v2702, %v2520
        %v2838 = vmul.f32 %v2703, %v2523
        %v2839 = vmul.f32 %v2704, %v2526
        %v2840 = vmul.f32 %v2705, %v2529
        %v2841 = vmul.f32 %v2706, %v2532
        %v2842 = vadd.f32 %v2832, %v2837
        %v2843 = vadd.f32 %v2833, %v2838
        %v2844 = vadd.f32 %v2834, %v2839
        %v2845 = vadd.f32 %v2835, %v2840
        %v2846 = vadd.f32 %v2836, %v2841
        %2847 = vst [vmem:[#allocation3 + $0x28] sm:$0xff] %v2842
        %2848 = vst [vmem:[#allocation3 + $0x78] sm:$0xff] %v2843
        %2849 = vst [vmem:[#allocation3 + $0xc8] sm:$0xff] %v2844
        %2850 = vst [vmem:[#allocation3 + $0x118] sm:$0xff] %v2845
        %2851 = vst [vmem:[#allocation3 + $0x168] sm:$0xff] %v2846
        %v2852 = vmul.f32 %v2747, %v2752
        %v2853 = vmul.f32 %v2748, %v2753
        %v2854 = vmul.f32 %v2749, %v2754
        %v2855 = vmul.f32 %v2750, %v2755
        %v2856 = vmul.f32 %v2751, %v2756
        %v2857 = vmul.f32 %v2737, %v2456
        %v2858 = vmul.f32 %v2738, %v2459
        %v2859 = vmul.f32 %v2739, %v2462
        %v2860 = vmul.f32 %v2740, %v2465
        %v2861 = vmul.f32 %v2741, %v2468
        %v2862 = vmul.f32 %v2857, 3.0
        %v2863 = vmul.f32 %v2858, 3.0
        %v2864 = vmul.f32 %v2859, 3.0
        %v2865 = vmul.f32 %v2860, 3.0
        %v2866 = vmul.f32 %v2861, 3.0
        %v2867 = vadd.f32 %v2852, %v2862
        %v2868 = vadd.f32 %v2853, %v2863
        %v2869 = vadd.f32 %v2854, %v2864
        %v2870 = vadd.f32 %v2855, %v2865
        %v2871 = vadd.f32 %v2856, %v2866
        %v2872 = vmul.f32 %v2702, %v2552
        %v2873 = vmul.f32 %v2703, %v2555
        %v2874 = vmul.f32 %v2704, %v2558
        %v2875 = vmul.f32 %v2705, %v2561
        %v2876 = vmul.f32 %v2706, %v2564
        %v2877 = vadd.f32 %v2867, %v2872
        %v2878 = vadd.f32 %v2868, %v2873
        %v2879 = vadd.f32 %v2869, %v2874
        %v2880 = vadd.f32 %v2870, %v2875
        %v2881 = vadd.f32 %v2871, %v2876
        %2882 = vst [vmem:[#allocation3 + $0x30] sm:$0xff] %v2877
        %2883 = vst [vmem:[#allocation3 + $0x80] sm:$0xff] %v2878
        %2884 = vst [vmem:[#allocation3 + $0xd0] sm:$0xff] %v2879
        %2885 = vst [vmem:[#allocation3 + $0x120] sm:$0xff] %v2880
        %2886 = vst [vmem:[#allocation3 + $0x170] sm:$0xff] %v2881
        %v2887 = vmul.f32 %v2747, %v2762
        %v2888 = vmul.f32 %v2748, %v2763
        %v2889 = vmul.f32 %v2749, %v2764
        %v2890 = vmul.f32 %v2750, %v2765
        %v2891 = vmul.f32 %v2751, %v2766
        %v2892 = vmul.f32 %v2737, %v2488
        %v2893 = vmul.f32 %v2738, %v2491
        %v2894 = vmul.f32 %v2739, %v2494
        %v2895 = vmul.f32 %v2740, %v2497
        %v2896 = vmul.f32 %v2741, %v2500
        %v2897 = vmul.f32 %v2892, 2.0
        %v2898 = vmul.f32 %v2893, 2.0
        %v2899 = vmul.f32 %v2894, 2.0
        %v2900 = vmul.f32 %v2895, 2.0
        %v2901 = vmul.f32 %v2896, 2.0
        %v2902 = vadd.f32 %v2887, %v2897
        %v2903 = vadd.f32 %v2888, %v2898
        %v2904 = vadd.f32 %v2889, %v2899
        %v2905 = vadd.f32 %v2890, %v2900
        %v2906 = vadd.f32 %v2891, %v2901
        %v2907 = vmul.f32 %v2742, %v2456
        %v2908 = vmul.f32 %v2743, %v2459
        %v2909 = vmul.f32 %v2744, %v2462
        %v2910 = vmul.f32 %v2745, %v2465
        %v2911 = vmul.f32 %v2746, %v2468
        %v2912 = vadd.f32 %v2902, %v2907
        %v2913 = vadd.f32 %v2903, %v2908
        %v2914 = vadd.f32 %v2904, %v2909
        %v2915 = vadd.f32 %v2905, %v2910
        %v2916 = vadd.f32 %v2906, %v2911
        %v2917 = vmul.f32 %v2702, %v2584
        %v2918 = vmul.f32 %v2703, %v2587
        %v2919 = vmul.f32 %v2704, %v2590
        %v2920 = vmul.f32 %v2705, %v2593
        %v2921 = vmul.f32 %v2706, %v2596
        %v2922 = vadd.f32 %v2912, %v2917
        %v2923 = vadd.f32 %v2913, %v2918
        %v2924 = vadd.f32 %v2914, %v2919
        %v2925 = vadd.f32 %v2915, %v2920
        %v2926 = vadd.f32 %v2916, %v2921
        %2927 = vst [vmem:[#allocation3 + $0x38] sm:$0xff] %v2922
        %2928 = vst [vmem:[#allocation3 + $0x88] sm:$0xff] %v2923
        %2929 = vst [vmem:[#allocation3 + $0xd8] sm:$0xff] %v2924
        %2930 = vst [vmem:[#allocation3 + $0x128] sm:$0xff] %v2925
        %2931 = vst [vmem:[#allocation3 + $0x178] sm:$0xff] %v2926
        %v2932 = vmul.f32 %v2747, %v2757
        %v2933 = vmul.f32 %v2748, %v2758
        %v2934 = vmul.f32 %v2749, %v2759
        %v2935 = vmul.f32 %v2750, %v2760
        %v2936 = vmul.f32 %v2751, %v2761
        %v2937 = vmul.f32 %v2737, %v2520
        %v2938 = vmul.f32 %v2738, %v2523
        %v2939 = vmul.f32 %v2739, %v2526
        %v2940 = vmul.f32 %v2740, %v2529
        %v2941 = vmul.f32 %v2741, %v2532
        %v2942 = vadd.f32 %v2932, %v2937
        %v2943 = vadd.f32 %v2933, %v2938
        %v2944 = vadd.f32 %v2934, %v2939
        %v2945 = vadd.f32 %v2935, %v2940
        %v2946 = vadd.f32 %v2936, %v2941
        %v2947 = vmul.f32 %v2742, %v2488
        %v2948 = vmul.f32 %v2743, %v2491
        %v2949 = vmul.f32 %v2744, %v2494
        %v2950 = vmul.f32 %v2745, %v2497
        %v2951 = vmul.f32 %v2746, %v2500
        %v2952 = vmul.f32 %v2947, 2.0
        %v2953 = vmul.f32 %v2948, 2.0
        %v2954 = vmul.f32 %v2949, 2.0
        %v2955 = vmul.f32 %v2950, 2.0
        %v2956 = vmul.f32 %v2951, 2.0
        %v2957 = vadd.f32 %v2942, %v2952
        %v2958 = vadd.f32 %v2943, %v2953
        %v2959 = vadd.f32 %v2944, %v2954
        %v2960 = vadd.f32 %v2945, %v2955
        %v2961 = vadd.f32 %v2946, %v2956
        %v2962 = vmul.f32 %v2702, %v2616
        %v2963 = vmul.f32 %v2703, %v2619
        %v2964 = vmul.f32 %v2704, %v2622
        %v2965 = vmul.f32 %v2705, %v2625
        %v2966 = vmul.f32 %v2706, %v2628
        %v2967 = vadd.f32 %v2957, %v2962
        %v2968 = vadd.f32 %v2958, %v2963
        %v2969 = vadd.f32 %v2959, %v2964
        %v2970 = vadd.f32 %v2960, %v2965
        %v2971 = vadd.f32 %v2961, %v2966
        %2972 = vst [vmem:[#allocation3 + $0x40] sm:$0xff] %v2967
        %2973 = vst [vmem:[#allocation3 + $0x90] sm:$0xff] %v2968
        %2974 = vst [vmem:[#allocation3 + $0xe0] sm:$0xff] %v2969
        %2975 = vst [vmem:[#allocation3 + $0x130] sm:$0xff] %v2970
        %2976 = vst [vmem:[#allocation3 + $0x180] sm:$0xff] %v2971
        %v2977 = vmul.f32 %v2757, %v2424
        %v2978 = vmul.f32 %v2758, %v2427
        %v2979 = vmul.f32 %v2759, %v2430
        %v2980 = vmul.f32 %v2760, %v2433
        %v2981 = vmul.f32 %v2761, %v2436
        %v2982 = vmul.f32 %v2732, %v2977
        %v2983 = vmul.f32 %v2733, %v2978
        %v2984 = vmul.f32 %v2734, %v2979
        %v2985 = vmul.f32 %v2735, %v2980
        %v2986 = vmul.f32 %v2736, %v2981
        %v2987 = vmul.f32 %v2742, %v2520
        %v2988 = vmul.f32 %v2743, %v2523
        %v2989 = vmul.f32 %v2744, %v2526
        %v2990 = vmul.f32 %v2745, %v2529
        %v2991 = vmul.f32 %v2746, %v2532
        %v2992 = vmul.f32 %v2987, 3.0
        %v2993 = vmul.f32 %v2988, 3.0
        %v2994 = vmul.f32 %v2989, 3.0
        %v2995 = vmul.f32 %v2990, 3.0
        %v2996 = vmul.f32 %v2991, 3.0
        %v2997 = vadd.f32 %v2982, %v2992
        %v2998 = vadd.f32 %v2983, %v2993
        %v2999 = vadd.f32 %v2984, %v2994
        %v3000 = vadd.f32 %v2985, %v2995
        %v3001 = vadd.f32 %v2986, %v2996
        %v3002 = vmul.f32 %v2702, %v2648
        %v3003 = vmul.f32 %v2703, %v2651
        %v3004 = vmul.f32 %v2704, %v2654
        %v3005 = vmul.f32 %v2705, %v2657
        %v3006 = vmul.f32 %v2706, %v2660
        %v3007 = vadd.f32 %v2997, %v3002
        %v3008 = vadd.f32 %v2998, %v3003
        %v3009 = vadd.f32 %v2999, %v3004
        %v3010 = vadd.f32 %v3000, %v3005
        %v3011 = vadd.f32 %v3001, %v3006
        %3012 = vst [vmem:[#allocation3 + $0x48] sm:$0xff] %v3007
        %3013 = vst [vmem:[#allocation3 + $0x98] sm:$0xff] %v3008
        %3014 = vst [vmem:[#allocation3 + $0xe8] sm:$0xff] %v3009
        %3015 = vst [vmem:[#allocation3 + $0x138] sm:$0xff] %v3010
        %3016 = vst [vmem:[#allocation3 + $0x188] sm:$0xff] %v3011
        %s3017 = scalar_lea.vmem %s3, 120
        %v3018 = vld [vmem:[%s3017] sm:$0xff]
        %v3019 = vld [vmem:[%s3017 + $0x8] sm:$0xff]
        %v3020 = vld [vmem:[%s3017 + $0x10] sm:$0xff]
        %v3021 = vld [vmem:[%s3017 + $0x18] sm:$0xff]
        %v3022 = vld [vmem:[%s3017 + $0x20] sm:$0xff]
        %s3023 = scalar_lea.vmem %s4, 120
        %v3024 = vld [vmem:[%s3023] sm:$0xff]
        %v3025 = vld [vmem:[%s3023 + $0x8] sm:$0xff]
        %v3026 = vld [vmem:[%s3023 + $0x10] sm:$0xff]
        %v3027 = vld [vmem:[%s3023 + $0x18] sm:$0xff]
        %v3028 = vld [vmem:[%s3023 + $0x20] sm:$0xff]
        %v3029 = vld [vmem:[#allocation3] sm:$0xff]
        %v3030 = vld [vmem:[#allocation3 + $0x8] sm:$0xff]
        %v3031 = vld [vmem:[#allocation3 + $0x10] sm:$0xff]
        %v3032 = vld [vmem:[#allocation3 + $0x18] sm:$0xff]
        %v3033 = vld [vmem:[#allocation3 + $0x20] sm:$0xff]
        %v3034 = vld [vmem:[#allocation3 + $0x28] sm:$0xff]
        %v3035 = vld [vmem:[#allocation3 + $0x30] sm:$0xff]
        %v3036 = vld [vmem:[#allocation3 + $0x38] sm:$0xff]
        %v3037 = vld [vmem:[#allocation3 + $0x40] sm:$0xff]
        %v3038 = vld [vmem:[#allocation3 + $0x48] sm:$0xff]
        %v3039 = vld [vmem:[#allocation3 + $0x50] sm:$0xff]
        %v3040 = vld [vmem:[#allocation3 + $0x58] sm:$0xff]
        %v3041 = vld [vmem:[#allocation3 + $0x60] sm:$0xff]
        %v3042 = vld [vmem:[#allocation3 + $0x68] sm:$0xff]
        %v3043 = vld [vmem:[#allocation3 + $0x70] sm:$0xff]
        %v3044 = vld [vmem:[#allocation3 + $0x78] sm:$0xff]
        %v3045 = vld [vmem:[#allocation3 + $0x80] sm:$0xff]
        %v3046 = vld [vmem:[#allocation3 + $0x88] sm:$0xff]
        %v3047 = vld [vmem:[#allocation3 + $0x90] sm:$0xff]
        %v3048 = vld [vmem:[#allocation3 + $0x98] sm:$0xff]
        %v3049 = vld [vmem:[#allocation3 + $0xa0] sm:$0xff]
        %v3050 = vld [vmem:[#allocation3 + $0xa8] sm:$0xff]
        %v3051 = vld [vmem:[#allocation3 + $0xb0] sm:$0xff]
        %v3052 = vld [vmem:[#allocation3 + $0xb8] sm:$0xff]
        %v3053 = vld [vmem:[#allocation3 + $0xc0] sm:$0xff]
        %v3054 = vld [vmem:[#allocation3 + $0xc8] sm:$0xff]
        %v3055 = vld [vmem:[#allocation3 + $0xd0] sm:$0xff]
        %v3056 = vld [vmem:[#allocation3 + $0xd8] sm:$0xff]
        %v3057 = vld [vmem:[#allocation3 + $0xe0] sm:$0xff]
        %v3058 = vld [vmem:[#allocation3 + $0xe8] sm:$0xff]
        %v3059 = vld [vmem:[#allocation3 + $0xf0] sm:$0xff]
        %v3060 = vld [vmem:[#allocation3 + $0xf8] sm:$0xff]
        %v3061 = vld [vmem:[#allocation3 + $0x100] sm:$0xff]
        %v3062 = vld [vmem:[#allocation3 + $0x108] sm:$0xff]
        %v3063 = vld [vmem:[#allocation3 + $0x110] sm:$0xff]
        %v3064 = vld [vmem:[#allocation3 + $0x118] sm:$0xff]
        %v3065 = vld [vmem:[#allocation3 + $0x120] sm:$0xff]
        %v3066 = vld [vmem:[#allocation3 + $0x128] sm:$0xff]
        %v3067 = vld [vmem:[#allocation3 + $0x130] sm:$0xff]
        %v3068 = vld [vmem:[#allocation3 + $0x138] sm:$0xff]
        %v3069 = vld [vmem:[#allocation3 + $0x140] sm:$0xff]
        %v3070 = vld [vmem:[#allocation3 + $0x148] sm:$0xff]
        %v3071 = vld [vmem:[#allocation3 + $0x150] sm:$0xff]
        %v3072 = vld [vmem:[#allocation3 + $0x158] sm:$0xff]
        %v3073 = vld [vmem:[#allocation3 + $0x160] sm:$0xff]
        %v3074 = vld [vmem:[#allocation3 + $0x168] sm:$0xff]
        %v3075 = vld [vmem:[#allocation3 + $0x170] sm:$0xff]
        %v3076 = vld [vmem:[#allocation3 + $0x178] sm:$0xff]
        %v3077 = vld [vmem:[#allocation3 + $0x180] sm:$0xff]
        %v3078 = vld [vmem:[#allocation3 + $0x188] sm:$0xff]
        %v3080 = vsel %vm822, %v3018, 0
        %v3083 = vsel %vm822, %v3019, 0
        %v3086 = vsel %vm822, %v3020, 0
        %v3089 = vsel %vm822, %v3021, 0
        %v3092 = vsel %vm822, %v3022, 0
        %3094 = vmatpush.msra.mxu0 0.0
        %3095 = vmatpush.msra.mxu0 0.0
        %3096 = vmatpush.msra.mxu0 0.0
        %3097 = vmatpush.msra.mxu0 0.0
        %3098 = vmatpush.msra.mxu0 0.0
        %3099 = vmatpush.msra.mxu0 0.0
        %3100 = vmatpush.msra.mxu0 0.0
        %3101 = vmatpush.msra.mxu0 0.0
        %3102 = vmatpush.msra.mxu0 0.0
        %3103 = vmatpush.msra.mxu0 0.0
        %3104 = vmatpush.msra.mxu0 0.0
        %3105 = vmatpush.msra.mxu0 %v3069
        %3106 = vmatpush.msra.mxu0 %v3059
        %3107 = vmatpush.msra.mxu0 %v3049
        %3108 = vmatpush.msra.mxu0 %v3039
        %3109 = vmatpush.msra.mxu0 %v3029
        %3110 = vmatmul.f32.gmra.mxu0 %v3080
        %v3111 = vpop.f32.mrf.mxu0
        %v3112 = vadd.f32 0.0, %v3111
        %3113 = vmatmul.f32.gmra.mxu0 %v3083
        %v3114 = vpop.f32.mrf.mxu0
        %v3115 = vadd.f32 0.0, %v3114
        %3116 = vmatmul.f32.gmra.mxu0 %v3086
        %v3117 = vpop.f32.mrf.mxu0
        %v3118 = vadd.f32 0.0, %v3117
        %3119 = vmatmul.f32.gmra.mxu0 %v3089
        %v3120 = vpop.f32.mrf.mxu0
        %v3121 = vadd.f32 0.0, %v3120
        %3122 = vmatmul.f32.gmra.mxu0 %v3092
        %v3123 = vpop.f32.mrf.mxu0
        %v3124 = vadd.f32 0.0, %v3123
        %3125 = vdwg.mxu0
        %3126 = vmatpush.msra.mxu0 0.0
        %3127 = vmatpush.msra.mxu0 0.0
        %3128 = vmatpush.msra.mxu0 0.0
        %3129 = vmatpush.msra.mxu0 0.0
        %3130 = vmatpush.msra.mxu0 0.0
        %3131 = vmatpush.msra.mxu0 0.0
        %3132 = vmatpush.msra.mxu0 0.0
        %3133 = vmatpush.msra.mxu0 0.0
        %3134 = vmatpush.msra.mxu0 0.0
        %3135 = vmatpush.msra.mxu0 0.0
        %3136 = vmatpush.msra.mxu0 0.0
        %3137 = vmatpush.msra.mxu0 %v3070
        %3138 = vmatpush.msra.mxu0 %v3060
        %3139 = vmatpush.msra.mxu0 %v3050
        %3140 = vmatpush.msra.mxu0 %v3040
        %3141 = vmatpush.msra.mxu0 %v3030
        %3142 = vmatmul.f32.gmra.mxu0 %v3080
        %v3143 = vpop.f32.mrf.mxu0
        %v3144 = vadd.f32 0.0, %v3143
        %3145 = vmatmul.f32.gmra.mxu0 %v3083
        %v3146 = vpop.f32.mrf.mxu0
        %v3147 = vadd.f32 0.0, %v3146
        %3148 = vmatmul.f32.gmra.mxu0 %v3086
        %v3149 = vpop.f32.mrf.mxu0
        %v3150 = vadd.f32 0.0, %v3149
        %3151 = vmatmul.f32.gmra.mxu0 %v3089
        %v3152 = vpop.f32.mrf.mxu0
        %v3153 = vadd.f32 0.0, %v3152
        %3154 = vmatmul.f32.gmra.mxu0 %v3092
        %v3155 = vpop.f32.mrf.mxu0
        %v3156 = vadd.f32 0.0, %v3155
        %3157 = vdwg.mxu0
        %3158 = vmatpush.msra.mxu0 0.0
        %3159 = vmatpush.msra.mxu0 0.0
        %3160 = vmatpush.msra.mxu0 0.0
        %3161 = vmatpush.msra.mxu0 0.0
        %3162 = vmatpush.msra.mxu0 0.0
        %3163 = vmatpush.msra.mxu0 0.0
        %3164 = vmatpush.msra.mxu0 0.0
        %3165 = vmatpush.msra.mxu0 0.0
        %3166 = vmatpush.msra.mxu0 0.0
        %3167 = vmatpush.msra.mxu0 0.0
        %3168 = vmatpush.msra.mxu0 0.0
        %3169 = vmatpush.msra.mxu0 %v3071
        %3170 = vmatpush.msra.mxu0 %v3061
        %3171 = vmatpush.msra.mxu0 %v3051
        %3172 = vmatpush.msra.mxu0 %v3041
        %3173 = vmatpush.msra.mxu0 %v3031
        %3174 = vmatmul.f32.gmra.mxu0 %v3080
        %v3175 = vpop.f32.mrf.mxu0
        %v3176 = vadd.f32 0.0, %v3175
        %3177 = vmatmul.f32.gmra.mxu0 %v3083
        %v3178 = vpop.f32.mrf.mxu0
        %v3179 = vadd.f32 0.0, %v3178
        %3180 = vmatmul.f32.gmra.mxu0 %v3086
        %v3181 = vpop.f32.mrf.mxu0
        %v3182 = vadd.f32 0.0, %v3181
        %3183 = vmatmul.f32.gmra.mxu0 %v3089
        %v3184 = vpop.f32.mrf.mxu0
        %v3185 = vadd.f32 0.0, %v3184
        %3186 = vmatmul.f32.gmra.mxu0 %v3092
        %v3187 = vpop.f32.mrf.mxu0
        %v3188 = vadd.f32 0.0, %v3187
        %3189 = vdwg.mxu0
        %3190 = vmatpush.msra.mxu0 0.0
        %3191 = vmatpush.msra.mxu0 0.0
        %3192 = vmatpush.msra.mxu0 0.0
        %3193 = vmatpush.msra.mxu0 0.0
        %3194 = vmatpush.msra.mxu0 0.0
        %3195 = vmatpush.msra.mxu0 0.0
        %3196 = vmatpush.msra.mxu0 0.0
        %3197 = vmatpush.msra.mxu0 0.0
        %3198 = vmatpush.msra.mxu0 0.0
        %3199 = vmatpush.msra.mxu0 0.0
        %3200 = vmatpush.msra.mxu0 0.0
        %3201 = vmatpush.msra.mxu0 %v3072
        %3202 = vmatpush.msra.mxu0 %v3062
        %3203 = vmatpush.msra.mxu0 %v3052
        %3204 = vmatpush.msra.mxu0 %v3042
        %3205 = vmatpush.msra.mxu0 %v3032
        %3206 = vmatmul.f32.gmra.mxu0 %v3080
        %v3207 = vpop.f32.mrf.mxu0
        %v3208 = vadd.f32 0.0, %v3207
        %3209 = vmatmul.f32.gmra.mxu0 %v3083
        %v3210 = vpop.f32.mrf.mxu0
        %v3211 = vadd.f32 0.0, %v3210
        %3212 = vmatmul.f32.gmra.mxu0 %v3086
        %v3213 = vpop.f32.mrf.mxu0
        %v3214 = vadd.f32 0.0, %v3213
        %3215 = vmatmul.f32.gmra.mxu0 %v3089
        %v3216 = vpop.f32.mrf.mxu0
        %v3217 = vadd.f32 0.0, %v3216
        %3218 = vmatmul.f32.gmra.mxu0 %v3092
        %v3219 = vpop.f32.mrf.mxu0
        %v3220 = vadd.f32 0.0, %v3219
        %3221 = vdwg.mxu0
        %3222 = vmatpush.msra.mxu0 0.0
        %3223 = vmatpush.msra.mxu0 0.0
        %3224 = vmatpush.msra.mxu0 0.0
        %3225 = vmatpush.msra.mxu0 0.0
        %3226 = vmatpush.msra.mxu0 0.0
        %3227 = vmatpush.msra.mxu0 0.0
        %3228 = vmatpush.msra.mxu0 0.0
        %3229 = vmatpush.msra.mxu0 0.0
        %3230 = vmatpush.msra.mxu0 0.0
        %3231 = vmatpush.msra.mxu0 0.0
        %3232 = vmatpush.msra.mxu0 0.0
        %3233 = vmatpush.msra.mxu0 %v3073
        %3234 = vmatpush.msra.mxu0 %v3063
        %3235 = vmatpush.msra.mxu0 %v3053
        %3236 = vmatpush.msra.mxu0 %v3043
        %3237 = vmatpush.msra.mxu0 %v3033
        %3238 = vmatmul.f32.gmra.mxu0 %v3080
        %v3239 = vpop.f32.mrf.mxu0
        %v3240 = vadd.f32 0.0, %v3239
        %3241 = vmatmul.f32.gmra.mxu0 %v3083
        %v3242 = vpop.f32.mrf.mxu0
        %v3243 = vadd.f32 0.0, %v3242
        %3244 = vmatmul.f32.gmra.mxu0 %v3086
        %v3245 = vpop.f32.mrf.mxu0
        %v3246 = vadd.f32 0.0, %v3245
        %3247 = vmatmul.f32.gmra.mxu0 %v3089
        %v3248 = vpop.f32.mrf.mxu0
        %v3249 = vadd.f32 0.0, %v3248
        %3250 = vmatmul.f32.gmra.mxu0 %v3092
        %v3251 = vpop.f32.mrf.mxu0
        %v3252 = vadd.f32 0.0, %v3251
        %3253 = vdwg.mxu0
        %3254 = vmatpush.msra.mxu0 0.0
        %3255 = vmatpush.msra.mxu0 0.0
        %3256 = vmatpush.msra.mxu0 0.0
        %3257 = vmatpush.msra.mxu0 0.0
        %3258 = vmatpush.msra.mxu0 0.0
        %3259 = vmatpush.msra.mxu0 0.0
        %3260 = vmatpush.msra.mxu0 0.0
        %3261 = vmatpush.msra.mxu0 0.0
        %3262 = vmatpush.msra.mxu0 0.0
        %3263 = vmatpush.msra.mxu0 0.0
        %3264 = vmatpush.msra.mxu0 0.0
        %3265 = vmatpush.msra.mxu0 %v3074
        %3266 = vmatpush.msra.mxu0 %v3064
        %3267 = vmatpush.msra.mxu0 %v3054
        %3268 = vmatpush.msra.mxu0 %v3044
        %3269 = vmatpush.msra.mxu0 %v3034
        %3270 = vmatmul.f32.gmra.mxu0 %v3080
        %v3271 = vpop.f32.mrf.mxu0
        %v3272 = vadd.f32 0.0, %v3271
        %3273 = vmatmul.f32.gmra.mxu0 %v3083
        %v3274 = vpop.f32.mrf.mxu0
        %v3275 = vadd.f32 0.0, %v3274
        %3276 = vmatmul.f32.gmra.mxu0 %v3086
        %v3277 = vpop.f32.mrf.mxu0
        %v3278 = vadd.f32 0.0, %v3277
        %3279 = vmatmul.f32.gmra.mxu0 %v3089
        %v3280 = vpop.f32.mrf.mxu0
        %v3281 = vadd.f32 0.0, %v3280
        %3282 = vmatmul.f32.gmra.mxu0 %v3092
        %v3283 = vpop.f32.mrf.mxu0
        %v3284 = vadd.f32 0.0, %v3283
        %3285 = vdwg.mxu0
        %3286 = vmatpush.msra.mxu0 0.0
        %3287 = vmatpush.msra.mxu0 0.0
        %3288 = vmatpush.msra.mxu0 0.0
        %3289 = vmatpush.msra.mxu0 0.0
        %3290 = vmatpush.msra.mxu0 0.0
        %3291 = vmatpush.msra.mxu0 0.0
        %3292 = vmatpush.msra.mxu0 0.0
        %3293 = vmatpush.msra.mxu0 0.0
        %3294 = vmatpush.msra.mxu0 0.0
        %3295 = vmatpush.msra.mxu0 0.0
        %3296 = vmatpush.msra.mxu0 0.0
        %3297 = vmatpush.msra.mxu0 %v3075
        %3298 = vmatpush.msra.mxu0 %v3065
        %3299 = vmatpush.msra.mxu0 %v3055
        %3300 = vmatpush.msra.mxu0 %v3045
        %3301 = vmatpush.msra.mxu0 %v3035
        %3302 = vmatmul.f32.gmra.mxu0 %v3080
        %v3303 = vpop.f32.mrf.mxu0
        %v3304 = vadd.f32 0.0, %v3303
        %3305 = vmatmul.f32.gmra.mxu0 %v3083
        %v3306 = vpop.f32.mrf.mxu0
        %v3307 = vadd.f32 0.0, %v3306
        %3308 = vmatmul.f32.gmra.mxu0 %v3086
        %v3309 = vpop.f32.mrf.mxu0
        %v3310 = vadd.f32 0.0, %v3309
        %3311 = vmatmul.f32.gmra.mxu0 %v3089
        %v3312 = vpop.f32.mrf.mxu0
        %v3313 = vadd.f32 0.0, %v3312
        %3314 = vmatmul.f32.gmra.mxu0 %v3092
        %v3315 = vpop.f32.mrf.mxu0
        %v3316 = vadd.f32 0.0, %v3315
        %3317 = vdwg.mxu0
        %3318 = vmatpush.msra.mxu0 0.0
        %3319 = vmatpush.msra.mxu0 0.0
        %3320 = vmatpush.msra.mxu0 0.0
        %3321 = vmatpush.msra.mxu0 0.0
        %3322 = vmatpush.msra.mxu0 0.0
        %3323 = vmatpush.msra.mxu0 0.0
        %3324 = vmatpush.msra.mxu0 0.0
        %3325 = vmatpush.msra.mxu0 0.0
        %3326 = vmatpush.msra.mxu0 0.0
        %3327 = vmatpush.msra.mxu0 0.0
        %3328 = vmatpush.msra.mxu0 0.0
        %3329 = vmatpush.msra.mxu0 %v3076
        %3330 = vmatpush.msra.mxu0 %v3066
        %3331 = vmatpush.msra.mxu0 %v3056
        %3332 = vmatpush.msra.mxu0 %v3046
        %3333 = vmatpush.msra.mxu0 %v3036
        %3334 = vmatmul.f32.gmra.mxu0 %v3080
        %v3335 = vpop.f32.mrf.mxu0
        %v3336 = vadd.f32 0.0, %v3335
        %3337 = vmatmul.f32.gmra.mxu0 %v3083
        %v3338 = vpop.f32.mrf.mxu0
        %v3339 = vadd.f32 0.0, %v3338
        %3340 = vmatmul.f32.gmra.mxu0 %v3086
        %v3341 = vpop.f32.mrf.mxu0
        %v3342 = vadd.f32 0.0, %v3341
        %3343 = vmatmul.f32.gmra.mxu0 %v3089
        %v3344 = vpop.f32.mrf.mxu0
        %v3345 = vadd.f32 0.0, %v3344
        %3346 = vmatmul.f32.gmra.mxu0 %v3092
        %v3347 = vpop.f32.mrf.mxu0
        %v3348 = vadd.f32 0.0, %v3347
        %3349 = vdwg.mxu0
        %3350 = vmatpush.msra.mxu0 0.0
        %3351 = vmatpush.msra.mxu0 0.0
        %3352 = vmatpush.msra.mxu0 0.0
        %3353 = vmatpush.msra.mxu0 0.0
        %3354 = vmatpush.msra.mxu0 0.0
        %3355 = vmatpush.msra.mxu0 0.0
        %3356 = vmatpush.msra.mxu0 0.0
        %3357 = vmatpush.msra.mxu0 0.0
        %3358 = vmatpush.msra.mxu0 0.0
        %3359 = vmatpush.msra.mxu0 0.0
        %3360 = vmatpush.msra.mxu0 0.0
        %3361 = vmatpush.msra.mxu0 %v3077
        %3362 = vmatpush.msra.mxu0 %v3067
        %3363 = vmatpush.msra.mxu0 %v3057
        %3364 = vmatpush.msra.mxu0 %v3047
        %3365 = vmatpush.msra.mxu0 %v3037
        %3366 = vmatmul.f32.gmra.mxu0 %v3080
        %v3367 = vpop.f32.mrf.mxu0
        %v3368 = vadd.f32 0.0, %v3367
        %3369 = vmatmul.f32.gmra.mxu0 %v3083
        %v3370 = vpop.f32.mrf.mxu0
        %v3371 = vadd.f32 0.0, %v3370
        %3372 = vmatmul.f32.gmra.mxu0 %v3086
        %v3373 = vpop.f32.mrf.mxu0
        %v3374 = vadd.f32 0.0, %v3373
        %3375 = vmatmul.f32.gmra.mxu0 %v3089
        %v3376 = vpop.f32.mrf.mxu0
        %v3377 = vadd.f32 0.0, %v3376
        %3378 = vmatmul.f32.gmra.mxu0 %v3092
        %v3379 = vpop.f32.mrf.mxu0
        %v3380 = vadd.f32 0.0, %v3379
        %3381 = vdwg.mxu0
        %3382 = vmatpush.msra.mxu0 0.0
        %3383 = vmatpush.msra.mxu0 0.0
        %3384 = vmatpush.msra.mxu0 0.0
        %3385 = vmatpush.msra.mxu0 0.0
        %3386 = vmatpush.msra.mxu0 0.0
        %3387 = vmatpush.msra.mxu0 0.0
        %3388 = vmatpush.msra.mxu0 0.0
        %3389 = vmatpush.msra.mxu0 0.0
        %3390 = vmatpush.msra.mxu0 0.0
        %3391 = vmatpush.msra.mxu0 0.0
        %3392 = vmatpush.msra.mxu0 0.0
        %3393 = vmatpush.msra.mxu0 %v3078
        %3394 = vmatpush.msra.mxu0 %v3068
        %3395 = vmatpush.msra.mxu0 %v3058
        %3396 = vmatpush.msra.mxu0 %v3048
        %3397 = vmatpush.msra.mxu0 %v3038
        %3398 = vmatmul.f32.gmra.mxu0 %v3080
        %v3399 = vpop.f32.mrf.mxu0
        %v3400 = vadd.f32 0.0, %v3399
        %3401 = vmatmul.f32.gmra.mxu0 %v3083
        %v3402 = vpop.f32.mrf.mxu0
        %v3403 = vadd.f32 0.0, %v3402
        %3404 = vmatmul.f32.gmra.mxu0 %v3086
        %v3405 = vpop.f32.mrf.mxu0
        %v3406 = vadd.f32 0.0, %v3405
        %3407 = vmatmul.f32.gmra.mxu0 %v3089
        %v3408 = vpop.f32.mrf.mxu0
        %v3409 = vadd.f32 0.0, %v3408
        %3410 = vmatmul.f32.gmra.mxu0 %v3092
        %v3411 = vpop.f32.mrf.mxu0
        %v3412 = vadd.f32 0.0, %v3411
        %3413 = vdwg.mxu0
        %3415 = vset.pattern.permute.xlu0 0
        %3416 = vperm.xlu0 %3415, %v3024
        %v3417 = vpop.permute.xlu0 %3416
        %3420 = vset.pattern.permute.xlu0 0
        %3421 = vperm.xlu0 %3420, %v3025
        %v3422 = vpop.permute.xlu0 %3421
        %3425 = vset.pattern.permute.xlu0 0
        %3426 = vperm.xlu0 %3425, %v3026
        %v3427 = vpop.permute.xlu0 %3426
        %3430 = vset.pattern.permute.xlu0 0
        %3431 = vperm.xlu0 %3430, %v3027
        %v3432 = vpop.permute.xlu0 %3431
        %3435 = vset.pattern.permute.xlu0 0
        %3436 = vperm.xlu0 %3435, %v3028
        %v3437 = vpop.permute.xlu0 %3436
        %v3439 = vadd.f32 %v3112, %v3417
        %v3440 = vadd.f32 %v3115, %v3422
        %v3441 = vadd.f32 %v3118, %v3427
        %v3442 = vadd.f32 %v3121, %v3432
        %v3443 = vadd.f32 %v3124, %v3437
        %v3444 = vtanh.pop %v3439
        %v3445 = vtanh.pop %v3440
        %v3446 = vtanh.pop %v3441
        %v3447 = vtanh.pop %v3442
        %v3448 = vtanh.pop %v3443
        %v3449 = vmul.f32 %v3444, %v3444
        %v3450 = vmul.f32 %v3445, %v3445
        %v3451 = vmul.f32 %v3446, %v3446
        %v3452 = vmul.f32 %v3447, %v3447
        %v3453 = vmul.f32 %v3448, %v3448
        %v3454 = vsub.f32 1.0, %v3449
        %v3455 = vsub.f32 1.0, %v3450
        %v3456 = vsub.f32 1.0, %v3451
        %v3457 = vsub.f32 1.0, %v3452
        %v3458 = vsub.f32 1.0, %v3453
        %v3459 = vmul.f32 %v3444, %v3454
        %v3460 = vmul.f32 %v3445, %v3455
        %v3461 = vmul.f32 %v3446, %v3456
        %v3462 = vmul.f32 %v3447, %v3457
        %v3463 = vmul.f32 %v3448, %v3458
        %v3464 = vmul.f32 %v3459, -2.0
        %v3465 = vmul.f32 %v3460, -2.0
        %v3466 = vmul.f32 %v3461, -2.0
        %v3467 = vmul.f32 %v3462, -2.0
        %v3468 = vmul.f32 %v3463, -2.0
        %v3469 = vmul.f32 %v3454, 2.0
        %v3470 = vmul.f32 %v3455, 2.0
        %v3471 = vmul.f32 %v3456, 2.0
        %v3472 = vmul.f32 %v3457, 2.0
        %v3473 = vmul.f32 %v3458, 2.0
        %v3474 = vmul.f32 %v3449, 2.0
        %v3475 = vmul.f32 %v3450, 2.0
        %v3476 = vmul.f32 %v3451, 2.0
        %v3477 = vmul.f32 %v3452, 2.0
        %v3478 = vmul.f32 %v3453, 2.0
        %v3479 = vsub.f32 %v3474, %v3454
        %v3480 = vsub.f32 %v3475, %v3455
        %v3481 = vsub.f32 %v3476, %v3456
        %v3482 = vsub.f32 %v3477, %v3457
        %v3483 = vsub.f32 %v3478, %v3458
        %v3484 = vmul.f32 %v3469, %v3479
        %v3485 = vmul.f32 %v3470, %v3480
        %v3486 = vmul.f32 %v3471, %v3481
        %v3487 = vmul.f32 %v3472, %v3482
        %v3488 = vmul.f32 %v3473, %v3483
        %v3489 = vmul.f32 %v3464, %v3144
        %v3490 = vmul.f32 %v3465, %v3147
        %v3491 = vmul.f32 %v3466, %v3150
        %v3492 = vmul.f32 %v3467, %v3153
        %v3493 = vmul.f32 %v3468, %v3156
        %v3494 = vmul.f32 %v3464, %v3176
        %v3495 = vmul.f32 %v3465, %v3179
        %v3496 = vmul.f32 %v3466, %v3182
        %v3497 = vmul.f32 %v3467, %v3185
        %v3498 = vmul.f32 %v3468, %v3188
        %v3499 = vmul.f32 %v3484, %v3144
        %v3500 = vmul.f32 %v3485, %v3147
        %v3501 = vmul.f32 %v3486, %v3150
        %v3502 = vmul.f32 %v3487, %v3153
        %v3503 = vmul.f32 %v3488, %v3156
        %v3504 = vmul.f32 %v3144, %v3144
        %v3505 = vmul.f32 %v3147, %v3147
        %v3506 = vmul.f32 %v3150, %v3150
        %v3507 = vmul.f32 %v3153, %v3153
        %v3508 = vmul.f32 %v3156, %v3156
        %v3509 = vmul.f32 %v3176, %v3176
        %v3510 = vmul.f32 %v3179, %v3179
        %v3511 = vmul.f32 %v3182, %v3182
        %v3512 = vmul.f32 %v3185, %v3185
        %v3513 = vmul.f32 %v3188, %v3188
        %v3514 = vmul.f32 %v3144, %v3176
        %v3515 = vmul.f32 %v3147, %v3179
        %v3516 = vmul.f32 %v3150, %v3182
        %v3517 = vmul.f32 %v3153, %v3185
        %v3518 = vmul.f32 %v3156, %v3188
        %3519 = vst [vmem:[#allocation2] sm:$0xff] %v3444
        %3520 = vst [vmem:[#allocation2 + $0x50] sm:$0xff] %v3445
        %3521 = vst [vmem:[#allocation2 + $0xa0] sm:$0xff] %v3446
        %3522 = vst [vmem:[#allocation2 + $0xf0] sm:$0xff] %v3447
        %3523 = vst [vmem:[#allocation2 + $0x140] sm:$0xff] %v3448
        %v3524 = vmul.f32 %v3454, %v3144
        %v3525 = vmul.f32 %v3455, %v3147
        %v3526 = vmul.f32 %v3456, %v3150
        %v3527 = vmul.f32 %v3457, %v3153
        %v3528 = vmul.f32 %v3458, %v3156
        %3529 = vst [vmem:[#allocation2 + $0x8] sm:$0xff] %v3524
        %3530 = vst [vmem:[#allocation2 + $0x58] sm:$0xff] %v3525
        %3531 = vst [vmem:[#allocation2 + $0xa8] sm:$0xff] %v3526
        %3532 = vst [vmem:[#allocation2 + $0xf8] sm:$0xff] %v3527
        %3533 = vst [vmem:[#allocation2 + $0x148] sm:$0xff] %v3528
        %v3534 = vmul.f32 %v3454, %v3176
        %v3535 = vmul.f32 %v3455, %v3179
        %v3536 = vmul.f32 %v3456, %v3182
        %v3537 = vmul.f32 %v3457, %v3185
        %v3538 = vmul.f32 %v3458, %v3188
        %3539 = vst [vmem:[#allocation2 + $0x10] sm:$0xff] %v3534
        %3540 = vst [vmem:[#allocation2 + $0x60] sm:$0xff] %v3535
        %3541 = vst [vmem:[#allocation2 + $0xb0] sm:$0xff] %v3536
        %3542 = vst [vmem:[#allocation2 + $0x100] sm:$0xff] %v3537
        %3543 = vst [vmem:[#allocation2 + $0x150] sm:$0xff] %v3538
        %v3544 = vmul.f32 %v3489, %v3144
        %v3545 = vmul.f32 %v3490, %v3147
        %v3546 = vmul.f32 %v3491, %v3150
        %v3547 = vmul.f32 %v3492, %v3153
        %v3548 = vmul.f32 %v3493, %v3156
        %v3549 = vmul.f32 %v3454, %v3208
        %v3550 = vmul.f32 %v3455, %v3211
        %v3551 = vmul.f32 %v3456, %v3214
        %v3552 = vmul.f32 %v3457, %v3217
        %v3553 = vmul.f32 %v3458, %v3220
        %v3554 = vadd.f32 %v3544, %v3549
        %v3555 = vadd.f32 %v3545, %v3550
        %v3556 = vadd.f32 %v3546, %v3551
        %v3557 = vadd.f32 %v3547, %v3552
        %v3558 = vadd.f32 %v3548, %v3553
        %3559 = vst [vmem:[#allocation2 + $0x18] sm:$0xff] %v3554
        %3560 = vst [vmem:[#allocation2 + $0x68] sm:$0xff] %v3555
        %3561 = vst [vmem:[#allocation2 + $0xb8] sm:$0xff] %v3556
        %3562 = vst [vmem:[#allocation2 + $0x108] sm:$0xff] %v3557
        %3563 = vst [vmem:[#allocation2 + $0x158] sm:$0xff] %v3558
        %v3564 = vmul.f32 %v3489, %v3176
        %v3565 = vmul.f32 %v3490, %v3179
        %v3566 = vmul.f32 %v3491, %v3182
        %v3567 = vmul.f32 %v3492, %v3185
        %v3568 = vmul.f32 %v3493, %v3188
        %v3569 = vmul.f32 %v3454, %v3240
        %v3570 = vmul.f32 %v3455, %v3243
        %v3571 = vmul.f32 %v3456, %v3246
        %v3572 = vmul.f32 %v3457, %v3249
        %v3573 = vmul.f32 %v3458, %v3252
        %v3574 = vadd.f32 %v3564, %v3569
        %v3575 = vadd.f32 %v3565, %v3570
        %v3576 = vadd.f32 %v3566, %v3571
        %v3577 = vadd.f32 %v3567, %v3572
        %v3578 = vadd.f32 %v3568, %v3573
        %3579 = vst [vmem:[#allocation2 + $0x20] sm:$0xff] %v3574
        %3580 = vst [vmem:[#allocation2 + $0x70] sm:$0xff] %v3575
        %3581 = vst [vmem:[#allocation2 + $0xc0] sm:$0xff] %v3576
        %3582 = vst [vmem:[#allocation2 + $0x110] sm:$0xff] %v3577
        %3583 = vst [vmem:[#allocation2 + $0x160] sm:$0xff] %v3578
        %v3584 = vmul.f32 %v3494, %v3176
        %v3585 = vmul.f32 %v3495, %v3179
        %v3586 = vmul.f32 %v3496, %v3182
        %v3587 = vmul.f32 %v3497, %v3185
        %v3588 = vmul.f32 %v3498, %v3188
        %v3589 = vmul.f32 %v3454, %v3272
        %v3590 = vmul.f32 %v3455, %v3275
        %v3591 = vmul.f32 %v3456, %v3278
        %v3592 = vmul.f32 %v3457, %v3281
        %v3593 = vmul.f32 %v3458, %v3284
        %v3594 = vadd.f32 %v3584, %v3589
        %v3595 = vadd.f32 %v3585, %v3590
        %v3596 = vadd.f32 %v3586, %v3591
        %v3597 = vadd.f32 %v3587, %v3592
        %v3598 = vadd.f32 %v3588, %v3593
        %3599 = vst [vmem:[#allocation2 + $0x28] sm:$0xff] %v3594
        %3600 = vst [vmem:[#allocation2 + $0x78] sm:$0xff] %v3595
        %3601 = vst [vmem:[#allocation2 + $0xc8] sm:$0xff] %v3596
        %3602 = vst [vmem:[#allocation2 + $0x118] sm:$0xff] %v3597
        %3603 = vst [vmem:[#allocation2 + $0x168] sm:$0xff] %v3598
        %v3604 = vmul.f32 %v3499, %v3504
        %v3605 = vmul.f32 %v3500, %v3505
        %v3606 = vmul.f32 %v3501, %v3506
        %v3607 = vmul.f32 %v3502, %v3507
        %v3608 = vmul.f32 %v3503, %v3508
        %v3609 = vmul.f32 %v3489, %v3208
        %v3610 = vmul.f32 %v3490, %v3211
        %v3611 = vmul.f32 %v3491, %v3214
        %v3612 = vmul.f32 %v3492, %v3217
        %v3613 = vmul.f32 %v3493, %v3220
        %v3614 = vmul.f32 %v3609, 3.0
        %v3615 = vmul.f32 %v3610, 3.0
        %v3616 = vmul.f32 %v3611, 3.0
        %v3617 = vmul.f32 %v3612, 3.0
        %v3618 = vmul.f32 %v3613, 3.0
        %v3619 = vadd.f32 %v3604, %v3614
        %v3620 = vadd.f32 %v3605, %v3615
        %v3621 = vadd.f32 %v3606, %v3616
        %v3622 = vadd.f32 %v3607, %v3617
        %v3623 = vadd.f32 %v3608, %v3618
        %v3624 = vmul.f32 %v3454, %v3304
        %v3625 = vmul.f32 %v3455, %v3307
        %v3626 = vmul.f32 %v3456, %v3310
        %v3627 = vmul.f32 %v3457, %v3313
        %v3628 = vmul.f32 %v3458, %v3316
        %v3629 = vadd.f32 %v3619, %v3624
        %v3630 = vadd.f32 %v3620, %v3625
        %v3631 = vadd.f32 %v3621, %v3626
        %v3632 = vadd.f32 %v3622, %v3627
        %v3633 = vadd.f32 %v3623, %v3628
        %3634 = vst [vmem:[#allocation2 + $0x30] sm:$0xff] %v3629
        %3635 = vst [vmem:[#allocation2 + $0x80] sm:$0xff] %v3630
        %3636 = vst [vmem:[#allocation2 + $0xd0] sm:$0xff] %v3631
        %3637 = vst [vmem:[#allocation2 + $0x120] sm:$0xff] %v3632
        %3638 = vst [vmem:[#allocation2 + $0x170] sm:$0xff] %v3633
        %v3639 = vmul.f32 %v3499, %v3514
        %v3640 = vmul.f32 %v3500, %v3515
        %v3641 = vmul.f32 %v3501, %v3516
        %v3642 = vmul.f32 %v3502, %v3517
        %v3643 = vmul.f32 %v3503, %v3518
        %v3644 = vmul.f32 %v3489, %v3240
        %v3645 = vmul.f32 %v3490, %v3243
        %v3646 = vmul.f32 %v3491, %v3246
        %v3647 = vmul.f32 %v3492, %v3249
        %v3648 = vmul.f32 %v3493, %v3252
        %v3649 = vmul.f32 %v3644, 2.0
        %v3650 = vmul.f32 %v3645, 2.0
        %v3651 = vmul.f32 %v3646, 2.0
        %v3652 = vmul.f32 %v3647, 2.0
        %v3653 = vmul.f32 %v3648, 2.0
        %v3654 = vadd.f32 %v3639, %v3649
        %v3655 = vadd.f32 %v3640, %v3650
        %v3656 = vadd.f32 %v3641, %v3651
        %v3657 = vadd.f32 %v3642, %v3652
        %v3658 = vadd.f32 %v3643, %v3653
        %v3659 = vmul.f32 %v3494, %v3208
        %v3660 = vmul.f32 %v3495, %v3211
        %v3661 = vmul.f32 %v3496, %v3214
        %v3662 = vmul.f32 %v3497, %v3217
        %v3663 = vmul.f32 %v3498, %v3220
        %v3664 = vadd.f32 %v3654, %v3659
        %v3665 = vadd.f32 %v3655, %v3660
        %v3666 = vadd.f32 %v3656, %v3661
        %v3667 = vadd.f32 %v3657, %v3662
        %v3668 = vadd.f32 %v3658, %v3663
        %v3669 = vmul.f32 %v3454, %v3336
        %v3670 = vmul.f32 %v3455, %v3339
        %v3671 = vmul.f32 %v3456, %v3342
        %v3672 = vmul.f32 %v3457, %v3345
        %v3673 = vmul.f32 %v3458, %v3348
        %v3674 = vadd.f32 %v3664, %v3669
        %v3675 = vadd.f32 %v3665, %v3670
        %v3676 = vadd.f32 %v3666, %v3671
        %v3677 = vadd.f32 %v3667, %v3672
        %v3678 = vadd.f32 %v3668, %v3673
        %3679 = vst [vmem:[#allocation2 + $0x38] sm:$0xff] %v3674
        %3680 = vst [vmem:[#allocation2 + $0x88] sm:$0xff] %v3675
        %3681 = vst [vmem:[#allocation2 + $0xd8] sm:$0xff] %v3676
        %3682 = vst [vmem:[#allocation2 + $0x128] sm:$0xff] %v3677
        %3683 = vst [vmem:[#allocation2 + $0x178] sm:$0xff] %v3678
        %v3684 = vmul.f32 %v3499, %v3509
        %v3685 = vmul.f32 %v3500, %v3510
        %v3686 = vmul.f32 %v3501, %v3511
        %v3687 = vmul.f32 %v3502, %v3512
        %v3688 = vmul.f32 %v3503, %v3513
        %v3689 = vmul.f32 %v3489, %v3272
        %v3690 = vmul.f32 %v3490, %v3275
        %v3691 = vmul.f32 %v3491, %v3278
        %v3692 = vmul.f32 %v3492, %v3281
        %v3693 = vmul.f32 %v3493, %v3284
        %v3694 = vadd.f32 %v3684, %v3689
        %v3695 = vadd.f32 %v3685, %v3690
        %v3696 = vadd.f32 %v3686, %v3691
        %v3697 = vadd.f32 %v3687, %v3692
        %v3698 = vadd.f32 %v3688, %v3693
        %v3699 = vmul.f32 %v3494, %v3240
        %v3700 = vmul.f32 %v3495, %v3243
        %v3701 = vmul.f32 %v3496, %v3246
        %v3702 = vmul.f32 %v3497, %v3249
        %v3703 = vmul.f32 %v3498, %v3252
        %v3704 = vmul.f32 %v3699, 2.0
        %v3705 = vmul.f32 %v3700, 2.0
        %v3706 = vmul.f32 %v3701, 2.0
        %v3707 = vmul.f32 %v3702, 2.0
        %v3708 = vmul.f32 %v3703, 2.0
        %v3709 = vadd.f32 %v3694, %v3704
        %v3710 = vadd.f32 %v3695, %v3705
        %v3711 = vadd.f32 %v3696, %v3706
        %v3712 = vadd.f32 %v3697, %v3707
        %v3713 = vadd.f32 %v3698, %v3708
        %v3714 = vmul.f32 %v3454, %v3368
        %v3715 = vmul.f32 %v3455, %v3371
        %v3716 = vmul.f32 %v3456, %v3374
        %v3717 = vmul.f32 %v3457, %v3377
        %v3718 = vmul.f32 %v3458, %v3380
        %v3719 = vadd.f32 %v3709, %v3714
        %v3720 = vadd.f32 %v3710, %v3715
        %v3721 = vadd.f32 %v3711, %v3716
        %v3722 = vadd.f32 %v3712, %v3717
        %v3723 = vadd.f32 %v3713, %v3718
        %3724 = vst [vmem:[#allocation2 + $0x40] sm:$0xff] %v3719
        %3725 = vst [vmem:[#allocation2 + $0x90] sm:$0xff] %v3720
        %3726 = vst [vmem:[#allocation2 + $0xe0] sm:$0xff] %v3721
        %3727 = vst [vmem:[#allocation2 + $0x130] sm:$0xff] %v3722
        %3728 = vst [vmem:[#allocation2 + $0x180] sm:$0xff] %v3723
        %v3729 = vmul.f32 %v3509, %v3176
        %v3730 = vmul.f32 %v3510, %v3179
        %v3731 = vmul.f32 %v3511, %v3182
        %v3732 = vmul.f32 %v3512, %v3185
        %v3733 = vmul.f32 %v3513, %v3188
        %v3734 = vmul.f32 %v3484, %v3729
        %v3735 = vmul.f32 %v3485, %v3730
        %v3736 = vmul.f32 %v3486, %v3731
        %v3737 = vmul.f32 %v3487, %v3732
        %v3738 = vmul.f32 %v3488, %v3733
        %v3739 = vmul.f32 %v3494, %v3272
        %v3740 = vmul.f32 %v3495, %v3275
        %v3741 = vmul.f32 %v3496, %v3278
        %v3742 = vmul.f32 %v3497, %v3281
        %v3743 = vmul.f32 %v3498, %v3284
        %v3744 = vmul.f32 %v3739, 3.0
        %v3745 = vmul.f32 %v3740, 3.0
        %v3746 = vmul.f32 %v3741, 3.0
        %v3747 = vmul.f32 %v3742, 3.0
        %v3748 = vmul.f32 %v3743, 3.0
        %v3749 = vadd.f32 %v3734, %v3744
        %v3750 = vadd.f32 %v3735, %v3745
        %v3751 = vadd.f32 %v3736, %v3746
        %v3752 = vadd.f32 %v3737, %v3747
        %v3753 = vadd.f32 %v3738, %v3748
        %v3754 = vmul.f32 %v3454, %v3400
        %v3755 = vmul.f32 %v3455, %v3403
        %v3756 = vmul.f32 %v3456, %v3406
        %v3757 = vmul.f32 %v3457, %v3409
        %v3758 = vmul.f32 %v3458, %v3412
        %v3759 = vadd.f32 %v3749, %v3754
        %v3760 = vadd.f32 %v3750, %v3755
        %v3761 = vadd.f32 %v3751, %v3756
        %v3762 = vadd.f32 %v3752, %v3757
        %v3763 = vadd.f32 %v3753, %v3758
        %3764 = vst [vmem:[#allocation2 + $0x48] sm:$0xff] %v3759
        %3765 = vst [vmem:[#allocation2 + $0x98] sm:$0xff] %v3760
        %3766 = vst [vmem:[#allocation2 + $0xe8] sm:$0xff] %v3761
        %3767 = vst [vmem:[#allocation2 + $0x138] sm:$0xff] %v3762
        %3768 = vst [vmem:[#allocation2 + $0x188] sm:$0xff] %v3763
        %s3769 = scalar_lea.vmem %s3, 160
        %v3770 = vld [vmem:[%s3769] sm:$0xff]
        %v3771 = vld [vmem:[%s3769 + $0x8] sm:$0xff]
        %v3772 = vld [vmem:[%s3769 + $0x10] sm:$0xff]
        %v3773 = vld [vmem:[%s3769 + $0x18] sm:$0xff]
        %v3774 = vld [vmem:[%s3769 + $0x20] sm:$0xff]
        %s3775 = scalar_lea.vmem %s4, 160
        %v3776 = vld [vmem:[%s3775] sm:$0xff]
        %v3777 = vld [vmem:[%s3775 + $0x8] sm:$0xff]
        %v3778 = vld [vmem:[%s3775 + $0x10] sm:$0xff]
        %v3779 = vld [vmem:[%s3775 + $0x18] sm:$0xff]
        %v3780 = vld [vmem:[%s3775 + $0x20] sm:$0xff]
        %v3781 = vld [vmem:[#allocation2] sm:$0xff]
        %v3782 = vld [vmem:[#allocation2 + $0x8] sm:$0xff]
        %v3783 = vld [vmem:[#allocation2 + $0x10] sm:$0xff]
        %v3784 = vld [vmem:[#allocation2 + $0x18] sm:$0xff]
        %v3785 = vld [vmem:[#allocation2 + $0x20] sm:$0xff]
        %v3786 = vld [vmem:[#allocation2 + $0x28] sm:$0xff]
        %v3787 = vld [vmem:[#allocation2 + $0x30] sm:$0xff]
        %v3788 = vld [vmem:[#allocation2 + $0x38] sm:$0xff]
        %v3789 = vld [vmem:[#allocation2 + $0x40] sm:$0xff]
        %v3790 = vld [vmem:[#allocation2 + $0x48] sm:$0xff]
        %v3791 = vld [vmem:[#allocation2 + $0x50] sm:$0xff]
        %v3792 = vld [vmem:[#allocation2 + $0x58] sm:$0xff]
        %v3793 = vld [vmem:[#allocation2 + $0x60] sm:$0xff]
        %v3794 = vld [vmem:[#allocation2 + $0x68] sm:$0xff]
        %v3795 = vld [vmem:[#allocation2 + $0x70] sm:$0xff]
        %v3796 = vld [vmem:[#allocation2 + $0x78] sm:$0xff]
        %v3797 = vld [vmem:[#allocation2 + $0x80] sm:$0xff]
        %v3798 = vld [vmem:[#allocation2 + $0x88] sm:$0xff]
        %v3799 = vld [vmem:[#allocation2 + $0x90] sm:$0xff]
        %v3800 = vld [vmem:[#allocation2 + $0x98] sm:$0xff]
        %v3801 = vld [vmem:[#allocation2 + $0xa0] sm:$0xff]
        %v3802 = vld [vmem:[#allocation2 + $0xa8] sm:$0xff]
        %v3803 = vld [vmem:[#allocation2 + $0xb0] sm:$0xff]
        %v3804 = vld [vmem:[#allocation2 + $0xb8] sm:$0xff]
        %v3805 = vld [vmem:[#allocation2 + $0xc0] sm:$0xff]
        %v3806 = vld [vmem:[#allocation2 + $0xc8] sm:$0xff]
        %v3807 = vld [vmem:[#allocation2 + $0xd0] sm:$0xff]
        %v3808 = vld [vmem:[#allocation2 + $0xd8] sm:$0xff]
        %v3809 = vld [vmem:[#allocation2 + $0xe0] sm:$0xff]
        %v3810 = vld [vmem:[#allocation2 + $0xe8] sm:$0xff]
        %v3811 = vld [vmem:[#allocation2 + $0xf0] sm:$0xff]
        %v3812 = vld [vmem:[#allocation2 + $0xf8] sm:$0xff]
        %v3813 = vld [vmem:[#allocation2 + $0x100] sm:$0xff]
        %v3814 = vld [vmem:[#allocation2 + $0x108] sm:$0xff]
        %v3815 = vld [vmem:[#allocation2 + $0x110] sm:$0xff]
        %v3816 = vld [vmem:[#allocation2 + $0x118] sm:$0xff]
        %v3817 = vld [vmem:[#allocation2 + $0x120] sm:$0xff]
        %v3818 = vld [vmem:[#allocation2 + $0x128] sm:$0xff]
        %v3819 = vld [vmem:[#allocation2 + $0x130] sm:$0xff]
        %v3820 = vld [vmem:[#allocation2 + $0x138] sm:$0xff]
        %v3821 = vld [vmem:[#allocation2 + $0x140] sm:$0xff]
        %v3822 = vld [vmem:[#allocation2 + $0x148] sm:$0xff]
        %v3823 = vld [vmem:[#allocation2 + $0x150] sm:$0xff]
        %v3824 = vld [vmem:[#allocation2 + $0x158] sm:$0xff]
        %v3825 = vld [vmem:[#allocation2 + $0x160] sm:$0xff]
        %v3826 = vld [vmem:[#allocation2 + $0x168] sm:$0xff]
        %v3827 = vld [vmem:[#allocation2 + $0x170] sm:$0xff]
        %v3828 = vld [vmem:[#allocation2 + $0x178] sm:$0xff]
        %v3829 = vld [vmem:[#allocation2 + $0x180] sm:$0xff]
        %v3830 = vld [vmem:[#allocation2 + $0x188] sm:$0xff]
        %v3832 = vsel %vm822, %v3770, 0
        %v3835 = vsel %vm822, %v3771, 0
        %v3838 = vsel %vm822, %v3772, 0
        %v3841 = vsel %vm822, %v3773, 0
        %v3844 = vsel %vm822, %v3774, 0
        %3846 = vmatpush.msra.mxu0 0.0
        %3847 = vmatpush.msra.mxu0 0.0
        %3848 = vmatpush.msra.mxu0 0.0
        %3849 = vmatpush.msra.mxu0 0.0
        %3850 = vmatpush.msra.mxu0 0.0
        %3851 = vmatpush.msra.mxu0 0.0
        %3852 = vmatpush.msra.mxu0 0.0
        %3853 = vmatpush.msra.mxu0 0.0
        %3854 = vmatpush.msra.mxu0 0.0
        %3855 = vmatpush.msra.mxu0 0.0
        %3856 = vmatpush.msra.mxu0 0.0
        %3857 = vmatpush.msra.mxu0 %v3821
        %3858 = vmatpush.msra.mxu0 %v3811
        %3859 = vmatpush.msra.mxu0 %v3801
        %3860 = vmatpush.msra.mxu0 %v3791
        %3861 = vmatpush.msra.mxu0 %v3781
        %3862 = vmatmul.f32.gmra.mxu0 %v3832
        %v3863 = vpop.f32.mrf.mxu0
        %v3864 = vadd.f32 0.0, %v3863
        %3865 = vmatmul.f32.gmra.mxu0 %v3835
        %v3866 = vpop.f32.mrf.mxu0
        %v3867 = vadd.f32 0.0, %v3866
        %3868 = vmatmul.f32.gmra.mxu0 %v3838
        %v3869 = vpop.f32.mrf.mxu0
        %v3870 = vadd.f32 0.0, %v3869
        %3871 = vmatmul.f32.gmra.mxu0 %v3841
        %v3872 = vpop.f32.mrf.mxu0
        %v3873 = vadd.f32 0.0, %v3872
        %3874 = vmatmul.f32.gmra.mxu0 %v3844
        %v3875 = vpop.f32.mrf.mxu0
        %v3876 = vadd.f32 0.0, %v3875
        %3877 = vdwg.mxu0
        %3878 = vmatpush.msra.mxu0 0.0
        %3879 = vmatpush.msra.mxu0 0.0
        %3880 = vmatpush.msra.mxu0 0.0
        %3881 = vmatpush.msra.mxu0 0.0
        %3882 = vmatpush.msra.mxu0 0.0
        %3883 = vmatpush.msra.mxu0 0.0
        %3884 = vmatpush.msra.mxu0 0.0
        %3885 = vmatpush.msra.mxu0 0.0
        %3886 = vmatpush.msra.mxu0 0.0
        %3887 = vmatpush.msra.mxu0 0.0
        %3888 = vmatpush.msra.mxu0 0.0
        %3889 = vmatpush.msra.mxu0 %v3822
        %3890 = vmatpush.msra.mxu0 %v3812
        %3891 = vmatpush.msra.mxu0 %v3802
        %3892 = vmatpush.msra.mxu0 %v3792
        %3893 = vmatpush.msra.mxu0 %v3782
        %3894 = vmatmul.f32.gmra.mxu0 %v3832
        %v3895 = vpop.f32.mrf.mxu0
        %v3896 = vadd.f32 0.0, %v3895
        %3897 = vmatmul.f32.gmra.mxu0 %v3835
        %v3898 = vpop.f32.mrf.mxu0
        %v3899 = vadd.f32 0.0, %v3898
        %3900 = vmatmul.f32.gmra.mxu0 %v3838
        %v3901 = vpop.f32.mrf.mxu0
        %v3902 = vadd.f32 0.0, %v3901
        %3903 = vmatmul.f32.gmra.mxu0 %v3841
        %v3904 = vpop.f32.mrf.mxu0
        %v3905 = vadd.f32 0.0, %v3904
        %3906 = vmatmul.f32.gmra.mxu0 %v3844
        %v3907 = vpop.f32.mrf.mxu0
        %v3908 = vadd.f32 0.0, %v3907
        %3909 = vdwg.mxu0
        %3910 = vmatpush.msra.mxu0 0.0
        %3911 = vmatpush.msra.mxu0 0.0
        %3912 = vmatpush.msra.mxu0 0.0
        %3913 = vmatpush.msra.mxu0 0.0
        %3914 = vmatpush.msra.mxu0 0.0
        %3915 = vmatpush.msra.mxu0 0.0
        %3916 = vmatpush.msra.mxu0 0.0
        %3917 = vmatpush.msra.mxu0 0.0
        %3918 = vmatpush.msra.mxu0 0.0
        %3919 = vmatpush.msra.mxu0 0.0
        %3920 = vmatpush.msra.mxu0 0.0
        %3921 = vmatpush.msra.mxu0 %v3823
        %3922 = vmatpush.msra.mxu0 %v3813
        %3923 = vmatpush.msra.mxu0 %v3803
        %3924 = vmatpush.msra.mxu0 %v3793
        %3925 = vmatpush.msra.mxu0 %v3783
        %3926 = vmatmul.f32.gmra.mxu0 %v3832
        %v3927 = vpop.f32.mrf.mxu0
        %v3928 = vadd.f32 0.0, %v3927
        %3929 = vmatmul.f32.gmra.mxu0 %v3835
        %v3930 = vpop.f32.mrf.mxu0
        %v3931 = vadd.f32 0.0, %v3930
        %3932 = vmatmul.f32.gmra.mxu0 %v3838
        %v3933 = vpop.f32.mrf.mxu0
        %v3934 = vadd.f32 0.0, %v3933
        %3935 = vmatmul.f32.gmra.mxu0 %v3841
        %v3936 = vpop.f32.mrf.mxu0
        %v3937 = vadd.f32 0.0, %v3936
        %3938 = vmatmul.f32.gmra.mxu0 %v3844
        %v3939 = vpop.f32.mrf.mxu0
        %v3940 = vadd.f32 0.0, %v3939
        %3941 = vdwg.mxu0
        %3942 = vmatpush.msra.mxu0 0.0
        %3943 = vmatpush.msra.mxu0 0.0
        %3944 = vmatpush.msra.mxu0 0.0
        %3945 = vmatpush.msra.mxu0 0.0
        %3946 = vmatpush.msra.mxu0 0.0
        %3947 = vmatpush.msra.mxu0 0.0
        %3948 = vmatpush.msra.mxu0 0.0
        %3949 = vmatpush.msra.mxu0 0.0
        %3950 = vmatpush.msra.mxu0 0.0
        %3951 = vmatpush.msra.mxu0 0.0
        %3952 = vmatpush.msra.mxu0 0.0
        %3953 = vmatpush.msra.mxu0 %v3824
        %3954 = vmatpush.msra.mxu0 %v3814
        %3955 = vmatpush.msra.mxu0 %v3804
        %3956 = vmatpush.msra.mxu0 %v3794
        %3957 = vmatpush.msra.mxu0 %v3784
        %3958 = vmatmul.f32.gmra.mxu0 %v3832
        %v3959 = vpop.f32.mrf.mxu0
        %v3960 = vadd.f32 0.0, %v3959
        %3961 = vmatmul.f32.gmra.mxu0 %v3835
        %v3962 = vpop.f32.mrf.mxu0
        %v3963 = vadd.f32 0.0, %v3962
        %3964 = vmatmul.f32.gmra.mxu0 %v3838
        %v3965 = vpop.f32.mrf.mxu0
        %v3966 = vadd.f32 0.0, %v3965
        %3967 = vmatmul.f32.gmra.mxu0 %v3841
        %v3968 = vpop.f32.mrf.mxu0
        %v3969 = vadd.f32 0.0, %v3968
        %3970 = vmatmul.f32.gmra.mxu0 %v3844
        %v3971 = vpop.f32.mrf.mxu0
        %v3972 = vadd.f32 0.0, %v3971
        %3973 = vdwg.mxu0
        %3974 = vmatpush.msra.mxu0 0.0
        %3975 = vmatpush.msra.mxu0 0.0
        %3976 = vmatpush.msra.mxu0 0.0
        %3977 = vmatpush.msra.mxu0 0.0
        %3978 = vmatpush.msra.mxu0 0.0
        %3979 = vmatpush.msra.mxu0 0.0
        %3980 = vmatpush.msra.mxu0 0.0
        %3981 = vmatpush.msra.mxu0 0.0
        %3982 = vmatpush.msra.mxu0 0.0
        %3983 = vmatpush.msra.mxu0 0.0
        %3984 = vmatpush.msra.mxu0 0.0
        %3985 = vmatpush.msra.mxu0 %v3825
        %3986 = vmatpush.msra.mxu0 %v3815
        %3987 = vmatpush.msra.mxu0 %v3805
        %3988 = vmatpush.msra.mxu0 %v3795
        %3989 = vmatpush.msra.mxu0 %v3785
        %3990 = vmatmul.f32.gmra.mxu0 %v3832
        %v3991 = vpop.f32.mrf.mxu0
        %v3992 = vadd.f32 0.0, %v3991
        %3993 = vmatmul.f32.gmra.mxu0 %v3835
        %v3994 = vpop.f32.mrf.mxu0
        %v3995 = vadd.f32 0.0, %v3994
        %3996 = vmatmul.f32.gmra.mxu0 %v3838
        %v3997 = vpop.f32.mrf.mxu0
        %v3998 = vadd.f32 0.0, %v3997
        %3999 = vmatmul.f32.gmra.mxu0 %v3841
        %v4000 = vpop.f32.mrf.mxu0
        %v4001 = vadd.f32 0.0, %v4000
        %4002 = vmatmul.f32.gmra.mxu0 %v3844
        %v4003 = vpop.f32.mrf.mxu0
        %v4004 = vadd.f32 0.0, %v4003
        %4005 = vdwg.mxu0
        %4006 = vmatpush.msra.mxu0 0.0
        %4007 = vmatpush.msra.mxu0 0.0
        %4008 = vmatpush.msra.mxu0 0.0
        %4009 = vmatpush.msra.mxu0 0.0
        %4010 = vmatpush.msra.mxu0 0.0
        %4011 = vmatpush.msra.mxu0 0.0
        %4012 = vmatpush.msra.mxu0 0.0
        %4013 = vmatpush.msra.mxu0 0.0
        %4014 = vmatpush.msra.mxu0 0.0
        %4015 = vmatpush.msra.mxu0 0.0
        %4016 = vmatpush.msra.mxu0 0.0
        %4017 = vmatpush.msra.mxu0 %v3826
        %4018 = vmatpush.msra.mxu0 %v3816
        %4019 = vmatpush.msra.mxu0 %v3806
        %4020 = vmatpush.msra.mxu0 %v3796
        %4021 = vmatpush.msra.mxu0 %v3786
        %4022 = vmatmul.f32.gmra.mxu0 %v3832
        %v4023 = vpop.f32.mrf.mxu0
        %v4024 = vadd.f32 0.0, %v4023
        %4025 = vmatmul.f32.gmra.mxu0 %v3835
        %v4026 = vpop.f32.mrf.mxu0
        %v4027 = vadd.f32 0.0, %v4026
        %4028 = vmatmul.f32.gmra.mxu0 %v3838
        %v4029 = vpop.f32.mrf.mxu0
        %v4030 = vadd.f32 0.0, %v4029
        %4031 = vmatmul.f32.gmra.mxu0 %v3841
        %v4032 = vpop.f32.mrf.mxu0
        %v4033 = vadd.f32 0.0, %v4032
        %4034 = vmatmul.f32.gmra.mxu0 %v3844
        %v4035 = vpop.f32.mrf.mxu0
        %v4036 = vadd.f32 0.0, %v4035
        %4037 = vdwg.mxu0
        %4038 = vmatpush.msra.mxu0 0.0
        %4039 = vmatpush.msra.mxu0 0.0
        %4040 = vmatpush.msra.mxu0 0.0
        %4041 = vmatpush.msra.mxu0 0.0
        %4042 = vmatpush.msra.mxu0 0.0
        %4043 = vmatpush.msra.mxu0 0.0
        %4044 = vmatpush.msra.mxu0 0.0
        %4045 = vmatpush.msra.mxu0 0.0
        %4046 = vmatpush.msra.mxu0 0.0
        %4047 = vmatpush.msra.mxu0 0.0
        %4048 = vmatpush.msra.mxu0 0.0
        %4049 = vmatpush.msra.mxu0 %v3827
        %4050 = vmatpush.msra.mxu0 %v3817
        %4051 = vmatpush.msra.mxu0 %v3807
        %4052 = vmatpush.msra.mxu0 %v3797
        %4053 = vmatpush.msra.mxu0 %v3787
        %4054 = vmatmul.f32.gmra.mxu0 %v3832
        %v4055 = vpop.f32.mrf.mxu0
        %v4056 = vadd.f32 0.0, %v4055
        %4057 = vmatmul.f32.gmra.mxu0 %v3835
        %v4058 = vpop.f32.mrf.mxu0
        %v4059 = vadd.f32 0.0, %v4058
        %4060 = vmatmul.f32.gmra.mxu0 %v3838
        %v4061 = vpop.f32.mrf.mxu0
        %v4062 = vadd.f32 0.0, %v4061
        %4063 = vmatmul.f32.gmra.mxu0 %v3841
        %v4064 = vpop.f32.mrf.mxu0
        %v4065 = vadd.f32 0.0, %v4064
        %4066 = vmatmul.f32.gmra.mxu0 %v3844
        %v4067 = vpop.f32.mrf.mxu0
        %v4068 = vadd.f32 0.0, %v4067
        %4069 = vdwg.mxu0
        %4070 = vmatpush.msra.mxu0 0.0
        %4071 = vmatpush.msra.mxu0 0.0
        %4072 = vmatpush.msra.mxu0 0.0
        %4073 = vmatpush.msra.mxu0 0.0
        %4074 = vmatpush.msra.mxu0 0.0
        %4075 = vmatpush.msra.mxu0 0.0
        %4076 = vmatpush.msra.mxu0 0.0
        %4077 = vmatpush.msra.mxu0 0.0
        %4078 = vmatpush.msra.mxu0 0.0
        %4079 = vmatpush.msra.mxu0 0.0
        %4080 = vmatpush.msra.mxu0 0.0
        %4081 = vmatpush.msra.mxu0 %v3828
        %4082 = vmatpush.msra.mxu0 %v3818
        %4083 = vmatpush.msra.mxu0 %v3808
        %4084 = vmatpush.msra.mxu0 %v3798
        %4085 = vmatpush.msra.mxu0 %v3788
        %4086 = vmatmul.f32.gmra.mxu0 %v3832
        %v4087 = vpop.f32.mrf.mxu0
        %v4088 = vadd.f32 0.0, %v4087
        %4089 = vmatmul.f32.gmra.mxu0 %v3835
        %v4090 = vpop.f32.mrf.mxu0
        %v4091 = vadd.f32 0.0, %v4090
        %4092 = vmatmul.f32.gmra.mxu0 %v3838
        %v4093 = vpop.f32.mrf.mxu0
        %v4094 = vadd.f32 0.0, %v4093
        %4095 = vmatmul.f32.gmra.mxu0 %v3841
        %v4096 = vpop.f32.mrf.mxu0
        %v4097 = vadd.f32 0.0, %v4096
        %4098 = vmatmul.f32.gmra.mxu0 %v3844
        %v4099 = vpop.f32.mrf.mxu0
        %v4100 = vadd.f32 0.0, %v4099
        %4101 = vdwg.mxu0
        %4102 = vmatpush.msra.mxu0 0.0
        %4103 = vmatpush.msra.mxu0 0.0
        %4104 = vmatpush.msra.mxu0 0.0
        %4105 = vmatpush.msra.mxu0 0.0
        %4106 = vmatpush.msra.mxu0 0.0
        %4107 = vmatpush.msra.mxu0 0.0
        %4108 = vmatpush.msra.mxu0 0.0
        %4109 = vmatpush.msra.mxu0 0.0
        %4110 = vmatpush.msra.mxu0 0.0
        %4111 = vmatpush.msra.mxu0 0.0
        %4112 = vmatpush.msra.mxu0 0.0
        %4113 = vmatpush.msra.mxu0 %v3829
        %4114 = vmatpush.msra.mxu0 %v3819
        %4115 = vmatpush.msra.mxu0 %v3809
        %4116 = vmatpush.msra.mxu0 %v3799
        %4117 = vmatpush.msra.mxu0 %v3789
        %4118 = vmatmul.f32.gmra.mxu0 %v3832
        %v4119 = vpop.f32.mrf.mxu0
        %v4120 = vadd.f32 0.0, %v4119
        %4121 = vmatmul.f32.gmra.mxu0 %v3835
        %v4122 = vpop.f32.mrf.mxu0
        %v4123 = vadd.f32 0.0, %v4122
        %4124 = vmatmul.f32.gmra.mxu0 %v3838
        %v4125 = vpop.f32.mrf.mxu0
        %v4126 = vadd.f32 0.0, %v4125
        %4127 = vmatmul.f32.gmra.mxu0 %v3841
        %v4128 = vpop.f32.mrf.mxu0
        %v4129 = vadd.f32 0.0, %v4128
        %4130 = vmatmul.f32.gmra.mxu0 %v3844
        %v4131 = vpop.f32.mrf.mxu0
        %v4132 = vadd.f32 0.0, %v4131
        %4133 = vdwg.mxu0
        %4134 = vmatpush.msra.mxu0 0.0
        %4135 = vmatpush.msra.mxu0 0.0
        %4136 = vmatpush.msra.mxu0 0.0
        %4137 = vmatpush.msra.mxu0 0.0
        %4138 = vmatpush.msra.mxu0 0.0
        %4139 = vmatpush.msra.mxu0 0.0
        %4140 = vmatpush.msra.mxu0 0.0
        %4141 = vmatpush.msra.mxu0 0.0
        %4142 = vmatpush.msra.mxu0 0.0
        %4143 = vmatpush.msra.mxu0 0.0
        %4144 = vmatpush.msra.mxu0 0.0
        %4145 = vmatpush.msra.mxu0 %v3830
        %4146 = vmatpush.msra.mxu0 %v3820
        %4147 = vmatpush.msra.mxu0 %v3810
        %4148 = vmatpush.msra.mxu0 %v3800
        %4149 = vmatpush.msra.mxu0 %v3790
        %4150 = vmatmul.f32.gmra.mxu0 %v3832
        %v4151 = vpop.f32.mrf.mxu0
        %v4152 = vadd.f32 0.0, %v4151
        %4153 = vmatmul.f32.gmra.mxu0 %v3835
        %v4154 = vpop.f32.mrf.mxu0
        %v4155 = vadd.f32 0.0, %v4154
        %4156 = vmatmul.f32.gmra.mxu0 %v3838
        %v4157 = vpop.f32.mrf.mxu0
        %v4158 = vadd.f32 0.0, %v4157
        %4159 = vmatmul.f32.gmra.mxu0 %v3841
        %v4160 = vpop.f32.mrf.mxu0
        %v4161 = vadd.f32 0.0, %v4160
        %4162 = vmatmul.f32.gmra.mxu0 %v3844
        %v4163 = vpop.f32.mrf.mxu0
        %v4164 = vadd.f32 0.0, %v4163
        %4165 = vdwg.mxu0
        %4167 = vset.pattern.permute.xlu0 0
        %4168 = vperm.xlu0 %4167, %v3776
        %v4169 = vpop.permute.xlu0 %4168
        %4172 = vset.pattern.permute.xlu0 0
        %4173 = vperm.xlu0 %4172, %v3777
        %v4174 = vpop.permute.xlu0 %4173
        %4177 = vset.pattern.permute.xlu0 0
        %4178 = vperm.xlu0 %4177, %v3778
        %v4179 = vpop.permute.xlu0 %4178
        %4182 = vset.pattern.permute.xlu0 0
        %4183 = vperm.xlu0 %4182, %v3779
        %v4184 = vpop.permute.xlu0 %4183
        %4187 = vset.pattern.permute.xlu0 0
        %4188 = vperm.xlu0 %4187, %v3780
        %v4189 = vpop.permute.xlu0 %4188
        %v4191 = vadd.f32 %v3864, %v4169
        %v4192 = vadd.f32 %v3867, %v4174
        %v4193 = vadd.f32 %v3870, %v4179
        %v4194 = vadd.f32 %v3873, %v4184
        %v4195 = vadd.f32 %v3876, %v4189
        %v4196 = vtanh.pop %v4191
        %v4197 = vtanh.pop %v4192
        %v4198 = vtanh.pop %v4193
        %v4199 = vtanh.pop %v4194
        %v4200 = vtanh.pop %v4195
        %v4201 = vmul.f32 %v4196, %v4196
        %v4202 = vmul.f32 %v4197, %v4197
        %v4203 = vmul.f32 %v4198, %v4198
        %v4204 = vmul.f32 %v4199, %v4199
        %v4205 = vmul.f32 %v4200, %v4200
        %v4206 = vsub.f32 1.0, %v4201
        %v4207 = vsub.f32 1.0, %v4202
        %v4208 = vsub.f32 1.0, %v4203
        %v4209 = vsub.f32 1.0, %v4204
        %v4210 = vsub.f32 1.0, %v4205
        %v4211 = vmul.f32 %v4196, %v4206
        %v4212 = vmul.f32 %v4197, %v4207
        %v4213 = vmul.f32 %v4198, %v4208
        %v4214 = vmul.f32 %v4199, %v4209
        %v4215 = vmul.f32 %v4200, %v4210
        %v4216 = vmul.f32 %v4211, -2.0
        %v4217 = vmul.f32 %v4212, -2.0
        %v4218 = vmul.f32 %v4213, -2.0
        %v4219 = vmul.f32 %v4214, -2.0
        %v4220 = vmul.f32 %v4215, -2.0
        %v4221 = vmul.f32 %v4206, 2.0
        %v4222 = vmul.f32 %v4207, 2.0
        %v4223 = vmul.f32 %v4208, 2.0
        %v4224 = vmul.f32 %v4209, 2.0
        %v4225 = vmul.f32 %v4210, 2.0
        %v4226 = vmul.f32 %v4201, 2.0
        %v4227 = vmul.f32 %v4202, 2.0
        %v4228 = vmul.f32 %v4203, 2.0
        %v4229 = vmul.f32 %v4204, 2.0
        %v4230 = vmul.f32 %v4205, 2.0
        %v4231 = vsub.f32 %v4226, %v4206
        %v4232 = vsub.f32 %v4227, %v4207
        %v4233 = vsub.f32 %v4228, %v4208
        %v4234 = vsub.f32 %v4229, %v4209
        %v4235 = vsub.f32 %v4230, %v4210
        %v4236 = vmul.f32 %v4221, %v4231
        %v4237 = vmul.f32 %v4222, %v4232
        %v4238 = vmul.f32 %v4223, %v4233
        %v4239 = vmul.f32 %v4224, %v4234
        %v4240 = vmul.f32 %v4225, %v4235
        %v4241 = vmul.f32 %v4216, %v3896
        %v4242 = vmul.f32 %v4217, %v3899
        %v4243 = vmul.f32 %v4218, %v3902
        %v4244 = vmul.f32 %v4219, %v3905
        %v4245 = vmul.f32 %v4220, %v3908
        %v4246 = vmul.f32 %v4216, %v3928
        %v4247 = vmul.f32 %v4217, %v3931
        %v4248 = vmul.f32 %v4218, %v3934
        %v4249 = vmul.f32 %v4219, %v3937
        %v4250 = vmul.f32 %v4220, %v3940
        %v4251 = vmul.f32 %v4236, %v3896
        %v4252 = vmul.f32 %v4237, %v3899
        %v4253 = vmul.f32 %v4238, %v3902
        %v4254 = vmul.f32 %v4239, %v3905
        %v4255 = vmul.f32 %v4240, %v3908
        %v4256 = vmul.f32 %v3896, %v3896
        %v4257 = vmul.f32 %v3899, %v3899
        %v4258 = vmul.f32 %v3902, %v3902
        %v4259 = vmul.f32 %v3905, %v3905
        %v4260 = vmul.f32 %v3908, %v3908
        %v4261 = vmul.f32 %v3928, %v3928
        %v4262 = vmul.f32 %v3931, %v3931
        %v4263 = vmul.f32 %v3934, %v3934
        %v4264 = vmul.f32 %v3937, %v3937
        %v4265 = vmul.f32 %v3940, %v3940
        %v4266 = vmul.f32 %v3896, %v3928
        %v4267 = vmul.f32 %v3899, %v3931
        %v4268 = vmul.f32 %v3902, %v3934
        %v4269 = vmul.f32 %v3905, %v3937
        %v4270 = vmul.f32 %v3908, %v3940
        %4271 = vst [vmem:[#allocation3] sm:$0xff] %v4196
        %4272 = vst [vmem:[#allocation3 + $0x50] sm:$0xff] %v4197
        %4273 = vst [vmem:[#allocation3 + $0xa0] sm:$0xff] %v4198
        %4274 = vst [vmem:[#allocation3 + $0xf0] sm:$0xff] %v4199
        %4275 = vst [vmem:[#allocation3 + $0x140] sm:$0xff] %v4200
        %v4276 = vmul.f32 %v4206, %v3896
        %v4277 = vmul.f32 %v4207, %v3899
        %v4278 = vmul.f32 %v4208, %v3902
        %v4279 = vmul.f32 %v4209, %v3905
        %v4280 = vmul.f32 %v4210, %v3908
        %4281 = vst [vmem:[#allocation3 + $0x8] sm:$0xff] %v4276
        %4282 = vst [vmem:[#allocation3 + $0x58] sm:$0xff] %v4277
        %4283 = vst [vmem:[#allocation3 + $0xa8] sm:$0xff] %v4278
        %4284 = vst [vmem:[#allocation3 + $0xf8] sm:$0xff] %v4279
        %4285 = vst [vmem:[#allocation3 + $0x148] sm:$0xff] %v4280
        %v4286 = vmul.f32 %v4206, %v3928
        %v4287 = vmul.f32 %v4207, %v3931
        %v4288 = vmul.f32 %v4208, %v3934
        %v4289 = vmul.f32 %v4209, %v3937
        %v4290 = vmul.f32 %v4210, %v3940
        %4291 = vst [vmem:[#allocation3 + $0x10] sm:$0xff] %v4286
        %4292 = vst [vmem:[#allocation3 + $0x60] sm:$0xff] %v4287
        %4293 = vst [vmem:[#allocation3 + $0xb0] sm:$0xff] %v4288
        %4294 = vst [vmem:[#allocation3 + $0x100] sm:$0xff] %v4289
        %4295 = vst [vmem:[#allocation3 + $0x150] sm:$0xff] %v4290
        %v4296 = vmul.f32 %v4241, %v3896
        %v4297 = vmul.f32 %v4242, %v3899
        %v4298 = vmul.f32 %v4243, %v3902
        %v4299 = vmul.f32 %v4244, %v3905
        %v4300 = vmul.f32 %v4245, %v3908
        %v4301 = vmul.f32 %v4206, %v3960
        %v4302 = vmul.f32 %v4207, %v3963
        %v4303 = vmul.f32 %v4208, %v3966
        %v4304 = vmul.f32 %v4209, %v3969
        %v4305 = vmul.f32 %v4210, %v3972
        %v4306 = vadd.f32 %v4296, %v4301
        %v4307 = vadd.f32 %v4297, %v4302
        %v4308 = vadd.f32 %v4298, %v4303
        %v4309 = vadd.f32 %v4299, %v4304
        %v4310 = vadd.f32 %v4300, %v4305
        %4311 = vst [vmem:[#allocation3 + $0x18] sm:$0xff] %v4306
        %4312 = vst [vmem:[#allocation3 + $0x68] sm:$0xff] %v4307
        %4313 = vst [vmem:[#allocation3 + $0xb8] sm:$0xff] %v4308
        %4314 = vst [vmem:[#allocation3 + $0x108] sm:$0xff] %v4309
        %4315 = vst [vmem:[#allocation3 + $0x158] sm:$0xff] %v4310
        %v4316 = vmul.f32 %v4241, %v3928
        %v4317 = vmul.f32 %v4242, %v3931
        %v4318 = vmul.f32 %v4243, %v3934
        %v4319 = vmul.f32 %v4244, %v3937
        %v4320 = vmul.f32 %v4245, %v3940
        %v4321 = vmul.f32 %v4206, %v3992
        %v4322 = vmul.f32 %v4207, %v3995
        %v4323 = vmul.f32 %v4208, %v3998
        %v4324 = vmul.f32 %v4209, %v4001
        %v4325 = vmul.f32 %v4210, %v4004
        %v4326 = vadd.f32 %v4316, %v4321
        %v4327 = vadd.f32 %v4317, %v4322
        %v4328 = vadd.f32 %v4318, %v4323
        %v4329 = vadd.f32 %v4319, %v4324
        %v4330 = vadd.f32 %v4320, %v4325
        %4331 = vst [vmem:[#allocation3 + $0x20] sm:$0xff] %v4326
        %4332 = vst [vmem:[#allocation3 + $0x70] sm:$0xff] %v4327
        %4333 = vst [vmem:[#allocation3 + $0xc0] sm:$0xff] %v4328
        %4334 = vst [vmem:[#allocation3 + $0x110] sm:$0xff] %v4329
        %4335 = vst [vmem:[#allocation3 + $0x160] sm:$0xff] %v4330
        %v4336 = vmul.f32 %v4246, %v3928
        %v4337 = vmul.f32 %v4247, %v3931
        %v4338 = vmul.f32 %v4248, %v3934
        %v4339 = vmul.f32 %v4249, %v3937
        %v4340 = vmul.f32 %v4250, %v3940
        %v4341 = vmul.f32 %v4206, %v4024
        %v4342 = vmul.f32 %v4207, %v4027
        %v4343 = vmul.f32 %v4208, %v4030
        %v4344 = vmul.f32 %v4209, %v4033
        %v4345 = vmul.f32 %v4210, %v4036
        %v4346 = vadd.f32 %v4336, %v4341
        %v4347 = vadd.f32 %v4337, %v4342
        %v4348 = vadd.f32 %v4338, %v4343
        %v4349 = vadd.f32 %v4339, %v4344
        %v4350 = vadd.f32 %v4340, %v4345
        %4351 = vst [vmem:[#allocation3 + $0x28] sm:$0xff] %v4346
        %4352 = vst [vmem:[#allocation3 + $0x78] sm:$0xff] %v4347
        %4353 = vst [vmem:[#allocation3 + $0xc8] sm:$0xff] %v4348
        %4354 = vst [vmem:[#allocation3 + $0x118] sm:$0xff] %v4349
        %4355 = vst [vmem:[#allocation3 + $0x168] sm:$0xff] %v4350
        %v4356 = vmul.f32 %v4251, %v4256
        %v4357 = vmul.f32 %v4252, %v4257
        %v4358 = vmul.f32 %v4253, %v4258
        %v4359 = vmul.f32 %v4254, %v4259
        %v4360 = vmul.f32 %v4255, %v4260
        %v4361 = vmul.f32 %v4241, %v3960
        %v4362 = vmul.f32 %v4242, %v3963
        %v4363 = vmul.f32 %v4243, %v3966
        %v4364 = vmul.f32 %v4244, %v3969
        %v4365 = vmul.f32 %v4245, %v3972
        %v4366 = vmul.f32 %v4361, 3.0
        %v4367 = vmul.f32 %v4362, 3.0
        %v4368 = vmul.f32 %v4363, 3.0
        %v4369 = vmul.f32 %v4364, 3.0
        %v4370 = vmul.f32 %v4365, 3.0
        %v4371 = vadd.f32 %v4356, %v4366
        %v4372 = vadd.f32 %v4357, %v4367
        %v4373 = vadd.f32 %v4358, %v4368
        %v4374 = vadd.f32 %v4359, %v4369
        %v4375 = vadd.f32 %v4360, %v4370
        %v4376 = vmul.f32 %v4206, %v4056
        %v4377 = vmul.f32 %v4207, %v4059
        %v4378 = vmul.f32 %v4208, %v4062
        %v4379 = vmul.f32 %v4209, %v4065
        %v4380 = vmul.f32 %v4210, %v4068
        %v4381 = vadd.f32 %v4371, %v4376
        %v4382 = vadd.f32 %v4372, %v4377
        %v4383 = vadd.f32 %v4373, %v4378
        %v4384 = vadd.f32 %v4374, %v4379
        %v4385 = vadd.f32 %v4375, %v4380
        %4386 = vst [vmem:[#allocation3 + $0x30] sm:$0xff] %v4381
        %4387 = vst [vmem:[#allocation3 + $0x80] sm:$0xff] %v4382
        %4388 = vst [vmem:[#allocation3 + $0xd0] sm:$0xff] %v4383
        %4389 = vst [vmem:[#allocation3 + $0x120] sm:$0xff] %v4384
        %4390 = vst [vmem:[#allocation3 + $0x170] sm:$0xff] %v4385
        %v4391 = vmul.f32 %v4251, %v4266
        %v4392 = vmul.f32 %v4252, %v4267
        %v4393 = vmul.f32 %v4253, %v4268
        %v4394 = vmul.f32 %v4254, %v4269
        %v4395 = vmul.f32 %v4255, %v4270
        %v4396 = vmul.f32 %v4241, %v3992
        %v4397 = vmul.f32 %v4242, %v3995
        %v4398 = vmul.f32 %v4243, %v3998
        %v4399 = vmul.f32 %v4244, %v4001
        %v4400 = vmul.f32 %v4245, %v4004
        %v4401 = vmul.f32 %v4396, 2.0
        %v4402 = vmul.f32 %v4397, 2.0
        %v4403 = vmul.f32 %v4398, 2.0
        %v4404 = vmul.f32 %v4399, 2.0
        %v4405 = vmul.f32 %v4400, 2.0
        %v4406 = vadd.f32 %v4391, %v4401
        %v4407 = vadd.f32 %v4392, %v4402
        %v4408 = vadd.f32 %v4393, %v4403
        %v4409 = vadd.f32 %v4394, %v4404
        %v4410 = vadd.f32 %v4395, %v4405
        %v4411 = vmul.f32 %v4246, %v3960
        %v4412 = vmul.f32 %v4247, %v3963
        %v4413 = vmul.f32 %v4248, %v3966
        %v4414 = vmul.f32 %v4249, %v3969
        %v4415 = vmul.f32 %v4250, %v3972
        %v4416 = vadd.f32 %v4406, %v4411
        %v4417 = vadd.f32 %v4407, %v4412
        %v4418 = vadd.f32 %v4408, %v4413
        %v4419 = vadd.f32 %v4409, %v4414
        %v4420 = vadd.f32 %v4410, %v4415
        %v4421 = vmul.f32 %v4206, %v4088
        %v4422 = vmul.f32 %v4207, %v4091
        %v4423 = vmul.f32 %v4208, %v4094
        %v4424 = vmul.f32 %v4209, %v4097
        %v4425 = vmul.f32 %v4210, %v4100
        %v4426 = vadd.f32 %v4416, %v4421
        %v4427 = vadd.f32 %v4417, %v4422
        %v4428 = vadd.f32 %v4418, %v4423
        %v4429 = vadd.f32 %v4419, %v4424
        %v4430 = vadd.f32 %v4420, %v4425
        %4431 = vst [vmem:[#allocation3 + $0x38] sm:$0xff] %v4426
        %4432 = vst [vmem:[#allocation3 + $0x88] sm:$0xff] %v4427
        %4433 = vst [vmem:[#allocation3 + $0xd8] sm:$0xff] %v4428
        %4434 = vst [vmem:[#allocation3 + $0x128] sm:$0xff] %v4429
        %4435 = vst [vmem:[#allocation3 + $0x178] sm:$0xff] %v4430
        %v4436 = vmul.f32 %v4251, %v4261
        %v4437 = vmul.f32 %v4252, %v4262
        %v4438 = vmul.f32 %v4253, %v4263
        %v4439 = vmul.f32 %v4254, %v4264
        %v4440 = vmul.f32 %v4255, %v4265
        %v4441 = vmul.f32 %v4241, %v4024
        %v4442 = vmul.f32 %v4242, %v4027
        %v4443 = vmul.f32 %v4243, %v4030
        %v4444 = vmul.f32 %v4244, %v4033
        %v4445 = vmul.f32 %v4245, %v4036
        %v4446 = vadd.f32 %v4436, %v4441
        %v4447 = vadd.f32 %v4437, %v4442
        %v4448 = vadd.f32 %v4438, %v4443
        %v4449 = vadd.f32 %v4439, %v4444
        %v4450 = vadd.f32 %v4440, %v4445
        %v4451 = vmul.f32 %v4246, %v3992
        %v4452 = vmul.f32 %v4247, %v3995
        %v4453 = vmul.f32 %v4248, %v3998
        %v4454 = vmul.f32 %v4249, %v4001
        %v4455 = vmul.f32 %v4250, %v4004
        %v4456 = vmul.f32 %v4451, 2.0
        %v4457 = vmul.f32 %v4452, 2.0
        %v4458 = vmul.f32 %v4453, 2.0
        %v4459 = vmul.f32 %v4454, 2.0
        %v4460 = vmul.f32 %v4455, 2.0
        %v4461 = vadd.f32 %v4446, %v4456
        %v4462 = vadd.f32 %v4447, %v4457
        %v4463 = vadd.f32 %v4448, %v4458
        %v4464 = vadd.f32 %v4449, %v4459
        %v4465 = vadd.f32 %v4450, %v4460
        %v4466 = vmul.f32 %v4206, %v4120
        %v4467 = vmul.f32 %v4207, %v4123
        %v4468 = vmul.f32 %v4208, %v4126
        %v4469 = vmul.f32 %v4209, %v4129
        %v4470 = vmul.f32 %v4210, %v4132
        %v4471 = vadd.f32 %v4461, %v4466
        %v4472 = vadd.f32 %v4462, %v4467
        %v4473 = vadd.f32 %v4463, %v4468
        %v4474 = vadd.f32 %v4464, %v4469
        %v4475 = vadd.f32 %v4465, %v4470
        %4476 = vst [vmem:[#allocation3 + $0x40] sm:$0xff] %v4471
        %4477 = vst [vmem:[#allocation3 + $0x90] sm:$0xff] %v4472
        %4478 = vst [vmem:[#allocation3 + $0xe0] sm:$0xff] %v4473
        %4479 = vst [vmem:[#allocation3 + $0x130] sm:$0xff] %v4474
        %4480 = vst [vmem:[#allocation3 + $0x180] sm:$0xff] %v4475
        %v4481 = vmul.f32 %v4261, %v3928
        %v4482 = vmul.f32 %v4262, %v3931
        %v4483 = vmul.f32 %v4263, %v3934
        %v4484 = vmul.f32 %v4264, %v3937
        %v4485 = vmul.f32 %v4265, %v3940
        %v4486 = vmul.f32 %v4236, %v4481
        %v4487 = vmul.f32 %v4237, %v4482
        %v4488 = vmul.f32 %v4238, %v4483
        %v4489 = vmul.f32 %v4239, %v4484
        %v4490 = vmul.f32 %v4240, %v4485
        %v4491 = vmul.f32 %v4246, %v4024
        %v4492 = vmul.f32 %v4247, %v4027
        %v4493 = vmul.f32 %v4248, %v4030
        %v4494 = vmul.f32 %v4249, %v4033
        %v4495 = vmul.f32 %v4250, %v4036
        %v4496 = vmul.f32 %v4491, 3.0
        %v4497 = vmul.f32 %v4492, 3.0
        %v4498 = vmul.f32 %v4493, 3.0
        %v4499 = vmul.f32 %v4494, 3.0
        %v4500 = vmul.f32 %v4495, 3.0
        %v4501 = vadd.f32 %v4486, %v4496
        %v4502 = vadd.f32 %v4487, %v4497
        %v4503 = vadd.f32 %v4488, %v4498
        %v4504 = vadd.f32 %v4489, %v4499
        %v4505 = vadd.f32 %v4490, %v4500
        %v4506 = vmul.f32 %v4206, %v4152
        %v4507 = vmul.f32 %v4207, %v4155
        %v4508 = vmul.f32 %v4208, %v4158
        %v4509 = vmul.f32 %v4209, %v4161
        %v4510 = vmul.f32 %v4210, %v4164
        %v4511 = vadd.f32 %v4501, %v4506
        %v4512 = vadd.f32 %v4502, %v4507
        %v4513 = vadd.f32 %v4503, %v4508
        %v4514 = vadd.f32 %v4504, %v4509
        %v4515 = vadd.f32 %v4505, %v4510
        %4516 = vst [vmem:[#allocation3 + $0x48] sm:$0xff] %v4511
        %4517 = vst [vmem:[#allocation3 + $0x98] sm:$0xff] %v4512
        %4518 = vst [vmem:[#allocation3 + $0xe8] sm:$0xff] %v4513
        %4519 = vst [vmem:[#allocation3 + $0x138] sm:$0xff] %v4514
        %4520 = vst [vmem:[#allocation3 + $0x188] sm:$0xff] %v4515
        %s4521 = scalar_lea.vmem %s3, 200
        %v4522 = vld [vmem:[%s4521] sm:$0xff]
        %v4523 = vld [vmem:[%s4521 + $0x8] sm:$0xff]
        %v4524 = vld [vmem:[%s4521 + $0x10] sm:$0xff]
        %v4525 = vld [vmem:[%s4521 + $0x18] sm:$0xff]
        %v4526 = vld [vmem:[%s4521 + $0x20] sm:$0xff]
        %s4527 = scalar_lea.vmem %s4, 200
        %v4528 = vld [vmem:[%s4527] sm:$0xff]
        %v4529 = vld [vmem:[%s4527 + $0x8] sm:$0xff]
        %v4530 = vld [vmem:[%s4527 + $0x10] sm:$0xff]
        %v4531 = vld [vmem:[%s4527 + $0x18] sm:$0xff]
        %v4532 = vld [vmem:[%s4527 + $0x20] sm:$0xff]
        %v4533 = vld [vmem:[#allocation3] sm:$0xff]
        %v4534 = vld [vmem:[#allocation3 + $0x8] sm:$0xff]
        %v4535 = vld [vmem:[#allocation3 + $0x10] sm:$0xff]
        %v4536 = vld [vmem:[#allocation3 + $0x18] sm:$0xff]
        %v4537 = vld [vmem:[#allocation3 + $0x20] sm:$0xff]
        %v4538 = vld [vmem:[#allocation3 + $0x28] sm:$0xff]
        %v4539 = vld [vmem:[#allocation3 + $0x30] sm:$0xff]
        %v4540 = vld [vmem:[#allocation3 + $0x38] sm:$0xff]
        %v4541 = vld [vmem:[#allocation3 + $0x40] sm:$0xff]
        %v4542 = vld [vmem:[#allocation3 + $0x48] sm:$0xff]
        %v4543 = vld [vmem:[#allocation3 + $0x50] sm:$0xff]
        %v4544 = vld [vmem:[#allocation3 + $0x58] sm:$0xff]
        %v4545 = vld [vmem:[#allocation3 + $0x60] sm:$0xff]
        %v4546 = vld [vmem:[#allocation3 + $0x68] sm:$0xff]
        %v4547 = vld [vmem:[#allocation3 + $0x70] sm:$0xff]
        %v4548 = vld [vmem:[#allocation3 + $0x78] sm:$0xff]
        %v4549 = vld [vmem:[#allocation3 + $0x80] sm:$0xff]
        %v4550 = vld [vmem:[#allocation3 + $0x88] sm:$0xff]
        %v4551 = vld [vmem:[#allocation3 + $0x90] sm:$0xff]
        %v4552 = vld [vmem:[#allocation3 + $0x98] sm:$0xff]
        %v4553 = vld [vmem:[#allocation3 + $0xa0] sm:$0xff]
        %v4554 = vld [vmem:[#allocation3 + $0xa8] sm:$0xff]
        %v4555 = vld [vmem:[#allocation3 + $0xb0] sm:$0xff]
        %v4556 = vld [vmem:[#allocation3 + $0xb8] sm:$0xff]
        %v4557 = vld [vmem:[#allocation3 + $0xc0] sm:$0xff]
        %v4558 = vld [vmem:[#allocation3 + $0xc8] sm:$0xff]
        %v4559 = vld [vmem:[#allocation3 + $0xd0] sm:$0xff]
        %v4560 = vld [vmem:[#allocation3 + $0xd8] sm:$0xff]
        %v4561 = vld [vmem:[#allocation3 + $0xe0] sm:$0xff]
        %v4562 = vld [vmem:[#allocation3 + $0xe8] sm:$0xff]
        %v4563 = vld [vmem:[#allocation3 + $0xf0] sm:$0xff]
        %v4564 = vld [vmem:[#allocation3 + $0xf8] sm:$0xff]
        %v4565 = vld [vmem:[#allocation3 + $0x100] sm:$0xff]
        %v4566 = vld [vmem:[#allocation3 + $0x108] sm:$0xff]
        %v4567 = vld [vmem:[#allocation3 + $0x110] sm:$0xff]
        %v4568 = vld [vmem:[#allocation3 + $0x118] sm:$0xff]
        %v4569 = vld [vmem:[#allocation3 + $0x120] sm:$0xff]
        %v4570 = vld [vmem:[#allocation3 + $0x128] sm:$0xff]
        %v4571 = vld [vmem:[#allocation3 + $0x130] sm:$0xff]
        %v4572 = vld [vmem:[#allocation3 + $0x138] sm:$0xff]
        %v4573 = vld [vmem:[#allocation3 + $0x140] sm:$0xff]
        %v4574 = vld [vmem:[#allocation3 + $0x148] sm:$0xff]
        %v4575 = vld [vmem:[#allocation3 + $0x150] sm:$0xff]
        %v4576 = vld [vmem:[#allocation3 + $0x158] sm:$0xff]
        %v4577 = vld [vmem:[#allocation3 + $0x160] sm:$0xff]
        %v4578 = vld [vmem:[#allocation3 + $0x168] sm:$0xff]
        %v4579 = vld [vmem:[#allocation3 + $0x170] sm:$0xff]
        %v4580 = vld [vmem:[#allocation3 + $0x178] sm:$0xff]
        %v4581 = vld [vmem:[#allocation3 + $0x180] sm:$0xff]
        %v4582 = vld [vmem:[#allocation3 + $0x188] sm:$0xff]
        %v4584 = vsel %vm822, %v4522, 0
        %v4587 = vsel %vm822, %v4523, 0
        %v4590 = vsel %vm822, %v4524, 0
        %v4593 = vsel %vm822, %v4525, 0
        %v4596 = vsel %vm822, %v4526, 0
        %4598 = vmatpush.msra.mxu0 0.0
        %4599 = vmatpush.msra.mxu0 0.0
        %4600 = vmatpush.msra.mxu0 0.0
        %4601 = vmatpush.msra.mxu0 0.0
        %4602 = vmatpush.msra.mxu0 0.0
        %4603 = vmatpush.msra.mxu0 0.0
        %4604 = vmatpush.msra.mxu0 0.0
        %4605 = vmatpush.msra.mxu0 0.0
        %4606 = vmatpush.msra.mxu0 0.0
        %4607 = vmatpush.msra.mxu0 0.0
        %4608 = vmatpush.msra.mxu0 0.0
        %4609 = vmatpush.msra.mxu0 %v4573
        %4610 = vmatpush.msra.mxu0 %v4563
        %4611 = vmatpush.msra.mxu0 %v4553
        %4612 = vmatpush.msra.mxu0 %v4543
        %4613 = vmatpush.msra.mxu0 %v4533
        %4614 = vmatmul.f32.gmra.mxu0 %v4584
        %v4615 = vpop.f32.mrf.mxu0
        %v4616 = vadd.f32 0.0, %v4615
        %4617 = vmatmul.f32.gmra.mxu0 %v4587
        %v4618 = vpop.f32.mrf.mxu0
        %v4619 = vadd.f32 0.0, %v4618
        %4620 = vmatmul.f32.gmra.mxu0 %v4590
        %v4621 = vpop.f32.mrf.mxu0
        %v4622 = vadd.f32 0.0, %v4621
        %4623 = vmatmul.f32.gmra.mxu0 %v4593
        %v4624 = vpop.f32.mrf.mxu0
        %v4625 = vadd.f32 0.0, %v4624
        %4626 = vmatmul.f32.gmra.mxu0 %v4596
        %v4627 = vpop.f32.mrf.mxu0
        %v4628 = vadd.f32 0.0, %v4627
        %4629 = vdwg.mxu0
        %4630 = vmatpush.msra.mxu0 0.0
        %4631 = vmatpush.msra.mxu0 0.0
        %4632 = vmatpush.msra.mxu0 0.0
        %4633 = vmatpush.msra.mxu0 0.0
        %4634 = vmatpush.msra.mxu0 0.0
        %4635 = vmatpush.msra.mxu0 0.0
        %4636 = vmatpush.msra.mxu0 0.0
        %4637 = vmatpush.msra.mxu0 0.0
        %4638 = vmatpush.msra.mxu0 0.0
        %4639 = vmatpush.msra.mxu0 0.0
        %4640 = vmatpush.msra.mxu0 0.0
        %4641 = vmatpush.msra.mxu0 %v4574
        %4642 = vmatpush.msra.mxu0 %v4564
        %4643 = vmatpush.msra.mxu0 %v4554
        %4644 = vmatpush.msra.mxu0 %v4544
        %4645 = vmatpush.msra.mxu0 %v4534
        %4646 = vmatmul.f32.gmra.mxu0 %v4584
        %v4647 = vpop.f32.mrf.mxu0
        %v4648 = vadd.f32 0.0, %v4647
        %4649 = vmatmul.f32.gmra.mxu0 %v4587
        %v4650 = vpop.f32.mrf.mxu0
        %v4651 = vadd.f32 0.0, %v4650
        %4652 = vmatmul.f32.gmra.mxu0 %v4590
        %v4653 = vpop.f32.mrf.mxu0
        %v4654 = vadd.f32 0.0, %v4653
        %4655 = vmatmul.f32.gmra.mxu0 %v4593
        %v4656 = vpop.f32.mrf.mxu0
        %v4657 = vadd.f32 0.0, %v4656
        %4658 = vmatmul.f32.gmra.mxu0 %v4596
        %v4659 = vpop.f32.mrf.mxu0
        %v4660 = vadd.f32 0.0, %v4659
        %4661 = vdwg.mxu0
        %4662 = vmatpush.msra.mxu0 0.0
        %4663 = vmatpush.msra.mxu0 0.0
        %4664 = vmatpush.msra.mxu0 0.0
        %4665 = vmatpush.msra.mxu0 0.0
        %4666 = vmatpush.msra.mxu0 0.0
        %4667 = vmatpush.msra.mxu0 0.0
        %4668 = vmatpush.msra.mxu0 0.0
        %4669 = vmatpush.msra.mxu0 0.0
        %4670 = vmatpush.msra.mxu0 0.0
        %4671 = vmatpush.msra.mxu0 0.0
        %4672 = vmatpush.msra.mxu0 0.0
        %4673 = vmatpush.msra.mxu0 %v4575
        %4674 = vmatpush.msra.mxu0 %v4565
        %4675 = vmatpush.msra.mxu0 %v4555
        %4676 = vmatpush.msra.mxu0 %v4545
        %4677 = vmatpush.msra.mxu0 %v4535
        %4678 = vmatmul.f32.gmra.mxu0 %v4584
        %v4679 = vpop.f32.mrf.mxu0
        %v4680 = vadd.f32 0.0, %v4679
        %4681 = vmatmul.f32.gmra.mxu0 %v4587
        %v4682 = vpop.f32.mrf.mxu0
        %v4683 = vadd.f32 0.0, %v4682
        %4684 = vmatmul.f32.gmra.mxu0 %v4590
        %v4685 = vpop.f32.mrf.mxu0
        %v4686 = vadd.f32 0.0, %v4685
        %4687 = vmatmul.f32.gmra.mxu0 %v4593
        %v4688 = vpop.f32.mrf.mxu0
        %v4689 = vadd.f32 0.0, %v4688
        %4690 = vmatmul.f32.gmra.mxu0 %v4596
        %v4691 = vpop.f32.mrf.mxu0
        %v4692 = vadd.f32 0.0, %v4691
        %4693 = vdwg.mxu0
        %4694 = vmatpush.msra.mxu0 0.0
        %4695 = vmatpush.msra.mxu0 0.0
        %4696 = vmatpush.msra.mxu0 0.0
        %4697 = vmatpush.msra.mxu0 0.0
        %4698 = vmatpush.msra.mxu0 0.0
        %4699 = vmatpush.msra.mxu0 0.0
        %4700 = vmatpush.msra.mxu0 0.0
        %4701 = vmatpush.msra.mxu0 0.0
        %4702 = vmatpush.msra.mxu0 0.0
        %4703 = vmatpush.msra.mxu0 0.0
        %4704 = vmatpush.msra.mxu0 0.0
        %4705 = vmatpush.msra.mxu0 %v4576
        %4706 = vmatpush.msra.mxu0 %v4566
        %4707 = vmatpush.msra.mxu0 %v4556
        %4708 = vmatpush.msra.mxu0 %v4546
        %4709 = vmatpush.msra.mxu0 %v4536
        %4710 = vmatmul.f32.gmra.mxu0 %v4584
        %v4711 = vpop.f32.mrf.mxu0
        %v4712 = vadd.f32 0.0, %v4711
        %4713 = vmatmul.f32.gmra.mxu0 %v4587
        %v4714 = vpop.f32.mrf.mxu0
        %v4715 = vadd.f32 0.0, %v4714
        %4716 = vmatmul.f32.gmra.mxu0 %v4590
        %v4717 = vpop.f32.mrf.mxu0
        %v4718 = vadd.f32 0.0, %v4717
        %4719 = vmatmul.f32.gmra.mxu0 %v4593
        %v4720 = vpop.f32.mrf.mxu0
        %v4721 = vadd.f32 0.0, %v4720
        %4722 = vmatmul.f32.gmra.mxu0 %v4596
        %v4723 = vpop.f32.mrf.mxu0
        %v4724 = vadd.f32 0.0, %v4723
        %4725 = vdwg.mxu0
        %4726 = vmatpush.msra.mxu0 0.0
        %4727 = vmatpush.msra.mxu0 0.0
        %4728 = vmatpush.msra.mxu0 0.0
        %4729 = vmatpush.msra.mxu0 0.0
        %4730 = vmatpush.msra.mxu0 0.0
        %4731 = vmatpush.msra.mxu0 0.0
        %4732 = vmatpush.msra.mxu0 0.0
        %4733 = vmatpush.msra.mxu0 0.0
        %4734 = vmatpush.msra.mxu0 0.0
        %4735 = vmatpush.msra.mxu0 0.0
        %4736 = vmatpush.msra.mxu0 0.0
        %4737 = vmatpush.msra.mxu0 %v4577
        %4738 = vmatpush.msra.mxu0 %v4567
        %4739 = vmatpush.msra.mxu0 %v4557
        %4740 = vmatpush.msra.mxu0 %v4547
        %4741 = vmatpush.msra.mxu0 %v4537
        %4742 = vmatmul.f32.gmra.mxu0 %v4584
        %v4743 = vpop.f32.mrf.mxu0
        %v4744 = vadd.f32 0.0, %v4743
        %4745 = vmatmul.f32.gmra.mxu0 %v4587
        %v4746 = vpop.f32.mrf.mxu0
        %v4747 = vadd.f32 0.0, %v4746
        %4748 = vmatmul.f32.gmra.mxu0 %v4590
        %v4749 = vpop.f32.mrf.mxu0
        %v4750 = vadd.f32 0.0, %v4749
        %4751 = vmatmul.f32.gmra.mxu0 %v4593
        %v4752 = vpop.f32.mrf.mxu0
        %v4753 = vadd.f32 0.0, %v4752
        %4754 = vmatmul.f32.gmra.mxu0 %v4596
        %v4755 = vpop.f32.mrf.mxu0
        %v4756 = vadd.f32 0.0, %v4755
        %4757 = vdwg.mxu0
        %4758 = vmatpush.msra.mxu0 0.0
        %4759 = vmatpush.msra.mxu0 0.0
        %4760 = vmatpush.msra.mxu0 0.0
        %4761 = vmatpush.msra.mxu0 0.0
        %4762 = vmatpush.msra.mxu0 0.0
        %4763 = vmatpush.msra.mxu0 0.0
        %4764 = vmatpush.msra.mxu0 0.0
        %4765 = vmatpush.msra.mxu0 0.0
        %4766 = vmatpush.msra.mxu0 0.0
        %4767 = vmatpush.msra.mxu0 0.0
        %4768 = vmatpush.msra.mxu0 0.0
        %4769 = vmatpush.msra.mxu0 %v4578
        %4770 = vmatpush.msra.mxu0 %v4568
        %4771 = vmatpush.msra.mxu0 %v4558
        %4772 = vmatpush.msra.mxu0 %v4548
        %4773 = vmatpush.msra.mxu0 %v4538
        %4774 = vmatmul.f32.gmra.mxu0 %v4584
        %v4775 = vpop.f32.mrf.mxu0
        %v4776 = vadd.f32 0.0, %v4775
        %4777 = vmatmul.f32.gmra.mxu0 %v4587
        %v4778 = vpop.f32.mrf.mxu0
        %v4779 = vadd.f32 0.0, %v4778
        %4780 = vmatmul.f32.gmra.mxu0 %v4590
        %v4781 = vpop.f32.mrf.mxu0
        %v4782 = vadd.f32 0.0, %v4781
        %4783 = vmatmul.f32.gmra.mxu0 %v4593
        %v4784 = vpop.f32.mrf.mxu0
        %v4785 = vadd.f32 0.0, %v4784
        %4786 = vmatmul.f32.gmra.mxu0 %v4596
        %v4787 = vpop.f32.mrf.mxu0
        %v4788 = vadd.f32 0.0, %v4787
        %4789 = vdwg.mxu0
        %4790 = vmatpush.msra.mxu0 0.0
        %4791 = vmatpush.msra.mxu0 0.0
        %4792 = vmatpush.msra.mxu0 0.0
        %4793 = vmatpush.msra.mxu0 0.0
        %4794 = vmatpush.msra.mxu0 0.0
        %4795 = vmatpush.msra.mxu0 0.0
        %4796 = vmatpush.msra.mxu0 0.0
        %4797 = vmatpush.msra.mxu0 0.0
        %4798 = vmatpush.msra.mxu0 0.0
        %4799 = vmatpush.msra.mxu0 0.0
        %4800 = vmatpush.msra.mxu0 0.0
        %4801 = vmatpush.msra.mxu0 %v4579
        %4802 = vmatpush.msra.mxu0 %v4569
        %4803 = vmatpush.msra.mxu0 %v4559
        %4804 = vmatpush.msra.mxu0 %v4549
        %4805 = vmatpush.msra.mxu0 %v4539
        %4806 = vmatmul.f32.gmra.mxu0 %v4584
        %v4807 = vpop.f32.mrf.mxu0
        %v4808 = vadd.f32 0.0, %v4807
        %4809 = vmatmul.f32.gmra.mxu0 %v4587
        %v4810 = vpop.f32.mrf.mxu0
        %v4811 = vadd.f32 0.0, %v4810
        %4812 = vmatmul.f32.gmra.mxu0 %v4590
        %v4813 = vpop.f32.mrf.mxu0
        %v4814 = vadd.f32 0.0, %v4813
        %4815 = vmatmul.f32.gmra.mxu0 %v4593
        %v4816 = vpop.f32.mrf.mxu0
        %v4817 = vadd.f32 0.0, %v4816
        %4818 = vmatmul.f32.gmra.mxu0 %v4596
        %v4819 = vpop.f32.mrf.mxu0
        %v4820 = vadd.f32 0.0, %v4819
        %4821 = vdwg.mxu0
        %4822 = vmatpush.msra.mxu0 0.0
        %4823 = vmatpush.msra.mxu0 0.0
        %4824 = vmatpush.msra.mxu0 0.0
        %4825 = vmatpush.msra.mxu0 0.0
        %4826 = vmatpush.msra.mxu0 0.0
        %4827 = vmatpush.msra.mxu0 0.0
        %4828 = vmatpush.msra.mxu0 0.0
        %4829 = vmatpush.msra.mxu0 0.0
        %4830 = vmatpush.msra.mxu0 0.0
        %4831 = vmatpush.msra.mxu0 0.0
        %4832 = vmatpush.msra.mxu0 0.0
        %4833 = vmatpush.msra.mxu0 %v4580
        %4834 = vmatpush.msra.mxu0 %v4570
        %4835 = vmatpush.msra.mxu0 %v4560
        %4836 = vmatpush.msra.mxu0 %v4550
        %4837 = vmatpush.msra.mxu0 %v4540
        %4838 = vmatmul.f32.gmra.mxu0 %v4584
        %v4839 = vpop.f32.mrf.mxu0
        %v4840 = vadd.f32 0.0, %v4839
        %4841 = vmatmul.f32.gmra.mxu0 %v4587
        %v4842 = vpop.f32.mrf.mxu0
        %v4843 = vadd.f32 0.0, %v4842
        %4844 = vmatmul.f32.gmra.mxu0 %v4590
        %v4845 = vpop.f32.mrf.mxu0
        %v4846 = vadd.f32 0.0, %v4845
        %4847 = vmatmul.f32.gmra.mxu0 %v4593
        %v4848 = vpop.f32.mrf.mxu0
        %v4849 = vadd.f32 0.0, %v4848
        %4850 = vmatmul.f32.gmra.mxu0 %v4596
        %v4851 = vpop.f32.mrf.mxu0
        %v4852 = vadd.f32 0.0, %v4851
        %4853 = vdwg.mxu0
        %4854 = vmatpush.msra.mxu0 0.0
        %4855 = vmatpush.msra.mxu0 0.0
        %4856 = vmatpush.msra.mxu0 0.0
        %4857 = vmatpush.msra.mxu0 0.0
        %4858 = vmatpush.msra.mxu0 0.0
        %4859 = vmatpush.msra.mxu0 0.0
        %4860 = vmatpush.msra.mxu0 0.0
        %4861 = vmatpush.msra.mxu0 0.0
        %4862 = vmatpush.msra.mxu0 0.0
        %4863 = vmatpush.msra.mxu0 0.0
        %4864 = vmatpush.msra.mxu0 0.0
        %4865 = vmatpush.msra.mxu0 %v4581
        %4866 = vmatpush.msra.mxu0 %v4571
        %4867 = vmatpush.msra.mxu0 %v4561
        %4868 = vmatpush.msra.mxu0 %v4551
        %4869 = vmatpush.msra.mxu0 %v4541
        %4870 = vmatmul.f32.gmra.mxu0 %v4584
        %v4871 = vpop.f32.mrf.mxu0
        %v4872 = vadd.f32 0.0, %v4871
        %4873 = vmatmul.f32.gmra.mxu0 %v4587
        %v4874 = vpop.f32.mrf.mxu0
        %v4875 = vadd.f32 0.0, %v4874
        %4876 = vmatmul.f32.gmra.mxu0 %v4590
        %v4877 = vpop.f32.mrf.mxu0
        %v4878 = vadd.f32 0.0, %v4877
        %4879 = vmatmul.f32.gmra.mxu0 %v4593
        %v4880 = vpop.f32.mrf.mxu0
        %v4881 = vadd.f32 0.0, %v4880
        %4882 = vmatmul.f32.gmra.mxu0 %v4596
        %v4883 = vpop.f32.mrf.mxu0
        %v4884 = vadd.f32 0.0, %v4883
        %4885 = vdwg.mxu0
        %4886 = vmatpush.msra.mxu0 0.0
        %4887 = vmatpush.msra.mxu0 0.0
        %4888 = vmatpush.msra.mxu0 0.0
        %4889 = vmatpush.msra.mxu0 0.0
        %4890 = vmatpush.msra.mxu0 0.0
        %4891 = vmatpush.msra.mxu0 0.0
        %4892 = vmatpush.msra.mxu0 0.0
        %4893 = vmatpush.msra.mxu0 0.0
        %4894 = vmatpush.msra.mxu0 0.0
        %4895 = vmatpush.msra.mxu0 0.0
        %4896 = vmatpush.msra.mxu0 0.0
        %4897 = vmatpush.msra.mxu0 %v4582
        %4898 = vmatpush.msra.mxu0 %v4572
        %4899 = vmatpush.msra.mxu0 %v4562
        %4900 = vmatpush.msra.mxu0 %v4552
        %4901 = vmatpush.msra.mxu0 %v4542
        %4902 = vmatmul.f32.gmra.mxu0 %v4584
        %v4903 = vpop.f32.mrf.mxu0
        %v4904 = vadd.f32 0.0, %v4903
        %4905 = vmatmul.f32.gmra.mxu0 %v4587
        %v4906 = vpop.f32.mrf.mxu0
        %v4907 = vadd.f32 0.0, %v4906
        %4908 = vmatmul.f32.gmra.mxu0 %v4590
        %v4909 = vpop.f32.mrf.mxu0
        %v4910 = vadd.f32 0.0, %v4909
        %4911 = vmatmul.f32.gmra.mxu0 %v4593
        %v4912 = vpop.f32.mrf.mxu0
        %v4913 = vadd.f32 0.0, %v4912
        %4914 = vmatmul.f32.gmra.mxu0 %v4596
        %v4915 = vpop.f32.mrf.mxu0
        %v4916 = vadd.f32 0.0, %v4915
        %4917 = vdwg.mxu0
        %4919 = vset.pattern.permute.xlu0 0
        %4920 = vperm.xlu0 %4919, %v4528
        %v4921 = vpop.permute.xlu0 %4920
        %4924 = vset.pattern.permute.xlu0 0
        %4925 = vperm.xlu0 %4924, %v4529
        %v4926 = vpop.permute.xlu0 %4925
        %4929 = vset.pattern.permute.xlu0 0
        %4930 = vperm.xlu0 %4929, %v4530
        %v4931 = vpop.permute.xlu0 %4930
        %4934 = vset.pattern.permute.xlu0 0
        %4935 = vperm.xlu0 %4934, %v4531
        %v4936 = vpop.permute.xlu0 %4935
        %4939 = vset.pattern.permute.xlu0 0
        %4940 = vperm.xlu0 %4939, %v4532
        %v4941 = vpop.permute.xlu0 %4940
        %v4943 = vadd.f32 %v4616, %v4921
        %v4944 = vadd.f32 %v4619, %v4926
        %v4945 = vadd.f32 %v4622, %v4931
        %v4946 = vadd.f32 %v4625, %v4936
        %v4947 = vadd.f32 %v4628, %v4941
        %v4948 = vtanh.pop %v4943
        %v4949 = vtanh.pop %v4944
        %v4950 = vtanh.pop %v4945
        %v4951 = vtanh.pop %v4946
        %v4952 = vtanh.pop %v4947
        %v4953 = vmul.f32 %v4948, %v4948
        %v4954 = vmul.f32 %v4949, %v4949
        %v4955 = vmul.f32 %v4950, %v4950
        %v4956 = vmul.f32 %v4951, %v4951
        %v4957 = vmul.f32 %v4952, %v4952
        %v4958 = vsub.f32 1.0, %v4953
        %v4959 = vsub.f32 1.0, %v4954
        %v4960 = vsub.f32 1.0, %v4955
        %v4961 = vsub.f32 1.0, %v4956
        %v4962 = vsub.f32 1.0, %v4957
        %v4963 = vmul.f32 %v4948, %v4958
        %v4964 = vmul.f32 %v4949, %v4959
        %v4965 = vmul.f32 %v4950, %v4960
        %v4966 = vmul.f32 %v4951, %v4961
        %v4967 = vmul.f32 %v4952, %v4962
        %v4968 = vmul.f32 %v4963, -2.0
        %v4969 = vmul.f32 %v4964, -2.0
        %v4970 = vmul.f32 %v4965, -2.0
        %v4971 = vmul.f32 %v4966, -2.0
        %v4972 = vmul.f32 %v4967, -2.0
        %v4973 = vmul.f32 %v4958, 2.0
        %v4974 = vmul.f32 %v4959, 2.0
        %v4975 = vmul.f32 %v4960, 2.0
        %v4976 = vmul.f32 %v4961, 2.0
        %v4977 = vmul.f32 %v4962, 2.0
        %v4978 = vmul.f32 %v4953, 2.0
        %v4979 = vmul.f32 %v4954, 2.0
        %v4980 = vmul.f32 %v4955, 2.0
        %v4981 = vmul.f32 %v4956, 2.0
        %v4982 = vmul.f32 %v4957, 2.0
        %v4983 = vsub.f32 %v4978, %v4958
        %v4984 = vsub.f32 %v4979, %v4959
        %v4985 = vsub.f32 %v4980, %v4960
        %v4986 = vsub.f32 %v4981, %v4961
        %v4987 = vsub.f32 %v4982, %v4962
        %v4988 = vmul.f32 %v4973, %v4983
        %v4989 = vmul.f32 %v4974, %v4984
        %v4990 = vmul.f32 %v4975, %v4985
        %v4991 = vmul.f32 %v4976, %v4986
        %v4992 = vmul.f32 %v4977, %v4987
        %v4993 = vmul.f32 %v4968, %v4648
        %v4994 = vmul.f32 %v4969, %v4651
        %v4995 = vmul.f32 %v4970, %v4654
        %v4996 = vmul.f32 %v4971, %v4657
        %v4997 = vmul.f32 %v4972, %v4660
        %v4998 = vmul.f32 %v4968, %v4680
        %v4999 = vmul.f32 %v4969, %v4683
        %v5000 = vmul.f32 %v4970, %v4686
        %v5001 = vmul.f32 %v4971, %v4689
        %v5002 = vmul.f32 %v4972, %v4692
        %v5003 = vmul.f32 %v4988, %v4648
        %v5004 = vmul.f32 %v4989, %v4651
        %v5005 = vmul.f32 %v4990, %v4654
        %v5006 = vmul.f32 %v4991, %v4657
        %v5007 = vmul.f32 %v4992, %v4660
        %v5008 = vmul.f32 %v4648, %v4648
        %v5009 = vmul.f32 %v4651, %v4651
        %v5010 = vmul.f32 %v4654, %v4654
        %v5011 = vmul.f32 %v4657, %v4657
        %v5012 = vmul.f32 %v4660, %v4660
        %v5013 = vmul.f32 %v4680, %v4680
        %v5014 = vmul.f32 %v4683, %v4683
        %v5015 = vmul.f32 %v4686, %v4686
        %v5016 = vmul.f32 %v4689, %v4689
        %v5017 = vmul.f32 %v4692, %v4692
        %v5018 = vmul.f32 %v4648, %v4680
        %v5019 = vmul.f32 %v4651, %v4683
        %v5020 = vmul.f32 %v4654, %v4686
        %v5021 = vmul.f32 %v4657, %v4689
        %v5022 = vmul.f32 %v4660, %v4692
        %5023 = vst [vmem:[#allocation2] sm:$0xff] %v4948
        %5024 = vst [vmem:[#allocation2 + $0x50] sm:$0xff] %v4949
        %5025 = vst [vmem:[#allocation2 + $0xa0] sm:$0xff] %v4950
        %5026 = vst [vmem:[#allocation2 + $0xf0] sm:$0xff] %v4951
        %5027 = vst [vmem:[#allocation2 + $0x140] sm:$0xff] %v4952
        %v5028 = vmul.f32 %v4958, %v4648
        %v5029 = vmul.f32 %v4959, %v4651
        %v5030 = vmul.f32 %v4960, %v4654
        %v5031 = vmul.f32 %v4961, %v4657
        %v5032 = vmul.f32 %v4962, %v4660
        %5033 = vst [vmem:[#allocation2 + $0x8] sm:$0xff] %v5028
        %5034 = vst [vmem:[#allocation2 + $0x58] sm:$0xff] %v5029
        %5035 = vst [vmem:[#allocation2 + $0xa8] sm:$0xff] %v5030
        %5036 = vst [vmem:[#allocation2 + $0xf8] sm:$0xff] %v5031
        %5037 = vst [vmem:[#allocation2 + $0x148] sm:$0xff] %v5032
        %v5038 = vmul.f32 %v4958, %v4680
        %v5039 = vmul.f32 %v4959, %v4683
        %v5040 = vmul.f32 %v4960, %v4686
        %v5041 = vmul.f32 %v4961, %v4689
        %v5042 = vmul.f32 %v4962, %v4692
        %5043 = vst [vmem:[#allocation2 + $0x10] sm:$0xff] %v5038
        %5044 = vst [vmem:[#allocation2 + $0x60] sm:$0xff] %v5039
        %5045 = vst [vmem:[#allocation2 + $0xb0] sm:$0xff] %v5040
        %5046 = vst [vmem:[#allocation2 + $0x100] sm:$0xff] %v5041
        %5047 = vst [vmem:[#allocation2 + $0x150] sm:$0xff] %v5042
        %v5048 = vmul.f32 %v4993, %v4648
        %v5049 = vmul.f32 %v4994, %v4651
        %v5050 = vmul.f32 %v4995, %v4654
        %v5051 = vmul.f32 %v4996, %v4657
        %v5052 = vmul.f32 %v4997, %v4660
        %v5053 = vmul.f32 %v4958, %v4712
        %v5054 = vmul.f32 %v4959, %v4715
        %v5055 = vmul.f32 %v4960, %v4718
        %v5056 = vmul.f32 %v4961, %v4721
        %v5057 = vmul.f32 %v4962, %v4724
        %v5058 = vadd.f32 %v5048, %v5053
        %v5059 = vadd.f32 %v5049, %v5054
        %v5060 = vadd.f32 %v5050, %v5055
        %v5061 = vadd.f32 %v5051, %v5056
        %v5062 = vadd.f32 %v5052, %v5057
        %5063 = vst [vmem:[#allocation2 + $0x18] sm:$0xff] %v5058
        %5064 = vst [vmem:[#allocation2 + $0x68] sm:$0xff] %v5059
        %5065 = vst [vmem:[#allocation2 + $0xb8] sm:$0xff] %v5060
        %5066 = vst [vmem:[#allocation2 + $0x108] sm:$0xff] %v5061
        %5067 = vst [vmem:[#allocation2 + $0x158] sm:$0xff] %v5062
        %v5068 = vmul.f32 %v4993, %v4680
        %v5069 = vmul.f32 %v4994, %v4683
        %v5070 = vmul.f32 %v4995, %v4686
        %v5071 = vmul.f32 %v4996, %v4689
        %v5072 = vmul.f32 %v4997, %v4692
        %v5073 = vmul.f32 %v4958, %v4744
        %v5074 = vmul.f32 %v4959, %v4747
        %v5075 = vmul.f32 %v4960, %v4750
        %v5076 = vmul.f32 %v4961, %v4753
        %v5077 = vmul.f32 %v4962, %v4756
        %v5078 = vadd.f32 %v5068, %v5073
        %v5079 = vadd.f32 %v5069, %v5074
        %v5080 = vadd.f32 %v5070, %v5075
        %v5081 = vadd.f32 %v5071, %v5076
        %v5082 = vadd.f32 %v5072, %v5077
        %5083 = vst [vmem:[#allocation2 + $0x20] sm:$0xff] %v5078
        %5084 = vst [vmem:[#allocation2 + $0x70] sm:$0xff] %v5079
        %5085 = vst [vmem:[#allocation2 + $0xc0] sm:$0xff] %v5080
        %5086 = vst [vmem:[#allocation2 + $0x110] sm:$0xff] %v5081
        %5087 = vst [vmem:[#allocation2 + $0x160] sm:$0xff] %v5082
        %v5088 = vmul.f32 %v4998, %v4680
        %v5089 = vmul.f32 %v4999, %v4683
        %v5090 = vmul.f32 %v5000, %v4686
        %v5091 = vmul.f32 %v5001, %v4689
        %v5092 = vmul.f32 %v5002, %v4692
        %v5093 = vmul.f32 %v4958, %v4776
        %v5094 = vmul.f32 %v4959, %v4779
        %v5095 = vmul.f32 %v4960, %v4782
        %v5096 = vmul.f32 %v4961, %v4785
        %v5097 = vmul.f32 %v4962, %v4788
        %v5098 = vadd.f32 %v5088, %v5093
        %v5099 = vadd.f32 %v5089, %v5094
        %v5100 = vadd.f32 %v5090, %v5095
        %v5101 = vadd.f32 %v5091, %v5096
        %v5102 = vadd.f32 %v5092, %v5097
        %5103 = vst [vmem:[#allocation2 + $0x28] sm:$0xff] %v5098
        %5104 = vst [vmem:[#allocation2 + $0x78] sm:$0xff] %v5099
        %5105 = vst [vmem:[#allocation2 + $0xc8] sm:$0xff] %v5100
        %5106 = vst [vmem:[#allocation2 + $0x118] sm:$0xff] %v5101
        %5107 = vst [vmem:[#allocation2 + $0x168] sm:$0xff] %v5102
        %v5108 = vmul.f32 %v5003, %v5008
        %v5109 = vmul.f32 %v5004, %v5009
        %v5110 = vmul.f32 %v5005, %v5010
        %v5111 = vmul.f32 %v5006, %v5011
        %v5112 = vmul.f32 %v5007, %v5012
        %v5113 = vmul.f32 %v4993, %v4712
        %v5114 = vmul.f32 %v4994, %v4715
        %v5115 = vmul.f32 %v4995, %v4718
        %v5116 = vmul.f32 %v4996, %v4721
        %v5117 = vmul.f32 %v4997, %v4724
        %v5118 = vmul.f32 %v5113, 3.0
        %v5119 = vmul.f32 %v5114, 3.0
        %v5120 = vmul.f32 %v5115, 3.0
        %v5121 = vmul.f32 %v5116, 3.0
        %v5122 = vmul.f32 %v5117, 3.0
        %v5123 = vadd.f32 %v5108, %v5118
        %v5124 = vadd.f32 %v5109, %v5119
        %v5125 = vadd.f32 %v5110, %v5120
        %v5126 = vadd.f32 %v5111, %v5121
        %v5127 = vadd.f32 %v5112, %v5122
        %v5128 = vmul.f32 %v4958, %v4808
        %v5129 = vmul.f32 %v4959, %v4811
        %v5130 = vmul.f32 %v4960, %v4814
        %v5131 = vmul.f32 %v4961, %v4817
        %v5132 = vmul.f32 %v4962, %v4820
        %v5133 = vadd.f32 %v5123, %v5128
        %v5134 = vadd.f32 %v5124, %v5129
        %v5135 = vadd.f32 %v5125, %v5130
        %v5136 = vadd.f32 %v5126, %v5131
        %v5137 = vadd.f32 %v5127, %v5132
        %5138 = vst [vmem:[#allocation2 + $0x30] sm:$0xff] %v5133
        %5139 = vst [vmem:[#allocation2 + $0x80] sm:$0xff] %v5134
        %5140 = vst [vmem:[#allocation2 + $0xd0] sm:$0xff] %v5135
        %5141 = vst [vmem:[#allocation2 + $0x120] sm:$0xff] %v5136
        %5142 = vst [vmem:[#allocation2 + $0x170] sm:$0xff] %v5137
        %v5143 = vmul.f32 %v5003, %v5018
        %v5144 = vmul.f32 %v5004, %v5019
        %v5145 = vmul.f32 %v5005, %v5020
        %v5146 = vmul.f32 %v5006, %v5021
        %v5147 = vmul.f32 %v5007, %v5022
        %v5148 = vmul.f32 %v4993, %v4744
        %v5149 = vmul.f32 %v4994, %v4747
        %v5150 = vmul.f32 %v4995, %v4750
        %v5151 = vmul.f32 %v4996, %v4753
        %v5152 = vmul.f32 %v4997, %v4756
        %v5153 = vmul.f32 %v5148, 2.0
        %v5154 = vmul.f32 %v5149, 2.0
        %v5155 = vmul.f32 %v5150, 2.0
        %v5156 = vmul.f32 %v5151, 2.0
        %v5157 = vmul.f32 %v5152, 2.0
        %v5158 = vadd.f32 %v5143, %v5153
        %v5159 = vadd.f32 %v5144, %v5154
        %v5160 = vadd.f32 %v5145, %v5155
        %v5161 = vadd.f32 %v5146, %v5156
        %v5162 = vadd.f32 %v5147, %v5157
        %v5163 = vmul.f32 %v4998, %v4712
        %v5164 = vmul.f32 %v4999, %v4715
        %v5165 = vmul.f32 %v5000, %v4718
        %v5166 = vmul.f32 %v5001, %v4721
        %v5167 = vmul.f32 %v5002, %v4724
        %v5168 = vadd.f32 %v5158, %v5163
        %v5169 = vadd.f32 %v5159, %v5164
        %v5170 = vadd.f32 %v5160, %v5165
        %v5171 = vadd.f32 %v5161, %v5166
        %v5172 = vadd.f32 %v5162, %v5167
        %v5173 = vmul.f32 %v4958, %v4840
        %v5174 = vmul.f32 %v4959, %v4843
        %v5175 = vmul.f32 %v4960, %v4846
        %v5176 = vmul.f32 %v4961, %v4849
        %v5177 = vmul.f32 %v4962, %v4852
        %v5178 = vadd.f32 %v5168, %v5173
        %v5179 = vadd.f32 %v5169, %v5174
        %v5180 = vadd.f32 %v5170, %v5175
        %v5181 = vadd.f32 %v5171, %v5176
        %v5182 = vadd.f32 %v5172, %v5177
        %5183 = vst [vmem:[#allocation2 + $0x38] sm:$0xff] %v5178
        %5184 = vst [vmem:[#allocation2 + $0x88] sm:$0xff] %v5179
        %5185 = vst [vmem:[#allocation2 + $0xd8] sm:$0xff] %v5180
        %5186 = vst [vmem:[#allocation2 + $0x128] sm:$0xff] %v5181
        %5187 = vst [vmem:[#allocation2 + $0x178] sm:$0xff] %v5182
        %v5188 = vmul.f32 %v5003, %v5013
        %v5189 = vmul.f32 %v5004, %v5014
        %v5190 = vmul.f32 %v5005, %v5015
        %v5191 = vmul.f32 %v5006, %v5016
        %v5192 = vmul.f32 %v5007, %v5017
        %v5193 = vmul.f32 %v4993, %v4776
        %v5194 = vmul.f32 %v4994, %v4779
        %v5195 = vmul.f32 %v4995, %v4782
        %v5196 = vmul.f32 %v4996, %v4785
        %v5197 = vmul.f32 %v4997, %v4788
        %v5198 = vadd.f32 %v5188, %v5193
        %v5199 = vadd.f32 %v5189, %v5194
        %v5200 = vadd.f32 %v5190, %v5195
        %v5201 = vadd.f32 %v5191, %v5196
        %v5202 = vadd.f32 %v5192, %v5197
        %v5203 = vmul.f32 %v4998, %v4744
        %v5204 = vmul.f32 %v4999, %v4747
        %v5205 = vmul.f32 %v5000, %v4750
        %v5206 = vmul.f32 %v5001, %v4753
        %v5207 = vmul.f32 %v5002, %v4756
        %v5208 = vmul.f32 %v5203, 2.0
        %v5209 = vmul.f32 %v5204, 2.0
        %v5210 = vmul.f32 %v5205, 2.0
        %v5211 = vmul.f32 %v5206, 2.0
        %v5212 = vmul.f32 %v5207, 2.0
        %v5213 = vadd.f32 %v5198, %v5208
        %v5214 = vadd.f32 %v5199, %v5209
        %v5215 = vadd.f32 %v5200, %v5210
        %v5216 = vadd.f32 %v5201, %v5211
        %v5217 = vadd.f32 %v5202, %v5212
        %v5218 = vmul.f32 %v4958, %v4872
        %v5219 = vmul.f32 %v4959, %v4875
        %v5220 = vmul.f32 %v4960, %v4878
        %v5221 = vmul.f32 %v4961, %v4881
        %v5222 = vmul.f32 %v4962, %v4884
        %v5223 = vadd.f32 %v5213, %v5218
        %v5224 = vadd.f32 %v5214, %v5219
        %v5225 = vadd.f32 %v5215, %v5220
        %v5226 = vadd.f32 %v5216, %v5221
        %v5227 = vadd.f32 %v5217, %v5222
        %5228 = vst [vmem:[#allocation2 + $0x40] sm:$0xff] %v5223
        %5229 = vst [vmem:[#allocation2 + $0x90] sm:$0xff] %v5224
        %5230 = vst [vmem:[#allocation2 + $0xe0] sm:$0xff] %v5225
        %5231 = vst [vmem:[#allocation2 + $0x130] sm:$0xff] %v5226
        %5232 = vst [vmem:[#allocation2 + $0x180] sm:$0xff] %v5227
        %v5233 = vmul.f32 %v5013, %v4680
        %v5234 = vmul.f32 %v5014, %v4683
        %v5235 = vmul.f32 %v5015, %v4686
        %v5236 = vmul.f32 %v5016, %v4689
        %v5237 = vmul.f32 %v5017, %v4692
        %v5238 = vmul.f32 %v4988, %v5233
        %v5239 = vmul.f32 %v4989, %v5234
        %v5240 = vmul.f32 %v4990, %v5235
        %v5241 = vmul.f32 %v4991, %v5236
        %v5242 = vmul.f32 %v4992, %v5237
        %v5243 = vmul.f32 %v4998, %v4776
        %v5244 = vmul.f32 %v4999, %v4779
        %v5245 = vmul.f32 %v5000, %v4782
        %v5246 = vmul.f32 %v5001, %v4785
        %v5247 = vmul.f32 %v5002, %v4788
        %v5248 = vmul.f32 %v5243, 3.0
        %v5249 = vmul.f32 %v5244, 3.0
        %v5250 = vmul.f32 %v5245, 3.0
        %v5251 = vmul.f32 %v5246, 3.0
        %v5252 = vmul.f32 %v5247, 3.0
        %v5253 = vadd.f32 %v5238, %v5248
        %v5254 = vadd.f32 %v5239, %v5249
        %v5255 = vadd.f32 %v5240, %v5250
        %v5256 = vadd.f32 %v5241, %v5251
        %v5257 = vadd.f32 %v5242, %v5252
        %v5258 = vmul.f32 %v4958, %v4904
        %v5259 = vmul.f32 %v4959, %v4907
        %v5260 = vmul.f32 %v4960, %v4910
        %v5261 = vmul.f32 %v4961, %v4913
        %v5262 = vmul.f32 %v4962, %v4916
        %v5263 = vadd.f32 %v5253, %v5258
        %v5264 = vadd.f32 %v5254, %v5259
        %v5265 = vadd.f32 %v5255, %v5260
        %v5266 = vadd.f32 %v5256, %v5261
        %v5267 = vadd.f32 %v5257, %v5262
        %5268 = vst [vmem:[#allocation2 + $0x48] sm:$0xff] %v5263
        %5269 = vst [vmem:[#allocation2 + $0x98] sm:$0xff] %v5264
        %5270 = vst [vmem:[#allocation2 + $0xe8] sm:$0xff] %v5265
        %5271 = vst [vmem:[#allocation2 + $0x138] sm:$0xff] %v5266
        %5272 = vst [vmem:[#allocation2 + $0x188] sm:$0xff] %v5267
        %s5273 = scalar_lea.vmem %s3, 240
        %v5274 = vld [vmem:[%s5273] sm:$0xff]
        %v5275 = vld [vmem:[%s5273 + $0x8] sm:$0xff]
        %v5276 = vld [vmem:[%s5273 + $0x10] sm:$0xff]
        %v5277 = vld [vmem:[%s5273 + $0x18] sm:$0xff]
        %v5278 = vld [vmem:[%s5273 + $0x20] sm:$0xff]
        %s5279 = scalar_lea.vmem %s4, 240
        %v5280 = vld [vmem:[%s5279] sm:$0xff]
        %v5281 = vld [vmem:[%s5279 + $0x8] sm:$0xff]
        %v5282 = vld [vmem:[%s5279 + $0x10] sm:$0xff]
        %v5283 = vld [vmem:[%s5279 + $0x18] sm:$0xff]
        %v5284 = vld [vmem:[%s5279 + $0x20] sm:$0xff]
        %v5285 = vld [vmem:[#allocation2] sm:$0xff]
        %v5286 = vld [vmem:[#allocation2 + $0x8] sm:$0xff]
        %v5287 = vld [vmem:[#allocation2 + $0x10] sm:$0xff]
        %v5288 = vld [vmem:[#allocation2 + $0x18] sm:$0xff]
        %v5289 = vld [vmem:[#allocation2 + $0x20] sm:$0xff]
        %v5290 = vld [vmem:[#allocation2 + $0x28] sm:$0xff]
        %v5291 = vld [vmem:[#allocation2 + $0x30] sm:$0xff]
        %v5292 = vld [vmem:[#allocation2 + $0x38] sm:$0xff]
        %v5293 = vld [vmem:[#allocation2 + $0x40] sm:$0xff]
        %v5294 = vld [vmem:[#allocation2 + $0x48] sm:$0xff]
        %v5295 = vld [vmem:[#allocation2 + $0x50] sm:$0xff]
        %v5296 = vld [vmem:[#allocation2 + $0x58] sm:$0xff]
        %v5297 = vld [vmem:[#allocation2 + $0x60] sm:$0xff]
        %v5298 = vld [vmem:[#allocation2 + $0x68] sm:$0xff]
        %v5299 = vld [vmem:[#allocation2 + $0x70] sm:$0xff]
        %v5300 = vld [vmem:[#allocation2 + $0x78] sm:$0xff]
        %v5301 = vld [vmem:[#allocation2 + $0x80] sm:$0xff]
        %v5302 = vld [vmem:[#allocation2 + $0x88] sm:$0xff]
        %v5303 = vld [vmem:[#allocation2 + $0x90] sm:$0xff]
        %v5304 = vld [vmem:[#allocation2 + $0x98] sm:$0xff]
        %v5305 = vld [vmem:[#allocation2 + $0xa0] sm:$0xff]
        %v5306 = vld [vmem:[#allocation2 + $0xa8] sm:$0xff]
        %v5307 = vld [vmem:[#allocation2 + $0xb0] sm:$0xff]
        %v5308 = vld [vmem:[#allocation2 + $0xb8] sm:$0xff]
        %v5309 = vld [vmem:[#allocation2 + $0xc0] sm:$0xff]
        %v5310 = vld [vmem:[#allocation2 + $0xc8] sm:$0xff]
        %v5311 = vld [vmem:[#allocation2 + $0xd0] sm:$0xff]
        %v5312 = vld [vmem:[#allocation2 + $0xd8] sm:$0xff]
        %v5313 = vld [vmem:[#allocation2 + $0xe0] sm:$0xff]
        %v5314 = vld [vmem:[#allocation2 + $0xe8] sm:$0xff]
        %v5315 = vld [vmem:[#allocation2 + $0xf0] sm:$0xff]
        %v5316 = vld [vmem:[#allocation2 + $0xf8] sm:$0xff]
        %v5317 = vld [vmem:[#allocation2 + $0x100] sm:$0xff]
        %v5318 = vld [vmem:[#allocation2 + $0x108] sm:$0xff]
        %v5319 = vld [vmem:[#allocation2 + $0x110] sm:$0xff]
        %v5320 = vld [vmem:[#allocation2 + $0x118] sm:$0xff]
        %v5321 = vld [vmem:[#allocation2 + $0x120] sm:$0xff]
        %v5322 = vld [vmem:[#allocation2 + $0x128] sm:$0xff]
        %v5323 = vld [vmem:[#allocation2 + $0x130] sm:$0xff]
        %v5324 = vld [vmem:[#allocation2 + $0x138] sm:$0xff]
        %v5325 = vld [vmem:[#allocation2 + $0x140] sm:$0xff]
        %v5326 = vld [vmem:[#allocation2 + $0x148] sm:$0xff]
        %v5327 = vld [vmem:[#allocation2 + $0x150] sm:$0xff]
        %v5328 = vld [vmem:[#allocation2 + $0x158] sm:$0xff]
        %v5329 = vld [vmem:[#allocation2 + $0x160] sm:$0xff]
        %v5330 = vld [vmem:[#allocation2 + $0x168] sm:$0xff]
        %v5331 = vld [vmem:[#allocation2 + $0x170] sm:$0xff]
        %v5332 = vld [vmem:[#allocation2 + $0x178] sm:$0xff]
        %v5333 = vld [vmem:[#allocation2 + $0x180] sm:$0xff]
        %v5334 = vld [vmem:[#allocation2 + $0x188] sm:$0xff]
        %v5336 = vsel %vm822, %v5274, 0
        %v5339 = vsel %vm822, %v5275, 0
        %v5342 = vsel %vm822, %v5276, 0
        %v5345 = vsel %vm822, %v5277, 0
        %v5348 = vsel %vm822, %v5278, 0
        %5350 = vmatpush.msra.mxu0 0.0
        %5351 = vmatpush.msra.mxu0 0.0
        %5352 = vmatpush.msra.mxu0 0.0
        %5353 = vmatpush.msra.mxu0 0.0
        %5354 = vmatpush.msra.mxu0 0.0
        %5355 = vmatpush.msra.mxu0 0.0
        %5356 = vmatpush.msra.mxu0 0.0
        %5357 = vmatpush.msra.mxu0 0.0
        %5358 = vmatpush.msra.mxu0 0.0
        %5359 = vmatpush.msra.mxu0 0.0
        %5360 = vmatpush.msra.mxu0 0.0
        %5361 = vmatpush.msra.mxu0 %v5325
        %5362 = vmatpush.msra.mxu0 %v5315
        %5363 = vmatpush.msra.mxu0 %v5305
        %5364 = vmatpush.msra.mxu0 %v5295
        %5365 = vmatpush.msra.mxu0 %v5285
        %5366 = vmatmul.f32.gmra.mxu0 %v5336
        %v5367 = vpop.f32.mrf.mxu0
        %v5368 = vadd.f32 0.0, %v5367
        %5369 = vmatmul.f32.gmra.mxu0 %v5339
        %v5370 = vpop.f32.mrf.mxu0
        %v5371 = vadd.f32 0.0, %v5370
        %5372 = vmatmul.f32.gmra.mxu0 %v5342
        %v5373 = vpop.f32.mrf.mxu0
        %v5374 = vadd.f32 0.0, %v5373
        %5375 = vmatmul.f32.gmra.mxu0 %v5345
        %v5376 = vpop.f32.mrf.mxu0
        %v5377 = vadd.f32 0.0, %v5376
        %5378 = vmatmul.f32.gmra.mxu0 %v5348
        %v5379 = vpop.f32.mrf.mxu0
        %v5380 = vadd.f32 0.0, %v5379
        %5381 = vdwg.mxu0
        %5382 = vmatpush.msra.mxu0 0.0
        %5383 = vmatpush.msra.mxu0 0.0
        %5384 = vmatpush.msra.mxu0 0.0
        %5385 = vmatpush.msra.mxu0 0.0
        %5386 = vmatpush.msra.mxu0 0.0
        %5387 = vmatpush.msra.mxu0 0.0
        %5388 = vmatpush.msra.mxu0 0.0
        %5389 = vmatpush.msra.mxu0 0.0
        %5390 = vmatpush.msra.mxu0 0.0
        %5391 = vmatpush.msra.mxu0 0.0
        %5392 = vmatpush.msra.mxu0 0.0
        %5393 = vmatpush.msra.mxu0 %v5326
        %5394 = vmatpush.msra.mxu0 %v5316
        %5395 = vmatpush.msra.mxu0 %v5306
        %5396 = vmatpush.msra.mxu0 %v5296
        %5397 = vmatpush.msra.mxu0 %v5286
        %5398 = vmatmul.f32.gmra.mxu0 %v5336
        %v5399 = vpop.f32.mrf.mxu0
        %v5400 = vadd.f32 0.0, %v5399
        %5401 = vmatmul.f32.gmra.mxu0 %v5339
        %v5402 = vpop.f32.mrf.mxu0
        %v5403 = vadd.f32 0.0, %v5402
        %5404 = vmatmul.f32.gmra.mxu0 %v5342
        %v5405 = vpop.f32.mrf.mxu0
        %v5406 = vadd.f32 0.0, %v5405
        %5407 = vmatmul.f32.gmra.mxu0 %v5345
        %v5408 = vpop.f32.mrf.mxu0
        %v5409 = vadd.f32 0.0, %v5408
        %5410 = vmatmul.f32.gmra.mxu0 %v5348
        %v5411 = vpop.f32.mrf.mxu0
        %v5412 = vadd.f32 0.0, %v5411
        %5413 = vdwg.mxu0
        %5414 = vmatpush.msra.mxu0 0.0
        %5415 = vmatpush.msra.mxu0 0.0
        %5416 = vmatpush.msra.mxu0 0.0
        %5417 = vmatpush.msra.mxu0 0.0
        %5418 = vmatpush.msra.mxu0 0.0
        %5419 = vmatpush.msra.mxu0 0.0
        %5420 = vmatpush.msra.mxu0 0.0
        %5421 = vmatpush.msra.mxu0 0.0
        %5422 = vmatpush.msra.mxu0 0.0
        %5423 = vmatpush.msra.mxu0 0.0
        %5424 = vmatpush.msra.mxu0 0.0
        %5425 = vmatpush.msra.mxu0 %v5327
        %5426 = vmatpush.msra.mxu0 %v5317
        %5427 = vmatpush.msra.mxu0 %v5307
        %5428 = vmatpush.msra.mxu0 %v5297
        %5429 = vmatpush.msra.mxu0 %v5287
        %5430 = vmatmul.f32.gmra.mxu0 %v5336
        %v5431 = vpop.f32.mrf.mxu0
        %v5432 = vadd.f32 0.0, %v5431
        %5433 = vmatmul.f32.gmra.mxu0 %v5339
        %v5434 = vpop.f32.mrf.mxu0
        %v5435 = vadd.f32 0.0, %v5434
        %5436 = vmatmul.f32.gmra.mxu0 %v5342
        %v5437 = vpop.f32.mrf.mxu0
        %v5438 = vadd.f32 0.0, %v5437
        %5439 = vmatmul.f32.gmra.mxu0 %v5345
        %v5440 = vpop.f32.mrf.mxu0
        %v5441 = vadd.f32 0.0, %v5440
        %5442 = vmatmul.f32.gmra.mxu0 %v5348
        %v5443 = vpop.f32.mrf.mxu0
        %v5444 = vadd.f32 0.0, %v5443
        %5445 = vdwg.mxu0
        %5446 = vmatpush.msra.mxu0 0.0
        %5447 = vmatpush.msra.mxu0 0.0
        %5448 = vmatpush.msra.mxu0 0.0
        %5449 = vmatpush.msra.mxu0 0.0
        %5450 = vmatpush.msra.mxu0 0.0
        %5451 = vmatpush.msra.mxu0 0.0
        %5452 = vmatpush.msra.mxu0 0.0
        %5453 = vmatpush.msra.mxu0 0.0
        %5454 = vmatpush.msra.mxu0 0.0
        %5455 = vmatpush.msra.mxu0 0.0
        %5456 = vmatpush.msra.mxu0 0.0
        %5457 = vmatpush.msra.mxu0 %v5328
        %5458 = vmatpush.msra.mxu0 %v5318
        %5459 = vmatpush.msra.mxu0 %v5308
        %5460 = vmatpush.msra.mxu0 %v5298
        %5461 = vmatpush.msra.mxu0 %v5288
        %5462 = vmatmul.f32.gmra.mxu0 %v5336
        %v5463 = vpop.f32.mrf.mxu0
        %v5464 = vadd.f32 0.0, %v5463
        %5465 = vmatmul.f32.gmra.mxu0 %v5339
        %v5466 = vpop.f32.mrf.mxu0
        %v5467 = vadd.f32 0.0, %v5466
        %5468 = vmatmul.f32.gmra.mxu0 %v5342
        %v5469 = vpop.f32.mrf.mxu0
        %v5470 = vadd.f32 0.0, %v5469
        %5471 = vmatmul.f32.gmra.mxu0 %v5345
        %v5472 = vpop.f32.mrf.mxu0
        %v5473 = vadd.f32 0.0, %v5472
        %5474 = vmatmul.f32.gmra.mxu0 %v5348
        %v5475 = vpop.f32.mrf.mxu0
        %v5476 = vadd.f32 0.0, %v5475
        %5477 = vdwg.mxu0
        %5478 = vmatpush.msra.mxu0 0.0
        %5479 = vmatpush.msra.mxu0 0.0
        %5480 = vmatpush.msra.mxu0 0.0
        %5481 = vmatpush.msra.mxu0 0.0
        %5482 = vmatpush.msra.mxu0 0.0
        %5483 = vmatpush.msra.mxu0 0.0
        %5484 = vmatpush.msra.mxu0 0.0
        %5485 = vmatpush.msra.mxu0 0.0
        %5486 = vmatpush.msra.mxu0 0.0
        %5487 = vmatpush.msra.mxu0 0.0
        %5488 = vmatpush.msra.mxu0 0.0
        %5489 = vmatpush.msra.mxu0 %v5329
        %5490 = vmatpush.msra.mxu0 %v5319
        %5491 = vmatpush.msra.mxu0 %v5309
        %5492 = vmatpush.msra.mxu0 %v5299
        %5493 = vmatpush.msra.mxu0 %v5289
        %5494 = vmatmul.f32.gmra.mxu0 %v5336
        %v5495 = vpop.f32.mrf.mxu0
        %v5496 = vadd.f32 0.0, %v5495
        %5497 = vmatmul.f32.gmra.mxu0 %v5339
        %v5498 = vpop.f32.mrf.mxu0
        %v5499 = vadd.f32 0.0, %v5498
        %5500 = vmatmul.f32.gmra.mxu0 %v5342
        %v5501 = vpop.f32.mrf.mxu0
        %v5502 = vadd.f32 0.0, %v5501
        %5503 = vmatmul.f32.gmra.mxu0 %v5345
        %v5504 = vpop.f32.mrf.mxu0
        %v5505 = vadd.f32 0.0, %v5504
        %5506 = vmatmul.f32.gmra.mxu0 %v5348
        %v5507 = vpop.f32.mrf.mxu0
        %v5508 = vadd.f32 0.0, %v5507
        %5509 = vdwg.mxu0
        %5510 = vmatpush.msra.mxu0 0.0
        %5511 = vmatpush.msra.mxu0 0.0
        %5512 = vmatpush.msra.mxu0 0.0
        %5513 = vmatpush.msra.mxu0 0.0
        %5514 = vmatpush.msra.mxu0 0.0
        %5515 = vmatpush.msra.mxu0 0.0
        %5516 = vmatpush.msra.mxu0 0.0
        %5517 = vmatpush.msra.mxu0 0.0
        %5518 = vmatpush.msra.mxu0 0.0
        %5519 = vmatpush.msra.mxu0 0.0
        %5520 = vmatpush.msra.mxu0 0.0
        %5521 = vmatpush.msra.mxu0 %v5330
        %5522 = vmatpush.msra.mxu0 %v5320
        %5523 = vmatpush.msra.mxu0 %v5310
        %5524 = vmatpush.msra.mxu0 %v5300
        %5525 = vmatpush.msra.mxu0 %v5290
        %5526 = vmatmul.f32.gmra.mxu0 %v5336
        %v5527 = vpop.f32.mrf.mxu0
        %v5528 = vadd.f32 0.0, %v5527
        %5529 = vmatmul.f32.gmra.mxu0 %v5339
        %v5530 = vpop.f32.mrf.mxu0
        %v5531 = vadd.f32 0.0, %v5530
        %5532 = vmatmul.f32.gmra.mxu0 %v5342
        %v5533 = vpop.f32.mrf.mxu0
        %v5534 = vadd.f32 0.0, %v5533
        %5535 = vmatmul.f32.gmra.mxu0 %v5345
        %v5536 = vpop.f32.mrf.mxu0
        %v5537 = vadd.f32 0.0, %v5536
        %5538 = vmatmul.f32.gmra.mxu0 %v5348
        %v5539 = vpop.f32.mrf.mxu0
        %v5540 = vadd.f32 0.0, %v5539
        %5541 = vdwg.mxu0
        %5542 = vmatpush.msra.mxu0 0.0
        %5543 = vmatpush.msra.mxu0 0.0
        %5544 = vmatpush.msra.mxu0 0.0
        %5545 = vmatpush.msra.mxu0 0.0
        %5546 = vmatpush.msra.mxu0 0.0
        %5547 = vmatpush.msra.mxu0 0.0
        %5548 = vmatpush.msra.mxu0 0.0
        %5549 = vmatpush.msra.mxu0 0.0
        %5550 = vmatpush.msra.mxu0 0.0
        %5551 = vmatpush.msra.mxu0 0.0
        %5552 = vmatpush.msra.mxu0 0.0
        %5553 = vmatpush.msra.mxu0 %v5331
        %5554 = vmatpush.msra.mxu0 %v5321
        %5555 = vmatpush.msra.mxu0 %v5311
        %5556 = vmatpush.msra.mxu0 %v5301
        %5557 = vmatpush.msra.mxu0 %v5291
        %5558 = vmatmul.f32.gmra.mxu0 %v5336
        %v5559 = vpop.f32.mrf.mxu0
        %v5560 = vadd.f32 0.0, %v5559
        %5561 = vmatmul.f32.gmra.mxu0 %v5339
        %v5562 = vpop.f32.mrf.mxu0
        %v5563 = vadd.f32 0.0, %v5562
        %5564 = vmatmul.f32.gmra.mxu0 %v5342
        %v5565 = vpop.f32.mrf.mxu0
        %v5566 = vadd.f32 0.0, %v5565
        %5567 = vmatmul.f32.gmra.mxu0 %v5345
        %v5568 = vpop.f32.mrf.mxu0
        %v5569 = vadd.f32 0.0, %v5568
        %5570 = vmatmul.f32.gmra.mxu0 %v5348
        %v5571 = vpop.f32.mrf.mxu0
        %v5572 = vadd.f32 0.0, %v5571
        %5573 = vdwg.mxu0
        %5574 = vmatpush.msra.mxu0 0.0
        %5575 = vmatpush.msra.mxu0 0.0
        %5576 = vmatpush.msra.mxu0 0.0
        %5577 = vmatpush.msra.mxu0 0.0
        %5578 = vmatpush.msra.mxu0 0.0
        %5579 = vmatpush.msra.mxu0 0.0
        %5580 = vmatpush.msra.mxu0 0.0
        %5581 = vmatpush.msra.mxu0 0.0
        %5582 = vmatpush.msra.mxu0 0.0
        %5583 = vmatpush.msra.mxu0 0.0
        %5584 = vmatpush.msra.mxu0 0.0
        %5585 = vmatpush.msra.mxu0 %v5332
        %5586 = vmatpush.msra.mxu0 %v5322
        %5587 = vmatpush.msra.mxu0 %v5312
        %5588 = vmatpush.msra.mxu0 %v5302
        %5589 = vmatpush.msra.mxu0 %v5292
        %5590 = vmatmul.f32.gmra.mxu0 %v5336
        %v5591 = vpop.f32.mrf.mxu0
        %v5592 = vadd.f32 0.0, %v5591
        %5593 = vmatmul.f32.gmra.mxu0 %v5339
        %v5594 = vpop.f32.mrf.mxu0
        %v5595 = vadd.f32 0.0, %v5594
        %5596 = vmatmul.f32.gmra.mxu0 %v5342
        %v5597 = vpop.f32.mrf.mxu0
        %v5598 = vadd.f32 0.0, %v5597
        %5599 = vmatmul.f32.gmra.mxu0 %v5345
        %v5600 = vpop.f32.mrf.mxu0
        %v5601 = vadd.f32 0.0, %v5600
        %5602 = vmatmul.f32.gmra.mxu0 %v5348
        %v5603 = vpop.f32.mrf.mxu0
        %v5604 = vadd.f32 0.0, %v5603
        %5605 = vdwg.mxu0
        %5606 = vmatpush.msra.mxu0 0.0
        %5607 = vmatpush.msra.mxu0 0.0
        %5608 = vmatpush.msra.mxu0 0.0
        %5609 = vmatpush.msra.mxu0 0.0
        %5610 = vmatpush.msra.mxu0 0.0
        %5611 = vmatpush.msra.mxu0 0.0
        %5612 = vmatpush.msra.mxu0 0.0
        %5613 = vmatpush.msra.mxu0 0.0
        %5614 = vmatpush.msra.mxu0 0.0
        %5615 = vmatpush.msra.mxu0 0.0
        %5616 = vmatpush.msra.mxu0 0.0
        %5617 = vmatpush.msra.mxu0 %v5333
        %5618 = vmatpush.msra.mxu0 %v5323
        %5619 = vmatpush.msra.mxu0 %v5313
        %5620 = vmatpush.msra.mxu0 %v5303
        %5621 = vmatpush.msra.mxu0 %v5293
        %5622 = vmatmul.f32.gmra.mxu0 %v5336
        %v5623 = vpop.f32.mrf.mxu0
        %v5624 = vadd.f32 0.0, %v5623
        %5625 = vmatmul.f32.gmra.mxu0 %v5339
        %v5626 = vpop.f32.mrf.mxu0
        %v5627 = vadd.f32 0.0, %v5626
        %5628 = vmatmul.f32.gmra.mxu0 %v5342
        %v5629 = vpop.f32.mrf.mxu0
        %v5630 = vadd.f32 0.0, %v5629
        %5631 = vmatmul.f32.gmra.mxu0 %v5345
        %v5632 = vpop.f32.mrf.mxu0
        %v5633 = vadd.f32 0.0, %v5632
        %5634 = vmatmul.f32.gmra.mxu0 %v5348
        %v5635 = vpop.f32.mrf.mxu0
        %v5636 = vadd.f32 0.0, %v5635
        %5637 = vdwg.mxu0
        %5638 = vmatpush.msra.mxu0 0.0
        %5639 = vmatpush.msra.mxu0 0.0
        %5640 = vmatpush.msra.mxu0 0.0
        %5641 = vmatpush.msra.mxu0 0.0
        %5642 = vmatpush.msra.mxu0 0.0
        %5643 = vmatpush.msra.mxu0 0.0
        %5644 = vmatpush.msra.mxu0 0.0
        %5645 = vmatpush.msra.mxu0 0.0
        %5646 = vmatpush.msra.mxu0 0.0
        %5647 = vmatpush.msra.mxu0 0.0
        %5648 = vmatpush.msra.mxu0 0.0
        %5649 = vmatpush.msra.mxu0 %v5334
        %5650 = vmatpush.msra.mxu0 %v5324
        %5651 = vmatpush.msra.mxu0 %v5314
        %5652 = vmatpush.msra.mxu0 %v5304
        %5653 = vmatpush.msra.mxu0 %v5294
        %5654 = vmatmul.f32.gmra.mxu0 %v5336
        %v5655 = vpop.f32.mrf.mxu0
        %v5656 = vadd.f32 0.0, %v5655
        %5657 = vmatmul.f32.gmra.mxu0 %v5339
        %v5658 = vpop.f32.mrf.mxu0
        %v5659 = vadd.f32 0.0, %v5658
        %5660 = vmatmul.f32.gmra.mxu0 %v5342
        %v5661 = vpop.f32.mrf.mxu0
        %v5662 = vadd.f32 0.0, %v5661
        %5663 = vmatmul.f32.gmra.mxu0 %v5345
        %v5664 = vpop.f32.mrf.mxu0
        %v5665 = vadd.f32 0.0, %v5664
        %5666 = vmatmul.f32.gmra.mxu0 %v5348
        %v5667 = vpop.f32.mrf.mxu0
        %v5668 = vadd.f32 0.0, %v5667
        %5669 = vdwg.mxu0
        %5671 = vset.pattern.permute.xlu0 0
        %5672 = vperm.xlu0 %5671, %v5280
        %v5673 = vpop.permute.xlu0 %5672
        %5676 = vset.pattern.permute.xlu0 0
        %5677 = vperm.xlu0 %5676, %v5281
        %v5678 = vpop.permute.xlu0 %5677
        %5681 = vset.pattern.permute.xlu0 0
        %5682 = vperm.xlu0 %5681, %v5282
        %v5683 = vpop.permute.xlu0 %5682
        %5686 = vset.pattern.permute.xlu0 0
        %5687 = vperm.xlu0 %5686, %v5283
        %v5688 = vpop.permute.xlu0 %5687
        %5691 = vset.pattern.permute.xlu0 0
        %5692 = vperm.xlu0 %5691, %v5284
        %v5693 = vpop.permute.xlu0 %5692
        %v5695 = vadd.f32 %v5368, %v5673
        %v5696 = vadd.f32 %v5371, %v5678
        %v5697 = vadd.f32 %v5374, %v5683
        %v5698 = vadd.f32 %v5377, %v5688
        %v5699 = vadd.f32 %v5380, %v5693
        %v5700 = vtanh.pop %v5695
        %v5701 = vtanh.pop %v5696
        %v5702 = vtanh.pop %v5697
        %v5703 = vtanh.pop %v5698
        %v5704 = vtanh.pop %v5699
        %v5705 = vmul.f32 %v5700, %v5700
        %v5706 = vmul.f32 %v5701, %v5701
        %v5707 = vmul.f32 %v5702, %v5702
        %v5708 = vmul.f32 %v5703, %v5703
        %v5709 = vmul.f32 %v5704, %v5704
        %v5710 = vsub.f32 1.0, %v5705
        %v5711 = vsub.f32 1.0, %v5706
        %v5712 = vsub.f32 1.0, %v5707
        %v5713 = vsub.f32 1.0, %v5708
        %v5714 = vsub.f32 1.0, %v5709
        %v5715 = vmul.f32 %v5700, %v5710
        %v5716 = vmul.f32 %v5701, %v5711
        %v5717 = vmul.f32 %v5702, %v5712
        %v5718 = vmul.f32 %v5703, %v5713
        %v5719 = vmul.f32 %v5704, %v5714
        %v5720 = vmul.f32 %v5715, -2.0
        %v5721 = vmul.f32 %v5716, -2.0
        %v5722 = vmul.f32 %v5717, -2.0
        %v5723 = vmul.f32 %v5718, -2.0
        %v5724 = vmul.f32 %v5719, -2.0
        %v5725 = vmul.f32 %v5710, 2.0
        %v5726 = vmul.f32 %v5711, 2.0
        %v5727 = vmul.f32 %v5712, 2.0
        %v5728 = vmul.f32 %v5713, 2.0
        %v5729 = vmul.f32 %v5714, 2.0
        %v5730 = vmul.f32 %v5705, 2.0
        %v5731 = vmul.f32 %v5706, 2.0
        %v5732 = vmul.f32 %v5707, 2.0
        %v5733 = vmul.f32 %v5708, 2.0
        %v5734 = vmul.f32 %v5709, 2.0
        %v5735 = vsub.f32 %v5730, %v5710
        %v5736 = vsub.f32 %v5731, %v5711
        %v5737 = vsub.f32 %v5732, %v5712
        %v5738 = vsub.f32 %v5733, %v5713
        %v5739 = vsub.f32 %v5734, %v5714
        %v5740 = vmul.f32 %v5725, %v5735
        %v5741 = vmul.f32 %v5726, %v5736
        %v5742 = vmul.f32 %v5727, %v5737
        %v5743 = vmul.f32 %v5728, %v5738
        %v5744 = vmul.f32 %v5729, %v5739
        %v5745 = vmul.f32 %v5720, %v5400
        %v5746 = vmul.f32 %v5721, %v5403
        %v5747 = vmul.f32 %v5722, %v5406
        %v5748 = vmul.f32 %v5723, %v5409
        %v5749 = vmul.f32 %v5724, %v5412
        %v5750 = vmul.f32 %v5720, %v5432
        %v5751 = vmul.f32 %v5721, %v5435
        %v5752 = vmul.f32 %v5722, %v5438
        %v5753 = vmul.f32 %v5723, %v5441
        %v5754 = vmul.f32 %v5724, %v5444
        %v5755 = vmul.f32 %v5740, %v5400
        %v5756 = vmul.f32 %v5741, %v5403
        %v5757 = vmul.f32 %v5742, %v5406
        %v5758 = vmul.f32 %v5743, %v5409
        %v5759 = vmul.f32 %v5744, %v5412
        %v5760 = vmul.f32 %v5400, %v5400
        %v5761 = vmul.f32 %v5403, %v5403
        %v5762 = vmul.f32 %v5406, %v5406
        %v5763 = vmul.f32 %v5409, %v5409
        %v5764 = vmul.f32 %v5412, %v5412
        %v5765 = vmul.f32 %v5432, %v5432
        %v5766 = vmul.f32 %v5435, %v5435
        %v5767 = vmul.f32 %v5438, %v5438
        %v5768 = vmul.f32 %v5441, %v5441
        %v5769 = vmul.f32 %v5444, %v5444
        %v5770 = vmul.f32 %v5400, %v5432
        %v5771 = vmul.f32 %v5403, %v5435
        %v5772 = vmul.f32 %v5406, %v5438
        %v5773 = vmul.f32 %v5409, %v5441
        %v5774 = vmul.f32 %v5412, %v5444
        %5775 = vst [vmem:[#allocation3] sm:$0xff] %v5700
        %5776 = vst [vmem:[#allocation3 + $0x50] sm:$0xff] %v5701
        %5777 = vst [vmem:[#allocation3 + $0xa0] sm:$0xff] %v5702
        %5778 = vst [vmem:[#allocation3 + $0xf0] sm:$0xff] %v5703
        %5779 = vst [vmem:[#allocation3 + $0x140] sm:$0xff] %v5704
        %v5780 = vmul.f32 %v5710, %v5400
        %v5781 = vmul.f32 %v5711, %v5403
        %v5782 = vmul.f32 %v5712, %v5406
        %v5783 = vmul.f32 %v5713, %v5409
        %v5784 = vmul.f32 %v5714, %v5412
        %5785 = vst [vmem:[#allocation3 + $0x8] sm:$0xff] %v5780
        %5786 = vst [vmem:[#allocation3 + $0x58] sm:$0xff] %v5781
        %5787 = vst [vmem:[#allocation3 + $0xa8] sm:$0xff] %v5782
        %5788 = vst [vmem:[#allocation3 + $0xf8] sm:$0xff] %v5783
        %5789 = vst [vmem:[#allocation3 + $0x148] sm:$0xff] %v5784
        %v5790 = vmul.f32 %v5710, %v5432
        %v5791 = vmul.f32 %v5711, %v5435
        %v5792 = vmul.f32 %v5712, %v5438
        %v5793 = vmul.f32 %v5713, %v5441
        %v5794 = vmul.f32 %v5714, %v5444
        %5795 = vst [vmem:[#allocation3 + $0x10] sm:$0xff] %v5790
        %5796 = vst [vmem:[#allocation3 + $0x60] sm:$0xff] %v5791
        %5797 = vst [vmem:[#allocation3 + $0xb0] sm:$0xff] %v5792
        %5798 = vst [vmem:[#allocation3 + $0x100] sm:$0xff] %v5793
        %5799 = vst [vmem:[#allocation3 + $0x150] sm:$0xff] %v5794
        %v5800 = vmul.f32 %v5745, %v5400
        %v5801 = vmul.f32 %v5746, %v5403
        %v5802 = vmul.f32 %v5747, %v5406
        %v5803 = vmul.f32 %v5748, %v5409
        %v5804 = vmul.f32 %v5749, %v5412
        %v5805 = vmul.f32 %v5710, %v5464
        %v5806 = vmul.f32 %v5711, %v5467
        %v5807 = vmul.f32 %v5712, %v5470
        %v5808 = vmul.f32 %v5713, %v5473
        %v5809 = vmul.f32 %v5714, %v5476
        %v5810 = vadd.f32 %v5800, %v5805
        %v5811 = vadd.f32 %v5801, %v5806
        %v5812 = vadd.f32 %v5802, %v5807
        %v5813 = vadd.f32 %v5803, %v5808
        %v5814 = vadd.f32 %v5804, %v5809
        %5815 = vst [vmem:[#allocation3 + $0x18] sm:$0xff] %v5810
        %5816 = vst [vmem:[#allocation3 + $0x68] sm:$0xff] %v5811
        %5817 = vst [vmem:[#allocation3 + $0xb8] sm:$0xff] %v5812
        %5818 = vst [vmem:[#allocation3 + $0x108] sm:$0xff] %v5813
        %5819 = vst [vmem:[#allocation3 + $0x158] sm:$0xff] %v5814
        %v5820 = vmul.f32 %v5745, %v5432
        %v5821 = vmul.f32 %v5746, %v5435
        %v5822 = vmul.f32 %v5747, %v5438
        %v5823 = vmul.f32 %v5748, %v5441
        %v5824 = vmul.f32 %v5749, %v5444
        %v5825 = vmul.f32 %v5710, %v5496
        %v5826 = vmul.f32 %v5711, %v5499
        %v5827 = vmul.f32 %v5712, %v5502
        %v5828 = vmul.f32 %v5713, %v5505
        %v5829 = vmul.f32 %v5714, %v5508
        %v5830 = vadd.f32 %v5820, %v5825
        %v5831 = vadd.f32 %v5821, %v5826
        %v5832 = vadd.f32 %v5822, %v5827
        %v5833 = vadd.f32 %v5823, %v5828
        %v5834 = vadd.f32 %v5824, %v5829
        %5835 = vst [vmem:[#allocation3 + $0x20] sm:$0xff] %v5830
        %5836 = vst [vmem:[#allocation3 + $0x70] sm:$0xff] %v5831
        %5837 = vst [vmem:[#allocation3 + $0xc0] sm:$0xff] %v5832
        %5838 = vst [vmem:[#allocation3 + $0x110] sm:$0xff] %v5833
        %5839 = vst [vmem:[#allocation3 + $0x160] sm:$0xff] %v5834
        %v5840 = vmul.f32 %v5750, %v5432
        %v5841 = vmul.f32 %v5751, %v5435
        %v5842 = vmul.f32 %v5752, %v5438
        %v5843 = vmul.f32 %v5753, %v5441
        %v5844 = vmul.f32 %v5754, %v5444
        %v5845 = vmul.f32 %v5710, %v5528
        %v5846 = vmul.f32 %v5711, %v5531
        %v5847 = vmul.f32 %v5712, %v5534
        %v5848 = vmul.f32 %v5713, %v5537
        %v5849 = vmul.f32 %v5714, %v5540
        %v5850 = vadd.f32 %v5840, %v5845
        %v5851 = vadd.f32 %v5841, %v5846
        %v5852 = vadd.f32 %v5842, %v5847
        %v5853 = vadd.f32 %v5843, %v5848
        %v5854 = vadd.f32 %v5844, %v5849
        %5855 = vst [vmem:[#allocation3 + $0x28] sm:$0xff] %v5850
        %5856 = vst [vmem:[#allocation3 + $0x78] sm:$0xff] %v5851
        %5857 = vst [vmem:[#allocation3 + $0xc8] sm:$0xff] %v5852
        %5858 = vst [vmem:[#allocation3 + $0x118] sm:$0xff] %v5853
        %5859 = vst [vmem:[#allocation3 + $0x168] sm:$0xff] %v5854
        %v5860 = vmul.f32 %v5755, %v5760
        %v5861 = vmul.f32 %v5756, %v5761
        %v5862 = vmul.f32 %v5757, %v5762
        %v5863 = vmul.f32 %v5758, %v5763
        %v5864 = vmul.f32 %v5759, %v5764
        %v5865 = vmul.f32 %v5745, %v5464
        %v5866 = vmul.f32 %v5746, %v5467
        %v5867 = vmul.f32 %v5747, %v5470
        %v5868 = vmul.f32 %v5748, %v5473
        %v5869 = vmul.f32 %v5749, %v5476
        %v5870 = vmul.f32 %v5865, 3.0
        %v5871 = vmul.f32 %v5866, 3.0
        %v5872 = vmul.f32 %v5867, 3.0
        %v5873 = vmul.f32 %v5868, 3.0
        %v5874 = vmul.f32 %v5869, 3.0
        %v5875 = vadd.f32 %v5860, %v5870
        %v5876 = vadd.f32 %v5861, %v5871
        %v5877 = vadd.f32 %v5862, %v5872
        %v5878 = vadd.f32 %v5863, %v5873
        %v5879 = vadd.f32 %v5864, %v5874
        %v5880 = vmul.f32 %v5710, %v5560
        %v5881 = vmul.f32 %v5711, %v5563
        %v5882 = vmul.f32 %v5712, %v5566
        %v5883 = vmul.f32 %v5713, %v5569
        %v5884 = vmul.f32 %v5714, %v5572
        %v5885 = vadd.f32 %v5875, %v5880
        %v5886 = vadd.f32 %v5876, %v5881
        %v5887 = vadd.f32 %v5877, %v5882
        %v5888 = vadd.f32 %v5878, %v5883
        %v5889 = vadd.f32 %v5879, %v5884
        %5890 = vst [vmem:[#allocation3 + $0x30] sm:$0xff] %v5885
        %5891 = vst [vmem:[#allocation3 + $0x80] sm:$0xff] %v5886
        %5892 = vst [vmem:[#allocation3 + $0xd0] sm:$0xff] %v5887
        %5893 = vst [vmem:[#allocation3 + $0x120] sm:$0xff] %v5888
        %5894 = vst [vmem:[#allocation3 + $0x170] sm:$0xff] %v5889
        %v5895 = vmul.f32 %v5755, %v5770
        %v5896 = vmul.f32 %v5756, %v5771
        %v5897 = vmul.f32 %v5757, %v5772
        %v5898 = vmul.f32 %v5758, %v5773
        %v5899 = vmul.f32 %v5759, %v5774
        %v5900 = vmul.f32 %v5745, %v5496
        %v5901 = vmul.f32 %v5746, %v5499
        %v5902 = vmul.f32 %v5747, %v5502
        %v5903 = vmul.f32 %v5748, %v5505
        %v5904 = vmul.f32 %v5749, %v5508
        %v5905 = vmul.f32 %v5900, 2.0
        %v5906 = vmul.f32 %v5901, 2.0
        %v5907 = vmul.f32 %v5902, 2.0
        %v5908 = vmul.f32 %v5903, 2.0
        %v5909 = vmul.f32 %v5904, 2.0
        %v5910 = vadd.f32 %v5895, %v5905
        %v5911 = vadd.f32 %v5896, %v5906
        %v5912 = vadd.f32 %v5897, %v5907
        %v5913 = vadd.f32 %v5898, %v5908
        %v5914 = vadd.f32 %v5899, %v5909
        %v5915 = vmul.f32 %v5750, %v5464
        %v5916 = vmul.f32 %v5751, %v5467
        %v5917 = vmul.f32 %v5752, %v5470
        %v5918 = vmul.f32 %v5753, %v5473
        %v5919 = vmul.f32 %v5754, %v5476
        %v5920 = vadd.f32 %v5910, %v5915
        %v5921 = vadd.f32 %v5911, %v5916
        %v5922 = vadd.f32 %v5912, %v5917
        %v5923 = vadd.f32 %v5913, %v5918
        %v5924 = vadd.f32 %v5914, %v5919
        %v5925 = vmul.f32 %v5710, %v5592
        %v5926 = vmul.f32 %v5711, %v5595
        %v5927 = vmul.f32 %v5712, %v5598
        %v5928 = vmul.f32 %v5713, %v5601
        %v5929 = vmul.f32 %v5714, %v5604
        %v5930 = vadd.f32 %v5920, %v5925
        %v5931 = vadd.f32 %v5921, %v5926
        %v5932 = vadd.f32 %v5922, %v5927
        %v5933 = vadd.f32 %v5923, %v5928
        %v5934 = vadd.f32 %v5924, %v5929
        %5935 = vst [vmem:[#allocation3 + $0x38] sm:$0xff] %v5930
        %5936 = vst [vmem:[#allocation3 + $0x88] sm:$0xff] %v5931
        %5937 = vst [vmem:[#allocation3 + $0xd8] sm:$0xff] %v5932
        %5938 = vst [vmem:[#allocation3 + $0x128] sm:$0xff] %v5933
        %5939 = vst [vmem:[#allocation3 + $0x178] sm:$0xff] %v5934
        %v5940 = vmul.f32 %v5755, %v5765
        %v5941 = vmul.f32 %v5756, %v5766
        %v5942 = vmul.f32 %v5757, %v5767
        %v5943 = vmul.f32 %v5758, %v5768
        %v5944 = vmul.f32 %v5759, %v5769
        %v5945 = vmul.f32 %v5745, %v5528
        %v5946 = vmul.f32 %v5746, %v5531
        %v5947 = vmul.f32 %v5747, %v5534
        %v5948 = vmul.f32 %v5748, %v5537
        %v5949 = vmul.f32 %v5749, %v5540
        %v5950 = vadd.f32 %v5940, %v5945
        %v5951 = vadd.f32 %v5941, %v5946
        %v5952 = vadd.f32 %v5942, %v5947
        %v5953 = vadd.f32 %v5943, %v5948
        %v5954 = vadd.f32 %v5944, %v5949
        %v5955 = vmul.f32 %v5750, %v5496
        %v5956 = vmul.f32 %v5751, %v5499
        %v5957 = vmul.f32 %v5752, %v5502
        %v5958 = vmul.f32 %v5753, %v5505
        %v5959 = vmul.f32 %v5754, %v5508
        %v5960 = vmul.f32 %v5955, 2.0
        %v5961 = vmul.f32 %v5956, 2.0
        %v5962 = vmul.f32 %v5957, 2.0
        %v5963 = vmul.f32 %v5958, 2.0
        %v5964 = vmul.f32 %v5959, 2.0
        %v5965 = vadd.f32 %v5950, %v5960
        %v5966 = vadd.f32 %v5951, %v5961
        %v5967 = vadd.f32 %v5952, %v5962
        %v5968 = vadd.f32 %v5953, %v5963
        %v5969 = vadd.f32 %v5954, %v5964
        %v5970 = vmul.f32 %v5710, %v5624
        %v5971 = vmul.f32 %v5711, %v5627
        %v5972 = vmul.f32 %v5712, %v5630
        %v5973 = vmul.f32 %v5713, %v5633
        %v5974 = vmul.f32 %v5714, %v5636
        %v5975 = vadd.f32 %v5965, %v5970
        %v5976 = vadd.f32 %v5966, %v5971
        %v5977 = vadd.f32 %v5967, %v5972
        %v5978 = vadd.f32 %v5968, %v5973
        %v5979 = vadd.f32 %v5969, %v5974
        %5980 = vst [vmem:[#allocation3 + $0x40] sm:$0xff] %v5975
        %5981 = vst [vmem:[#allocation3 + $0x90] sm:$0xff] %v5976
        %5982 = vst [vmem:[#allocation3 + $0xe0] sm:$0xff] %v5977
        %5983 = vst [vmem:[#allocation3 + $0x130] sm:$0xff] %v5978
        %5984 = vst [vmem:[#allocation3 + $0x180] sm:$0xff] %v5979
        %v5985 = vmul.f32 %v5765, %v5432
        %v5986 = vmul.f32 %v5766, %v5435
        %v5987 = vmul.f32 %v5767, %v5438
        %v5988 = vmul.f32 %v5768, %v5441
        %v5989 = vmul.f32 %v5769, %v5444
        %v5990 = vmul.f32 %v5740, %v5985
        %v5991 = vmul.f32 %v5741, %v5986
        %v5992 = vmul.f32 %v5742, %v5987
        %v5993 = vmul.f32 %v5743, %v5988
        %v5994 = vmul.f32 %v5744, %v5989
        %v5995 = vmul.f32 %v5750, %v5528
        %v5996 = vmul.f32 %v5751, %v5531
        %v5997 = vmul.f32 %v5752, %v5534
        %v5998 = vmul.f32 %v5753, %v5537
        %v5999 = vmul.f32 %v5754, %v5540
        %v6000 = vmul.f32 %v5995, 3.0
        %v6001 = vmul.f32 %v5996, 3.0
        %v6002 = vmul.f32 %v5997, 3.0
        %v6003 = vmul.f32 %v5998, 3.0
        %v6004 = vmul.f32 %v5999, 3.0
        %v6005 = vadd.f32 %v5990, %v6000
        %v6006 = vadd.f32 %v5991, %v6001
        %v6007 = vadd.f32 %v5992, %v6002
        %v6008 = vadd.f32 %v5993, %v6003
        %v6009 = vadd.f32 %v5994, %v6004
        %v6010 = vmul.f32 %v5710, %v5656
        %v6011 = vmul.f32 %v5711, %v5659
        %v6012 = vmul.f32 %v5712, %v5662
        %v6013 = vmul.f32 %v5713, %v5665
        %v6014 = vmul.f32 %v5714, %v5668
        %v6015 = vadd.f32 %v6005, %v6010
        %v6016 = vadd.f32 %v6006, %v6011
        %v6017 = vadd.f32 %v6007, %v6012
        %v6018 = vadd.f32 %v6008, %v6013
        %v6019 = vadd.f32 %v6009, %v6014
        %6020 = vst [vmem:[#allocation3 + $0x48] sm:$0xff] %v6015
        %6021 = vst [vmem:[#allocation3 + $0x98] sm:$0xff] %v6016
        %6022 = vst [vmem:[#allocation3 + $0xe8] sm:$0xff] %v6017
        %6023 = vst [vmem:[#allocation3 + $0x138] sm:$0xff] %v6018
        %6024 = vst [vmem:[#allocation3 + $0x188] sm:$0xff] %v6019
        %v6025 = vld [vmem:[%s5] sm:$0x3]
        %v6026 = vld [vmem:[#allocation3] sm:$0xff]
        %v6027 = vld [vmem:[#allocation3 + $0x8] sm:$0xff]
        %v6028 = vld [vmem:[#allocation3 + $0x10] sm:$0xff]
        %v6029 = vld [vmem:[#allocation3 + $0x18] sm:$0xff]
        %v6030 = vld [vmem:[#allocation3 + $0x20] sm:$0xff]
        %v6031 = vld [vmem:[#allocation3 + $0x28] sm:$0xff]
        %v6032 = vld [vmem:[#allocation3 + $0x30] sm:$0xff]
        %v6033 = vld [vmem:[#allocation3 + $0x38] sm:$0xff]
        %v6034 = vld [vmem:[#allocation3 + $0x40] sm:$0xff]
        %v6035 = vld [vmem:[#allocation3 + $0x48] sm:$0xff]
        %v6036 = vld [vmem:[#allocation3 + $0x50] sm:$0xff]
        %v6037 = vld [vmem:[#allocation3 + $0x58] sm:$0xff]
        %v6038 = vld [vmem:[#allocation3 + $0x60] sm:$0xff]
        %v6039 = vld [vmem:[#allocation3 + $0x68] sm:$0xff]
        %v6040 = vld [vmem:[#allocation3 + $0x70] sm:$0xff]
        %v6041 = vld [vmem:[#allocation3 + $0x78] sm:$0xff]
        %v6042 = vld [vmem:[#allocation3 + $0x80] sm:$0xff]
        %v6043 = vld [vmem:[#allocation3 + $0x88] sm:$0xff]
        %v6044 = vld [vmem:[#allocation3 + $0x90] sm:$0xff]
        %v6045 = vld [vmem:[#allocation3 + $0x98] sm:$0xff]
        %v6046 = vld [vmem:[#allocation3 + $0xa0] sm:$0xff]
        %v6047 = vld [vmem:[#allocation3 + $0xa8] sm:$0xff]
        %v6048 = vld [vmem:[#allocation3 + $0xb0] sm:$0xff]
        %v6049 = vld [vmem:[#allocation3 + $0xb8] sm:$0xff]
        %v6050 = vld [vmem:[#allocation3 + $0xc0] sm:$0xff]
        %v6051 = vld [vmem:[#allocation3 + $0xc8] sm:$0xff]
        %v6052 = vld [vmem:[#allocation3 + $0xd0] sm:$0xff]
        %v6053 = vld [vmem:[#allocation3 + $0xd8] sm:$0xff]
        %v6054 = vld [vmem:[#allocation3 + $0xe0] sm:$0xff]
        %v6055 = vld [vmem:[#allocation3 + $0xe8] sm:$0xff]
        %v6056 = vld [vmem:[#allocation3 + $0xf0] sm:$0xff]
        %v6057 = vld [vmem:[#allocation3 + $0xf8] sm:$0xff]
        %v6058 = vld [vmem:[#allocation3 + $0x100] sm:$0xff]
        %v6059 = vld [vmem:[#allocation3 + $0x108] sm:$0xff]
        %v6060 = vld [vmem:[#allocation3 + $0x110] sm:$0xff]
        %v6061 = vld [vmem:[#allocation3 + $0x118] sm:$0xff]
        %v6062 = vld [vmem:[#allocation3 + $0x120] sm:$0xff]
        %v6063 = vld [vmem:[#allocation3 + $0x128] sm:$0xff]
        %v6064 = vld [vmem:[#allocation3 + $0x130] sm:$0xff]
        %v6065 = vld [vmem:[#allocation3 + $0x138] sm:$0xff]
        %v6066 = vld [vmem:[#allocation3 + $0x140] sm:$0xff]
        %v6067 = vld [vmem:[#allocation3 + $0x148] sm:$0xff]
        %v6068 = vld [vmem:[#allocation3 + $0x150] sm:$0xff]
        %v6069 = vld [vmem:[#allocation3 + $0x158] sm:$0xff]
        %v6070 = vld [vmem:[#allocation3 + $0x160] sm:$0xff]
        %v6071 = vld [vmem:[#allocation3 + $0x168] sm:$0xff]
        %v6072 = vld [vmem:[#allocation3 + $0x170] sm:$0xff]
        %v6073 = vld [vmem:[#allocation3 + $0x178] sm:$0xff]
        %v6074 = vld [vmem:[#allocation3 + $0x180] sm:$0xff]
        %v6075 = vld [vmem:[#allocation3 + $0x188] sm:$0xff]
        %v6077 = vsel %vm822, %v6025, 0
        %6079 = vmatpush.msra.mxu0 0.0
        %6080 = vmatpush.msra.mxu0 0.0
        %6081 = vmatpush.msra.mxu0 0.0
        %6082 = vmatpush.msra.mxu0 0.0
        %6083 = vmatpush.msra.mxu0 0.0
        %6084 = vmatpush.msra.mxu0 0.0
        %6085 = vmatpush.msra.mxu0 0.0
        %6086 = vmatpush.msra.mxu0 0.0
        %6087 = vmatpush.msra.mxu0 0.0
        %6088 = vmatpush.msra.mxu0 0.0
        %6089 = vmatpush.msra.mxu0 0.0
        %6090 = vmatpush.msra.mxu0 %v6066
        %6091 = vmatpush.msra.mxu0 %v6056
        %6092 = vmatpush.msra.mxu0 %v6046
        %6093 = vmatpush.msra.mxu0 %v6036
        %6094 = vmatpush.msra.mxu0 %v6026
        %6095 = vmatmul.f32.gmra.mxu0 %v6077
        %v6096 = vpop.f32.mrf.mxu0
        %v6097 = vadd.f32 0.0, %v6096
        %6098 = vdwg.mxu0
        %6099 = vmatpush.msra.mxu0 0.0
        %6100 = vmatpush.msra.mxu0 0.0
        %6101 = vmatpush.msra.mxu0 0.0
        %6102 = vmatpush.msra.mxu0 0.0
        %6103 = vmatpush.msra.mxu0 0.0
        %6104 = vmatpush.msra.mxu0 0.0
        %6105 = vmatpush.msra.mxu0 0.0
        %6106 = vmatpush.msra.mxu0 0.0
        %6107 = vmatpush.msra.mxu0 0.0
        %6108 = vmatpush.msra.mxu0 0.0
        %6109 = vmatpush.msra.mxu0 0.0
        %6110 = vmatpush.msra.mxu0 %v6067
        %6111 = vmatpush.msra.mxu0 %v6057
        %6112 = vmatpush.msra.mxu0 %v6047
        %6113 = vmatpush.msra.mxu0 %v6037
        %6114 = vmatpush.msra.mxu0 %v6027
        %6115 = vmatmul.f32.gmra.mxu0 %v6077
        %v6116 = vpop.f32.mrf.mxu0
        %v6117 = vadd.f32 0.0, %v6116
        %6118 = vdwg.mxu0
        %6119 = vmatpush.msra.mxu0 0.0
        %6120 = vmatpush.msra.mxu0 0.0
        %6121 = vmatpush.msra.mxu0 0.0
        %6122 = vmatpush.msra.mxu0 0.0
        %6123 = vmatpush.msra.mxu0 0.0
        %6124 = vmatpush.msra.mxu0 0.0
        %6125 = vmatpush.msra.mxu0 0.0
        %6126 = vmatpush.msra.mxu0 0.0
        %6127 = vmatpush.msra.mxu0 0.0
        %6128 = vmatpush.msra.mxu0 0.0
        %6129 = vmatpush.msra.mxu0 0.0
        %6130 = vmatpush.msra.mxu0 %v6068
        %6131 = vmatpush.msra.mxu0 %v6058
        %6132 = vmatpush.msra.mxu0 %v6048
        %6133 = vmatpush.msra.mxu0 %v6038
        %6134 = vmatpush.msra.mxu0 %v6028
        %6135 = vmatmul.f32.gmra.mxu0 %v6077
        %v6136 = vpop.f32.mrf.mxu0
        %v6137 = vadd.f32 0.0, %v6136
        %6138 = vdwg.mxu0
        %6139 = vmatpush.msra.mxu0 0.0
        %6140 = vmatpush.msra.mxu0 0.0
        %6141 = vmatpush.msra.mxu0 0.0
        %6142 = vmatpush.msra.mxu0 0.0
        %6143 = vmatpush.msra.mxu0 0.0
        %6144 = vmatpush.msra.mxu0 0.0
        %6145 = vmatpush.msra.mxu0 0.0
        %6146 = vmatpush.msra.mxu0 0.0
        %6147 = vmatpush.msra.mxu0 0.0
        %6148 = vmatpush.msra.mxu0 0.0
        %6149 = vmatpush.msra.mxu0 0.0
        %6150 = vmatpush.msra.mxu0 %v6069
        %6151 = vmatpush.msra.mxu0 %v6059
        %6152 = vmatpush.msra.mxu0 %v6049
        %6153 = vmatpush.msra.mxu0 %v6039
        %6154 = vmatpush.msra.mxu0 %v6029
        %6155 = vmatmul.f32.gmra.mxu0 %v6077
        %v6156 = vpop.f32.mrf.mxu0
        %v6157 = vadd.f32 0.0, %v6156
        %6158 = vdwg.mxu0
        %6159 = vmatpush.msra.mxu0 0.0
        %6160 = vmatpush.msra.mxu0 0.0
        %6161 = vmatpush.msra.mxu0 0.0
        %6162 = vmatpush.msra.mxu0 0.0
        %6163 = vmatpush.msra.mxu0 0.0
        %6164 = vmatpush.msra.mxu0 0.0
        %6165 = vmatpush.msra.mxu0 0.0
        %6166 = vmatpush.msra.mxu0 0.0
        %6167 = vmatpush.msra.mxu0 0.0
        %6168 = vmatpush.msra.mxu0 0.0
        %6169 = vmatpush.msra.mxu0 0.0
        %6170 = vmatpush.msra.mxu0 %v6070
        %6171 = vmatpush.msra.mxu0 %v6060
        %6172 = vmatpush.msra.mxu0 %v6050
        %6173 = vmatpush.msra.mxu0 %v6040
        %6174 = vmatpush.msra.mxu0 %v6030
        %6175 = vmatmul.f32.gmra.mxu0 %v6077
        %v6176 = vpop.f32.mrf.mxu0
        %v6177 = vadd.f32 0.0, %v6176
        %6178 = vdwg.mxu0
        %6179 = vmatpush.msra.mxu0 0.0
        %6180 = vmatpush.msra.mxu0 0.0
        %6181 = vmatpush.msra.mxu0 0.0
        %6182 = vmatpush.msra.mxu0 0.0
        %6183 = vmatpush.msra.mxu0 0.0
        %6184 = vmatpush.msra.mxu0 0.0
        %6185 = vmatpush.msra.mxu0 0.0
        %6186 = vmatpush.msra.mxu0 0.0
        %6187 = vmatpush.msra.mxu0 0.0
        %6188 = vmatpush.msra.mxu0 0.0
        %6189 = vmatpush.msra.mxu0 0.0
        %6190 = vmatpush.msra.mxu0 %v6071
        %6191 = vmatpush.msra.mxu0 %v6061
        %6192 = vmatpush.msra.mxu0 %v6051
        %6193 = vmatpush.msra.mxu0 %v6041
        %6194 = vmatpush.msra.mxu0 %v6031
        %6195 = vmatmul.f32.gmra.mxu0 %v6077
        %v6196 = vpop.f32.mrf.mxu0
        %v6197 = vadd.f32 0.0, %v6196
        %6198 = vdwg.mxu0
        %6199 = vmatpush.msra.mxu0 0.0
        %6200 = vmatpush.msra.mxu0 0.0
        %6201 = vmatpush.msra.mxu0 0.0
        %6202 = vmatpush.msra.mxu0 0.0
        %6203 = vmatpush.msra.mxu0 0.0
        %6204 = vmatpush.msra.mxu0 0.0
        %6205 = vmatpush.msra.mxu0 0.0
        %6206 = vmatpush.msra.mxu0 0.0
        %6207 = vmatpush.msra.mxu0 0.0
        %6208 = vmatpush.msra.mxu0 0.0
        %6209 = vmatpush.msra.mxu0 0.0
        %6210 = vmatpush.msra.mxu0 %v6072
        %6211 = vmatpush.msra.mxu0 %v6062
        %6212 = vmatpush.msra.mxu0 %v6052
        %6213 = vmatpush.msra.mxu0 %v6042
        %6214 = vmatpush.msra.mxu0 %v6032
        %6215 = vmatmul.f32.gmra.mxu0 %v6077
        %v6216 = vpop.f32.mrf.mxu0
        %v6217 = vadd.f32 0.0, %v6216
        %6218 = vdwg.mxu0
        %6219 = vmatpush.msra.mxu0 0.0
        %6220 = vmatpush.msra.mxu0 0.0
        %6221 = vmatpush.msra.mxu0 0.0
        %6222 = vmatpush.msra.mxu0 0.0
        %6223 = vmatpush.msra.mxu0 0.0
        %6224 = vmatpush.msra.mxu0 0.0
        %6225 = vmatpush.msra.mxu0 0.0
        %6226 = vmatpush.msra.mxu0 0.0
        %6227 = vmatpush.msra.mxu0 0.0
        %6228 = vmatpush.msra.mxu0 0.0
        %6229 = vmatpush.msra.mxu0 0.0
        %6230 = vmatpush.msra.mxu0 %v6073
        %6231 = vmatpush.msra.mxu0 %v6063
        %6232 = vmatpush.msra.mxu0 %v6053
        %6233 = vmatpush.msra.mxu0 %v6043
        %6234 = vmatpush.msra.mxu0 %v6033
        %6235 = vmatmul.f32.gmra.mxu0 %v6077
        %v6236 = vpop.f32.mrf.mxu0
        %v6237 = vadd.f32 0.0, %v6236
        %6238 = vdwg.mxu0
        %6239 = vmatpush.msra.mxu0 0.0
        %6240 = vmatpush.msra.mxu0 0.0
        %6241 = vmatpush.msra.mxu0 0.0
        %6242 = vmatpush.msra.mxu0 0.0
        %6243 = vmatpush.msra.mxu0 0.0
        %6244 = vmatpush.msra.mxu0 0.0
        %6245 = vmatpush.msra.mxu0 0.0
        %6246 = vmatpush.msra.mxu0 0.0
        %6247 = vmatpush.msra.mxu0 0.0
        %6248 = vmatpush.msra.mxu0 0.0
        %6249 = vmatpush.msra.mxu0 0.0
        %6250 = vmatpush.msra.mxu0 %v6074
        %6251 = vmatpush.msra.mxu0 %v6064
        %6252 = vmatpush.msra.mxu0 %v6054
        %6253 = vmatpush.msra.mxu0 %v6044
        %6254 = vmatpush.msra.mxu0 %v6034
        %6255 = vmatmul.f32.gmra.mxu0 %v6077
        %v6256 = vpop.f32.mrf.mxu0
        %v6257 = vadd.f32 0.0, %v6256
        %6258 = vdwg.mxu0
        %6259 = vmatpush.msra.mxu0 0.0
        %6260 = vmatpush.msra.mxu0 0.0
        %6261 = vmatpush.msra.mxu0 0.0
        %6262 = vmatpush.msra.mxu0 0.0
        %6263 = vmatpush.msra.mxu0 0.0
        %6264 = vmatpush.msra.mxu0 0.0
        %6265 = vmatpush.msra.mxu0 0.0
        %6266 = vmatpush.msra.mxu0 0.0
        %6267 = vmatpush.msra.mxu0 0.0
        %6268 = vmatpush.msra.mxu0 0.0
        %6269 = vmatpush.msra.mxu0 0.0
        %6270 = vmatpush.msra.mxu0 %v6075
        %6271 = vmatpush.msra.mxu0 %v6065
        %6272 = vmatpush.msra.mxu0 %v6055
        %6273 = vmatpush.msra.mxu0 %v6045
        %6274 = vmatpush.msra.mxu0 %v6035
        %6275 = vmatmul.f32.gmra.mxu0 %v6077
        %v6276 = vpop.f32.mrf.mxu0
        %v6277 = vadd.f32 0.0, %v6276
        %6278 = vdwg.mxu0
        %v6279 = vld [vmem:[%s6] sm:$0x1]
        %6281 = vset.pattern.permute.xlu0 0
        %6282 = vperm.xlu0 %6281, %v6279
        %v6283 = vpop.permute.xlu0 %6282
        %v6285 = vadd.f32 %v6097, %v6283
        %v6286 = vsub.f32 0.0, %v6117
        %v6287 = vsub.f32 0.0, %v6157
        %v6288 = vsub.f32 0.0, %v6177
        %v6289 = vsub.f32 0.0, %v6217
        %v6290 = vsub.f32 0.0, %v6257
        %v6291 = vmul.f32 %v6137, %v6177
        %v6292 = vmul.f32 %v6286, %v6197
        %v6293 = vadd.f32 %v6291, %v6292
        %v6295 = vrot.slane %v6117, 1
        %v6297 = vadd.f32 %v6293, %v6295
        %v6298 = vadd.f32 %v6237, %v6277
        %v6299 = vmul.f32 %v6298, 0.01
        %v6300 = vsub.f32 %v6297, %v6299
        %v6301 = vmul.f32 %v6137, %v6287
        %v6302 = vmul.f32 %v6286, %v6288
        %v6303 = vadd.f32 %v6301, %v6302
        %v6305 = vrot.slane %v6137, 1
        %v6307 = vadd.f32 %v6303, %v6305
        %v6308 = vadd.f32 %v6289, %v6290
        %v6309 = vmul.f32 %v6308, 0.01
        %v6310 = vsub.f32 %v6307, %v6309
        %v6311 = vrot.slane %v6137, 7
        %v6314 = vrot.slane %v6286, 6
        %v6317 = vrot.slane %v6300, 5
        %v6320 = vrot.slane %v6310, 4
        %vm6322 = vcmask 1040384
        %v6323 = vsel %vm6322, %v6285, %v6311
        %v6324 = vsel %vm326, %v6323, %v6314
        %vm6325 = vcmask 1042432
        %v6326 = vsel %vm6325, %v6324, %v6317
        %vm6327 = vcmask 1043456
        %v6328 = vsel %vm6327, %v6326, %v6320
        %vm6329 = vcmask 1044480
        %v6330 = vsel %vm6329, %v6328, 0.0
        %6331 = vst [vmem:[%s269] sm:$0xff] %v6330
        %s6332 = sand.u32 %s181, 1
        %s6333 = scalar_lea.sflag [#allocation5], %s6332
        %s6334 = sand.u32 %s181, 1
        %s6335 = smul.addr %s6334, 8
        %s6336 = scalar_lea.vmem [#allocation4], %s6335
        // Predicated region
        $region49: #{tpu_custom_call.1} parent=47 // pred_check
          %p6337 = pneg %p191
        $region50: #{tpu_custom_call.1} parent=47 // pred_check_branch
          %6339 = sbr.rel (%p6337) target = $region52
        $region51: #{tpu_custom_call.1} parent=47 // pred_region
          %6341 = vsyncadd %s6333, 0
          %s6342 = smul.addr %s21, 8
          %s6343 = scalar_lea.hbm %s7, %s6342
          %s6345 = sshll.u32 %s6336, 4
          %s6346 = int_to_ptr.vmem [resolvable:$true] %s6345
          %s6347 = sshll.u32 %s6343, 4
          %s6348 = int_to_ptr.hbm [resolvable:$true] %s6347
          %6350 = dma.vmem_to_hbm [thread:$0]  %s6346, 128, %s6348, %s6333
        $region52: #{tpu_custom_call.1} parent=47 // pred_fallthru
          _
      $region48: #{tpu_custom_call.1} parent=5 // pred_fallthru
        _
      %p6351 = scmp.le.s32.totalorder 2, %s16
      // Predicated region
      $region53: #{tpu_custom_call.1} parent=5 // pred_check
        %p6352 = pneg %p6351
      $region54: #{tpu_custom_call.1} parent=5 // pred_check_branch
        %6354 = sbr.rel (%p6352) target = $region56
      $region55: #{tpu_custom_call.1} parent=5 // pred_region
        %s6355 = ssub.s32 %s16, 2
        // Predicated region
        $region57: #{tpu_custom_call.1} parent=55 // pred_check
          %p6356 = pneg %p197
        $region58: #{tpu_custom_call.1} parent=55 // pred_check_branch
          %6358 = sbr.rel (%p6356) target = $region60
        $region59: #{tpu_custom_call.1} parent=55 // pred_region
          %s6359 = sand.u32 %s182, 1
          %s6360 = scalar_lea.sflag [#allocation5], %s6359
          %s6361 = sand.u32 %s182, 1
          %s6362 = smul.addr %s6361, 8
          %s6363 = scalar_lea.vmem [#allocation4], %s6362
          %6365 = dma.done %s6360, 128
        $region60: #{tpu_custom_call.1} parent=55 // pred_fallthru
          _
      $region56: #{tpu_custom_call.1} parent=5 // pred_fallthru
        _
    $region6: #{tpu_custom_call.1} parent=1 // loop_footer
      %s20 = sadd.s32 1, %s16
    $region7: #{tpu_custom_call.1} parent=1 // loop_footer_branch
      %15 = sbr.rel target = $region3
    $region8: #{tpu_custom_call.1} parent=1 // loop_exit
      _
    %6366 = vsyncpa [#allocation5], 1
    %s6367 = scalar_lea.sflag [#allocation5], 1
    %6368 = vsyncpa %s6367, 1

</llo_original>
